<compile_context>
chip_gen: v5e
topology: v5e:2x2
jax: 0.10.0
libtpu: 0.0.40
codegen_flags: <defaults>
</compile_context>

<pallas_src>
import jax
import jax.numpy as jnp
from jax.experimental import pallas as pl
from jax.experimental.pallas import tpu as pltpu

N_EMBD = 384            # as in the reference module
HIDDEN = 4 * N_EMBD     # 1536
DROPOUT_P = 0.2         # unused in eval mode


def _round_up(x, m):
    return ((x + m - 1) // m) * m


def _ffn_kernel(x_ref, w1_ref, b1_ref, w2_ref, b2_ref, o_ref, h_ref):
    # x_ref : [tm, n_embd]   (pipelined row tile, caller dtype)
    # w1_ref: [n_embd, H]    (resident, compute dtype)
    # b1_ref: [1, H]         (f32)
    # w2_ref: [H, n_embd]    (resident, compute dtype)
    # b2_ref: [1, n_embd]    (f32)
    # o_ref : [tm, n_embd]
    # h_ref : [tm, H]        (bf16 VMEM scratch for the staged hidden activation)
    x = x_ref[...].astype(w1_ref.dtype)          # no-op if caller already bf16
    h = jnp.dot(x, w1_ref[...], preferred_element_type=jnp.float32)
    h = jnp.maximum(h + b1_ref[...], 0.0)        # bias + ReLU in f32
    # Explicitly stage the intermediate as bf16 instead of spilling f32.
    h_ref[...] = h.astype(h_ref.dtype)
    y = jnp.dot(h_ref[...], w2_ref[...], preferred_element_type=jnp.float32)
    # Dropout in eval mode == identity.
    o_ref[...] = (y + b2_ref[...]).astype(o_ref.dtype)


def _choose_tm(m):
    """Row tile:
      - amortize the ~0.35 us per-grid-step overhead with bigger tiles when M
        is large,
      - but keep >= 4 (even) grid steps so both v7x TensorCores get >= 2 steps
        each and x/out DMA-compute overlap survives.
    """
    if m >= 4096:
        return 512
    if m >= 1024:
        return 256
    if m >= 256:
        return 128
    # Tiny inputs: one grid step over sublane-aligned (multiple-of-8) rows.
    return _round_up(max(m, 1), 8)


def _build_ffn_call(Mp, tm, d, H, out_dtype, x_dtype, compute_dtype,
                    single_buffer_weights):
    def invariant_spec(shape):
        # Grid-invariant operands: one VMEM buffer is enough.
        if single_buffer_weights:
            return pl.BlockSpec(shape, lambda i: (0, 0),
                                pipeline_mode=pl.Buffered(1))
        return pl.BlockSpec(shape, lambda i: (0, 0))

    cdt_bytes = jnp.dtype(compute_dtype).itemsize
    x_bytes = jnp.dtype(x_dtype).itemsize
    out_bytes = jnp.dtype(out_dtype).itemsize
    cost = pl.CostEstimate(
        flops=4 * Mp * d * H,                        # two [Mp,d/H] matmuls
        transcendentals=0,
        bytes_accessed=(Mp * d * x_bytes             # x in
                        + Mp * d * out_bytes         # out
                        + 2 * d * H * cdt_bytes      # W1 + W2
                        + (H + d) * 4),              # biases
    )

    return pl.pallas_call(
        _ffn_kernel,
        out_shape=jax.ShapeDtypeStruct((Mp, d), out_dtype),
        grid_spec=pltpu.PrefetchScalarGridSpec(
            num_scalar_prefetch=0,
            grid=(Mp // tm,),
            in_specs=[
                pl.BlockSpec((tm, d), lambda i: (i, 0)),   # x rows (pipelined)
                invariant_spec((d, H)),                    # W1 (resident)
                invariant_spec((1, H)),                    # b1
                invariant_spec((H, d)),                    # W2 (resident)
                invariant_spec((1, d)),                    # b2
            ],
            out_specs=pl.BlockSpec((tm, d), lambda i: (i, 0)),
            scratch_shapes=[pltpu.VMEM((tm, H), compute_dtype)],  # staged hidden
        ),
        compiler_params=pltpu.CompilerParams(
            dimension_semantics=("parallel",),
        ),
        cost_estimate=cost,
    )


def feed_forward(x, w1, b1, w2, b2, *, tm=None, compute_dtype=jnp.bfloat16):
    """x: [..., n_embd] -> [..., n_embd]  (eval-mode FeedForward)."""
    orig_shape = x.shape
    d = orig_shape[-1]
    H = w1.shape[1]

    x2 = x.reshape(-1, d)
    M = x2.shape[0]
    if tm is None:
        tm = _choose_tm(M)

    # Pad the ragged row tail up to a multiple of the tile (padded rows are
    # computed and discarded; cheap relative to the large-tile MXU win).
    Mp = _round_up(M, tm)
    if Mp != M:
        x2 = jnp.pad(x2, ((0, Mp - M), (0, 0)))

    # Weights in the (bf16) compute dtype; biases stay f32 and are added to
    # the f32 accumulator inside the kernel.  If the caller already supplies
    # bf16 activations, no extra wrapper cast / HBM round trip is added.
    w1c = w1.astype(compute_dtype)
    w2c = w2.astype(compute_dtype)
    b1_2d = b1.reshape(1, H).astype(jnp.float32)
    b2_2d = b2.reshape(1, d).astype(jnp.float32)

    args = (x2, w1c, b1_2d, w2c, b2_2d)
    try:
        out = _build_ffn_call(Mp, tm, d, H, x.dtype, x2.dtype, compute_dtype,
                              single_buffer_weights=True)(*args)
    except Exception:
        # Fallback for Pallas versions without BlockSpec(pipeline_mode=...):
        # identical kernel, just default double-buffered (still only ~8 MiB).
        out = _build_ffn_call(Mp, tm, d, H, x.dtype, x2.dtype, compute_dtype,
                              single_buffer_weights=False)(*args)

    if Mp != M:
        out = out[:M]
    return out.reshape(orig_shape)


def init_params(key, n_embd=N_EMBD, dtype=jnp.float32):
    """Deterministic init mimicking nn.Linear's U(-1/sqrt(fan_in), 1/sqrt(fan_in))."""
    k1, k2, k3, k4 = jax.random.split(key, 4)
    hidden = 4 * n_embd
    bound1 = 1.0 / (n_embd ** 0.5)
    bound2 = 1.0 / (hidden ** 0.5)
    w1 = jax.random.uniform(k1, (n_embd, hidden), dtype, -bound1, bound1)
    b1 = jax.random.uniform(k2, (hidden,), dtype, -bound1, bound1)
    w2 = jax.random.uniform(k3, (hidden, n_embd), dtype, -bound2, bound2)
    b2 = jax.random.uniform(k4, (n_embd,), dtype, -bound2, bound2)
    return w1, b1, w2, b2


def _reference_bf16(x, w1, b1, w2, b2):
    """Pure-JAX reference following the same bf16-input / f32-accumulate path."""
    h = jnp.dot(x.astype(jnp.bfloat16), w1.astype(jnp.bfloat16),
                preferred_element_type=jnp.float32) + b1
    h = jnp.maximum(h, 0.0)
    y = jnp.dot(h.astype(jnp.bfloat16), w2.astype(jnp.bfloat16),
                preferred_element_type=jnp.float32) + b2
    return y


if __name__ == "__main__":
    key = jax.random.PRNGKey(0)
    kx, kp = jax.random.split(key)

    w1, b1, w2, b2 = init_params(kp)

    # Small shapes consistent with the module: (batch, seq, n_embd).
    batch, seq = 2, 8                       # M = 16 rows, single grid step
    x = jax.random.normal(kx, (batch, seq, N_EMBD), dtype=jnp.float32)

    y = jax.block_until_ready(feed_forward(x, w1, b1, w2, b2))
    assert y.shape == x.shape

    # Compare against the same bf16-input / f32-accumulate reference ...
    ref = _reference_bf16(x, w1, b1, w2, b2)
    assert jnp.allclose(y, ref, atol=2e-2, rtol=2e-2), "mismatch vs bf16 reference"
    # ... and against the full-f32 reference with bf16-appropriate tolerance.
    ref_f32 = jnp.maximum(x @ w1 + b1, 0.0) @ w2 + b2
    assert jnp.allclose(y, ref_f32, atol=5e-2, rtol=5e-2), "mismatch vs f32 reference"

    # Ragged-tail (padding) path with a non-aligned M.
    x_odd = jax.random.normal(kx, (3, 7, N_EMBD), dtype=jnp.float32)  # M = 21
    y_odd = jax.block_until_ready(feed_forward(x_odd, w1, b1, w2, b2))
    ref_odd = _reference_bf16(x_odd, w1, b1, w2, b2)
    assert y_odd.shape == x_odd.shape
    assert jnp.allclose(y_odd, ref_odd, atol=2e-2, rtol=2e-2), "mismatch (ragged M)"

    # Multi-step pipelined grid + padding (M = 288 -> tm = 128, grid = 3).
    x_big = jax.random.normal(kx, (4, 72, N_EMBD), dtype=jnp.float32)
    y_big = jax.block_until_ready(feed_forward(x_big, w1, b1, w2, b2))
    ref_big = _reference_bf16(x_big, w1, b1, w2, b2)
    assert y_big.shape == x_big.shape
    assert jnp.allclose(y_big, ref_big, atol=2e-2, rtol=2e-2), "mismatch (multi-step)"

    print("KERNEL_OK")
</pallas_src>

<mosaic_0001>
module attributes {stable_mosaic.version = 11 : i64} {
  func.func @_ffn_kernel(%arg0: i32, %arg1: memref<16x384xf32, #tpu.memory_space<vmem>>, %arg2: memref<384x1536xbf16, #tpu.memory_space<vmem>>, %arg3: memref<1x1536xf32, #tpu.memory_space<vmem>>, %arg4: memref<1536x384xbf16, #tpu.memory_space<vmem>>, %arg5: memref<1x384xf32, #tpu.memory_space<vmem>>, %arg6: memref<16x384xf32, #tpu.memory_space<vmem>>, %arg7: memref<16x1536xbf16, #tpu.memory_space<vmem>>) attributes {dimension_semantics = [#tpu.dimension_semantics<parallel>], iteration_bounds = array<i64: 1>, scalar_prefetch = 0 : i64, scratch_operands = 1 : i64, tpu.core_type = #tpu.core_type<tc>, window_params = [{transform_indices = @transform_0, window_bounds = array<i64: 16, 384>}, {pipeline_mode = #tpu.pipeline_mode<synchronous>, transform_indices = @transform_1, window_bounds = array<i64: 384, 1536>}, {pipeline_mode = #tpu.pipeline_mode<synchronous>, transform_indices = @transform_2, window_bounds = array<i64: 1, 1536>}, {pipeline_mode = #tpu.pipeline_mode<synchronous>, transform_indices = @transform_3, window_bounds = array<i64: 1536, 384>}, {pipeline_mode = #tpu.pipeline_mode<synchronous>, transform_indices = @transform_4, window_bounds = array<i64: 1, 384>}, {transform_indices = @transform_5, window_bounds = array<i64: 16, 384>}]} {
    %c0 = arith.constant 0 : index
    %c0_0 = arith.constant 0 : index
    %0 = vector.load %arg1[%c0, %c0_0] : memref<16x384xf32, #tpu.memory_space<vmem>>, vector<16x384xf32>
    %1 = arith.truncf %0 : vector<16x384xf32> to vector<16x384xbf16>
    %c0_1 = arith.constant 0 : index
    %c0_2 = arith.constant 0 : index
    %2 = vector.load %arg2[%c0_1, %c0_2] : memref<384x1536xbf16, #tpu.memory_space<vmem>>, vector<384x1536xbf16>
    %cst = arith.constant dense<0.000000e+00> : vector<16x1536xf32>
    %3 = tpu.matmul %1, %2, %cst {dimension_numbers = #tpu.dot_dimension_numbers<[1], [0], [0], [1], [0, 0, 1, 1], [], []>} : vector<16x384xbf16>, vector<384x1536xbf16>, vector<16x1536xf32> -> vector<16x1536xf32>
    %c0_3 = arith.constant 0 : index
    %c0_4 = arith.constant 0 : index
    %4 = vector.load %arg3[%c0_3, %c0_4] : memref<1x1536xf32, #tpu.memory_space<vmem>>, vector<1x1536xf32>
    %5 = vector.broadcast %4 : vector<1x1536xf32> to vector<16x1536xf32>
    %6 = arith.addf %3, %5 : vector<16x1536xf32>
    %cst_5 = arith.constant 0.000000e+00 : f32
    %7 = vector.broadcast %cst_5 : f32 to vector<16x1536xf32>
    %8 = arith.maximumf %6, %7 : vector<16x1536xf32>
    %9 = arith.truncf %8 : vector<16x1536xf32> to vector<16x1536xbf16>
    %c0_6 = arith.constant 0 : index
    %c0_7 = arith.constant 0 : index
    %10 = vector.load %arg7[%c0_6, %c0_7] : memref<16x1536xbf16, #tpu.memory_space<vmem>>, vector<16x1536xbf16>
    tpu.vector_store %arg7[%c0_6, %c0_7], %9 {strides = array<i32>} : memref<16x1536xbf16, #tpu.memory_space<vmem>>, vector<16x1536xbf16>,
    %c0_8 = arith.constant 0 : index
    %c0_9 = arith.constant 0 : index
    %11 = vector.load %arg7[%c0_8, %c0_9] : memref<16x1536xbf16, #tpu.memory_space<vmem>>, vector<16x1536xbf16>
    %c0_10 = arith.constant 0 : index
    %c0_11 = arith.constant 0 : index
    %12 = vector.load %arg4[%c0_10, %c0_11] : memref<1536x384xbf16, #tpu.memory_space<vmem>>, vector<1536x384xbf16>
    %cst_12 = arith.constant dense<0.000000e+00> : vector<16x384xf32>
    %13 = tpu.matmul %11, %12, %cst_12 {dimension_numbers = #tpu.dot_dimension_numbers<[1], [0], [0], [1], [0, 0, 1, 1], [], []>} : vector<16x1536xbf16>, vector<1536x384xbf16>, vector<16x384xf32> -> vector<16x384xf32>
    %c0_13 = arith.constant 0 : index
    %c0_14 = arith.constant 0 : index
    %14 = vector.load %arg5[%c0_13, %c0_14] : memref<1x384xf32, #tpu.memory_space<vmem>>, vector<1x384xf32>
    %15 = vector.broadcast %14 : vector<1x384xf32> to vector<16x384xf32>
    %16 = arith.addf %13, %15 : vector<16x384xf32>
    %c0_15 = arith.constant 0 : index
    %c0_16 = arith.constant 0 : index
    %17 = vector.load %arg6[%c0_15, %c0_16] : memref<16x384xf32, #tpu.memory_space<vmem>>, vector<16x384xf32>
    tpu.vector_store %arg6[%c0_15, %c0_16], %16 {strides = array<i32>} : memref<16x384xf32, #tpu.memory_space<vmem>>, vector<16x384xf32>,
    return
  }
  func.func @transform_0(%arg0: i32) -> (i32, i32) {
    %c0_i32 = arith.constant 0 : i32
    %c0_i32_0 = arith.constant 0 : i32
    return %arg0, %c0_i32 : i32, i32
  }
  func.func @transform_1(%arg0: i32) -> (i32, i32) {
    %c0_i32 = arith.constant 0 : i32
    %c0_i32_0 = arith.constant 0 : i32
    %c0_i32_1 = arith.constant 0 : i32
    return %c0_i32, %c0_i32_0 : i32, i32
  }
  func.func @transform_2(%arg0: i32) -> (i32, i32) {
    %c0_i32 = arith.constant 0 : i32
    %c0_i32_0 = arith.constant 0 : i32
    %c0_i32_1 = arith.constant 0 : i32
    return %c0_i32, %c0_i32_0 : i32, i32
  }
  func.func @transform_3(%arg0: i32) -> (i32, i32) {
    %c0_i32 = arith.constant 0 : i32
    %c0_i32_0 = arith.constant 0 : i32
    %c0_i32_1 = arith.constant 0 : i32
    return %c0_i32, %c0_i32_0 : i32, i32
  }
  func.func @transform_4(%arg0: i32) -> (i32, i32) {
    %c0_i32 = arith.constant 0 : i32
    %c0_i32_0 = arith.constant 0 : i32
    %c0_i32_1 = arith.constant 0 : i32
    return %c0_i32, %c0_i32_0 : i32, i32
  }
  func.func @transform_5(%arg0: i32) -> (i32, i32) {
    %c0_i32 = arith.constant 0 : i32
    %c0_i32_0 = arith.constant 0 : i32
    return %arg0, %c0_i32 : i32, i32
  }
}

module attributes {stable_mosaic.version = 11 : i64} {
  func.func @_ffn_kernel(%arg0: i32, %arg1: memref<16x384xf32, #tpu.memory_space<vmem>>, %arg2: memref<384x1536xbf16, #tpu.memory_space<vmem>>, %arg3: memref<1x1536xf32, #tpu.memory_space<vmem>>, %arg4: memref<1536x384xbf16, #tpu.memory_space<vmem>>, %arg5: memref<1x384xf32, #tpu.memory_space<vmem>>, %arg6: memref<16x384xf32, #tpu.memory_space<vmem>>, %arg7: memref<16x1536xbf16, #tpu.memory_space<vmem>>) attributes {dimension_semantics = [#tpu.dimension_semantics<parallel>], iteration_bounds = array<i64: 1>, scalar_prefetch = 0 : i64, scratch_operands = 1 : i64, tpu.core_type = #tpu.core_type<tc>, window_params = [{transform_indices = @transform_0, window_bounds = array<i64: 16, 384>}, {pipeline_mode = #tpu.pipeline_mode<synchronous>, transform_indices = @transform_1, window_bounds = array<i64: 384, 1536>}, {pipeline_mode = #tpu.pipeline_mode<synchronous>, transform_indices = @transform_2, window_bounds = array<i64: 1, 1536>}, {pipeline_mode = #tpu.pipeline_mode<synchronous>, transform_indices = @transform_3, window_bounds = array<i64: 1536, 384>}, {pipeline_mode = #tpu.pipeline_mode<synchronous>, transform_indices = @transform_4, window_bounds = array<i64: 1, 384>}, {transform_indices = @transform_5, window_bounds = array<i64: 16, 384>}]} {
    %c0 = arith.constant 0 : index
    %c0_0 = arith.constant 0 : index
    %0 = vector.load %arg1[%c0, %c0_0] : memref<16x384xf32, #tpu.memory_space<vmem>>, vector<16x384xf32>
    %1 = arith.truncf %0 : vector<16x384xf32> to vector<16x384xbf16>
    %c0_1 = arith.constant 0 : index
    %c0_2 = arith.constant 0 : index
    %2 = vector.load %arg2[%c0_1, %c0_2] : memref<384x1536xbf16, #tpu.memory_space<vmem>>, vector<384x1536xbf16>
    %cst = arith.constant dense<0.000000e+00> : vector<16x1536xf32>
    %3 = tpu.matmul %1, %2, %cst {dimension_numbers = #tpu.dot_dimension_numbers<[1], [0], [0], [1], [0, 0, 1, 1], [], []>} : vector<16x384xbf16>, vector<384x1536xbf16>, vector<16x1536xf32> -> vector<16x1536xf32>
    %c0_3 = arith.constant 0 : index
    %c0_4 = arith.constant 0 : index
    %4 = vector.load %arg3[%c0_3, %c0_4] : memref<1x1536xf32, #tpu.memory_space<vmem>>, vector<1x1536xf32>
    %5 = vector.broadcast %4 : vector<1x1536xf32> to vector<16x1536xf32>
    %6 = arith.addf %3, %5 : vector<16x1536xf32>
    %cst_5 = arith.constant 0.000000e+00 : f32
    %7 = vector.broadcast %cst_5 : f32 to vector<16x1536xf32>
    %8 = arith.maximumf %6, %7 : vector<16x1536xf32>
    %9 = arith.truncf %8 : vector<16x1536xf32> to vector<16x1536xbf16>
    %c0_6 = arith.constant 0 : index
    %c0_7 = arith.constant 0 : index
    %10 = vector.load %arg7[%c0_6, %c0_7] : memref<16x1536xbf16, #tpu.memory_space<vmem>>, vector<16x1536xbf16>
    tpu.vector_store %arg7[%c0_6, %c0_7], %9 {strides = array<i32>} : memref<16x1536xbf16, #tpu.memory_space<vmem>>, vector<16x1536xbf16>,
    %c0_8 = arith.constant 0 : index
    %c0_9 = arith.constant 0 : index
    %11 = vector.load %arg7[%c0_8, %c0_9] : memref<16x1536xbf16, #tpu.memory_space<vmem>>, vector<16x1536xbf16>
    %c0_10 = arith.constant 0 : index
    %c0_11 = arith.constant 0 : index
    %12 = vector.load %arg4[%c0_10, %c0_11] : memref<1536x384xbf16, #tpu.memory_space<vmem>>, vector<1536x384xbf16>
    %cst_12 = arith.constant dense<0.000000e+00> : vector<16x384xf32>
    %13 = tpu.matmul %11, %12, %cst_12 {dimension_numbers = #tpu.dot_dimension_numbers<[1], [0], [0], [1], [0, 0, 1, 1], [], []>} : vector<16x1536xbf16>, vector<1536x384xbf16>, vector<16x384xf32> -> vector<16x384xf32>
    %c0_13 = arith.constant 0 : index
    %c0_14 = arith.constant 0 : index
    %14 = vector.load %arg5[%c0_13, %c0_14] : memref<1x384xf32, #tpu.memory_space<vmem>>, vector<1x384xf32>
    %15 = vector.broadcast %14 : vector<1x384xf32> to vector<16x384xf32>
    %16 = arith.addf %13, %15 : vector<16x384xf32>
    %c0_15 = arith.constant 0 : index
    %c0_16 = arith.constant 0 : index
    %17 = vector.load %arg6[%c0_15, %c0_16] : memref<16x384xf32, #tpu.memory_space<vmem>>, vector<16x384xf32>
    tpu.vector_store %arg6[%c0_15, %c0_16], %16 {strides = array<i32>} : memref<16x384xf32, #tpu.memory_space<vmem>>, vector<16x384xf32>,
    return
  }
  func.func @transform_0(%arg0: i32) -> (i32, i32) {
    %c0_i32 = arith.constant 0 : i32
    %c0_i32_0 = arith.constant 0 : i32
    return %arg0, %c0_i32 : i32, i32
  }
  func.func @transform_1(%arg0: i32) -> (i32, i32) {
    %c0_i32 = arith.constant 0 : i32
    %c0_i32_0 = arith.constant 0 : i32
    %c0_i32_1 = arith.constant 0 : i32
    return %c0_i32, %c0_i32_0 : i32, i32
  }
  func.func @transform_2(%arg0: i32) -> (i32, i32) {
    %c0_i32 = arith.constant 0 : i32
    %c0_i32_0 = arith.constant 0 : i32
    %c0_i32_1 = arith.constant 0 : i32
    return %c0_i32, %c0_i32_0 : i32, i32
  }
  func.func @transform_3(%arg0: i32) -> (i32, i32) {
    %c0_i32 = arith.constant 0 : i32
    %c0_i32_0 = arith.constant 0 : i32
    %c0_i32_1 = arith.constant 0 : i32
    return %c0_i32, %c0_i32_0 : i32, i32
  }
  func.func @transform_4(%arg0: i32) -> (i32, i32) {
    %c0_i32 = arith.constant 0 : i32
    %c0_i32_0 = arith.constant 0 : i32
    %c0_i32_1 = arith.constant 0 : i32
    return %c0_i32, %c0_i32_0 : i32, i32
  }
  func.func @transform_5(%arg0: i32) -> (i32, i32) {
    %c0_i32 = arith.constant 0 : i32
    %c0_i32_0 = arith.constant 0 : i32
    return %arg0, %c0_i32 : i32, i32
  }
}

</mosaic_0001>

<llo_original>
// kernel: tpu_custom_call.1
$region0: #{tpu_custom_call.1}
  #allocation0 [shape = 'u32[]', space=smem, size = 0x4, offset = 0x4, fixed_abs, tag = 'smem constant byte address 0x4 - core index']
  #allocation1 [shape = 'u32[72,128]{1,0:T(1,128)}', space=vmem, size = 0x9000, scoped, tag = 'internal scratch']
  #allocation2 [shape = 'bf16[16,1536]{1,0:T(8,128)(2,1)}', space=vmem, size = 0xc000, scoped, tag = 'scratch operand']
  %s0 = inlined_call_operand.hbm [shape: f32[16,384], index: 0, kind: input, shape index: {}]
  %s1 = inlined_call_operand.hbm [shape: bf16[384,1536], index: 1, kind: input, shape index: {}]
  %s2 = inlined_call_operand.hbm [shape: f32[1,1536], index: 2, kind: input, shape index: {}]
  %s3 = inlined_call_operand.hbm [shape: bf16[1536,384], index: 3, kind: input, shape index: {}]
  %s4 = inlined_call_operand.hbm [shape: f32[1,384], index: 4, kind: input, shape index: {}]
  %s5 = inlined_call_operand.hbm [shape: f32[16,384], index: 5, kind: output, shape index: {}]
  %s6 = sld [smem:[#allocation0]]
  $region50: #{tpu_custom_call.1} parent=0
    _
  %s8 = ssub.s32 1, %s6
  %s9 = scalar_select 0, %s8, %s6
  $region1: #{tpu_custom_call.1} parent=0
    #allocation3 [shape = 'u8[24576]{0}', space=vmem, size = 0x6000, scoped, tag = 'input window, operand 0, single buffered']
    #allocation4 [shape = 's32[1]{0}', space=sflag, size = 0x4, scoped, tag = 'scoped memory for tpu_custom_call.1']
    #allocation5 [shape = 's32[1]{0}', space=sflag, size = 0x4, scoped, tag = 'scoped memory for tpu_custom_call.1']
    #allocation6 [shape = 'u8[1179648]{0}', space=vmem, size = 0x120000, scoped, tag = 'input window, operand 1, single buffered']
    #allocation7 [shape = 's32[1]{0}', space=sflag, size = 0x4, scoped, tag = 'scoped memory for tpu_custom_call.1']
    #allocation8 [shape = 'u8[6144]{0}', space=vmem, size = 0x1800, scoped, tag = 'input window, operand 2, single buffered']
    #allocation9 [shape = 'u8[1179648]{0}', space=vmem, size = 0x120000, scoped, tag = 'input window, operand 3, single buffered']
    #allocation10 [shape = 's32[1]{0}', space=sflag, size = 0x4, scoped, tag = 'scoped memory for tpu_custom_call.1']
    #allocation11 [shape = 'u8[1536]{0}', space=vmem, size = 0x800, scoped, tag = 'input window, operand 4, single buffered']
    #allocation12 [shape = 'u8[24576]{0}', space=vmem, size = 0x6000, scoped, tag = 'output window, operand 0, single buffered']
    %10 = vsyncpa [#allocation4], 0
    %11 = vsyncpa [#allocation7], 0
    %12 = vsyncpa [#allocation10], 0
    %13 = vsyncpa [#allocation5], 0
    // Predicated region
    $region2: #{tpu_custom_call.1} parent=1 // pred_check
      _
    $region3: #{tpu_custom_call.1} parent=1 // pred_check_branch
      %15 = sbr.rel (0) target = $region5
    $region4: #{tpu_custom_call.1} parent=1 // pred_region
      %17 = vsyncadd [#allocation4], 0
      %s18 = sshll.u32 %s0, 4
      %s19 = int_to_ptr.hbm [resolvable:$true] %s18
      %s20 = sshll.u32 [#allocation3], 4
      %s21 = int_to_ptr.vmem [resolvable:$true] %s20
      %26 = dma.hbm_to_vmem [thread:$0]  %s19, 768, %s21, [#allocation4], 384, 384, 24
    $region5: #{tpu_custom_call.1} parent=1 // pred_fallthru
      _
    // Predicated region
    $region6: #{tpu_custom_call.1} parent=1 // pred_check
      _
    $region7: #{tpu_custom_call.1} parent=1 // pred_check_branch
      %28 = sbr.rel (0) target = $region9
    $region8: #{tpu_custom_call.1} parent=1 // pred_region
      %30 = vsyncadd [#allocation7], 0
      %s31 = sshll.u32 %s1, 4
      %s32 = int_to_ptr.hbm [resolvable:$true] %s31
      %s33 = sshll.u32 [#allocation6], 4
      %s34 = int_to_ptr.vmem [resolvable:$true] %s33
      %39 = dma.hbm_to_vmem [thread:$0]  %s32, 36864, %s34, [#allocation7], 768, 768, 48
    $region9: #{tpu_custom_call.1} parent=1 // pred_fallthru
      _
    // Predicated region
    $region10: #{tpu_custom_call.1} parent=1 // pred_check
      _
    $region11: #{tpu_custom_call.1} parent=1 // pred_check_branch
      %41 = sbr.rel (0) target = $region13
    $region12: #{tpu_custom_call.1} parent=1 // pred_region
      %43 = vsyncadd [#allocation7], 0
      %s45 = sshll.u32 %s2, 4
      %s46 = int_to_ptr.hbm [resolvable:$true] %s45
      %s47 = sshll.u32 [#allocation8], 4
      %s48 = int_to_ptr.vmem [resolvable:$true] %s47
      %50 = dma.hbm_to_vmem [thread:$0]  %s46, 192, %s48, [#allocation7]
    $region13: #{tpu_custom_call.1} parent=1 // pred_fallthru
      _
    // Predicated region
    $region14: #{tpu_custom_call.1} parent=1 // pred_check
      _
    $region15: #{tpu_custom_call.1} parent=1 // pred_check_branch
      %52 = sbr.rel (0) target = $region17
    $region16: #{tpu_custom_call.1} parent=1 // pred_region
      %54 = vsyncadd [#allocation10], 0
      %s55 = sshll.u32 %s3, 4
      %s56 = int_to_ptr.hbm [resolvable:$true] %s55
      %s57 = sshll.u32 [#allocation9], 4
      %s58 = int_to_ptr.vmem [resolvable:$true] %s57
      %63 = dma.hbm_to_vmem [thread:$0]  %s56, 36864, %s58, [#allocation10], 192, 192, 12
    $region17: #{tpu_custom_call.1} parent=1 // pred_fallthru
      _
    // Predicated region
    $region18: #{tpu_custom_call.1} parent=1 // pred_check
      _
    $region19: #{tpu_custom_call.1} parent=1 // pred_check_branch
      %65 = sbr.rel (0) target = $region21
    $region20: #{tpu_custom_call.1} parent=1 // pred_region
      %67 = vsyncadd [#allocation10], 0
      %s69 = sshll.u32 %s4, 4
      %s70 = int_to_ptr.hbm [resolvable:$true] %s69
      %s71 = sshll.u32 [#allocation11], 4
      %s72 = int_to_ptr.vmem [resolvable:$true] %s71
      %74 = dma.hbm_to_vmem [thread:$0]  %s70, 48, %s72, [#allocation10]
    $region21: #{tpu_custom_call.1} parent=1 // pred_fallthru
      _
    // Predicated region
    $region22: #{tpu_custom_call.1} parent=1 // pred_check
      _
    $region23: #{tpu_custom_call.1} parent=1 // pred_check_branch
      %76 = sbr.rel (0) target = $region25
    $region24: #{tpu_custom_call.1} parent=1 // pred_region
      %78 = dma.done [#allocation4], 768
    $region25: #{tpu_custom_call.1} parent=1 // pred_fallthru
      _
    // Predicated region
    $region26: #{tpu_custom_call.1} parent=1 // pred_check
      _
    $region27: #{tpu_custom_call.1} parent=1 // pred_check_branch
      %80 = sbr.rel (0) target = $region29
    $region28: #{tpu_custom_call.1} parent=1 // pred_region
      %82 = dma.done [#allocation7], 36864
    $region29: #{tpu_custom_call.1} parent=1 // pred_fallthru
      _
    // Predicated region
    $region30: #{tpu_custom_call.1} parent=1 // pred_check
      _
    $region31: #{tpu_custom_call.1} parent=1 // pred_check_branch
      %84 = sbr.rel (0) target = $region33
    $region32: #{tpu_custom_call.1} parent=1 // pred_region
      %86 = dma.done [#allocation7], 192
    $region33: #{tpu_custom_call.1} parent=1 // pred_fallthru
      _
    // Predicated region
    $region34: #{tpu_custom_call.1} parent=1 // pred_check
      _
    $region35: #{tpu_custom_call.1} parent=1 // pred_check_branch
      %88 = sbr.rel (0) target = $region37
    $region36: #{tpu_custom_call.1} parent=1 // pred_region
      %90 = dma.done [#allocation10], 36864
    $region37: #{tpu_custom_call.1} parent=1 // pred_fallthru
      _
    // Predicated region
    $region38: #{tpu_custom_call.1} parent=1 // pred_check
      _
    $region39: #{tpu_custom_call.1} parent=1 // pred_check_branch
      %92 = sbr.rel (0) target = $region41
    $region40: #{tpu_custom_call.1} parent=1 // pred_region
      %94 = dma.done [#allocation10], 48
    $region41: #{tpu_custom_call.1} parent=1 // pred_fallthru
      _
    %v95 = vld [vmem:[#allocation3] sm:$0xff]
    %v96 = vld [vmem:[#allocation3 + $0x8] sm:$0xff]
    %v97 = vld [vmem:[#allocation3 + $0x10] sm:$0xff]
    %v98 = vld [vmem:[#allocation3 + $0x18] sm:$0xff]
    %v99 = vld [vmem:[#allocation3 + $0x20] sm:$0xff]
    %v100 = vld [vmem:[#allocation3 + $0x28] sm:$0xff]
    %v101 = vpack.c.bf16 %v98, %v95
    %v102 = vpack.c.bf16 %v99, %v96
    %v103 = vpack.c.bf16 %v100, %v97
    %v104 = vld [vmem:[#allocation6] sm:$0xff]
    %v105 = vld [vmem:[#allocation6 + $0x8] sm:$0xff]
    %v106 = vld [vmem:[#allocation6 + $0x10] sm:$0xff]
    %v107 = vld [vmem:[#allocation6 + $0x18] sm:$0xff]
    %v108 = vld [vmem:[#allocation6 + $0x20] sm:$0xff]
    %v109 = vld [vmem:[#allocation6 + $0x28] sm:$0xff]
    %v110 = vld [vmem:[#allocation6 + $0x30] sm:$0xff]
    %v111 = vld [vmem:[#allocation6 + $0x38] sm:$0xff]
    %v112 = vld [vmem:[#allocation6 + $0x40] sm:$0xff]
    %v113 = vld [vmem:[#allocation6 + $0x48] sm:$0xff]
    %v114 = vld [vmem:[#allocation6 + $0x50] sm:$0xff]
    %v115 = vld [vmem:[#allocation6 + $0x58] sm:$0xff]
    %v116 = vld [vmem:[#allocation6 + $0x60] sm:$0xff]
    %v117 = vld [vmem:[#allocation6 + $0x68] sm:$0xff]
    %v118 = vld [vmem:[#allocation6 + $0x70] sm:$0xff]
    %v119 = vld [vmem:[#allocation6 + $0x78] sm:$0xff]
    %v120 = vld [vmem:[#allocation6 + $0x80] sm:$0xff]
    %v121 = vld [vmem:[#allocation6 + $0x88] sm:$0xff]
    %v122 = vld [vmem:[#allocation6 + $0x90] sm:$0xff]
    %v123 = vld [vmem:[#allocation6 + $0x98] sm:$0xff]
    %v124 = vld [vmem:[#allocation6 + $0xa0] sm:$0xff]
    %v125 = vld [vmem:[#allocation6 + $0xa8] sm:$0xff]
    %v126 = vld [vmem:[#allocation6 + $0xb0] sm:$0xff]
    %v127 = vld [vmem:[#allocation6 + $0xb8] sm:$0xff]
    %v128 = vld [vmem:[#allocation6 + $0xc0] sm:$0xff]
    %v129 = vld [vmem:[#allocation6 + $0xc8] sm:$0xff]
    %v130 = vld [vmem:[#allocation6 + $0xd0] sm:$0xff]
    %v131 = vld [vmem:[#allocation6 + $0xd8] sm:$0xff]
    %v132 = vld [vmem:[#allocation6 + $0xe0] sm:$0xff]
    %v133 = vld [vmem:[#allocation6 + $0xe8] sm:$0xff]
    %v134 = vld [vmem:[#allocation6 + $0xf0] sm:$0xff]
    %v135 = vld [vmem:[#allocation6 + $0xf8] sm:$0xff]
    %v136 = vld [vmem:[#allocation6 + $0x100] sm:$0xff]
    %v137 = vld [vmem:[#allocation6 + $0x108] sm:$0xff]
    %v138 = vld [vmem:[#allocation6 + $0x110] sm:$0xff]
    %v139 = vld [vmem:[#allocation6 + $0x118] sm:$0xff]
    %v140 = vld [vmem:[#allocation6 + $0x120] sm:$0xff]
    %v141 = vld [vmem:[#allocation6 + $0x128] sm:$0xff]
    %v142 = vld [vmem:[#allocation6 + $0x130] sm:$0xff]
    %v143 = vld [vmem:[#allocation6 + $0x138] sm:$0xff]
    %v144 = vld [vmem:[#allocation6 + $0x140] sm:$0xff]
    %v145 = vld [vmem:[#allocation6 + $0x148] sm:$0xff]
    %v146 = vld [vmem:[#allocation6 + $0x150] sm:$0xff]
    %v147 = vld [vmem:[#allocation6 + $0x158] sm:$0xff]
    %v148 = vld [vmem:[#allocation6 + $0x160] sm:$0xff]
    %v149 = vld [vmem:[#allocation6 + $0x168] sm:$0xff]
    %v150 = vld [vmem:[#allocation6 + $0x170] sm:$0xff]
    %v151 = vld [vmem:[#allocation6 + $0x178] sm:$0xff]
    %v152 = vld [vmem:[#allocation6 + $0x180] sm:$0xff]
    %v153 = vld [vmem:[#allocation6 + $0x188] sm:$0xff]
    %v154 = vld [vmem:[#allocation6 + $0x190] sm:$0xff]
    %v155 = vld [vmem:[#allocation6 + $0x198] sm:$0xff]
    %v156 = vld [vmem:[#allocation6 + $0x1a0] sm:$0xff]
    %v157 = vld [vmem:[#allocation6 + $0x1a8] sm:$0xff]
    %v158 = vld [vmem:[#allocation6 + $0x1b0] sm:$0xff]
    %v159 = vld [vmem:[#allocation6 + $0x1b8] sm:$0xff]
    %v160 = vld [vmem:[#allocation6 + $0x1c0] sm:$0xff]
    %v161 = vld [vmem:[#allocation6 + $0x1c8] sm:$0xff]
    %v162 = vld [vmem:[#allocation6 + $0x1d0] sm:$0xff]
    %v163 = vld [vmem:[#allocation6 + $0x1d8] sm:$0xff]
    %v164 = vld [vmem:[#allocation6 + $0x1e0] sm:$0xff]
    %v165 = vld [vmem:[#allocation6 + $0x1e8] sm:$0xff]
    %v166 = vld [vmem:[#allocation6 + $0x1f0] sm:$0xff]
    %v167 = vld [vmem:[#allocation6 + $0x1f8] sm:$0xff]
    %v168 = vld [vmem:[#allocation6 + $0x200] sm:$0xff]
    %v169 = vld [vmem:[#allocation6 + $0x208] sm:$0xff]
    %v170 = vld [vmem:[#allocation6 + $0x210] sm:$0xff]
    %v171 = vld [vmem:[#allocation6 + $0x218] sm:$0xff]
    %v172 = vld [vmem:[#allocation6 + $0x220] sm:$0xff]
    %v173 = vld [vmem:[#allocation6 + $0x228] sm:$0xff]
    %v174 = vld [vmem:[#allocation6 + $0x230] sm:$0xff]
    %v175 = vld [vmem:[#allocation6 + $0x238] sm:$0xff]
    %v176 = vld [vmem:[#allocation6 + $0x240] sm:$0xff]
    %v177 = vld [vmem:[#allocation6 + $0x248] sm:$0xff]
    %v178 = vld [vmem:[#allocation6 + $0x250] sm:$0xff]
    %v179 = vld [vmem:[#allocation6 + $0x258] sm:$0xff]
    %v180 = vld [vmem:[#allocation6 + $0x260] sm:$0xff]
    %v181 = vld [vmem:[#allocation6 + $0x268] sm:$0xff]
    %v182 = vld [vmem:[#allocation6 + $0x270] sm:$0xff]
    %v183 = vld [vmem:[#allocation6 + $0x278] sm:$0xff]
    %v184 = vld [vmem:[#allocation6 + $0x280] sm:$0xff]
    %v185 = vld [vmem:[#allocation6 + $0x288] sm:$0xff]
    %v186 = vld [vmem:[#allocation6 + $0x290] sm:$0xff]
    %v187 = vld [vmem:[#allocation6 + $0x298] sm:$0xff]
    %v188 = vld [vmem:[#allocation6 + $0x2a0] sm:$0xff]
    %v189 = vld [vmem:[#allocation6 + $0x2a8] sm:$0xff]
    %v190 = vld [vmem:[#allocation6 + $0x2b0] sm:$0xff]
    %v191 = vld [vmem:[#allocation6 + $0x2b8] sm:$0xff]
    %v192 = vld [vmem:[#allocation6 + $0x2c0] sm:$0xff]
    %v193 = vld [vmem:[#allocation6 + $0x2c8] sm:$0xff]
    %v194 = vld [vmem:[#allocation6 + $0x2d0] sm:$0xff]
    %v195 = vld [vmem:[#allocation6 + $0x2d8] sm:$0xff]
    %v196 = vld [vmem:[#allocation6 + $0x2e0] sm:$0xff]
    %v197 = vld [vmem:[#allocation6 + $0x2e8] sm:$0xff]
    %v198 = vld [vmem:[#allocation6 + $0x2f0] sm:$0xff]
    %v199 = vld [vmem:[#allocation6 + $0x2f8] sm:$0xff]
    %v200 = vld [vmem:[#allocation6 + $0x300] sm:$0xff]
    %v201 = vld [vmem:[#allocation6 + $0x308] sm:$0xff]
    %v202 = vld [vmem:[#allocation6 + $0x310] sm:$0xff]
    %v203 = vld [vmem:[#allocation6 + $0x318] sm:$0xff]
    %v204 = vld [vmem:[#allocation6 + $0x320] sm:$0xff]
    %v205 = vld [vmem:[#allocation6 + $0x328] sm:$0xff]
    %v206 = vld [vmem:[#allocation6 + $0x330] sm:$0xff]
    %v207 = vld [vmem:[#allocation6 + $0x338] sm:$0xff]
    %v208 = vld [vmem:[#allocation6 + $0x340] sm:$0xff]
    %v209 = vld [vmem:[#allocation6 + $0x348] sm:$0xff]
    %v210 = vld [vmem:[#allocation6 + $0x350] sm:$0xff]
    %v211 = vld [vmem:[#allocation6 + $0x358] sm:$0xff]
    %v212 = vld [vmem:[#allocation6 + $0x360] sm:$0xff]
    %v213 = vld [vmem:[#allocation6 + $0x368] sm:$0xff]
    %v214 = vld [vmem:[#allocation6 + $0x370] sm:$0xff]
    %v215 = vld [vmem:[#allocation6 + $0x378] sm:$0xff]
    %v216 = vld [vmem:[#allocation6 + $0x380] sm:$0xff]
    %v217 = vld [vmem:[#allocation6 + $0x388] sm:$0xff]
    %v218 = vld [vmem:[#allocation6 + $0x390] sm:$0xff]
    %v219 = vld [vmem:[#allocation6 + $0x398] sm:$0xff]
    %v220 = vld [vmem:[#allocation6 + $0x3a0] sm:$0xff]
    %v221 = vld [vmem:[#allocation6 + $0x3a8] sm:$0xff]
    %v222 = vld [vmem:[#allocation6 + $0x3b0] sm:$0xff]
    %v223 = vld [vmem:[#allocation6 + $0x3b8] sm:$0xff]
    %v224 = vld [vmem:[#allocation6 + $0x3c0] sm:$0xff]
    %v225 = vld [vmem:[#allocation6 + $0x3c8] sm:$0xff]
    %v226 = vld [vmem:[#allocation6 + $0x3d0] sm:$0xff]
    %v227 = vld [vmem:[#allocation6 + $0x3d8] sm:$0xff]
    %v228 = vld [vmem:[#allocation6 + $0x3e0] sm:$0xff]
    %v229 = vld [vmem:[#allocation6 + $0x3e8] sm:$0xff]
    %v230 = vld [vmem:[#allocation6 + $0x3f0] sm:$0xff]
    %v231 = vld [vmem:[#allocation6 + $0x3f8] sm:$0xff]
    %v232 = vld [vmem:[#allocation6 + $0x400] sm:$0xff]
    %v233 = vld [vmem:[#allocation6 + $0x408] sm:$0xff]
    %v234 = vld [vmem:[#allocation6 + $0x410] sm:$0xff]
    %v235 = vld [vmem:[#allocation6 + $0x418] sm:$0xff]
    %v236 = vld [vmem:[#allocation6 + $0x420] sm:$0xff]
    %v237 = vld [vmem:[#allocation6 + $0x428] sm:$0xff]
    %v238 = vld [vmem:[#allocation6 + $0x430] sm:$0xff]
    %v239 = vld [vmem:[#allocation6 + $0x438] sm:$0xff]
    %v240 = vld [vmem:[#allocation6 + $0x440] sm:$0xff]
    %v241 = vld [vmem:[#allocation6 + $0x448] sm:$0xff]
    %v242 = vld [vmem:[#allocation6 + $0x450] sm:$0xff]
    %v243 = vld [vmem:[#allocation6 + $0x458] sm:$0xff]
    %v244 = vld [vmem:[#allocation6 + $0x460] sm:$0xff]
    %v245 = vld [vmem:[#allocation6 + $0x468] sm:$0xff]
    %v246 = vld [vmem:[#allocation6 + $0x470] sm:$0xff]
    %v247 = vld [vmem:[#allocation6 + $0x478] sm:$0xff]
    %v248 = vld [vmem:[#allocation6 + $0x480] sm:$0xff]
    %v249 = vld [vmem:[#allocation6 + $0x488] sm:$0xff]
    %v250 = vld [vmem:[#allocation6 + $0x490] sm:$0xff]
    %v251 = vld [vmem:[#allocation6 + $0x498] sm:$0xff]
    %v252 = vld [vmem:[#allocation6 + $0x4a0] sm:$0xff]
    %v253 = vld [vmem:[#allocation6 + $0x4a8] sm:$0xff]
    %v254 = vld [vmem:[#allocation6 + $0x4b0] sm:$0xff]
    %v255 = vld [vmem:[#allocation6 + $0x4b8] sm:$0xff]
    %v256 = vld [vmem:[#allocation6 + $0x4c0] sm:$0xff]
    %v257 = vld [vmem:[#allocation6 + $0x4c8] sm:$0xff]
    %v258 = vld [vmem:[#allocation6 + $0x4d0] sm:$0xff]
    %v259 = vld [vmem:[#allocation6 + $0x4d8] sm:$0xff]
    %v260 = vld [vmem:[#allocation6 + $0x4e0] sm:$0xff]
    %v261 = vld [vmem:[#allocation6 + $0x4e8] sm:$0xff]
    %v262 = vld [vmem:[#allocation6 + $0x4f0] sm:$0xff]
    %v263 = vld [vmem:[#allocation6 + $0x4f8] sm:$0xff]
    %v264 = vld [vmem:[#allocation6 + $0x500] sm:$0xff]
    %v265 = vld [vmem:[#allocation6 + $0x508] sm:$0xff]
    %v266 = vld [vmem:[#allocation6 + $0x510] sm:$0xff]
    %v267 = vld [vmem:[#allocation6 + $0x518] sm:$0xff]
    %v268 = vld [vmem:[#allocation6 + $0x520] sm:$0xff]
    %v269 = vld [vmem:[#allocation6 + $0x528] sm:$0xff]
    %v270 = vld [vmem:[#allocation6 + $0x530] sm:$0xff]
    %v271 = vld [vmem:[#allocation6 + $0x538] sm:$0xff]
    %v272 = vld [vmem:[#allocation6 + $0x540] sm:$0xff]
    %v273 = vld [vmem:[#allocation6 + $0x548] sm:$0xff]
    %v274 = vld [vmem:[#allocation6 + $0x550] sm:$0xff]
    %v275 = vld [vmem:[#allocation6 + $0x558] sm:$0xff]
    %v276 = vld [vmem:[#allocation6 + $0x560] sm:$0xff]
    %v277 = vld [vmem:[#allocation6 + $0x568] sm:$0xff]
    %v278 = vld [vmem:[#allocation6 + $0x570] sm:$0xff]
    %v279 = vld [vmem:[#allocation6 + $0x578] sm:$0xff]
    %v280 = vld [vmem:[#allocation6 + $0x580] sm:$0xff]
    %v281 = vld [vmem:[#allocation6 + $0x588] sm:$0xff]
    %v282 = vld [vmem:[#allocation6 + $0x590] sm:$0xff]
    %v283 = vld [vmem:[#allocation6 + $0x598] sm:$0xff]
    %v284 = vld [vmem:[#allocation6 + $0x5a0] sm:$0xff]
    %v285 = vld [vmem:[#allocation6 + $0x5a8] sm:$0xff]
    %v286 = vld [vmem:[#allocation6 + $0x5b0] sm:$0xff]
    %v287 = vld [vmem:[#allocation6 + $0x5b8] sm:$0xff]
    %v288 = vld [vmem:[#allocation6 + $0x5c0] sm:$0xff]
    %v289 = vld [vmem:[#allocation6 + $0x5c8] sm:$0xff]
    %v290 = vld [vmem:[#allocation6 + $0x5d0] sm:$0xff]
    %v291 = vld [vmem:[#allocation6 + $0x5d8] sm:$0xff]
    %v292 = vld [vmem:[#allocation6 + $0x5e0] sm:$0xff]
    %v293 = vld [vmem:[#allocation6 + $0x5e8] sm:$0xff]
    %v294 = vld [vmem:[#allocation6 + $0x5f0] sm:$0xff]
    %v295 = vld [vmem:[#allocation6 + $0x5f8] sm:$0xff]
    %v296 = vld [vmem:[#allocation6 + $0x600] sm:$0xff]
    %v297 = vld [vmem:[#allocation6 + $0x608] sm:$0xff]
    %v298 = vld [vmem:[#allocation6 + $0x610] sm:$0xff]
    %v299 = vld [vmem:[#allocation6 + $0x618] sm:$0xff]
    %v300 = vld [vmem:[#allocation6 + $0x620] sm:$0xff]
    %v301 = vld [vmem:[#allocation6 + $0x628] sm:$0xff]
    %v302 = vld [vmem:[#allocation6 + $0x630] sm:$0xff]
    %v303 = vld [vmem:[#allocation6 + $0x638] sm:$0xff]
    %v304 = vld [vmem:[#allocation6 + $0x640] sm:$0xff]
    %v305 = vld [vmem:[#allocation6 + $0x648] sm:$0xff]
    %v306 = vld [vmem:[#allocation6 + $0x650] sm:$0xff]
    %v307 = vld [vmem:[#allocation6 + $0x658] sm:$0xff]
    %v308 = vld [vmem:[#allocation6 + $0x660] sm:$0xff]
    %v309 = vld [vmem:[#allocation6 + $0x668] sm:$0xff]
    %v310 = vld [vmem:[#allocation6 + $0x670] sm:$0xff]
    %v311 = vld [vmem:[#allocation6 + $0x678] sm:$0xff]
    %v312 = vld [vmem:[#allocation6 + $0x680] sm:$0xff]
    %v313 = vld [vmem:[#allocation6 + $0x688] sm:$0xff]
    %v314 = vld [vmem:[#allocation6 + $0x690] sm:$0xff]
    %v315 = vld [vmem:[#allocation6 + $0x698] sm:$0xff]
    %v316 = vld [vmem:[#allocation6 + $0x6a0] sm:$0xff]
    %v317 = vld [vmem:[#allocation6 + $0x6a8] sm:$0xff]
    %v318 = vld [vmem:[#allocation6 + $0x6b0] sm:$0xff]
    %v319 = vld [vmem:[#allocation6 + $0x6b8] sm:$0xff]
    %v320 = vld [vmem:[#allocation6 + $0x6c0] sm:$0xff]
    %v321 = vld [vmem:[#allocation6 + $0x6c8] sm:$0xff]
    %v322 = vld [vmem:[#allocation6 + $0x6d0] sm:$0xff]
    %v323 = vld [vmem:[#allocation6 + $0x6d8] sm:$0xff]
    %v324 = vld [vmem:[#allocation6 + $0x6e0] sm:$0xff]
    %v325 = vld [vmem:[#allocation6 + $0x6e8] sm:$0xff]
    %v326 = vld [vmem:[#allocation6 + $0x6f0] sm:$0xff]
    %v327 = vld [vmem:[#allocation6 + $0x6f8] sm:$0xff]
    %v328 = vld [vmem:[#allocation6 + $0x700] sm:$0xff]
    %v329 = vld [vmem:[#allocation6 + $0x708] sm:$0xff]
    %v330 = vld [vmem:[#allocation6 + $0x710] sm:$0xff]
    %v331 = vld [vmem:[#allocation6 + $0x718] sm:$0xff]
    %v332 = vld [vmem:[#allocation6 + $0x720] sm:$0xff]
    %v333 = vld [vmem:[#allocation6 + $0x728] sm:$0xff]
    %v334 = vld [vmem:[#allocation6 + $0x730] sm:$0xff]
    %v335 = vld [vmem:[#allocation6 + $0x738] sm:$0xff]
    %v336 = vld [vmem:[#allocation6 + $0x740] sm:$0xff]
    %v337 = vld [vmem:[#allocation6 + $0x748] sm:$0xff]
    %v338 = vld [vmem:[#allocation6 + $0x750] sm:$0xff]
    %v339 = vld [vmem:[#allocation6 + $0x758] sm:$0xff]
    %v340 = vld [vmem:[#allocation6 + $0x760] sm:$0xff]
    %v341 = vld [vmem:[#allocation6 + $0x768] sm:$0xff]
    %v342 = vld [vmem:[#allocation6 + $0x770] sm:$0xff]
    %v343 = vld [vmem:[#allocation6 + $0x778] sm:$0xff]
    %v344 = vld [vmem:[#allocation6 + $0x780] sm:$0xff]
    %v345 = vld [vmem:[#allocation6 + $0x788] sm:$0xff]
    %v346 = vld [vmem:[#allocation6 + $0x790] sm:$0xff]
    %v347 = vld [vmem:[#allocation6 + $0x798] sm:$0xff]
    %v348 = vld [vmem:[#allocation6 + $0x7a0] sm:$0xff]
    %v349 = vld [vmem:[#allocation6 + $0x7a8] sm:$0xff]
    %v350 = vld [vmem:[#allocation6 + $0x7b0] sm:$0xff]
    %v351 = vld [vmem:[#allocation6 + $0x7b8] sm:$0xff]
    %v352 = vld [vmem:[#allocation6 + $0x7c0] sm:$0xff]
    %v353 = vld [vmem:[#allocation6 + $0x7c8] sm:$0xff]
    %v354 = vld [vmem:[#allocation6 + $0x7d0] sm:$0xff]
    %v355 = vld [vmem:[#allocation6 + $0x7d8] sm:$0xff]
    %v356 = vld [vmem:[#allocation6 + $0x7e0] sm:$0xff]
    %v357 = vld [vmem:[#allocation6 + $0x7e8] sm:$0xff]
    %v358 = vld [vmem:[#allocation6 + $0x7f0] sm:$0xff]
    %v359 = vld [vmem:[#allocation6 + $0x7f8] sm:$0xff]
    %v360 = vld [vmem:[#allocation6 + $0x800] sm:$0xff]
    %v361 = vld [vmem:[#allocation6 + $0x808] sm:$0xff]
    %v362 = vld [vmem:[#allocation6 + $0x810] sm:$0xff]
    %v363 = vld [vmem:[#allocation6 + $0x818] sm:$0xff]
    %v364 = vld [vmem:[#allocation6 + $0x820] sm:$0xff]
    %v365 = vld [vmem:[#allocation6 + $0x828] sm:$0xff]
    %v366 = vld [vmem:[#allocation6 + $0x830] sm:$0xff]
    %v367 = vld [vmem:[#allocation6 + $0x838] sm:$0xff]
    %v368 = vld [vmem:[#allocation6 + $0x840] sm:$0xff]
    %v369 = vld [vmem:[#allocation6 + $0x848] sm:$0xff]
    %v370 = vld [vmem:[#allocation6 + $0x850] sm:$0xff]
    %v371 = vld [vmem:[#allocation6 + $0x858] sm:$0xff]
    %v372 = vld [vmem:[#allocation6 + $0x860] sm:$0xff]
    %v373 = vld [vmem:[#allocation6 + $0x868] sm:$0xff]
    %v374 = vld [vmem:[#allocation6 + $0x870] sm:$0xff]
    %v375 = vld [vmem:[#allocation6 + $0x878] sm:$0xff]
    %v376 = vld [vmem:[#allocation6 + $0x880] sm:$0xff]
    %v377 = vld [vmem:[#allocation6 + $0x888] sm:$0xff]
    %v378 = vld [vmem:[#allocation6 + $0x890] sm:$0xff]
    %v379 = vld [vmem:[#allocation6 + $0x898] sm:$0xff]
    %v380 = vld [vmem:[#allocation6 + $0x8a0] sm:$0xff]
    %v381 = vld [vmem:[#allocation6 + $0x8a8] sm:$0xff]
    %v382 = vld [vmem:[#allocation6 + $0x8b0] sm:$0xff]
    %v383 = vld [vmem:[#allocation6 + $0x8b8] sm:$0xff]
    %v384 = vld [vmem:[#allocation6 + $0x8c0] sm:$0xff]
    %v385 = vld [vmem:[#allocation6 + $0x8c8] sm:$0xff]
    %v386 = vld [vmem:[#allocation6 + $0x8d0] sm:$0xff]
    %v387 = vld [vmem:[#allocation6 + $0x8d8] sm:$0xff]
    %v388 = vld [vmem:[#allocation6 + $0x8e0] sm:$0xff]
    %v389 = vld [vmem:[#allocation6 + $0x8e8] sm:$0xff]
    %v390 = vld [vmem:[#allocation6 + $0x8f0] sm:$0xff]
    %v391 = vld [vmem:[#allocation6 + $0x8f8] sm:$0xff]
    %v392 = vld [vmem:[#allocation8] sm:$0xff]
    %v393 = vld [vmem:[#allocation8 + $0x8] sm:$0xf]
    %v396 = vperm.slane %v392, 0
    %v397 = vperm.slane %v392, 1
    %v398 = vperm.slane %v392, 2
    %v399 = vperm.slane %v392, 3
    %v400 = vperm.slane %v392, 4
    %v401 = vperm.slane %v392, 5
    %v402 = vperm.slane %v392, 6
    %v403 = vperm.slane %v392, 7
    %v404 = vperm.slane %v393, 0
    %v405 = vperm.slane %v393, 1
    %v406 = vperm.slane %v393, 2
    %v407 = vperm.slane %v393, 3
    %v708 = vunpack.c.l.b16 %v104
    %v709 = vunpack.c.h.b16 %v104
    %v710 = vunpack.c.l.b16 %v105
    %v711 = vunpack.c.h.b16 %v105
    %v712 = vunpack.c.l.b16 %v106
    %v713 = vunpack.c.h.b16 %v106
    %v714 = vunpack.c.l.b16 %v107
    %v715 = vunpack.c.h.b16 %v107
    %v716 = vunpack.c.l.b16 %v108
    %v717 = vunpack.c.h.b16 %v108
    %v718 = vunpack.c.l.b16 %v109
    %v719 = vunpack.c.h.b16 %v109
    %v720 = vunpack.c.l.b16 %v110
    %v721 = vunpack.c.h.b16 %v110
    %v722 = vunpack.c.l.b16 %v111
    %v723 = vunpack.c.h.b16 %v111
    %v724 = vunpack.c.l.b16 %v112
    %v725 = vunpack.c.h.b16 %v112
    %v726 = vunpack.c.l.b16 %v113
    %v727 = vunpack.c.h.b16 %v113
    %v728 = vunpack.c.l.b16 %v114
    %v729 = vunpack.c.h.b16 %v114
    %v730 = vunpack.c.l.b16 %v115
    %v731 = vunpack.c.h.b16 %v115
    %v732 = vunpack.c.l.b16 %v116
    %v733 = vunpack.c.h.b16 %v116
    %v734 = vunpack.c.l.b16 %v117
    %v735 = vunpack.c.h.b16 %v117
    %v736 = vunpack.c.l.b16 %v118
    %v737 = vunpack.c.h.b16 %v118
    %v738 = vunpack.c.l.b16 %v119
    %v739 = vunpack.c.h.b16 %v119
    %v740 = vunpack.c.l.b16 %v120
    %v741 = vunpack.c.h.b16 %v120
    %v742 = vunpack.c.l.b16 %v121
    %v743 = vunpack.c.h.b16 %v121
    %v744 = vunpack.c.l.b16 %v122
    %v745 = vunpack.c.h.b16 %v122
    %v746 = vunpack.c.l.b16 %v123
    %v747 = vunpack.c.h.b16 %v123
    %v748 = vunpack.c.l.b16 %v124
    %v749 = vunpack.c.h.b16 %v124
    %v750 = vunpack.c.l.b16 %v125
    %v751 = vunpack.c.h.b16 %v125
    %v752 = vunpack.c.l.b16 %v126
    %v753 = vunpack.c.h.b16 %v126
    %v754 = vunpack.c.l.b16 %v127
    %v755 = vunpack.c.h.b16 %v127
    %v756 = vunpack.c.l.b16 %v128
    %v757 = vunpack.c.h.b16 %v128
    %v758 = vunpack.c.l.b16 %v129
    %v759 = vunpack.c.h.b16 %v129
    %v760 = vunpack.c.l.b16 %v130
    %v761 = vunpack.c.h.b16 %v130
    %v762 = vunpack.c.l.b16 %v131
    %v763 = vunpack.c.h.b16 %v131
    %v764 = vunpack.c.l.b16 %v132
    %v765 = vunpack.c.h.b16 %v132
    %v766 = vunpack.c.l.b16 %v133
    %v767 = vunpack.c.h.b16 %v133
    %v768 = vunpack.c.l.b16 %v134
    %v769 = vunpack.c.h.b16 %v134
    %v770 = vunpack.c.l.b16 %v135
    %v771 = vunpack.c.h.b16 %v135
    %v772 = vunpack.c.l.b16 %v136
    %v773 = vunpack.c.h.b16 %v136
    %v774 = vunpack.c.l.b16 %v137
    %v775 = vunpack.c.h.b16 %v137
    %v776 = vunpack.c.l.b16 %v138
    %v777 = vunpack.c.h.b16 %v138
    %v778 = vunpack.c.l.b16 %v139
    %v779 = vunpack.c.h.b16 %v139
    %v780 = vunpack.c.l.b16 %v140
    %v781 = vunpack.c.h.b16 %v140
    %v782 = vunpack.c.l.b16 %v141
    %v783 = vunpack.c.h.b16 %v141
    %v784 = vunpack.c.l.b16 %v142
    %v785 = vunpack.c.h.b16 %v142
    %v786 = vunpack.c.l.b16 %v143
    %v787 = vunpack.c.h.b16 %v143
    %v788 = vunpack.c.l.b16 %v144
    %v789 = vunpack.c.h.b16 %v144
    %v790 = vunpack.c.l.b16 %v145
    %v791 = vunpack.c.h.b16 %v145
    %v792 = vunpack.c.l.b16 %v146
    %v793 = vunpack.c.h.b16 %v146
    %v794 = vunpack.c.l.b16 %v147
    %v795 = vunpack.c.h.b16 %v147
    %v796 = vunpack.c.l.b16 %v148
    %v797 = vunpack.c.h.b16 %v148
    %v798 = vunpack.c.l.b16 %v149
    %v799 = vunpack.c.h.b16 %v149
    %v800 = vunpack.c.l.b16 %v150
    %v801 = vunpack.c.h.b16 %v150
    %v802 = vunpack.c.l.b16 %v151
    %v803 = vunpack.c.h.b16 %v151
    %v804 = vunpack.c.l.b16 %v152
    %v805 = vunpack.c.h.b16 %v152
    %v806 = vunpack.c.l.b16 %v153
    %v807 = vunpack.c.h.b16 %v153
    %v808 = vunpack.c.l.b16 %v154
    %v809 = vunpack.c.h.b16 %v154
    %v810 = vunpack.c.l.b16 %v155
    %v811 = vunpack.c.h.b16 %v155
    %v812 = vunpack.c.l.b16 %v156
    %v813 = vunpack.c.h.b16 %v156
    %v814 = vunpack.c.l.b16 %v157
    %v815 = vunpack.c.h.b16 %v157
    %v816 = vunpack.c.l.b16 %v158
    %v817 = vunpack.c.h.b16 %v158
    %v818 = vunpack.c.l.b16 %v159
    %v819 = vunpack.c.h.b16 %v159
    %v820 = vunpack.c.l.b16 %v160
    %v821 = vunpack.c.h.b16 %v160
    %v822 = vunpack.c.l.b16 %v161
    %v823 = vunpack.c.h.b16 %v161
    %v824 = vunpack.c.l.b16 %v162
    %v825 = vunpack.c.h.b16 %v162
    %v826 = vunpack.c.l.b16 %v163
    %v827 = vunpack.c.h.b16 %v163
    %v828 = vunpack.c.l.b16 %v164
    %v829 = vunpack.c.h.b16 %v164
    %v830 = vunpack.c.l.b16 %v165
    %v831 = vunpack.c.h.b16 %v165
    %v832 = vunpack.c.l.b16 %v166
    %v833 = vunpack.c.h.b16 %v166
    %v834 = vunpack.c.l.b16 %v167
    %v835 = vunpack.c.h.b16 %v167
    %v836 = vunpack.c.l.b16 %v168
    %v837 = vunpack.c.h.b16 %v168
    %v838 = vunpack.c.l.b16 %v169
    %v839 = vunpack.c.h.b16 %v169
    %v840 = vunpack.c.l.b16 %v170
    %v841 = vunpack.c.h.b16 %v170
    %v842 = vunpack.c.l.b16 %v171
    %v843 = vunpack.c.h.b16 %v171
    %v844 = vunpack.c.l.b16 %v172
    %v845 = vunpack.c.h.b16 %v172
    %v846 = vunpack.c.l.b16 %v173
    %v847 = vunpack.c.h.b16 %v173
    %v848 = vunpack.c.l.b16 %v174
    %v849 = vunpack.c.h.b16 %v174
    %v850 = vunpack.c.l.b16 %v175
    %v851 = vunpack.c.h.b16 %v175
    %v852 = vunpack.c.l.b16 %v176
    %v853 = vunpack.c.h.b16 %v176
    %v854 = vunpack.c.l.b16 %v177
    %v855 = vunpack.c.h.b16 %v177
    %v856 = vunpack.c.l.b16 %v178
    %v857 = vunpack.c.h.b16 %v178
    %v858 = vunpack.c.l.b16 %v179
    %v859 = vunpack.c.h.b16 %v179
    %v860 = vunpack.c.l.b16 %v180
    %v861 = vunpack.c.h.b16 %v180
    %v862 = vunpack.c.l.b16 %v181
    %v863 = vunpack.c.h.b16 %v181
    %v864 = vunpack.c.l.b16 %v182
    %v865 = vunpack.c.h.b16 %v182
    %v866 = vunpack.c.l.b16 %v183
    %v867 = vunpack.c.h.b16 %v183
    %v868 = vunpack.c.l.b16 %v184
    %v869 = vunpack.c.h.b16 %v184
    %v870 = vunpack.c.l.b16 %v185
    %v871 = vunpack.c.h.b16 %v185
    %v872 = vunpack.c.l.b16 %v186
    %v873 = vunpack.c.h.b16 %v186
    %v874 = vunpack.c.l.b16 %v187
    %v875 = vunpack.c.h.b16 %v187
    %v876 = vunpack.c.l.b16 %v188
    %v877 = vunpack.c.h.b16 %v188
    %v878 = vunpack.c.l.b16 %v189
    %v879 = vunpack.c.h.b16 %v189
    %v880 = vunpack.c.l.b16 %v190
    %v881 = vunpack.c.h.b16 %v190
    %v882 = vunpack.c.l.b16 %v191
    %v883 = vunpack.c.h.b16 %v191
    %v884 = vunpack.c.l.b16 %v192
    %v885 = vunpack.c.h.b16 %v192
    %v886 = vunpack.c.l.b16 %v193
    %v887 = vunpack.c.h.b16 %v193
    %v888 = vunpack.c.l.b16 %v194
    %v889 = vunpack.c.h.b16 %v194
    %v890 = vunpack.c.l.b16 %v195
    %v891 = vunpack.c.h.b16 %v195
    %v892 = vunpack.c.l.b16 %v196
    %v893 = vunpack.c.h.b16 %v196
    %v894 = vunpack.c.l.b16 %v197
    %v895 = vunpack.c.h.b16 %v197
    %v896 = vunpack.c.l.b16 %v198
    %v897 = vunpack.c.h.b16 %v198
    %v898 = vunpack.c.l.b16 %v199
    %v899 = vunpack.c.h.b16 %v199
    %v900 = vunpack.c.l.b16 %v200
    %v901 = vunpack.c.h.b16 %v200
    %v902 = vunpack.c.l.b16 %v201
    %v903 = vunpack.c.h.b16 %v201
    %v904 = vunpack.c.l.b16 %v202
    %v905 = vunpack.c.h.b16 %v202
    %v906 = vunpack.c.l.b16 %v203
    %v907 = vunpack.c.h.b16 %v203
    %v908 = vunpack.c.l.b16 %v204
    %v909 = vunpack.c.h.b16 %v204
    %v910 = vunpack.c.l.b16 %v205
    %v911 = vunpack.c.h.b16 %v205
    %v912 = vunpack.c.l.b16 %v206
    %v913 = vunpack.c.h.b16 %v206
    %v914 = vunpack.c.l.b16 %v207
    %v915 = vunpack.c.h.b16 %v207
    %v916 = vunpack.c.l.b16 %v208
    %v917 = vunpack.c.h.b16 %v208
    %v918 = vunpack.c.l.b16 %v209
    %v919 = vunpack.c.h.b16 %v209
    %v920 = vunpack.c.l.b16 %v210
    %v921 = vunpack.c.h.b16 %v210
    %v922 = vunpack.c.l.b16 %v211
    %v923 = vunpack.c.h.b16 %v211
    %v924 = vunpack.c.l.b16 %v212
    %v925 = vunpack.c.h.b16 %v212
    %v926 = vunpack.c.l.b16 %v213
    %v927 = vunpack.c.h.b16 %v213
    %v928 = vunpack.c.l.b16 %v214
    %v929 = vunpack.c.h.b16 %v214
    %v930 = vunpack.c.l.b16 %v215
    %v931 = vunpack.c.h.b16 %v215
    %v932 = vunpack.c.l.b16 %v216
    %v933 = vunpack.c.h.b16 %v216
    %v934 = vunpack.c.l.b16 %v217
    %v935 = vunpack.c.h.b16 %v217
    %v936 = vunpack.c.l.b16 %v218
    %v937 = vunpack.c.h.b16 %v218
    %v938 = vunpack.c.l.b16 %v219
    %v939 = vunpack.c.h.b16 %v219
    %v940 = vunpack.c.l.b16 %v220
    %v941 = vunpack.c.h.b16 %v220
    %v942 = vunpack.c.l.b16 %v221
    %v943 = vunpack.c.h.b16 %v221
    %v944 = vunpack.c.l.b16 %v222
    %v945 = vunpack.c.h.b16 %v222
    %v946 = vunpack.c.l.b16 %v223
    %v947 = vunpack.c.h.b16 %v223
    %v948 = vunpack.c.l.b16 %v224
    %v949 = vunpack.c.h.b16 %v224
    %v950 = vunpack.c.l.b16 %v225
    %v951 = vunpack.c.h.b16 %v225
    %v952 = vunpack.c.l.b16 %v226
    %v953 = vunpack.c.h.b16 %v226
    %v954 = vunpack.c.l.b16 %v227
    %v955 = vunpack.c.h.b16 %v227
    %v956 = vunpack.c.l.b16 %v228
    %v957 = vunpack.c.h.b16 %v228
    %v958 = vunpack.c.l.b16 %v229
    %v959 = vunpack.c.h.b16 %v229
    %v960 = vunpack.c.l.b16 %v230
    %v961 = vunpack.c.h.b16 %v230
    %v962 = vunpack.c.l.b16 %v231
    %v963 = vunpack.c.h.b16 %v231
    %v964 = vunpack.c.l.b16 %v232
    %v965 = vunpack.c.h.b16 %v232
    %v966 = vunpack.c.l.b16 %v233
    %v967 = vunpack.c.h.b16 %v233
    %v968 = vunpack.c.l.b16 %v234
    %v969 = vunpack.c.h.b16 %v234
    %v970 = vunpack.c.l.b16 %v235
    %v971 = vunpack.c.h.b16 %v235
    %v972 = vunpack.c.l.b16 %v236
    %v973 = vunpack.c.h.b16 %v236
    %v974 = vunpack.c.l.b16 %v237
    %v975 = vunpack.c.h.b16 %v237
    %v976 = vunpack.c.l.b16 %v238
    %v977 = vunpack.c.h.b16 %v238
    %v978 = vunpack.c.l.b16 %v239
    %v979 = vunpack.c.h.b16 %v239
    %v980 = vunpack.c.l.b16 %v240
    %v981 = vunpack.c.h.b16 %v240
    %v982 = vunpack.c.l.b16 %v241
    %v983 = vunpack.c.h.b16 %v241
    %v984 = vunpack.c.l.b16 %v242
    %v985 = vunpack.c.h.b16 %v242
    %v986 = vunpack.c.l.b16 %v243
    %v987 = vunpack.c.h.b16 %v243
    %v988 = vunpack.c.l.b16 %v244
    %v989 = vunpack.c.h.b16 %v244
    %v990 = vunpack.c.l.b16 %v245
    %v991 = vunpack.c.h.b16 %v245
    %v992 = vunpack.c.l.b16 %v246
    %v993 = vunpack.c.h.b16 %v246
    %v994 = vunpack.c.l.b16 %v247
    %v995 = vunpack.c.h.b16 %v247
    %v996 = vunpack.c.l.b16 %v248
    %v997 = vunpack.c.h.b16 %v248
    %v998 = vunpack.c.l.b16 %v249
    %v999 = vunpack.c.h.b16 %v249
    %v1000 = vunpack.c.l.b16 %v250
    %v1001 = vunpack.c.h.b16 %v250
    %v1002 = vunpack.c.l.b16 %v251
    %v1003 = vunpack.c.h.b16 %v251
    %v1004 = vunpack.c.l.b16 %v252
    %v1005 = vunpack.c.h.b16 %v252
    %v1006 = vunpack.c.l.b16 %v253
    %v1007 = vunpack.c.h.b16 %v253
    %v1008 = vunpack.c.l.b16 %v254
    %v1009 = vunpack.c.h.b16 %v254
    %v1010 = vunpack.c.l.b16 %v255
    %v1011 = vunpack.c.h.b16 %v255
    %v1012 = vunpack.c.l.b16 %v256
    %v1013 = vunpack.c.h.b16 %v256
    %v1014 = vunpack.c.l.b16 %v257
    %v1015 = vunpack.c.h.b16 %v257
    %v1016 = vunpack.c.l.b16 %v258
    %v1017 = vunpack.c.h.b16 %v258
    %v1018 = vunpack.c.l.b16 %v259
    %v1019 = vunpack.c.h.b16 %v259
    %v1020 = vunpack.c.l.b16 %v260
    %v1021 = vunpack.c.h.b16 %v260
    %v1022 = vunpack.c.l.b16 %v261
    %v1023 = vunpack.c.h.b16 %v261
    %v1024 = vunpack.c.l.b16 %v262
    %v1025 = vunpack.c.h.b16 %v262
    %v1026 = vunpack.c.l.b16 %v263
    %v1027 = vunpack.c.h.b16 %v263
    %v1028 = vunpack.c.l.b16 %v264
    %v1029 = vunpack.c.h.b16 %v264
    %v1030 = vunpack.c.l.b16 %v265
    %v1031 = vunpack.c.h.b16 %v265
    %v1032 = vunpack.c.l.b16 %v266
    %v1033 = vunpack.c.h.b16 %v266
    %v1034 = vunpack.c.l.b16 %v267
    %v1035 = vunpack.c.h.b16 %v267
    %v1036 = vunpack.c.l.b16 %v268
    %v1037 = vunpack.c.h.b16 %v268
    %v1038 = vunpack.c.l.b16 %v269
    %v1039 = vunpack.c.h.b16 %v269
    %v1040 = vunpack.c.l.b16 %v270
    %v1041 = vunpack.c.h.b16 %v270
    %v1042 = vunpack.c.l.b16 %v271
    %v1043 = vunpack.c.h.b16 %v271
    %v1044 = vunpack.c.l.b16 %v272
    %v1045 = vunpack.c.h.b16 %v272
    %v1046 = vunpack.c.l.b16 %v273
    %v1047 = vunpack.c.h.b16 %v273
    %v1048 = vunpack.c.l.b16 %v274
    %v1049 = vunpack.c.h.b16 %v274
    %v1050 = vunpack.c.l.b16 %v275
    %v1051 = vunpack.c.h.b16 %v275
    %v1052 = vunpack.c.l.b16 %v276
    %v1053 = vunpack.c.h.b16 %v276
    %v1054 = vunpack.c.l.b16 %v277
    %v1055 = vunpack.c.h.b16 %v277
    %v1056 = vunpack.c.l.b16 %v278
    %v1057 = vunpack.c.h.b16 %v278
    %v1058 = vunpack.c.l.b16 %v279
    %v1059 = vunpack.c.h.b16 %v279
    %v1060 = vunpack.c.l.b16 %v280
    %v1061 = vunpack.c.h.b16 %v280
    %v1062 = vunpack.c.l.b16 %v281
    %v1063 = vunpack.c.h.b16 %v281
    %v1064 = vunpack.c.l.b16 %v282
    %v1065 = vunpack.c.h.b16 %v282
    %v1066 = vunpack.c.l.b16 %v283
    %v1067 = vunpack.c.h.b16 %v283
    %v1068 = vunpack.c.l.b16 %v284
    %v1069 = vunpack.c.h.b16 %v284
    %v1070 = vunpack.c.l.b16 %v285
    %v1071 = vunpack.c.h.b16 %v285
    %v1072 = vunpack.c.l.b16 %v286
    %v1073 = vunpack.c.h.b16 %v286
    %v1074 = vunpack.c.l.b16 %v287
    %v1075 = vunpack.c.h.b16 %v287
    %v1076 = vunpack.c.l.b16 %v288
    %v1077 = vunpack.c.h.b16 %v288
    %v1078 = vunpack.c.l.b16 %v289
    %v1079 = vunpack.c.h.b16 %v289
    %v1080 = vunpack.c.l.b16 %v290
    %v1081 = vunpack.c.h.b16 %v290
    %v1082 = vunpack.c.l.b16 %v291
    %v1083 = vunpack.c.h.b16 %v291
    %v1084 = vunpack.c.l.b16 %v292
    %v1085 = vunpack.c.h.b16 %v292
    %v1086 = vunpack.c.l.b16 %v293
    %v1087 = vunpack.c.h.b16 %v293
    %v1088 = vunpack.c.l.b16 %v294
    %v1089 = vunpack.c.h.b16 %v294
    %v1090 = vunpack.c.l.b16 %v295
    %v1091 = vunpack.c.h.b16 %v295
    %v1092 = vunpack.c.l.b16 %v296
    %v1093 = vunpack.c.h.b16 %v296
    %v1094 = vunpack.c.l.b16 %v297
    %v1095 = vunpack.c.h.b16 %v297
    %v1096 = vunpack.c.l.b16 %v298
    %v1097 = vunpack.c.h.b16 %v298
    %v1098 = vunpack.c.l.b16 %v299
    %v1099 = vunpack.c.h.b16 %v299
    %v1100 = vunpack.c.l.b16 %v300
    %v1101 = vunpack.c.h.b16 %v300
    %v1102 = vunpack.c.l.b16 %v301
    %v1103 = vunpack.c.h.b16 %v301
    %v1104 = vunpack.c.l.b16 %v302
    %v1105 = vunpack.c.h.b16 %v302
    %v1106 = vunpack.c.l.b16 %v303
    %v1107 = vunpack.c.h.b16 %v303
    %v1108 = vunpack.c.l.b16 %v304
    %v1109 = vunpack.c.h.b16 %v304
    %v1110 = vunpack.c.l.b16 %v305
    %v1111 = vunpack.c.h.b16 %v305
    %v1112 = vunpack.c.l.b16 %v306
    %v1113 = vunpack.c.h.b16 %v306
    %v1114 = vunpack.c.l.b16 %v307
    %v1115 = vunpack.c.h.b16 %v307
    %v1116 = vunpack.c.l.b16 %v308
    %v1117 = vunpack.c.h.b16 %v308
    %v1118 = vunpack.c.l.b16 %v309
    %v1119 = vunpack.c.h.b16 %v309
    %v1120 = vunpack.c.l.b16 %v310
    %v1121 = vunpack.c.h.b16 %v310
    %v1122 = vunpack.c.l.b16 %v311
    %v1123 = vunpack.c.h.b16 %v311
    %v1124 = vunpack.c.l.b16 %v312
    %v1125 = vunpack.c.h.b16 %v312
    %v1126 = vunpack.c.l.b16 %v313
    %v1127 = vunpack.c.h.b16 %v313
    %v1128 = vunpack.c.l.b16 %v314
    %v1129 = vunpack.c.h.b16 %v314
    %v1130 = vunpack.c.l.b16 %v315
    %v1131 = vunpack.c.h.b16 %v315
    %v1132 = vunpack.c.l.b16 %v316
    %v1133 = vunpack.c.h.b16 %v316
    %v1134 = vunpack.c.l.b16 %v317
    %v1135 = vunpack.c.h.b16 %v317
    %v1136 = vunpack.c.l.b16 %v318
    %v1137 = vunpack.c.h.b16 %v318
    %v1138 = vunpack.c.l.b16 %v319
    %v1139 = vunpack.c.h.b16 %v319
    %v1140 = vunpack.c.l.b16 %v320
    %v1141 = vunpack.c.h.b16 %v320
    %v1142 = vunpack.c.l.b16 %v321
    %v1143 = vunpack.c.h.b16 %v321
    %v1144 = vunpack.c.l.b16 %v322
    %v1145 = vunpack.c.h.b16 %v322
    %v1146 = vunpack.c.l.b16 %v323
    %v1147 = vunpack.c.h.b16 %v323
    %v1148 = vunpack.c.l.b16 %v324
    %v1149 = vunpack.c.h.b16 %v324
    %v1150 = vunpack.c.l.b16 %v325
    %v1151 = vunpack.c.h.b16 %v325
    %v1152 = vunpack.c.l.b16 %v326
    %v1153 = vunpack.c.h.b16 %v326
    %v1154 = vunpack.c.l.b16 %v327
    %v1155 = vunpack.c.h.b16 %v327
    %v1156 = vunpack.c.l.b16 %v328
    %v1157 = vunpack.c.h.b16 %v328
    %v1158 = vunpack.c.l.b16 %v329
    %v1159 = vunpack.c.h.b16 %v329
    %v1160 = vunpack.c.l.b16 %v330
    %v1161 = vunpack.c.h.b16 %v330
    %v1162 = vunpack.c.l.b16 %v331
    %v1163 = vunpack.c.h.b16 %v331
    %v1164 = vunpack.c.l.b16 %v332
    %v1165 = vunpack.c.h.b16 %v332
    %v1166 = vunpack.c.l.b16 %v333
    %v1167 = vunpack.c.h.b16 %v333
    %v1168 = vunpack.c.l.b16 %v334
    %v1169 = vunpack.c.h.b16 %v334
    %v1170 = vunpack.c.l.b16 %v335
    %v1171 = vunpack.c.h.b16 %v335
    %v1172 = vunpack.c.l.b16 %v336
    %v1173 = vunpack.c.h.b16 %v336
    %v1174 = vunpack.c.l.b16 %v337
    %v1175 = vunpack.c.h.b16 %v337
    %v1176 = vunpack.c.l.b16 %v338
    %v1177 = vunpack.c.h.b16 %v338
    %v1178 = vunpack.c.l.b16 %v339
    %v1179 = vunpack.c.h.b16 %v339
    %v1180 = vunpack.c.l.b16 %v340
    %v1181 = vunpack.c.h.b16 %v340
    %v1182 = vunpack.c.l.b16 %v341
    %v1183 = vunpack.c.h.b16 %v341
    %v1184 = vunpack.c.l.b16 %v342
    %v1185 = vunpack.c.h.b16 %v342
    %v1186 = vunpack.c.l.b16 %v343
    %v1187 = vunpack.c.h.b16 %v343
    %v1188 = vunpack.c.l.b16 %v344
    %v1189 = vunpack.c.h.b16 %v344
    %v1190 = vunpack.c.l.b16 %v345
    %v1191 = vunpack.c.h.b16 %v345
    %v1192 = vunpack.c.l.b16 %v346
    %v1193 = vunpack.c.h.b16 %v346
    %v1194 = vunpack.c.l.b16 %v347
    %v1195 = vunpack.c.h.b16 %v347
    %v1196 = vunpack.c.l.b16 %v348
    %v1197 = vunpack.c.h.b16 %v348
    %v1198 = vunpack.c.l.b16 %v349
    %v1199 = vunpack.c.h.b16 %v349
    %v1200 = vunpack.c.l.b16 %v350
    %v1201 = vunpack.c.h.b16 %v350
    %v1202 = vunpack.c.l.b16 %v351
    %v1203 = vunpack.c.h.b16 %v351
    %v1204 = vunpack.c.l.b16 %v352
    %v1205 = vunpack.c.h.b16 %v352
    %v1206 = vunpack.c.l.b16 %v353
    %v1207 = vunpack.c.h.b16 %v353
    %v1208 = vunpack.c.l.b16 %v354
    %v1209 = vunpack.c.h.b16 %v354
    %v1210 = vunpack.c.l.b16 %v355
    %v1211 = vunpack.c.h.b16 %v355
    %v1212 = vunpack.c.l.b16 %v356
    %v1213 = vunpack.c.h.b16 %v356
    %v1214 = vunpack.c.l.b16 %v357
    %v1215 = vunpack.c.h.b16 %v357
    %v1216 = vunpack.c.l.b16 %v358
    %v1217 = vunpack.c.h.b16 %v358
    %v1218 = vunpack.c.l.b16 %v359
    %v1219 = vunpack.c.h.b16 %v359
    %v1220 = vunpack.c.l.b16 %v360
    %v1221 = vunpack.c.h.b16 %v360
    %v1222 = vunpack.c.l.b16 %v361
    %v1223 = vunpack.c.h.b16 %v361
    %v1224 = vunpack.c.l.b16 %v362
    %v1225 = vunpack.c.h.b16 %v362
    %v1226 = vunpack.c.l.b16 %v363
    %v1227 = vunpack.c.h.b16 %v363
    %v1228 = vunpack.c.l.b16 %v364
    %v1229 = vunpack.c.h.b16 %v364
    %v1230 = vunpack.c.l.b16 %v365
    %v1231 = vunpack.c.h.b16 %v365
    %v1232 = vunpack.c.l.b16 %v366
    %v1233 = vunpack.c.h.b16 %v366
    %v1234 = vunpack.c.l.b16 %v367
    %v1235 = vunpack.c.h.b16 %v367
    %v1236 = vunpack.c.l.b16 %v368
    %v1237 = vunpack.c.h.b16 %v368
    %v1238 = vunpack.c.l.b16 %v369
    %v1239 = vunpack.c.h.b16 %v369
    %v1240 = vunpack.c.l.b16 %v370
    %v1241 = vunpack.c.h.b16 %v370
    %v1242 = vunpack.c.l.b16 %v371
    %v1243 = vunpack.c.h.b16 %v371
    %v1244 = vunpack.c.l.b16 %v372
    %v1245 = vunpack.c.h.b16 %v372
    %v1246 = vunpack.c.l.b16 %v373
    %v1247 = vunpack.c.h.b16 %v373
    %v1248 = vunpack.c.l.b16 %v374
    %v1249 = vunpack.c.h.b16 %v374
    %v1250 = vunpack.c.l.b16 %v375
    %v1251 = vunpack.c.h.b16 %v375
    %v1252 = vunpack.c.l.b16 %v376
    %v1253 = vunpack.c.h.b16 %v376
    %v1254 = vunpack.c.l.b16 %v377
    %v1255 = vunpack.c.h.b16 %v377
    %v1256 = vunpack.c.l.b16 %v378
    %v1257 = vunpack.c.h.b16 %v378
    %v1258 = vunpack.c.l.b16 %v379
    %v1259 = vunpack.c.h.b16 %v379
    %v1260 = vunpack.c.l.b16 %v380
    %v1261 = vunpack.c.h.b16 %v380
    %v1262 = vunpack.c.l.b16 %v381
    %v1263 = vunpack.c.h.b16 %v381
    %v1264 = vunpack.c.l.b16 %v382
    %v1265 = vunpack.c.h.b16 %v382
    %v1266 = vunpack.c.l.b16 %v383
    %v1267 = vunpack.c.h.b16 %v383
    %v1268 = vunpack.c.l.b16 %v384
    %v1269 = vunpack.c.h.b16 %v384
    %v1270 = vunpack.c.l.b16 %v385
    %v1271 = vunpack.c.h.b16 %v385
    %v1272 = vunpack.c.l.b16 %v386
    %v1273 = vunpack.c.h.b16 %v386
    %v1274 = vunpack.c.l.b16 %v387
    %v1275 = vunpack.c.h.b16 %v387
    %v1276 = vunpack.c.l.b16 %v388
    %v1277 = vunpack.c.h.b16 %v388
    %v1278 = vunpack.c.l.b16 %v389
    %v1279 = vunpack.c.h.b16 %v389
    %v1280 = vunpack.c.l.b16 %v390
    %v1281 = vunpack.c.h.b16 %v390
    %v1282 = vunpack.c.l.b16 %v391
    %v1283 = vunpack.c.h.b16 %v391
    %v1284 = vpack.c.b16 %v720, %v708
    %v1285 = vpack.c.b16 %v721, %v709
    %v1286 = vpack.c.b16 %v722, %v710
    %v1287 = vpack.c.b16 %v723, %v711
    %v1288 = vpack.c.b16 %v724, %v712
    %v1289 = vpack.c.b16 %v725, %v713
    %v1290 = vpack.c.b16 %v726, %v714
    %v1291 = vpack.c.b16 %v727, %v715
    %v1292 = vpack.c.b16 %v728, %v716
    %v1293 = vpack.c.b16 %v729, %v717
    %v1294 = vpack.c.b16 %v730, %v718
    %v1295 = vpack.c.b16 %v731, %v719
    %v1296 = vpack.c.b16 %v744, %v732
    %v1297 = vpack.c.b16 %v745, %v733
    %v1298 = vpack.c.b16 %v746, %v734
    %v1299 = vpack.c.b16 %v747, %v735
    %v1300 = vpack.c.b16 %v748, %v736
    %v1301 = vpack.c.b16 %v749, %v737
    %v1302 = vpack.c.b16 %v750, %v738
    %v1303 = vpack.c.b16 %v751, %v739
    %v1304 = vpack.c.b16 %v752, %v740
    %v1305 = vpack.c.b16 %v753, %v741
    %v1306 = vpack.c.b16 %v754, %v742
    %v1307 = vpack.c.b16 %v755, %v743
    %v1308 = vpack.c.b16 %v768, %v756
    %v1309 = vpack.c.b16 %v769, %v757
    %v1310 = vpack.c.b16 %v770, %v758
    %v1311 = vpack.c.b16 %v771, %v759
    %v1312 = vpack.c.b16 %v772, %v760
    %v1313 = vpack.c.b16 %v773, %v761
    %v1314 = vpack.c.b16 %v774, %v762
    %v1315 = vpack.c.b16 %v775, %v763
    %v1316 = vpack.c.b16 %v776, %v764
    %v1317 = vpack.c.b16 %v777, %v765
    %v1318 = vpack.c.b16 %v778, %v766
    %v1319 = vpack.c.b16 %v779, %v767
    %v1320 = vpack.c.b16 %v792, %v780
    %v1321 = vpack.c.b16 %v793, %v781
    %v1322 = vpack.c.b16 %v794, %v782
    %v1323 = vpack.c.b16 %v795, %v783
    %v1324 = vpack.c.b16 %v796, %v784
    %v1325 = vpack.c.b16 %v797, %v785
    %v1326 = vpack.c.b16 %v798, %v786
    %v1327 = vpack.c.b16 %v799, %v787
    %v1328 = vpack.c.b16 %v800, %v788
    %v1329 = vpack.c.b16 %v801, %v789
    %v1330 = vpack.c.b16 %v802, %v790
    %v1331 = vpack.c.b16 %v803, %v791
    %v1332 = vpack.c.b16 %v816, %v804
    %v1333 = vpack.c.b16 %v817, %v805
    %v1334 = vpack.c.b16 %v818, %v806
    %v1335 = vpack.c.b16 %v819, %v807
    %v1336 = vpack.c.b16 %v820, %v808
    %v1337 = vpack.c.b16 %v821, %v809
    %v1338 = vpack.c.b16 %v822, %v810
    %v1339 = vpack.c.b16 %v823, %v811
    %v1340 = vpack.c.b16 %v824, %v812
    %v1341 = vpack.c.b16 %v825, %v813
    %v1342 = vpack.c.b16 %v826, %v814
    %v1343 = vpack.c.b16 %v827, %v815
    %v1344 = vpack.c.b16 %v840, %v828
    %v1345 = vpack.c.b16 %v841, %v829
    %v1346 = vpack.c.b16 %v842, %v830
    %v1347 = vpack.c.b16 %v843, %v831
    %v1348 = vpack.c.b16 %v844, %v832
    %v1349 = vpack.c.b16 %v845, %v833
    %v1350 = vpack.c.b16 %v846, %v834
    %v1351 = vpack.c.b16 %v847, %v835
    %v1352 = vpack.c.b16 %v848, %v836
    %v1353 = vpack.c.b16 %v849, %v837
    %v1354 = vpack.c.b16 %v850, %v838
    %v1355 = vpack.c.b16 %v851, %v839
    %v1356 = vpack.c.b16 %v864, %v852
    %v1357 = vpack.c.b16 %v865, %v853
    %v1358 = vpack.c.b16 %v866, %v854
    %v1359 = vpack.c.b16 %v867, %v855
    %v1360 = vpack.c.b16 %v868, %v856
    %v1361 = vpack.c.b16 %v869, %v857
    %v1362 = vpack.c.b16 %v870, %v858
    %v1363 = vpack.c.b16 %v871, %v859
    %v1364 = vpack.c.b16 %v872, %v860
    %v1365 = vpack.c.b16 %v873, %v861
    %v1366 = vpack.c.b16 %v874, %v862
    %v1367 = vpack.c.b16 %v875, %v863
    %v1368 = vpack.c.b16 %v888, %v876
    %v1369 = vpack.c.b16 %v889, %v877
    %v1370 = vpack.c.b16 %v890, %v878
    %v1371 = vpack.c.b16 %v891, %v879
    %v1372 = vpack.c.b16 %v892, %v880
    %v1373 = vpack.c.b16 %v893, %v881
    %v1374 = vpack.c.b16 %v894, %v882
    %v1375 = vpack.c.b16 %v895, %v883
    %v1376 = vpack.c.b16 %v896, %v884
    %v1377 = vpack.c.b16 %v897, %v885
    %v1378 = vpack.c.b16 %v898, %v886
    %v1379 = vpack.c.b16 %v899, %v887
    %v1380 = vpack.c.b16 %v912, %v900
    %v1381 = vpack.c.b16 %v913, %v901
    %v1382 = vpack.c.b16 %v914, %v902
    %v1383 = vpack.c.b16 %v915, %v903
    %v1384 = vpack.c.b16 %v916, %v904
    %v1385 = vpack.c.b16 %v917, %v905
    %v1386 = vpack.c.b16 %v918, %v906
    %v1387 = vpack.c.b16 %v919, %v907
    %v1388 = vpack.c.b16 %v920, %v908
    %v1389 = vpack.c.b16 %v921, %v909
    %v1390 = vpack.c.b16 %v922, %v910
    %v1391 = vpack.c.b16 %v923, %v911
    %v1392 = vpack.c.b16 %v936, %v924
    %v1393 = vpack.c.b16 %v937, %v925
    %v1394 = vpack.c.b16 %v938, %v926
    %v1395 = vpack.c.b16 %v939, %v927
    %v1396 = vpack.c.b16 %v940, %v928
    %v1397 = vpack.c.b16 %v941, %v929
    %v1398 = vpack.c.b16 %v942, %v930
    %v1399 = vpack.c.b16 %v943, %v931
    %v1400 = vpack.c.b16 %v944, %v932
    %v1401 = vpack.c.b16 %v945, %v933
    %v1402 = vpack.c.b16 %v946, %v934
    %v1403 = vpack.c.b16 %v947, %v935
    %v1404 = vpack.c.b16 %v960, %v948
    %v1405 = vpack.c.b16 %v961, %v949
    %v1406 = vpack.c.b16 %v962, %v950
    %v1407 = vpack.c.b16 %v963, %v951
    %v1408 = vpack.c.b16 %v964, %v952
    %v1409 = vpack.c.b16 %v965, %v953
    %v1410 = vpack.c.b16 %v966, %v954
    %v1411 = vpack.c.b16 %v967, %v955
    %v1412 = vpack.c.b16 %v968, %v956
    %v1413 = vpack.c.b16 %v969, %v957
    %v1414 = vpack.c.b16 %v970, %v958
    %v1415 = vpack.c.b16 %v971, %v959
    %v1416 = vpack.c.b16 %v984, %v972
    %v1417 = vpack.c.b16 %v985, %v973
    %v1418 = vpack.c.b16 %v986, %v974
    %v1419 = vpack.c.b16 %v987, %v975
    %v1420 = vpack.c.b16 %v988, %v976
    %v1421 = vpack.c.b16 %v989, %v977
    %v1422 = vpack.c.b16 %v990, %v978
    %v1423 = vpack.c.b16 %v991, %v979
    %v1424 = vpack.c.b16 %v992, %v980
    %v1425 = vpack.c.b16 %v993, %v981
    %v1426 = vpack.c.b16 %v994, %v982
    %v1427 = vpack.c.b16 %v995, %v983
    %v1428 = vpack.c.b16 %v1008, %v996
    %v1429 = vpack.c.b16 %v1009, %v997
    %v1430 = vpack.c.b16 %v1010, %v998
    %v1431 = vpack.c.b16 %v1011, %v999
    %v1432 = vpack.c.b16 %v1012, %v1000
    %v1433 = vpack.c.b16 %v1013, %v1001
    %v1434 = vpack.c.b16 %v1014, %v1002
    %v1435 = vpack.c.b16 %v1015, %v1003
    %v1436 = vpack.c.b16 %v1016, %v1004
    %v1437 = vpack.c.b16 %v1017, %v1005
    %v1438 = vpack.c.b16 %v1018, %v1006
    %v1439 = vpack.c.b16 %v1019, %v1007
    %v1440 = vpack.c.b16 %v1032, %v1020
    %v1441 = vpack.c.b16 %v1033, %v1021
    %v1442 = vpack.c.b16 %v1034, %v1022
    %v1443 = vpack.c.b16 %v1035, %v1023
    %v1444 = vpack.c.b16 %v1036, %v1024
    %v1445 = vpack.c.b16 %v1037, %v1025
    %v1446 = vpack.c.b16 %v1038, %v1026
    %v1447 = vpack.c.b16 %v1039, %v1027
    %v1448 = vpack.c.b16 %v1040, %v1028
    %v1449 = vpack.c.b16 %v1041, %v1029
    %v1450 = vpack.c.b16 %v1042, %v1030
    %v1451 = vpack.c.b16 %v1043, %v1031
    %v1452 = vpack.c.b16 %v1056, %v1044
    %v1453 = vpack.c.b16 %v1057, %v1045
    %v1454 = vpack.c.b16 %v1058, %v1046
    %v1455 = vpack.c.b16 %v1059, %v1047
    %v1456 = vpack.c.b16 %v1060, %v1048
    %v1457 = vpack.c.b16 %v1061, %v1049
    %v1458 = vpack.c.b16 %v1062, %v1050
    %v1459 = vpack.c.b16 %v1063, %v1051
    %v1460 = vpack.c.b16 %v1064, %v1052
    %v1461 = vpack.c.b16 %v1065, %v1053
    %v1462 = vpack.c.b16 %v1066, %v1054
    %v1463 = vpack.c.b16 %v1067, %v1055
    %v1464 = vpack.c.b16 %v1080, %v1068
    %v1465 = vpack.c.b16 %v1081, %v1069
    %v1466 = vpack.c.b16 %v1082, %v1070
    %v1467 = vpack.c.b16 %v1083, %v1071
    %v1468 = vpack.c.b16 %v1084, %v1072
    %v1469 = vpack.c.b16 %v1085, %v1073
    %v1470 = vpack.c.b16 %v1086, %v1074
    %v1471 = vpack.c.b16 %v1087, %v1075
    %v1472 = vpack.c.b16 %v1088, %v1076
    %v1473 = vpack.c.b16 %v1089, %v1077
    %v1474 = vpack.c.b16 %v1090, %v1078
    %v1475 = vpack.c.b16 %v1091, %v1079
    %v1476 = vpack.c.b16 %v1104, %v1092
    %v1477 = vpack.c.b16 %v1105, %v1093
    %v1478 = vpack.c.b16 %v1106, %v1094
    %v1479 = vpack.c.b16 %v1107, %v1095
    %v1480 = vpack.c.b16 %v1108, %v1096
    %v1481 = vpack.c.b16 %v1109, %v1097
    %v1482 = vpack.c.b16 %v1110, %v1098
    %v1483 = vpack.c.b16 %v1111, %v1099
    %v1484 = vpack.c.b16 %v1112, %v1100
    %v1485 = vpack.c.b16 %v1113, %v1101
    %v1486 = vpack.c.b16 %v1114, %v1102
    %v1487 = vpack.c.b16 %v1115, %v1103
    %v1488 = vpack.c.b16 %v1128, %v1116
    %v1489 = vpack.c.b16 %v1129, %v1117
    %v1490 = vpack.c.b16 %v1130, %v1118
    %v1491 = vpack.c.b16 %v1131, %v1119
    %v1492 = vpack.c.b16 %v1132, %v1120
    %v1493 = vpack.c.b16 %v1133, %v1121
    %v1494 = vpack.c.b16 %v1134, %v1122
    %v1495 = vpack.c.b16 %v1135, %v1123
    %v1496 = vpack.c.b16 %v1136, %v1124
    %v1497 = vpack.c.b16 %v1137, %v1125
    %v1498 = vpack.c.b16 %v1138, %v1126
    %v1499 = vpack.c.b16 %v1139, %v1127
    %v1500 = vpack.c.b16 %v1152, %v1140
    %v1501 = vpack.c.b16 %v1153, %v1141
    %v1502 = vpack.c.b16 %v1154, %v1142
    %v1503 = vpack.c.b16 %v1155, %v1143
    %v1504 = vpack.c.b16 %v1156, %v1144
    %v1505 = vpack.c.b16 %v1157, %v1145
    %v1506 = vpack.c.b16 %v1158, %v1146
    %v1507 = vpack.c.b16 %v1159, %v1147
    %v1508 = vpack.c.b16 %v1160, %v1148
    %v1509 = vpack.c.b16 %v1161, %v1149
    %v1510 = vpack.c.b16 %v1162, %v1150
    %v1511 = vpack.c.b16 %v1163, %v1151
    %v1512 = vpack.c.b16 %v1176, %v1164
    %v1513 = vpack.c.b16 %v1177, %v1165
    %v1514 = vpack.c.b16 %v1178, %v1166
    %v1515 = vpack.c.b16 %v1179, %v1167
    %v1516 = vpack.c.b16 %v1180, %v1168
    %v1517 = vpack.c.b16 %v1181, %v1169
    %v1518 = vpack.c.b16 %v1182, %v1170
    %v1519 = vpack.c.b16 %v1183, %v1171
    %v1520 = vpack.c.b16 %v1184, %v1172
    %v1521 = vpack.c.b16 %v1185, %v1173
    %v1522 = vpack.c.b16 %v1186, %v1174
    %v1523 = vpack.c.b16 %v1187, %v1175
    %v1524 = vpack.c.b16 %v1200, %v1188
    %v1525 = vpack.c.b16 %v1201, %v1189
    %v1526 = vpack.c.b16 %v1202, %v1190
    %v1527 = vpack.c.b16 %v1203, %v1191
    %v1528 = vpack.c.b16 %v1204, %v1192
    %v1529 = vpack.c.b16 %v1205, %v1193
    %v1530 = vpack.c.b16 %v1206, %v1194
    %v1531 = vpack.c.b16 %v1207, %v1195
    %v1532 = vpack.c.b16 %v1208, %v1196
    %v1533 = vpack.c.b16 %v1209, %v1197
    %v1534 = vpack.c.b16 %v1210, %v1198
    %v1535 = vpack.c.b16 %v1211, %v1199
    %v1536 = vpack.c.b16 %v1224, %v1212
    %v1537 = vpack.c.b16 %v1225, %v1213
    %v1538 = vpack.c.b16 %v1226, %v1214
    %v1539 = vpack.c.b16 %v1227, %v1215
    %v1540 = vpack.c.b16 %v1228, %v1216
    %v1541 = vpack.c.b16 %v1229, %v1217
    %v1542 = vpack.c.b16 %v1230, %v1218
    %v1543 = vpack.c.b16 %v1231, %v1219
    %v1544 = vpack.c.b16 %v1232, %v1220
    %v1545 = vpack.c.b16 %v1233, %v1221
    %v1546 = vpack.c.b16 %v1234, %v1222
    %v1547 = vpack.c.b16 %v1235, %v1223
    %v1548 = vpack.c.b16 %v1248, %v1236
    %v1549 = vpack.c.b16 %v1249, %v1237
    %v1550 = vpack.c.b16 %v1250, %v1238
    %v1551 = vpack.c.b16 %v1251, %v1239
    %v1552 = vpack.c.b16 %v1252, %v1240
    %v1553 = vpack.c.b16 %v1253, %v1241
    %v1554 = vpack.c.b16 %v1254, %v1242
    %v1555 = vpack.c.b16 %v1255, %v1243
    %v1556 = vpack.c.b16 %v1256, %v1244
    %v1557 = vpack.c.b16 %v1257, %v1245
    %v1558 = vpack.c.b16 %v1258, %v1246
    %v1559 = vpack.c.b16 %v1259, %v1247
    %v1560 = vpack.c.b16 %v1272, %v1260
    %v1561 = vpack.c.b16 %v1273, %v1261
    %v1562 = vpack.c.b16 %v1274, %v1262
    %v1563 = vpack.c.b16 %v1275, %v1263
    %v1564 = vpack.c.b16 %v1276, %v1264
    %v1565 = vpack.c.b16 %v1277, %v1265
    %v1566 = vpack.c.b16 %v1278, %v1266
    %v1567 = vpack.c.b16 %v1279, %v1267
    %v1568 = vpack.c.b16 %v1280, %v1268
    %v1569 = vpack.c.b16 %v1281, %v1269
    %v1570 = vpack.c.b16 %v1282, %v1270
    %v1571 = vpack.c.b16 %v1283, %v1271
    %1860 = vmatpush.bf16.msra.mxu0 %v1368
    %1861 = vmatpush.bf16.msra.mxu0 %v1356
    %1862 = vmatpush.bf16.msra.mxu0 %v1344
    %1863 = vmatpush.bf16.msra.mxu0 %v1332
    %1864 = vmatpush.bf16.msra.mxu0 %v1320
    %1865 = vmatpush.bf16.msra.mxu0 %v1308
    %1866 = vmatpush.bf16.msra.mxu0 %v1296
    %1867 = vmatpush.bf16.msra.mxu0 %v1284
    %1868 = vmatmul.bf16.gmra.mxu0 %v101
    %v1869 = vpop.f32.mrf.mxu0
    %v1870 = vadd.f32 %v396, %v1869
    %v1871 = vpop.f32.mrf.mxu0
    %v1872 = vadd.f32 %v396, %v1871
    %1873 = vdwg.mxu0
    %1874 = vmatpush.bf16.msra.mxu0 %v1464
    %1875 = vmatpush.bf16.msra.mxu0 %v1452
    %1876 = vmatpush.bf16.msra.mxu0 %v1440
    %1877 = vmatpush.bf16.msra.mxu0 %v1428
    %1878 = vmatpush.bf16.msra.mxu0 %v1416
    %1879 = vmatpush.bf16.msra.mxu0 %v1404
    %1880 = vmatpush.bf16.msra.mxu0 %v1392
    %1881 = vmatpush.bf16.msra.mxu0 %v1380
    %1882 = vmatmul.bf16.gmra.mxu0 %v102
    %v1883 = vpop.f32.mrf.mxu0
    %v1884 = vadd.f32 %v1870, %v1883
    %v1885 = vpop.f32.mrf.mxu0
    %v1886 = vadd.f32 %v1872, %v1885
    %1887 = vdwg.mxu0
    %1888 = vmatpush.bf16.msra.mxu0 %v1560
    %1889 = vmatpush.bf16.msra.mxu0 %v1548
    %1890 = vmatpush.bf16.msra.mxu0 %v1536
    %1891 = vmatpush.bf16.msra.mxu0 %v1524
    %1892 = vmatpush.bf16.msra.mxu0 %v1512
    %1893 = vmatpush.bf16.msra.mxu0 %v1500
    %1894 = vmatpush.bf16.msra.mxu0 %v1488
    %1895 = vmatpush.bf16.msra.mxu0 %v1476
    %1896 = vmatmul.bf16.gmra.mxu0 %v103
    %v1897 = vpop.f32.mrf.mxu0
    %v1898 = vadd.f32 %v1884, %v1897
    %v1899 = vpop.f32.mrf.mxu0
    %v1900 = vadd.f32 %v1886, %v1899
    %1901 = vdwg.mxu0
    %1902 = vmatpush.bf16.msra.mxu0 %v1369
    %1903 = vmatpush.bf16.msra.mxu0 %v1357
    %1904 = vmatpush.bf16.msra.mxu0 %v1345
    %1905 = vmatpush.bf16.msra.mxu0 %v1333
    %1906 = vmatpush.bf16.msra.mxu0 %v1321
    %1907 = vmatpush.bf16.msra.mxu0 %v1309
    %1908 = vmatpush.bf16.msra.mxu0 %v1297
    %1909 = vmatpush.bf16.msra.mxu0 %v1285
    %1910 = vmatmul.bf16.gmra.mxu0 %v101
    %v1911 = vpop.f32.mrf.mxu0
    %v1912 = vadd.f32 %v397, %v1911
    %v1913 = vpop.f32.mrf.mxu0
    %v1914 = vadd.f32 %v397, %v1913
    %1915 = vdwg.mxu0
    %1916 = vmatpush.bf16.msra.mxu0 %v1465
    %1917 = vmatpush.bf16.msra.mxu0 %v1453
    %1918 = vmatpush.bf16.msra.mxu0 %v1441
    %1919 = vmatpush.bf16.msra.mxu0 %v1429
    %1920 = vmatpush.bf16.msra.mxu0 %v1417
    %1921 = vmatpush.bf16.msra.mxu0 %v1405
    %1922 = vmatpush.bf16.msra.mxu0 %v1393
    %1923 = vmatpush.bf16.msra.mxu0 %v1381
    %1924 = vmatmul.bf16.gmra.mxu0 %v102
    %v1925 = vpop.f32.mrf.mxu0
    %v1926 = vadd.f32 %v1912, %v1925
    %v1927 = vpop.f32.mrf.mxu0
    %v1928 = vadd.f32 %v1914, %v1927
    %1929 = vdwg.mxu0
    %1930 = vmatpush.bf16.msra.mxu0 %v1561
    %1931 = vmatpush.bf16.msra.mxu0 %v1549
    %1932 = vmatpush.bf16.msra.mxu0 %v1537
    %1933 = vmatpush.bf16.msra.mxu0 %v1525
    %1934 = vmatpush.bf16.msra.mxu0 %v1513
    %1935 = vmatpush.bf16.msra.mxu0 %v1501
    %1936 = vmatpush.bf16.msra.mxu0 %v1489
    %1937 = vmatpush.bf16.msra.mxu0 %v1477
    %1938 = vmatmul.bf16.gmra.mxu0 %v103
    %v1939 = vpop.f32.mrf.mxu0
    %v1940 = vadd.f32 %v1926, %v1939
    %v1941 = vpop.f32.mrf.mxu0
    %v1942 = vadd.f32 %v1928, %v1941
    %1943 = vdwg.mxu0
    %1944 = vmatpush.bf16.msra.mxu0 %v1370
    %1945 = vmatpush.bf16.msra.mxu0 %v1358
    %1946 = vmatpush.bf16.msra.mxu0 %v1346
    %1947 = vmatpush.bf16.msra.mxu0 %v1334
    %1948 = vmatpush.bf16.msra.mxu0 %v1322
    %1949 = vmatpush.bf16.msra.mxu0 %v1310
    %1950 = vmatpush.bf16.msra.mxu0 %v1298
    %1951 = vmatpush.bf16.msra.mxu0 %v1286
    %1952 = vmatmul.bf16.gmra.mxu0 %v101
    %v1953 = vpop.f32.mrf.mxu0
    %v1954 = vadd.f32 %v398, %v1953
    %v1955 = vpop.f32.mrf.mxu0
    %v1956 = vadd.f32 %v398, %v1955
    %1957 = vdwg.mxu0
    %1958 = vmatpush.bf16.msra.mxu0 %v1466
    %1959 = vmatpush.bf16.msra.mxu0 %v1454
    %1960 = vmatpush.bf16.msra.mxu0 %v1442
    %1961 = vmatpush.bf16.msra.mxu0 %v1430
    %1962 = vmatpush.bf16.msra.mxu0 %v1418
    %1963 = vmatpush.bf16.msra.mxu0 %v1406
    %1964 = vmatpush.bf16.msra.mxu0 %v1394
    %1965 = vmatpush.bf16.msra.mxu0 %v1382
    %1966 = vmatmul.bf16.gmra.mxu0 %v102
    %v1967 = vpop.f32.mrf.mxu0
    %v1968 = vadd.f32 %v1954, %v1967
    %v1969 = vpop.f32.mrf.mxu0
    %v1970 = vadd.f32 %v1956, %v1969
    %1971 = vdwg.mxu0
    %1972 = vmatpush.bf16.msra.mxu0 %v1562
    %1973 = vmatpush.bf16.msra.mxu0 %v1550
    %1974 = vmatpush.bf16.msra.mxu0 %v1538
    %1975 = vmatpush.bf16.msra.mxu0 %v1526
    %1976 = vmatpush.bf16.msra.mxu0 %v1514
    %1977 = vmatpush.bf16.msra.mxu0 %v1502
    %1978 = vmatpush.bf16.msra.mxu0 %v1490
    %1979 = vmatpush.bf16.msra.mxu0 %v1478
    %1980 = vmatmul.bf16.gmra.mxu0 %v103
    %v1981 = vpop.f32.mrf.mxu0
    %v1982 = vadd.f32 %v1968, %v1981
    %v1983 = vpop.f32.mrf.mxu0
    %v1984 = vadd.f32 %v1970, %v1983
    %1985 = vdwg.mxu0
    %1986 = vmatpush.bf16.msra.mxu0 %v1371
    %1987 = vmatpush.bf16.msra.mxu0 %v1359
    %1988 = vmatpush.bf16.msra.mxu0 %v1347
    %1989 = vmatpush.bf16.msra.mxu0 %v1335
    %1990 = vmatpush.bf16.msra.mxu0 %v1323
    %1991 = vmatpush.bf16.msra.mxu0 %v1311
    %1992 = vmatpush.bf16.msra.mxu0 %v1299
    %1993 = vmatpush.bf16.msra.mxu0 %v1287
    %1994 = vmatmul.bf16.gmra.mxu0 %v101
    %v1995 = vpop.f32.mrf.mxu0
    %v1996 = vadd.f32 %v399, %v1995
    %v1997 = vpop.f32.mrf.mxu0
    %v1998 = vadd.f32 %v399, %v1997
    %1999 = vdwg.mxu0
    %2000 = vmatpush.bf16.msra.mxu0 %v1467
    %2001 = vmatpush.bf16.msra.mxu0 %v1455
    %2002 = vmatpush.bf16.msra.mxu0 %v1443
    %2003 = vmatpush.bf16.msra.mxu0 %v1431
    %2004 = vmatpush.bf16.msra.mxu0 %v1419
    %2005 = vmatpush.bf16.msra.mxu0 %v1407
    %2006 = vmatpush.bf16.msra.mxu0 %v1395
    %2007 = vmatpush.bf16.msra.mxu0 %v1383
    %2008 = vmatmul.bf16.gmra.mxu0 %v102
    %v2009 = vpop.f32.mrf.mxu0
    %v2010 = vadd.f32 %v1996, %v2009
    %v2011 = vpop.f32.mrf.mxu0
    %v2012 = vadd.f32 %v1998, %v2011
    %2013 = vdwg.mxu0
    %2014 = vmatpush.bf16.msra.mxu0 %v1563
    %2015 = vmatpush.bf16.msra.mxu0 %v1551
    %2016 = vmatpush.bf16.msra.mxu0 %v1539
    %2017 = vmatpush.bf16.msra.mxu0 %v1527
    %2018 = vmatpush.bf16.msra.mxu0 %v1515
    %2019 = vmatpush.bf16.msra.mxu0 %v1503
    %2020 = vmatpush.bf16.msra.mxu0 %v1491
    %2021 = vmatpush.bf16.msra.mxu0 %v1479
    %2022 = vmatmul.bf16.gmra.mxu0 %v103
    %v2023 = vpop.f32.mrf.mxu0
    %v2024 = vadd.f32 %v2010, %v2023
    %v2025 = vpop.f32.mrf.mxu0
    %v2026 = vadd.f32 %v2012, %v2025
    %2027 = vdwg.mxu0
    %2028 = vmatpush.bf16.msra.mxu0 %v1372
    %2029 = vmatpush.bf16.msra.mxu0 %v1360
    %2030 = vmatpush.bf16.msra.mxu0 %v1348
    %2031 = vmatpush.bf16.msra.mxu0 %v1336
    %2032 = vmatpush.bf16.msra.mxu0 %v1324
    %2033 = vmatpush.bf16.msra.mxu0 %v1312
    %2034 = vmatpush.bf16.msra.mxu0 %v1300
    %2035 = vmatpush.bf16.msra.mxu0 %v1288
    %2036 = vmatmul.bf16.gmra.mxu0 %v101
    %v2037 = vpop.f32.mrf.mxu0
    %v2038 = vadd.f32 %v400, %v2037
    %v2039 = vpop.f32.mrf.mxu0
    %v2040 = vadd.f32 %v400, %v2039
    %2041 = vdwg.mxu0
    %2042 = vmatpush.bf16.msra.mxu0 %v1468
    %2043 = vmatpush.bf16.msra.mxu0 %v1456
    %2044 = vmatpush.bf16.msra.mxu0 %v1444
    %2045 = vmatpush.bf16.msra.mxu0 %v1432
    %2046 = vmatpush.bf16.msra.mxu0 %v1420
    %2047 = vmatpush.bf16.msra.mxu0 %v1408
    %2048 = vmatpush.bf16.msra.mxu0 %v1396
    %2049 = vmatpush.bf16.msra.mxu0 %v1384
    %2050 = vmatmul.bf16.gmra.mxu0 %v102
    %v2051 = vpop.f32.mrf.mxu0
    %v2052 = vadd.f32 %v2038, %v2051
    %v2053 = vpop.f32.mrf.mxu0
    %v2054 = vadd.f32 %v2040, %v2053
    %2055 = vdwg.mxu0
    %2056 = vmatpush.bf16.msra.mxu0 %v1564
    %2057 = vmatpush.bf16.msra.mxu0 %v1552
    %2058 = vmatpush.bf16.msra.mxu0 %v1540
    %2059 = vmatpush.bf16.msra.mxu0 %v1528
    %2060 = vmatpush.bf16.msra.mxu0 %v1516
    %2061 = vmatpush.bf16.msra.mxu0 %v1504
    %2062 = vmatpush.bf16.msra.mxu0 %v1492
    %2063 = vmatpush.bf16.msra.mxu0 %v1480
    %2064 = vmatmul.bf16.gmra.mxu0 %v103
    %v2065 = vpop.f32.mrf.mxu0
    %v2066 = vadd.f32 %v2052, %v2065
    %v2067 = vpop.f32.mrf.mxu0
    %v2068 = vadd.f32 %v2054, %v2067
    %2069 = vdwg.mxu0
    %2070 = vmatpush.bf16.msra.mxu0 %v1373
    %2071 = vmatpush.bf16.msra.mxu0 %v1361
    %2072 = vmatpush.bf16.msra.mxu0 %v1349
    %2073 = vmatpush.bf16.msra.mxu0 %v1337
    %2074 = vmatpush.bf16.msra.mxu0 %v1325
    %2075 = vmatpush.bf16.msra.mxu0 %v1313
    %2076 = vmatpush.bf16.msra.mxu0 %v1301
    %2077 = vmatpush.bf16.msra.mxu0 %v1289
    %2078 = vmatmul.bf16.gmra.mxu0 %v101
    %v2079 = vpop.f32.mrf.mxu0
    %v2080 = vadd.f32 %v401, %v2079
    %v2081 = vpop.f32.mrf.mxu0
    %v2082 = vadd.f32 %v401, %v2081
    %2083 = vdwg.mxu0
    %2084 = vmatpush.bf16.msra.mxu0 %v1469
    %2085 = vmatpush.bf16.msra.mxu0 %v1457
    %2086 = vmatpush.bf16.msra.mxu0 %v1445
    %2087 = vmatpush.bf16.msra.mxu0 %v1433
    %2088 = vmatpush.bf16.msra.mxu0 %v1421
    %2089 = vmatpush.bf16.msra.mxu0 %v1409
    %2090 = vmatpush.bf16.msra.mxu0 %v1397
    %2091 = vmatpush.bf16.msra.mxu0 %v1385
    %2092 = vmatmul.bf16.gmra.mxu0 %v102
    %v2093 = vpop.f32.mrf.mxu0
    %v2094 = vadd.f32 %v2080, %v2093
    %v2095 = vpop.f32.mrf.mxu0
    %v2096 = vadd.f32 %v2082, %v2095
    %2097 = vdwg.mxu0
    %2098 = vmatpush.bf16.msra.mxu0 %v1565
    %2099 = vmatpush.bf16.msra.mxu0 %v1553
    %2100 = vmatpush.bf16.msra.mxu0 %v1541
    %2101 = vmatpush.bf16.msra.mxu0 %v1529
    %2102 = vmatpush.bf16.msra.mxu0 %v1517
    %2103 = vmatpush.bf16.msra.mxu0 %v1505
    %2104 = vmatpush.bf16.msra.mxu0 %v1493
    %2105 = vmatpush.bf16.msra.mxu0 %v1481
    %2106 = vmatmul.bf16.gmra.mxu0 %v103
    %v2107 = vpop.f32.mrf.mxu0
    %v2108 = vadd.f32 %v2094, %v2107
    %v2109 = vpop.f32.mrf.mxu0
    %v2110 = vadd.f32 %v2096, %v2109
    %2111 = vdwg.mxu0
    %2112 = vmatpush.bf16.msra.mxu0 %v1374
    %2113 = vmatpush.bf16.msra.mxu0 %v1362
    %2114 = vmatpush.bf16.msra.mxu0 %v1350
    %2115 = vmatpush.bf16.msra.mxu0 %v1338
    %2116 = vmatpush.bf16.msra.mxu0 %v1326
    %2117 = vmatpush.bf16.msra.mxu0 %v1314
    %2118 = vmatpush.bf16.msra.mxu0 %v1302
    %2119 = vmatpush.bf16.msra.mxu0 %v1290
    %2120 = vmatmul.bf16.gmra.mxu0 %v101
    %v2121 = vpop.f32.mrf.mxu0
    %v2122 = vadd.f32 %v402, %v2121
    %v2123 = vpop.f32.mrf.mxu0
    %v2124 = vadd.f32 %v402, %v2123
    %2125 = vdwg.mxu0
    %2126 = vmatpush.bf16.msra.mxu0 %v1470
    %2127 = vmatpush.bf16.msra.mxu0 %v1458
    %2128 = vmatpush.bf16.msra.mxu0 %v1446
    %2129 = vmatpush.bf16.msra.mxu0 %v1434
    %2130 = vmatpush.bf16.msra.mxu0 %v1422
    %2131 = vmatpush.bf16.msra.mxu0 %v1410
    %2132 = vmatpush.bf16.msra.mxu0 %v1398
    %2133 = vmatpush.bf16.msra.mxu0 %v1386
    %2134 = vmatmul.bf16.gmra.mxu0 %v102
    %v2135 = vpop.f32.mrf.mxu0
    %v2136 = vadd.f32 %v2122, %v2135
    %v2137 = vpop.f32.mrf.mxu0
    %v2138 = vadd.f32 %v2124, %v2137
    %2139 = vdwg.mxu0
    %2140 = vmatpush.bf16.msra.mxu0 %v1566
    %2141 = vmatpush.bf16.msra.mxu0 %v1554
    %2142 = vmatpush.bf16.msra.mxu0 %v1542
    %2143 = vmatpush.bf16.msra.mxu0 %v1530
    %2144 = vmatpush.bf16.msra.mxu0 %v1518
    %2145 = vmatpush.bf16.msra.mxu0 %v1506
    %2146 = vmatpush.bf16.msra.mxu0 %v1494
    %2147 = vmatpush.bf16.msra.mxu0 %v1482
    %2148 = vmatmul.bf16.gmra.mxu0 %v103
    %v2149 = vpop.f32.mrf.mxu0
    %v2150 = vadd.f32 %v2136, %v2149
    %v2151 = vpop.f32.mrf.mxu0
    %v2152 = vadd.f32 %v2138, %v2151
    %2153 = vdwg.mxu0
    %2154 = vmatpush.bf16.msra.mxu0 %v1375
    %2155 = vmatpush.bf16.msra.mxu0 %v1363
    %2156 = vmatpush.bf16.msra.mxu0 %v1351
    %2157 = vmatpush.bf16.msra.mxu0 %v1339
    %2158 = vmatpush.bf16.msra.mxu0 %v1327
    %2159 = vmatpush.bf16.msra.mxu0 %v1315
    %2160 = vmatpush.bf16.msra.mxu0 %v1303
    %2161 = vmatpush.bf16.msra.mxu0 %v1291
    %2162 = vmatmul.bf16.gmra.mxu0 %v101
    %v2163 = vpop.f32.mrf.mxu0
    %v2164 = vadd.f32 %v403, %v2163
    %v2165 = vpop.f32.mrf.mxu0
    %v2166 = vadd.f32 %v403, %v2165
    %2167 = vdwg.mxu0
    %2168 = vmatpush.bf16.msra.mxu0 %v1471
    %2169 = vmatpush.bf16.msra.mxu0 %v1459
    %2170 = vmatpush.bf16.msra.mxu0 %v1447
    %2171 = vmatpush.bf16.msra.mxu0 %v1435
    %2172 = vmatpush.bf16.msra.mxu0 %v1423
    %2173 = vmatpush.bf16.msra.mxu0 %v1411
    %2174 = vmatpush.bf16.msra.mxu0 %v1399
    %2175 = vmatpush.bf16.msra.mxu0 %v1387
    %2176 = vmatmul.bf16.gmra.mxu0 %v102
    %v2177 = vpop.f32.mrf.mxu0
    %v2178 = vadd.f32 %v2164, %v2177
    %v2179 = vpop.f32.mrf.mxu0
    %v2180 = vadd.f32 %v2166, %v2179
    %2181 = vdwg.mxu0
    %2182 = vmatpush.bf16.msra.mxu0 %v1567
    %2183 = vmatpush.bf16.msra.mxu0 %v1555
    %2184 = vmatpush.bf16.msra.mxu0 %v1543
    %2185 = vmatpush.bf16.msra.mxu0 %v1531
    %2186 = vmatpush.bf16.msra.mxu0 %v1519
    %2187 = vmatpush.bf16.msra.mxu0 %v1507
    %2188 = vmatpush.bf16.msra.mxu0 %v1495
    %2189 = vmatpush.bf16.msra.mxu0 %v1483
    %2190 = vmatmul.bf16.gmra.mxu0 %v103
    %v2191 = vpop.f32.mrf.mxu0
    %v2192 = vadd.f32 %v2178, %v2191
    %v2193 = vpop.f32.mrf.mxu0
    %v2194 = vadd.f32 %v2180, %v2193
    %2195 = vdwg.mxu0
    %2196 = vmatpush.bf16.msra.mxu0 %v1376
    %2197 = vmatpush.bf16.msra.mxu0 %v1364
    %2198 = vmatpush.bf16.msra.mxu0 %v1352
    %2199 = vmatpush.bf16.msra.mxu0 %v1340
    %2200 = vmatpush.bf16.msra.mxu0 %v1328
    %2201 = vmatpush.bf16.msra.mxu0 %v1316
    %2202 = vmatpush.bf16.msra.mxu0 %v1304
    %2203 = vmatpush.bf16.msra.mxu0 %v1292
    %2204 = vmatmul.bf16.gmra.mxu0 %v101
    %v2205 = vpop.f32.mrf.mxu0
    %v2206 = vadd.f32 %v404, %v2205
    %v2207 = vpop.f32.mrf.mxu0
    %v2208 = vadd.f32 %v404, %v2207
    %2209 = vdwg.mxu0
    %2210 = vmatpush.bf16.msra.mxu0 %v1472
    %2211 = vmatpush.bf16.msra.mxu0 %v1460
    %2212 = vmatpush.bf16.msra.mxu0 %v1448
    %2213 = vmatpush.bf16.msra.mxu0 %v1436
    %2214 = vmatpush.bf16.msra.mxu0 %v1424
    %2215 = vmatpush.bf16.msra.mxu0 %v1412
    %2216 = vmatpush.bf16.msra.mxu0 %v1400
    %2217 = vmatpush.bf16.msra.mxu0 %v1388
    %2218 = vmatmul.bf16.gmra.mxu0 %v102
    %v2219 = vpop.f32.mrf.mxu0
    %v2220 = vadd.f32 %v2206, %v2219
    %v2221 = vpop.f32.mrf.mxu0
    %v2222 = vadd.f32 %v2208, %v2221
    %2223 = vdwg.mxu0
    %2224 = vmatpush.bf16.msra.mxu0 %v1568
    %2225 = vmatpush.bf16.msra.mxu0 %v1556
    %2226 = vmatpush.bf16.msra.mxu0 %v1544
    %2227 = vmatpush.bf16.msra.mxu0 %v1532
    %2228 = vmatpush.bf16.msra.mxu0 %v1520
    %2229 = vmatpush.bf16.msra.mxu0 %v1508
    %2230 = vmatpush.bf16.msra.mxu0 %v1496
    %2231 = vmatpush.bf16.msra.mxu0 %v1484
    %2232 = vmatmul.bf16.gmra.mxu0 %v103
    %v2233 = vpop.f32.mrf.mxu0
    %v2234 = vadd.f32 %v2220, %v2233
    %v2235 = vpop.f32.mrf.mxu0
    %v2236 = vadd.f32 %v2222, %v2235
    %2237 = vdwg.mxu0
    %2238 = vmatpush.bf16.msra.mxu0 %v1377
    %2239 = vmatpush.bf16.msra.mxu0 %v1365
    %2240 = vmatpush.bf16.msra.mxu0 %v1353
    %2241 = vmatpush.bf16.msra.mxu0 %v1341
    %2242 = vmatpush.bf16.msra.mxu0 %v1329
    %2243 = vmatpush.bf16.msra.mxu0 %v1317
    %2244 = vmatpush.bf16.msra.mxu0 %v1305
    %2245 = vmatpush.bf16.msra.mxu0 %v1293
    %2246 = vmatmul.bf16.gmra.mxu0 %v101
    %v2247 = vpop.f32.mrf.mxu0
    %v2248 = vadd.f32 %v405, %v2247
    %v2249 = vpop.f32.mrf.mxu0
    %v2250 = vadd.f32 %v405, %v2249
    %2251 = vdwg.mxu0
    %2252 = vmatpush.bf16.msra.mxu0 %v1473
    %2253 = vmatpush.bf16.msra.mxu0 %v1461
    %2254 = vmatpush.bf16.msra.mxu0 %v1449
    %2255 = vmatpush.bf16.msra.mxu0 %v1437
    %2256 = vmatpush.bf16.msra.mxu0 %v1425
    %2257 = vmatpush.bf16.msra.mxu0 %v1413
    %2258 = vmatpush.bf16.msra.mxu0 %v1401
    %2259 = vmatpush.bf16.msra.mxu0 %v1389
    %2260 = vmatmul.bf16.gmra.mxu0 %v102
    %v2261 = vpop.f32.mrf.mxu0
    %v2262 = vadd.f32 %v2248, %v2261
    %v2263 = vpop.f32.mrf.mxu0
    %v2264 = vadd.f32 %v2250, %v2263
    %2265 = vdwg.mxu0
    %2266 = vmatpush.bf16.msra.mxu0 %v1569
    %2267 = vmatpush.bf16.msra.mxu0 %v1557
    %2268 = vmatpush.bf16.msra.mxu0 %v1545
    %2269 = vmatpush.bf16.msra.mxu0 %v1533
    %2270 = vmatpush.bf16.msra.mxu0 %v1521
    %2271 = vmatpush.bf16.msra.mxu0 %v1509
    %2272 = vmatpush.bf16.msra.mxu0 %v1497
    %2273 = vmatpush.bf16.msra.mxu0 %v1485
    %2274 = vmatmul.bf16.gmra.mxu0 %v103
    %v2275 = vpop.f32.mrf.mxu0
    %v2276 = vadd.f32 %v2262, %v2275
    %v2277 = vpop.f32.mrf.mxu0
    %v2278 = vadd.f32 %v2264, %v2277
    %2279 = vdwg.mxu0
    %2280 = vmatpush.bf16.msra.mxu0 %v1378
    %2281 = vmatpush.bf16.msra.mxu0 %v1366
    %2282 = vmatpush.bf16.msra.mxu0 %v1354
    %2283 = vmatpush.bf16.msra.mxu0 %v1342
    %2284 = vmatpush.bf16.msra.mxu0 %v1330
    %2285 = vmatpush.bf16.msra.mxu0 %v1318
    %2286 = vmatpush.bf16.msra.mxu0 %v1306
    %2287 = vmatpush.bf16.msra.mxu0 %v1294
    %2288 = vmatmul.bf16.gmra.mxu0 %v101
    %v2289 = vpop.f32.mrf.mxu0
    %v2290 = vadd.f32 %v406, %v2289
    %v2291 = vpop.f32.mrf.mxu0
    %v2292 = vadd.f32 %v406, %v2291
    %2293 = vdwg.mxu0
    %2294 = vmatpush.bf16.msra.mxu0 %v1474
    %2295 = vmatpush.bf16.msra.mxu0 %v1462
    %2296 = vmatpush.bf16.msra.mxu0 %v1450
    %2297 = vmatpush.bf16.msra.mxu0 %v1438
    %2298 = vmatpush.bf16.msra.mxu0 %v1426
    %2299 = vmatpush.bf16.msra.mxu0 %v1414
    %2300 = vmatpush.bf16.msra.mxu0 %v1402
    %2301 = vmatpush.bf16.msra.mxu0 %v1390
    %2302 = vmatmul.bf16.gmra.mxu0 %v102
    %v2303 = vpop.f32.mrf.mxu0
    %v2304 = vadd.f32 %v2290, %v2303
    %v2305 = vpop.f32.mrf.mxu0
    %v2306 = vadd.f32 %v2292, %v2305
    %2307 = vdwg.mxu0
    %2308 = vmatpush.bf16.msra.mxu0 %v1570
    %2309 = vmatpush.bf16.msra.mxu0 %v1558
    %2310 = vmatpush.bf16.msra.mxu0 %v1546
    %2311 = vmatpush.bf16.msra.mxu0 %v1534
    %2312 = vmatpush.bf16.msra.mxu0 %v1522
    %2313 = vmatpush.bf16.msra.mxu0 %v1510
    %2314 = vmatpush.bf16.msra.mxu0 %v1498
    %2315 = vmatpush.bf16.msra.mxu0 %v1486
    %2316 = vmatmul.bf16.gmra.mxu0 %v103
    %v2317 = vpop.f32.mrf.mxu0
    %v2318 = vadd.f32 %v2304, %v2317
    %v2319 = vpop.f32.mrf.mxu0
    %v2320 = vadd.f32 %v2306, %v2319
    %2321 = vdwg.mxu0
    %2322 = vmatpush.bf16.msra.mxu0 %v1379
    %2323 = vmatpush.bf16.msra.mxu0 %v1367
    %2324 = vmatpush.bf16.msra.mxu0 %v1355
    %2325 = vmatpush.bf16.msra.mxu0 %v1343
    %2326 = vmatpush.bf16.msra.mxu0 %v1331
    %2327 = vmatpush.bf16.msra.mxu0 %v1319
    %2328 = vmatpush.bf16.msra.mxu0 %v1307
    %2329 = vmatpush.bf16.msra.mxu0 %v1295
    %2330 = vmatmul.bf16.gmra.mxu0 %v101
    %v2331 = vpop.f32.mrf.mxu0
    %v2332 = vadd.f32 %v407, %v2331
    %v2333 = vpop.f32.mrf.mxu0
    %v2334 = vadd.f32 %v407, %v2333
    %2335 = vdwg.mxu0
    %2336 = vmatpush.bf16.msra.mxu0 %v1475
    %2337 = vmatpush.bf16.msra.mxu0 %v1463
    %2338 = vmatpush.bf16.msra.mxu0 %v1451
    %2339 = vmatpush.bf16.msra.mxu0 %v1439
    %2340 = vmatpush.bf16.msra.mxu0 %v1427
    %2341 = vmatpush.bf16.msra.mxu0 %v1415
    %2342 = vmatpush.bf16.msra.mxu0 %v1403
    %2343 = vmatpush.bf16.msra.mxu0 %v1391
    %2344 = vmatmul.bf16.gmra.mxu0 %v102
    %v2345 = vpop.f32.mrf.mxu0
    %v2346 = vadd.f32 %v2332, %v2345
    %v2347 = vpop.f32.mrf.mxu0
    %v2348 = vadd.f32 %v2334, %v2347
    %2349 = vdwg.mxu0
    %2350 = vmatpush.bf16.msra.mxu0 %v1571
    %2351 = vmatpush.bf16.msra.mxu0 %v1559
    %2352 = vmatpush.bf16.msra.mxu0 %v1547
    %2353 = vmatpush.bf16.msra.mxu0 %v1535
    %2354 = vmatpush.bf16.msra.mxu0 %v1523
    %2355 = vmatpush.bf16.msra.mxu0 %v1511
    %2356 = vmatpush.bf16.msra.mxu0 %v1499
    %2357 = vmatpush.bf16.msra.mxu0 %v1487
    %2358 = vmatmul.bf16.gmra.mxu0 %v103
    %v2359 = vpop.f32.mrf.mxu0
    %v2360 = vadd.f32 %v2346, %v2359
    %v2361 = vpop.f32.mrf.mxu0
    %v2362 = vadd.f32 %v2348, %v2361
    %2363 = vdwg.mxu0
    %v2364 = vmax.f32 %v1898, 0.0
    %v2365 = vmax.f32 %v1940, 0.0
    %v2366 = vmax.f32 %v1982, 0.0
    %v2367 = vmax.f32 %v2024, 0.0
    %v2368 = vmax.f32 %v2066, 0.0
    %v2369 = vmax.f32 %v2108, 0.0
    %v2370 = vmax.f32 %v2150, 0.0
    %v2371 = vmax.f32 %v2192, 0.0
    %v2372 = vmax.f32 %v2234, 0.0
    %v2373 = vmax.f32 %v2276, 0.0
    %v2374 = vmax.f32 %v2318, 0.0
    %v2375 = vmax.f32 %v2360, 0.0
    %v2376 = vmax.f32 %v1900, 0.0
    %v2377 = vmax.f32 %v1942, 0.0
    %v2378 = vmax.f32 %v1984, 0.0
    %v2379 = vmax.f32 %v2026, 0.0
    %v2380 = vmax.f32 %v2068, 0.0
    %v2381 = vmax.f32 %v2110, 0.0
    %v2382 = vmax.f32 %v2152, 0.0
    %v2383 = vmax.f32 %v2194, 0.0
    %v2384 = vmax.f32 %v2236, 0.0
    %v2385 = vmax.f32 %v2278, 0.0
    %v2386 = vmax.f32 %v2320, 0.0
    %v2387 = vmax.f32 %v2362, 0.0
    %v2388 = vpack.c.bf16 %v2365, %v2364
    %v2389 = vpack.c.bf16 %v2367, %v2366
    %v2390 = vpack.c.bf16 %v2369, %v2368
    %v2391 = vpack.c.bf16 %v2371, %v2370
    %v2392 = vpack.c.bf16 %v2373, %v2372
    %v2393 = vpack.c.bf16 %v2375, %v2374
    %v2394 = vpack.c.bf16 %v2377, %v2376
    %v2395 = vpack.c.bf16 %v2379, %v2378
    %v2396 = vpack.c.bf16 %v2381, %v2380
    %v2397 = vpack.c.bf16 %v2383, %v2382
    %v2398 = vpack.c.bf16 %v2385, %v2384
    %v2399 = vpack.c.bf16 %v2387, %v2386
    %2400 = vst [vmem:[#allocation2] sm:$0xff] %v2388
    %2401 = vst [vmem:[#allocation2 + $0x8] sm:$0xff] %v2389
    %2402 = vst [vmem:[#allocation2 + $0x10] sm:$0xff] %v2390
    %2403 = vst [vmem:[#allocation2 + $0x18] sm:$0xff] %v2391
    %2404 = vst [vmem:[#allocation2 + $0x20] sm:$0xff] %v2392
    %2405 = vst [vmem:[#allocation2 + $0x28] sm:$0xff] %v2393
    %2406 = vst [vmem:[#allocation2 + $0x30] sm:$0xff] %v2394
    %2407 = vst [vmem:[#allocation2 + $0x38] sm:$0xff] %v2395
    %2408 = vst [vmem:[#allocation2 + $0x40] sm:$0xff] %v2396
    %2409 = vst [vmem:[#allocation2 + $0x48] sm:$0xff] %v2397
    %2410 = vst [vmem:[#allocation2 + $0x50] sm:$0xff] %v2398
    %2411 = vst [vmem:[#allocation2 + $0x58] sm:$0xff] %v2399
    %v2412 = vld [vmem:[#allocation2] sm:$0xff]
    %v2413 = vld [vmem:[#allocation2 + $0x8] sm:$0xff]
    %v2414 = vld [vmem:[#allocation2 + $0x10] sm:$0xff]
    %v2415 = vld [vmem:[#allocation2 + $0x18] sm:$0xff]
    %v2416 = vld [vmem:[#allocation2 + $0x20] sm:$0xff]
    %v2417 = vld [vmem:[#allocation2 + $0x28] sm:$0xff]
    %v2418 = vld [vmem:[#allocation2 + $0x30] sm:$0xff]
    %v2419 = vld [vmem:[#allocation2 + $0x38] sm:$0xff]
    %v2420 = vld [vmem:[#allocation2 + $0x40] sm:$0xff]
    %v2421 = vld [vmem:[#allocation2 + $0x48] sm:$0xff]
    %v2422 = vld [vmem:[#allocation2 + $0x50] sm:$0xff]
    %v2423 = vld [vmem:[#allocation2 + $0x58] sm:$0xff]
    %v2424 = vld [vmem:[#allocation9] sm:$0xff]
    %v2425 = vld [vmem:[#allocation9 + $0x8] sm:$0xf]
    %v2426 = vld [vmem:[#allocation9 + $0xc] sm:$0xff]
    %v2427 = vld [vmem:[#allocation9 + $0x14] sm:$0xf]
    %v2428 = vld [vmem:[#allocation9 + $0x18] sm:$0xff]
    %v2429 = vld [vmem:[#allocation9 + $0x20] sm:$0xf]
    %v2430 = vld [vmem:[#allocation9 + $0x24] sm:$0xff]
    %v2431 = vld [vmem:[#allocation9 + $0x2c] sm:$0xf]
    %v2432 = vld [vmem:[#allocation9 + $0x30] sm:$0xff]
    %v2433 = vld [vmem:[#allocation9 + $0x38] sm:$0xf]
    %v2434 = vld [vmem:[#allocation9 + $0x3c] sm:$0xff]
    %v2435 = vld [vmem:[#allocation9 + $0x44] sm:$0xf]
    %v2436 = vld [vmem:[#allocation9 + $0x48] sm:$0xff]
    %v2437 = vld [vmem:[#allocation9 + $0x50] sm:$0xf]
    %v2438 = vld [vmem:[#allocation9 + $0x54] sm:$0xff]
    %v2439 = vld [vmem:[#allocation9 + $0x5c] sm:$0xf]
    %v2440 = vld [vmem:[#allocation9 + $0x60] sm:$0xff]
    %v2441 = vld [vmem:[#allocation9 + $0x68] sm:$0xf]
    %v2442 = vld [vmem:[#allocation9 + $0x6c] sm:$0xff]
    %v2443 = vld [vmem:[#allocation9 + $0x74] sm:$0xf]
    %v2444 = vld [vmem:[#allocation9 + $0x78] sm:$0xff]
    %v2445 = vld [vmem:[#allocation9 + $0x80] sm:$0xf]
    %v2446 = vld [vmem:[#allocation9 + $0x84] sm:$0xff]
    %v2447 = vld [vmem:[#allocation9 + $0x8c] sm:$0xf]
    %v2448 = vld [vmem:[#allocation9 + $0x90] sm:$0xff]
    %v2449 = vld [vmem:[#allocation9 + $0x98] sm:$0xf]
    %v2450 = vld [vmem:[#allocation9 + $0x9c] sm:$0xff]
    %v2451 = vld [vmem:[#allocation9 + $0xa4] sm:$0xf]
    %v2452 = vld [vmem:[#allocation9 + $0xa8] sm:$0xff]
    %v2453 = vld [vmem:[#allocation9 + $0xb0] sm:$0xf]
    %v2454 = vld [vmem:[#allocation9 + $0xb4] sm:$0xff]
    %v2455 = vld [vmem:[#allocation9 + $0xbc] sm:$0xf]
    %v2456 = vld [vmem:[#allocation9 + $0xc0] sm:$0xff]
    %v2457 = vld [vmem:[#allocation9 + $0xc8] sm:$0xf]
    %v2458 = vld [vmem:[#allocation9 + $0xcc] sm:$0xff]
    %v2459 = vld [vmem:[#allocation9 + $0xd4] sm:$0xf]
    %v2460 = vld [vmem:[#allocation9 + $0xd8] sm:$0xff]
    %v2461 = vld [vmem:[#allocation9 + $0xe0] sm:$0xf]
    %v2462 = vld [vmem:[#allocation9 + $0xe4] sm:$0xff]
    %v2463 = vld [vmem:[#allocation9 + $0xec] sm:$0xf]
    %v2464 = vld [vmem:[#allocation9 + $0xf0] sm:$0xff]
    %v2465 = vld [vmem:[#allocation9 + $0xf8] sm:$0xf]
    %v2466 = vld [vmem:[#allocation9 + $0xfc] sm:$0xff]
    %v2467 = vld [vmem:[#allocation9 + $0x104] sm:$0xf]
    %v2468 = vld [vmem:[#allocation9 + $0x108] sm:$0xff]
    %v2469 = vld [vmem:[#allocation9 + $0x110] sm:$0xf]
    %v2470 = vld [vmem:[#allocation9 + $0x114] sm:$0xff]
    %v2471 = vld [vmem:[#allocation9 + $0x11c] sm:$0xf]
    %v2472 = vld [vmem:[#allocation9 + $0x120] sm:$0xff]
    %v2473 = vld [vmem:[#allocation9 + $0x128] sm:$0xf]
    %v2474 = vld [vmem:[#allocation9 + $0x12c] sm:$0xff]
    %v2475 = vld [vmem:[#allocation9 + $0x134] sm:$0xf]
    %v2476 = vld [vmem:[#allocation9 + $0x138] sm:$0xff]
    %v2477 = vld [vmem:[#allocation9 + $0x140] sm:$0xf]
    %v2478 = vld [vmem:[#allocation9 + $0x144] sm:$0xff]
    %v2479 = vld [vmem:[#allocation9 + $0x14c] sm:$0xf]
    %v2480 = vld [vmem:[#allocation9 + $0x150] sm:$0xff]
    %v2481 = vld [vmem:[#allocation9 + $0x158] sm:$0xf]
    %v2482 = vld [vmem:[#allocation9 + $0x15c] sm:$0xff]
    %v2483 = vld [vmem:[#allocation9 + $0x164] sm:$0xf]
    %v2484 = vld [vmem:[#allocation9 + $0x168] sm:$0xff]
    %v2485 = vld [vmem:[#allocation9 + $0x170] sm:$0xf]
    %v2486 = vld [vmem:[#allocation9 + $0x174] sm:$0xff]
    %v2487 = vld [vmem:[#allocation9 + $0x17c] sm:$0xf]
    %v2488 = vld [vmem:[#allocation9 + $0x180] sm:$0xff]
    %v2489 = vld [vmem:[#allocation9 + $0x188] sm:$0xf]
    %v2490 = vld [vmem:[#allocation9 + $0x18c] sm:$0xff]
    %v2491 = vld [vmem:[#allocation9 + $0x194] sm:$0xf]
    %v2492 = vld [vmem:[#allocation9 + $0x198] sm:$0xff]
    %v2493 = vld [vmem:[#allocation9 + $0x1a0] sm:$0xf]
    %v2494 = vld [vmem:[#allocation9 + $0x1a4] sm:$0xff]
    %v2495 = vld [vmem:[#allocation9 + $0x1ac] sm:$0xf]
    %v2496 = vld [vmem:[#allocation9 + $0x1b0] sm:$0xff]
    %v2497 = vld [vmem:[#allocation9 + $0x1b8] sm:$0xf]
    %v2498 = vld [vmem:[#allocation9 + $0x1bc] sm:$0xff]
    %v2499 = vld [vmem:[#allocation9 + $0x1c4] sm:$0xf]
    %v2500 = vld [vmem:[#allocation9 + $0x1c8] sm:$0xff]
    %v2501 = vld [vmem:[#allocation9 + $0x1d0] sm:$0xf]
    %v2502 = vld [vmem:[#allocation9 + $0x1d4] sm:$0xff]
    %v2503 = vld [vmem:[#allocation9 + $0x1dc] sm:$0xf]
    %v2504 = vld [vmem:[#allocation9 + $0x1e0] sm:$0xff]
    %v2505 = vld [vmem:[#allocation9 + $0x1e8] sm:$0xf]
    %v2506 = vld [vmem:[#allocation9 + $0x1ec] sm:$0xff]
    %v2507 = vld [vmem:[#allocation9 + $0x1f4] sm:$0xf]
    %v2508 = vld [vmem:[#allocation9 + $0x1f8] sm:$0xff]
    %v2509 = vld [vmem:[#allocation9 + $0x200] sm:$0xf]
    %v2510 = vld [vmem:[#allocation9 + $0x204] sm:$0xff]
    %v2511 = vld [vmem:[#allocation9 + $0x20c] sm:$0xf]
    %v2512 = vld [vmem:[#allocation9 + $0x210] sm:$0xff]
    %v2513 = vld [vmem:[#allocation9 + $0x218] sm:$0xf]
    %v2514 = vld [vmem:[#allocation9 + $0x21c] sm:$0xff]
    %v2515 = vld [vmem:[#allocation9 + $0x224] sm:$0xf]
    %v2516 = vld [vmem:[#allocation9 + $0x228] sm:$0xff]
    %v2517 = vld [vmem:[#allocation9 + $0x230] sm:$0xf]
    %v2518 = vld [vmem:[#allocation9 + $0x234] sm:$0xff]
    %v2519 = vld [vmem:[#allocation9 + $0x23c] sm:$0xf]
    %v2520 = vld [vmem:[#allocation9 + $0x240] sm:$0xff]
    %v2521 = vld [vmem:[#allocation9 + $0x248] sm:$0xf]
    %v2522 = vld [vmem:[#allocation9 + $0x24c] sm:$0xff]
    %v2523 = vld [vmem:[#allocation9 + $0x254] sm:$0xf]
    %v2524 = vld [vmem:[#allocation9 + $0x258] sm:$0xff]
    %v2525 = vld [vmem:[#allocation9 + $0x260] sm:$0xf]
    %v2526 = vld [vmem:[#allocation9 + $0x264] sm:$0xff]
    %v2527 = vld [vmem:[#allocation9 + $0x26c] sm:$0xf]
    %v2528 = vld [vmem:[#allocation9 + $0x270] sm:$0xff]
    %v2529 = vld [vmem:[#allocation9 + $0x278] sm:$0xf]
    %v2530 = vld [vmem:[#allocation9 + $0x27c] sm:$0xff]
    %v2531 = vld [vmem:[#allocation9 + $0x284] sm:$0xf]
    %v2532 = vld [vmem:[#allocation9 + $0x288] sm:$0xff]
    %v2533 = vld [vmem:[#allocation9 + $0x290] sm:$0xf]
    %v2534 = vld [vmem:[#allocation9 + $0x294] sm:$0xff]
    %v2535 = vld [vmem:[#allocation9 + $0x29c] sm:$0xf]
    %v2536 = vld [vmem:[#allocation9 + $0x2a0] sm:$0xff]
    %v2537 = vld [vmem:[#allocation9 + $0x2a8] sm:$0xf]
    %v2538 = vld [vmem:[#allocation9 + $0x2ac] sm:$0xff]
    %v2539 = vld [vmem:[#allocation9 + $0x2b4] sm:$0xf]
    %v2540 = vld [vmem:[#allocation9 + $0x2b8] sm:$0xff]
    %v2541 = vld [vmem:[#allocation9 + $0x2c0] sm:$0xf]
    %v2542 = vld [vmem:[#allocation9 + $0x2c4] sm:$0xff]
    %v2543 = vld [vmem:[#allocation9 + $0x2cc] sm:$0xf]
    %v2544 = vld [vmem:[#allocation9 + $0x2d0] sm:$0xff]
    %v2545 = vld [vmem:[#allocation9 + $0x2d8] sm:$0xf]
    %v2546 = vld [vmem:[#allocation9 + $0x2dc] sm:$0xff]
    %v2547 = vld [vmem:[#allocation9 + $0x2e4] sm:$0xf]
    %v2548 = vld [vmem:[#allocation9 + $0x2e8] sm:$0xff]
    %v2549 = vld [vmem:[#allocation9 + $0x2f0] sm:$0xf]
    %v2550 = vld [vmem:[#allocation9 + $0x2f4] sm:$0xff]
    %v2551 = vld [vmem:[#allocation9 + $0x2fc] sm:$0xf]
    %v2552 = vld [vmem:[#allocation9 + $0x300] sm:$0xff]
    %v2553 = vld [vmem:[#allocation9 + $0x308] sm:$0xf]
    %v2554 = vld [vmem:[#allocation9 + $0x30c] sm:$0xff]
    %v2555 = vld [vmem:[#allocation9 + $0x314] sm:$0xf]
    %v2556 = vld [vmem:[#allocation9 + $0x318] sm:$0xff]
    %v2557 = vld [vmem:[#allocation9 + $0x320] sm:$0xf]
    %v2558 = vld [vmem:[#allocation9 + $0x324] sm:$0xff]
    %v2559 = vld [vmem:[#allocation9 + $0x32c] sm:$0xf]
    %v2560 = vld [vmem:[#allocation9 + $0x330] sm:$0xff]
    %v2561 = vld [vmem:[#allocation9 + $0x338] sm:$0xf]
    %v2562 = vld [vmem:[#allocation9 + $0x33c] sm:$0xff]
    %v2563 = vld [vmem:[#allocation9 + $0x344] sm:$0xf]
    %v2564 = vld [vmem:[#allocation9 + $0x348] sm:$0xff]
    %v2565 = vld [vmem:[#allocation9 + $0x350] sm:$0xf]
    %v2566 = vld [vmem:[#allocation9 + $0x354] sm:$0xff]
    %v2567 = vld [vmem:[#allocation9 + $0x35c] sm:$0xf]
    %v2568 = vld [vmem:[#allocation9 + $0x360] sm:$0xff]
    %v2569 = vld [vmem:[#allocation9 + $0x368] sm:$0xf]
    %v2570 = vld [vmem:[#allocation9 + $0x36c] sm:$0xff]
    %v2571 = vld [vmem:[#allocation9 + $0x374] sm:$0xf]
    %v2572 = vld [vmem:[#allocation9 + $0x378] sm:$0xff]
    %v2573 = vld [vmem:[#allocation9 + $0x380] sm:$0xf]
    %v2574 = vld [vmem:[#allocation9 + $0x384] sm:$0xff]
    %v2575 = vld [vmem:[#allocation9 + $0x38c] sm:$0xf]
    %v2576 = vld [vmem:[#allocation9 + $0x390] sm:$0xff]
    %v2577 = vld [vmem:[#allocation9 + $0x398] sm:$0xf]
    %v2578 = vld [vmem:[#allocation9 + $0x39c] sm:$0xff]
    %v2579 = vld [vmem:[#allocation9 + $0x3a4] sm:$0xf]
    %v2580 = vld [vmem:[#allocation9 + $0x3a8] sm:$0xff]
    %v2581 = vld [vmem:[#allocation9 + $0x3b0] sm:$0xf]
    %v2582 = vld [vmem:[#allocation9 + $0x3b4] sm:$0xff]
    %v2583 = vld [vmem:[#allocation9 + $0x3bc] sm:$0xf]
    %v2584 = vld [vmem:[#allocation9 + $0x3c0] sm:$0xff]
    %v2585 = vld [vmem:[#allocation9 + $0x3c8] sm:$0xf]
    %v2586 = vld [vmem:[#allocation9 + $0x3cc] sm:$0xff]
    %v2587 = vld [vmem:[#allocation9 + $0x3d4] sm:$0xf]
    %v2588 = vld [vmem:[#allocation9 + $0x3d8] sm:$0xff]
    %v2589 = vld [vmem:[#allocation9 + $0x3e0] sm:$0xf]
    %v2590 = vld [vmem:[#allocation9 + $0x3e4] sm:$0xff]
    %v2591 = vld [vmem:[#allocation9 + $0x3ec] sm:$0xf]
    %v2592 = vld [vmem:[#allocation9 + $0x3f0] sm:$0xff]
    %v2593 = vld [vmem:[#allocation9 + $0x3f8] sm:$0xf]
    %v2594 = vld [vmem:[#allocation9 + $0x3fc] sm:$0xff]
    %v2595 = vld [vmem:[#allocation9 + $0x404] sm:$0xf]
    %v2596 = vld [vmem:[#allocation9 + $0x408] sm:$0xff]
    %v2597 = vld [vmem:[#allocation9 + $0x410] sm:$0xf]
    %v2598 = vld [vmem:[#allocation9 + $0x414] sm:$0xff]
    %v2599 = vld [vmem:[#allocation9 + $0x41c] sm:$0xf]
    %v2600 = vld [vmem:[#allocation9 + $0x420] sm:$0xff]
    %v2601 = vld [vmem:[#allocation9 + $0x428] sm:$0xf]
    %v2602 = vld [vmem:[#allocation9 + $0x42c] sm:$0xff]
    %v2603 = vld [vmem:[#allocation9 + $0x434] sm:$0xf]
    %v2604 = vld [vmem:[#allocation9 + $0x438] sm:$0xff]
    %v2605 = vld [vmem:[#allocation9 + $0x440] sm:$0xf]
    %v2606 = vld [vmem:[#allocation9 + $0x444] sm:$0xff]
    %v2607 = vld [vmem:[#allocation9 + $0x44c] sm:$0xf]
    %v2608 = vld [vmem:[#allocation9 + $0x450] sm:$0xff]
    %v2609 = vld [vmem:[#allocation9 + $0x458] sm:$0xf]
    %v2610 = vld [vmem:[#allocation9 + $0x45c] sm:$0xff]
    %v2611 = vld [vmem:[#allocation9 + $0x464] sm:$0xf]
    %v2612 = vld [vmem:[#allocation9 + $0x468] sm:$0xff]
    %v2613 = vld [vmem:[#allocation9 + $0x470] sm:$0xf]
    %v2614 = vld [vmem:[#allocation9 + $0x474] sm:$0xff]
    %v2615 = vld [vmem:[#allocation9 + $0x47c] sm:$0xf]
    %v2616 = vld [vmem:[#allocation9 + $0x480] sm:$0xff]
    %v2617 = vld [vmem:[#allocation9 + $0x488] sm:$0xf]
    %v2618 = vld [vmem:[#allocation9 + $0x48c] sm:$0xff]
    %v2619 = vld [vmem:[#allocation9 + $0x494] sm:$0xf]
    %v2620 = vld [vmem:[#allocation9 + $0x498] sm:$0xff]
    %v2621 = vld [vmem:[#allocation9 + $0x4a0] sm:$0xf]
    %v2622 = vld [vmem:[#allocation9 + $0x4a4] sm:$0xff]
    %v2623 = vld [vmem:[#allocation9 + $0x4ac] sm:$0xf]
    %v2624 = vld [vmem:[#allocation9 + $0x4b0] sm:$0xff]
    %v2625 = vld [vmem:[#allocation9 + $0x4b8] sm:$0xf]
    %v2626 = vld [vmem:[#allocation9 + $0x4bc] sm:$0xff]
    %v2627 = vld [vmem:[#allocation9 + $0x4c4] sm:$0xf]
    %v2628 = vld [vmem:[#allocation9 + $0x4c8] sm:$0xff]
    %v2629 = vld [vmem:[#allocation9 + $0x4d0] sm:$0xf]
    %v2630 = vld [vmem:[#allocation9 + $0x4d4] sm:$0xff]
    %v2631 = vld [vmem:[#allocation9 + $0x4dc] sm:$0xf]
    %v2632 = vld [vmem:[#allocation9 + $0x4e0] sm:$0xff]
    %v2633 = vld [vmem:[#allocation9 + $0x4e8] sm:$0xf]
    %v2634 = vld [vmem:[#allocation9 + $0x4ec] sm:$0xff]
    %v2635 = vld [vmem:[#allocation9 + $0x4f4] sm:$0xf]
    %v2636 = vld [vmem:[#allocation9 + $0x4f8] sm:$0xff]
    %v2637 = vld [vmem:[#allocation9 + $0x500] sm:$0xf]
    %v2638 = vld [vmem:[#allocation9 + $0x504] sm:$0xff]
    %v2639 = vld [vmem:[#allocation9 + $0x50c] sm:$0xf]
    %v2640 = vld [vmem:[#allocation9 + $0x510] sm:$0xff]
    %v2641 = vld [vmem:[#allocation9 + $0x518] sm:$0xf]
    %v2642 = vld [vmem:[#allocation9 + $0x51c] sm:$0xff]
    %v2643 = vld [vmem:[#allocation9 + $0x524] sm:$0xf]
    %v2644 = vld [vmem:[#allocation9 + $0x528] sm:$0xff]
    %v2645 = vld [vmem:[#allocation9 + $0x530] sm:$0xf]
    %v2646 = vld [vmem:[#allocation9 + $0x534] sm:$0xff]
    %v2647 = vld [vmem:[#allocation9 + $0x53c] sm:$0xf]
    %v2648 = vld [vmem:[#allocation9 + $0x540] sm:$0xff]
    %v2649 = vld [vmem:[#allocation9 + $0x548] sm:$0xf]
    %v2650 = vld [vmem:[#allocation9 + $0x54c] sm:$0xff]
    %v2651 = vld [vmem:[#allocation9 + $0x554] sm:$0xf]
    %v2652 = vld [vmem:[#allocation9 + $0x558] sm:$0xff]
    %v2653 = vld [vmem:[#allocation9 + $0x560] sm:$0xf]
    %v2654 = vld [vmem:[#allocation9 + $0x564] sm:$0xff]
    %v2655 = vld [vmem:[#allocation9 + $0x56c] sm:$0xf]
    %v2656 = vld [vmem:[#allocation9 + $0x570] sm:$0xff]
    %v2657 = vld [vmem:[#allocation9 + $0x578] sm:$0xf]
    %v2658 = vld [vmem:[#allocation9 + $0x57c] sm:$0xff]
    %v2659 = vld [vmem:[#allocation9 + $0x584] sm:$0xf]
    %v2660 = vld [vmem:[#allocation9 + $0x588] sm:$0xff]
    %v2661 = vld [vmem:[#allocation9 + $0x590] sm:$0xf]
    %v2662 = vld [vmem:[#allocation9 + $0x594] sm:$0xff]
    %v2663 = vld [vmem:[#allocation9 + $0x59c] sm:$0xf]
    %v2664 = vld [vmem:[#allocation9 + $0x5a0] sm:$0xff]
    %v2665 = vld [vmem:[#allocation9 + $0x5a8] sm:$0xf]
    %v2666 = vld [vmem:[#allocation9 + $0x5ac] sm:$0xff]
    %v2667 = vld [vmem:[#allocation9 + $0x5b4] sm:$0xf]
    %v2668 = vld [vmem:[#allocation9 + $0x5b8] sm:$0xff]
    %v2669 = vld [vmem:[#allocation9 + $0x5c0] sm:$0xf]
    %v2670 = vld [vmem:[#allocation9 + $0x5c4] sm:$0xff]
    %v2671 = vld [vmem:[#allocation9 + $0x5cc] sm:$0xf]
    %v2672 = vld [vmem:[#allocation9 + $0x5d0] sm:$0xff]
    %v2673 = vld [vmem:[#allocation9 + $0x5d8] sm:$0xf]
    %v2674 = vld [vmem:[#allocation9 + $0x5dc] sm:$0xff]
    %v2675 = vld [vmem:[#allocation9 + $0x5e4] sm:$0xf]
    %v2676 = vld [vmem:[#allocation9 + $0x5e8] sm:$0xff]
    %v2677 = vld [vmem:[#allocation9 + $0x5f0] sm:$0xf]
    %v2678 = vld [vmem:[#allocation9 + $0x5f4] sm:$0xff]
    %v2679 = vld [vmem:[#allocation9 + $0x5fc] sm:$0xf]
    %v2680 = vld [vmem:[#allocation9 + $0x600] sm:$0xff]
    %v2681 = vld [vmem:[#allocation9 + $0x608] sm:$0xf]
    %v2682 = vld [vmem:[#allocation9 + $0x60c] sm:$0xff]
    %v2683 = vld [vmem:[#allocation9 + $0x614] sm:$0xf]
    %v2684 = vld [vmem:[#allocation9 + $0x618] sm:$0xff]
    %v2685 = vld [vmem:[#allocation9 + $0x620] sm:$0xf]
    %v2686 = vld [vmem:[#allocation9 + $0x624] sm:$0xff]
    %v2687 = vld [vmem:[#allocation9 + $0x62c] sm:$0xf]
    %v2688 = vld [vmem:[#allocation9 + $0x630] sm:$0xff]
    %v2689 = vld [vmem:[#allocation9 + $0x638] sm:$0xf]
    %v2690 = vld [vmem:[#allocation9 + $0x63c] sm:$0xff]
    %v2691 = vld [vmem:[#allocation9 + $0x644] sm:$0xf]
    %v2692 = vld [vmem:[#allocation9 + $0x648] sm:$0xff]
    %v2693 = vld [vmem:[#allocation9 + $0x650] sm:$0xf]
    %v2694 = vld [vmem:[#allocation9 + $0x654] sm:$0xff]
    %v2695 = vld [vmem:[#allocation9 + $0x65c] sm:$0xf]
    %v2696 = vld [vmem:[#allocation9 + $0x660] sm:$0xff]
    %v2697 = vld [vmem:[#allocation9 + $0x668] sm:$0xf]
    %v2698 = vld [vmem:[#allocation9 + $0x66c] sm:$0xff]
    %v2699 = vld [vmem:[#allocation9 + $0x674] sm:$0xf]
    %v2700 = vld [vmem:[#allocation9 + $0x678] sm:$0xff]
    %v2701 = vld [vmem:[#allocation9 + $0x680] sm:$0xf]
    %v2702 = vld [vmem:[#allocation9 + $0x684] sm:$0xff]
    %v2703 = vld [vmem:[#allocation9 + $0x68c] sm:$0xf]
    %v2704 = vld [vmem:[#allocation9 + $0x690] sm:$0xff]
    %v2705 = vld [vmem:[#allocation9 + $0x698] sm:$0xf]
    %v2706 = vld [vmem:[#allocation9 + $0x69c] sm:$0xff]
    %v2707 = vld [vmem:[#allocation9 + $0x6a4] sm:$0xf]
    %v2708 = vld [vmem:[#allocation9 + $0x6a8] sm:$0xff]
    %v2709 = vld [vmem:[#allocation9 + $0x6b0] sm:$0xf]
    %v2710 = vld [vmem:[#allocation9 + $0x6b4] sm:$0xff]
    %v2711 = vld [vmem:[#allocation9 + $0x6bc] sm:$0xf]
    %v2712 = vld [vmem:[#allocation9 + $0x6c0] sm:$0xff]
    %v2713 = vld [vmem:[#allocation9 + $0x6c8] sm:$0xf]
    %v2714 = vld [vmem:[#allocation9 + $0x6cc] sm:$0xff]
    %v2715 = vld [vmem:[#allocation9 + $0x6d4] sm:$0xf]
    %v2716 = vld [vmem:[#allocation9 + $0x6d8] sm:$0xff]
    %v2717 = vld [vmem:[#allocation9 + $0x6e0] sm:$0xf]
    %v2718 = vld [vmem:[#allocation9 + $0x6e4] sm:$0xff]
    %v2719 = vld [vmem:[#allocation9 + $0x6ec] sm:$0xf]
    %v2720 = vld [vmem:[#allocation9 + $0x6f0] sm:$0xff]
    %v2721 = vld [vmem:[#allocation9 + $0x6f8] sm:$0xf]
    %v2722 = vld [vmem:[#allocation9 + $0x6fc] sm:$0xff]
    %v2723 = vld [vmem:[#allocation9 + $0x704] sm:$0xf]
    %v2724 = vld [vmem:[#allocation9 + $0x708] sm:$0xff]
    %v2725 = vld [vmem:[#allocation9 + $0x710] sm:$0xf]
    %v2726 = vld [vmem:[#allocation9 + $0x714] sm:$0xff]
    %v2727 = vld [vmem:[#allocation9 + $0x71c] sm:$0xf]
    %v2728 = vld [vmem:[#allocation9 + $0x720] sm:$0xff]
    %v2729 = vld [vmem:[#allocation9 + $0x728] sm:$0xf]
    %v2730 = vld [vmem:[#allocation9 + $0x72c] sm:$0xff]
    %v2731 = vld [vmem:[#allocation9 + $0x734] sm:$0xf]
    %v2732 = vld [vmem:[#allocation9 + $0x738] sm:$0xff]
    %v2733 = vld [vmem:[#allocation9 + $0x740] sm:$0xf]
    %v2734 = vld [vmem:[#allocation9 + $0x744] sm:$0xff]
    %v2735 = vld [vmem:[#allocation9 + $0x74c] sm:$0xf]
    %v2736 = vld [vmem:[#allocation9 + $0x750] sm:$0xff]
    %v2737 = vld [vmem:[#allocation9 + $0x758] sm:$0xf]
    %v2738 = vld [vmem:[#allocation9 + $0x75c] sm:$0xff]
    %v2739 = vld [vmem:[#allocation9 + $0x764] sm:$0xf]
    %v2740 = vld [vmem:[#allocation9 + $0x768] sm:$0xff]
    %v2741 = vld [vmem:[#allocation9 + $0x770] sm:$0xf]
    %v2742 = vld [vmem:[#allocation9 + $0x774] sm:$0xff]
    %v2743 = vld [vmem:[#allocation9 + $0x77c] sm:$0xf]
    %v2744 = vld [vmem:[#allocation9 + $0x780] sm:$0xff]
    %v2745 = vld [vmem:[#allocation9 + $0x788] sm:$0xf]
    %v2746 = vld [vmem:[#allocation9 + $0x78c] sm:$0xff]
    %v2747 = vld [vmem:[#allocation9 + $0x794] sm:$0xf]
    %v2748 = vld [vmem:[#allocation9 + $0x798] sm:$0xff]
    %v2749 = vld [vmem:[#allocation9 + $0x7a0] sm:$0xf]
    %v2750 = vld [vmem:[#allocation9 + $0x7a4] sm:$0xff]
    %v2751 = vld [vmem:[#allocation9 + $0x7ac] sm:$0xf]
    %v2752 = vld [vmem:[#allocation9 + $0x7b0] sm:$0xff]
    %v2753 = vld [vmem:[#allocation9 + $0x7b8] sm:$0xf]
    %v2754 = vld [vmem:[#allocation9 + $0x7bc] sm:$0xff]
    %v2755 = vld [vmem:[#allocation9 + $0x7c4] sm:$0xf]
    %v2756 = vld [vmem:[#allocation9 + $0x7c8] sm:$0xff]
    %v2757 = vld [vmem:[#allocation9 + $0x7d0] sm:$0xf]
    %v2758 = vld [vmem:[#allocation9 + $0x7d4] sm:$0xff]
    %v2759 = vld [vmem:[#allocation9 + $0x7dc] sm:$0xf]
    %v2760 = vld [vmem:[#allocation9 + $0x7e0] sm:$0xff]
    %v2761 = vld [vmem:[#allocation9 + $0x7e8] sm:$0xf]
    %v2762 = vld [vmem:[#allocation9 + $0x7ec] sm:$0xff]
    %v2763 = vld [vmem:[#allocation9 + $0x7f4] sm:$0xf]
    %v2764 = vld [vmem:[#allocation9 + $0x7f8] sm:$0xff]
    %v2765 = vld [vmem:[#allocation9 + $0x800] sm:$0xf]
    %v2766 = vld [vmem:[#allocation9 + $0x804] sm:$0xff]
    %v2767 = vld [vmem:[#allocation9 + $0x80c] sm:$0xf]
    %v2768 = vld [vmem:[#allocation9 + $0x810] sm:$0xff]
    %v2769 = vld [vmem:[#allocation9 + $0x818] sm:$0xf]
    %v2770 = vld [vmem:[#allocation9 + $0x81c] sm:$0xff]
    %v2771 = vld [vmem:[#allocation9 + $0x824] sm:$0xf]
    %v2772 = vld [vmem:[#allocation9 + $0x828] sm:$0xff]
    %v2773 = vld [vmem:[#allocation9 + $0x830] sm:$0xf]
    %v2774 = vld [vmem:[#allocation9 + $0x834] sm:$0xff]
    %v2775 = vld [vmem:[#allocation9 + $0x83c] sm:$0xf]
    %v2776 = vld [vmem:[#allocation9 + $0x840] sm:$0xff]
    %v2777 = vld [vmem:[#allocation9 + $0x848] sm:$0xf]
    %v2778 = vld [vmem:[#allocation9 + $0x84c] sm:$0xff]
    %v2779 = vld [vmem:[#allocation9 + $0x854] sm:$0xf]
    %v2780 = vld [vmem:[#allocation9 + $0x858] sm:$0xff]
    %v2781 = vld [vmem:[#allocation9 + $0x860] sm:$0xf]
    %v2782 = vld [vmem:[#allocation9 + $0x864] sm:$0xff]
    %v2783 = vld [vmem:[#allocation9 + $0x86c] sm:$0xf]
    %v2784 = vld [vmem:[#allocation9 + $0x870] sm:$0xff]
    %v2785 = vld [vmem:[#allocation9 + $0x878] sm:$0xf]
    %v2786 = vld [vmem:[#allocation9 + $0x87c] sm:$0xff]
    %v2787 = vld [vmem:[#allocation9 + $0x884] sm:$0xf]
    %v2788 = vld [vmem:[#allocation9 + $0x888] sm:$0xff]
    %v2789 = vld [vmem:[#allocation9 + $0x890] sm:$0xf]
    %v2790 = vld [vmem:[#allocation9 + $0x894] sm:$0xff]
    %v2791 = vld [vmem:[#allocation9 + $0x89c] sm:$0xf]
    %v2792 = vld [vmem:[#allocation9 + $0x8a0] sm:$0xff]
    %v2793 = vld [vmem:[#allocation9 + $0x8a8] sm:$0xf]
    %v2794 = vld [vmem:[#allocation9 + $0x8ac] sm:$0xff]
    %v2795 = vld [vmem:[#allocation9 + $0x8b4] sm:$0xf]
    %v2796 = vld [vmem:[#allocation9 + $0x8b8] sm:$0xff]
    %v2797 = vld [vmem:[#allocation9 + $0x8c0] sm:$0xf]
    %v2798 = vld [vmem:[#allocation9 + $0x8c4] sm:$0xff]
    %v2799 = vld [vmem:[#allocation9 + $0x8cc] sm:$0xf]
    %v2800 = vld [vmem:[#allocation9 + $0x8d0] sm:$0xff]
    %v2801 = vld [vmem:[#allocation9 + $0x8d8] sm:$0xf]
    %v2802 = vld [vmem:[#allocation9 + $0x8dc] sm:$0xff]
    %v2803 = vld [vmem:[#allocation9 + $0x8e4] sm:$0xf]
    %v2804 = vld [vmem:[#allocation9 + $0x8e8] sm:$0xff]
    %v2805 = vld [vmem:[#allocation9 + $0x8f0] sm:$0xf]
    %v2806 = vld [vmem:[#allocation9 + $0x8f4] sm:$0xff]
    %v2807 = vld [vmem:[#allocation9 + $0x8fc] sm:$0xf]
    %v2808 = vld [vmem:[#allocation11] sm:$0x7]
    %v2810 = vperm.slane %v2808, 0
    %v2811 = vperm.slane %v2808, 1
    %v2812 = vperm.slane %v2808, 2
    %v2828 = vunpack.c.l.b16 %v2412
    %v2829 = vunpack.c.h.b16 %v2412
    %v2830 = vunpack.c.l.b16 %v2413
    %v2831 = vunpack.c.h.b16 %v2413
    %v2832 = vunpack.c.l.b16 %v2414
    %v2833 = vunpack.c.h.b16 %v2414
    %v2834 = vunpack.c.l.b16 %v2415
    %v2835 = vunpack.c.h.b16 %v2415
    %v2836 = vunpack.c.l.b16 %v2416
    %v2837 = vunpack.c.h.b16 %v2416
    %v2838 = vunpack.c.l.b16 %v2417
    %v2839 = vunpack.c.h.b16 %v2417
    %v2840 = vunpack.c.l.b16 %v2418
    %v2841 = vunpack.c.h.b16 %v2418
    %v2842 = vunpack.c.l.b16 %v2419
    %v2843 = vunpack.c.h.b16 %v2419
    %v2844 = vunpack.c.l.b16 %v2420
    %v2845 = vunpack.c.h.b16 %v2420
    %v2846 = vunpack.c.l.b16 %v2421
    %v2847 = vunpack.c.h.b16 %v2421
    %v2848 = vunpack.c.l.b16 %v2422
    %v2849 = vunpack.c.h.b16 %v2422
    %v2850 = vunpack.c.l.b16 %v2423
    %v2851 = vunpack.c.h.b16 %v2423
    %v2852 = vpack.c.b16 %v2840, %v2828
    %v2853 = vpack.c.b16 %v2841, %v2829
    %v2854 = vpack.c.b16 %v2842, %v2830
    %v2855 = vpack.c.b16 %v2843, %v2831
    %v2856 = vpack.c.b16 %v2844, %v2832
    %v2857 = vpack.c.b16 %v2845, %v2833
    %v2858 = vpack.c.b16 %v2846, %v2834
    %v2859 = vpack.c.b16 %v2847, %v2835
    %v2860 = vpack.c.b16 %v2848, %v2836
    %v2861 = vpack.c.b16 %v2849, %v2837
    %v2862 = vpack.c.b16 %v2850, %v2838
    %v2863 = vpack.c.b16 %v2851, %v2839
    %v3260 = vunpack.c.l.b16 %v2424
    %v3261 = vunpack.c.h.b16 %v2424
    %v3262 = vunpack.c.l.b16 %v2425
    %v3263 = vunpack.c.l.b16 %v2426
    %v3264 = vunpack.c.h.b16 %v2426
    %v3265 = vunpack.c.l.b16 %v2427
    %v3266 = vunpack.c.l.b16 %v2428
    %v3267 = vunpack.c.h.b16 %v2428
    %v3268 = vunpack.c.l.b16 %v2429
    %v3269 = vunpack.c.l.b16 %v2430
    %v3270 = vunpack.c.h.b16 %v2430
    %v3271 = vunpack.c.l.b16 %v2431
    %v3272 = vunpack.c.l.b16 %v2432
    %v3273 = vunpack.c.h.b16 %v2432
    %v3274 = vunpack.c.l.b16 %v2433
    %v3275 = vunpack.c.l.b16 %v2434
    %v3276 = vunpack.c.h.b16 %v2434
    %v3277 = vunpack.c.l.b16 %v2435
    %v3278 = vunpack.c.l.b16 %v2436
    %v3279 = vunpack.c.h.b16 %v2436
    %v3280 = vunpack.c.l.b16 %v2437
    %v3281 = vunpack.c.l.b16 %v2438
    %v3282 = vunpack.c.h.b16 %v2438
    %v3283 = vunpack.c.l.b16 %v2439
    %v3284 = vunpack.c.l.b16 %v2440
    %v3285 = vunpack.c.h.b16 %v2440
    %v3286 = vunpack.c.l.b16 %v2441
    %v3287 = vunpack.c.l.b16 %v2442
    %v3288 = vunpack.c.h.b16 %v2442
    %v3289 = vunpack.c.l.b16 %v2443
    %v3290 = vunpack.c.l.b16 %v2444
    %v3291 = vunpack.c.h.b16 %v2444
    %v3292 = vunpack.c.l.b16 %v2445
    %v3293 = vunpack.c.l.b16 %v2446
    %v3294 = vunpack.c.h.b16 %v2446
    %v3295 = vunpack.c.l.b16 %v2447
    %v3296 = vunpack.c.l.b16 %v2448
    %v3297 = vunpack.c.h.b16 %v2448
    %v3298 = vunpack.c.l.b16 %v2449
    %v3299 = vunpack.c.l.b16 %v2450
    %v3300 = vunpack.c.h.b16 %v2450
    %v3301 = vunpack.c.l.b16 %v2451
    %v3302 = vunpack.c.l.b16 %v2452
    %v3303 = vunpack.c.h.b16 %v2452
    %v3304 = vunpack.c.l.b16 %v2453
    %v3305 = vunpack.c.l.b16 %v2454
    %v3306 = vunpack.c.h.b16 %v2454
    %v3307 = vunpack.c.l.b16 %v2455
    %v3308 = vunpack.c.l.b16 %v2456
    %v3309 = vunpack.c.h.b16 %v2456
    %v3310 = vunpack.c.l.b16 %v2457
    %v3311 = vunpack.c.l.b16 %v2458
    %v3312 = vunpack.c.h.b16 %v2458
    %v3313 = vunpack.c.l.b16 %v2459
    %v3314 = vunpack.c.l.b16 %v2460
    %v3315 = vunpack.c.h.b16 %v2460
    %v3316 = vunpack.c.l.b16 %v2461
    %v3317 = vunpack.c.l.b16 %v2462
    %v3318 = vunpack.c.h.b16 %v2462
    %v3319 = vunpack.c.l.b16 %v2463
    %v3320 = vunpack.c.l.b16 %v2464
    %v3321 = vunpack.c.h.b16 %v2464
    %v3322 = vunpack.c.l.b16 %v2465
    %v3323 = vunpack.c.l.b16 %v2466
    %v3324 = vunpack.c.h.b16 %v2466
    %v3325 = vunpack.c.l.b16 %v2467
    %v3326 = vunpack.c.l.b16 %v2468
    %v3327 = vunpack.c.h.b16 %v2468
    %v3328 = vunpack.c.l.b16 %v2469
    %v3329 = vunpack.c.l.b16 %v2470
    %v3330 = vunpack.c.h.b16 %v2470
    %v3331 = vunpack.c.l.b16 %v2471
    %v3332 = vunpack.c.l.b16 %v2472
    %v3333 = vunpack.c.h.b16 %v2472
    %v3334 = vunpack.c.l.b16 %v2473
    %v3335 = vunpack.c.l.b16 %v2474
    %v3336 = vunpack.c.h.b16 %v2474
    %v3337 = vunpack.c.l.b16 %v2475
    %v3338 = vunpack.c.l.b16 %v2476
    %v3339 = vunpack.c.h.b16 %v2476
    %v3340 = vunpack.c.l.b16 %v2477
    %v3341 = vunpack.c.l.b16 %v2478
    %v3342 = vunpack.c.h.b16 %v2478
    %v3343 = vunpack.c.l.b16 %v2479
    %v3344 = vunpack.c.l.b16 %v2480
    %v3345 = vunpack.c.h.b16 %v2480
    %v3346 = vunpack.c.l.b16 %v2481
    %v3347 = vunpack.c.l.b16 %v2482
    %v3348 = vunpack.c.h.b16 %v2482
    %v3349 = vunpack.c.l.b16 %v2483
    %v3350 = vunpack.c.l.b16 %v2484
    %v3351 = vunpack.c.h.b16 %v2484
    %v3352 = vunpack.c.l.b16 %v2485
    %v3353 = vunpack.c.l.b16 %v2486
    %v3354 = vunpack.c.h.b16 %v2486
    %v3355 = vunpack.c.l.b16 %v2487
    %v3356 = vunpack.c.l.b16 %v2488
    %v3357 = vunpack.c.h.b16 %v2488
    %v3358 = vunpack.c.l.b16 %v2489
    %v3359 = vunpack.c.l.b16 %v2490
    %v3360 = vunpack.c.h.b16 %v2490
    %v3361 = vunpack.c.l.b16 %v2491
    %v3362 = vunpack.c.l.b16 %v2492
    %v3363 = vunpack.c.h.b16 %v2492
    %v3364 = vunpack.c.l.b16 %v2493
    %v3365 = vunpack.c.l.b16 %v2494
    %v3366 = vunpack.c.h.b16 %v2494
    %v3367 = vunpack.c.l.b16 %v2495
    %v3368 = vunpack.c.l.b16 %v2496
    %v3369 = vunpack.c.h.b16 %v2496
    %v3370 = vunpack.c.l.b16 %v2497
    %v3371 = vunpack.c.l.b16 %v2498
    %v3372 = vunpack.c.h.b16 %v2498
    %v3373 = vunpack.c.l.b16 %v2499
    %v3374 = vunpack.c.l.b16 %v2500
    %v3375 = vunpack.c.h.b16 %v2500
    %v3376 = vunpack.c.l.b16 %v2501
    %v3377 = vunpack.c.l.b16 %v2502
    %v3378 = vunpack.c.h.b16 %v2502
    %v3379 = vunpack.c.l.b16 %v2503
    %v3380 = vunpack.c.l.b16 %v2504
    %v3381 = vunpack.c.h.b16 %v2504
    %v3382 = vunpack.c.l.b16 %v2505
    %v3383 = vunpack.c.l.b16 %v2506
    %v3384 = vunpack.c.h.b16 %v2506
    %v3385 = vunpack.c.l.b16 %v2507
    %v3386 = vunpack.c.l.b16 %v2508
    %v3387 = vunpack.c.h.b16 %v2508
    %v3388 = vunpack.c.l.b16 %v2509
    %v3389 = vunpack.c.l.b16 %v2510
    %v3390 = vunpack.c.h.b16 %v2510
    %v3391 = vunpack.c.l.b16 %v2511
    %v3392 = vunpack.c.l.b16 %v2512
    %v3393 = vunpack.c.h.b16 %v2512
    %v3394 = vunpack.c.l.b16 %v2513
    %v3395 = vunpack.c.l.b16 %v2514
    %v3396 = vunpack.c.h.b16 %v2514
    %v3397 = vunpack.c.l.b16 %v2515
    %v3398 = vunpack.c.l.b16 %v2516
    %v3399 = vunpack.c.h.b16 %v2516
    %v3400 = vunpack.c.l.b16 %v2517
    %v3401 = vunpack.c.l.b16 %v2518
    %v3402 = vunpack.c.h.b16 %v2518
    %v3403 = vunpack.c.l.b16 %v2519
    %v3404 = vunpack.c.l.b16 %v2520
    %v3405 = vunpack.c.h.b16 %v2520
    %v3406 = vunpack.c.l.b16 %v2521
    %v3407 = vunpack.c.l.b16 %v2522
    %v3408 = vunpack.c.h.b16 %v2522
    %v3409 = vunpack.c.l.b16 %v2523
    %v3410 = vunpack.c.l.b16 %v2524
    %v3411 = vunpack.c.h.b16 %v2524
    %v3412 = vunpack.c.l.b16 %v2525
    %v3413 = vunpack.c.l.b16 %v2526
    %v3414 = vunpack.c.h.b16 %v2526
    %v3415 = vunpack.c.l.b16 %v2527
    %v3416 = vunpack.c.l.b16 %v2528
    %v3417 = vunpack.c.h.b16 %v2528
    %v3418 = vunpack.c.l.b16 %v2529
    %v3419 = vunpack.c.l.b16 %v2530
    %v3420 = vunpack.c.h.b16 %v2530
    %v3421 = vunpack.c.l.b16 %v2531
    %v3422 = vunpack.c.l.b16 %v2532
    %v3423 = vunpack.c.h.b16 %v2532
    %v3424 = vunpack.c.l.b16 %v2533
    %v3425 = vunpack.c.l.b16 %v2534
    %v3426 = vunpack.c.h.b16 %v2534
    %v3427 = vunpack.c.l.b16 %v2535
    %v3428 = vunpack.c.l.b16 %v2536
    %v3429 = vunpack.c.h.b16 %v2536
    %v3430 = vunpack.c.l.b16 %v2537
    %v3431 = vunpack.c.l.b16 %v2538
    %v3432 = vunpack.c.h.b16 %v2538
    %v3433 = vunpack.c.l.b16 %v2539
    %v3434 = vunpack.c.l.b16 %v2540
    %v3435 = vunpack.c.h.b16 %v2540
    %v3436 = vunpack.c.l.b16 %v2541
    %v3437 = vunpack.c.l.b16 %v2542
    %v3438 = vunpack.c.h.b16 %v2542
    %v3439 = vunpack.c.l.b16 %v2543
    %v3440 = vunpack.c.l.b16 %v2544
    %v3441 = vunpack.c.h.b16 %v2544
    %v3442 = vunpack.c.l.b16 %v2545
    %v3443 = vunpack.c.l.b16 %v2546
    %v3444 = vunpack.c.h.b16 %v2546
    %v3445 = vunpack.c.l.b16 %v2547
    %v3446 = vunpack.c.l.b16 %v2548
    %v3447 = vunpack.c.h.b16 %v2548
    %v3448 = vunpack.c.l.b16 %v2549
    %v3449 = vunpack.c.l.b16 %v2550
    %v3450 = vunpack.c.h.b16 %v2550
    %v3451 = vunpack.c.l.b16 %v2551
    %v3452 = vunpack.c.l.b16 %v2552
    %v3453 = vunpack.c.h.b16 %v2552
    %v3454 = vunpack.c.l.b16 %v2553
    %v3455 = vunpack.c.l.b16 %v2554
    %v3456 = vunpack.c.h.b16 %v2554
    %v3457 = vunpack.c.l.b16 %v2555
    %v3458 = vunpack.c.l.b16 %v2556
    %v3459 = vunpack.c.h.b16 %v2556
    %v3460 = vunpack.c.l.b16 %v2557
    %v3461 = vunpack.c.l.b16 %v2558
    %v3462 = vunpack.c.h.b16 %v2558
    %v3463 = vunpack.c.l.b16 %v2559
    %v3464 = vunpack.c.l.b16 %v2560
    %v3465 = vunpack.c.h.b16 %v2560
    %v3466 = vunpack.c.l.b16 %v2561
    %v3467 = vunpack.c.l.b16 %v2562
    %v3468 = vunpack.c.h.b16 %v2562
    %v3469 = vunpack.c.l.b16 %v2563
    %v3470 = vunpack.c.l.b16 %v2564
    %v3471 = vunpack.c.h.b16 %v2564
    %v3472 = vunpack.c.l.b16 %v2565
    %v3473 = vunpack.c.l.b16 %v2566
    %v3474 = vunpack.c.h.b16 %v2566
    %v3475 = vunpack.c.l.b16 %v2567
    %v3476 = vunpack.c.l.b16 %v2568
    %v3477 = vunpack.c.h.b16 %v2568
    %v3478 = vunpack.c.l.b16 %v2569
    %v3479 = vunpack.c.l.b16 %v2570
    %v3480 = vunpack.c.h.b16 %v2570
    %v3481 = vunpack.c.l.b16 %v2571
    %v3482 = vunpack.c.l.b16 %v2572
    %v3483 = vunpack.c.h.b16 %v2572
    %v3484 = vunpack.c.l.b16 %v2573
    %v3485 = vunpack.c.l.b16 %v2574
    %v3486 = vunpack.c.h.b16 %v2574
    %v3487 = vunpack.c.l.b16 %v2575
    %v3488 = vunpack.c.l.b16 %v2576
    %v3489 = vunpack.c.h.b16 %v2576
    %v3490 = vunpack.c.l.b16 %v2577
    %v3491 = vunpack.c.l.b16 %v2578
    %v3492 = vunpack.c.h.b16 %v2578
    %v3493 = vunpack.c.l.b16 %v2579
    %v3494 = vunpack.c.l.b16 %v2580
    %v3495 = vunpack.c.h.b16 %v2580
    %v3496 = vunpack.c.l.b16 %v2581
    %v3497 = vunpack.c.l.b16 %v2582
    %v3498 = vunpack.c.h.b16 %v2582
    %v3499 = vunpack.c.l.b16 %v2583
    %v3500 = vunpack.c.l.b16 %v2584
    %v3501 = vunpack.c.h.b16 %v2584
    %v3502 = vunpack.c.l.b16 %v2585
    %v3503 = vunpack.c.l.b16 %v2586
    %v3504 = vunpack.c.h.b16 %v2586
    %v3505 = vunpack.c.l.b16 %v2587
    %v3506 = vunpack.c.l.b16 %v2588
    %v3507 = vunpack.c.h.b16 %v2588
    %v3508 = vunpack.c.l.b16 %v2589
    %v3509 = vunpack.c.l.b16 %v2590
    %v3510 = vunpack.c.h.b16 %v2590
    %v3511 = vunpack.c.l.b16 %v2591
    %v3512 = vunpack.c.l.b16 %v2592
    %v3513 = vunpack.c.h.b16 %v2592
    %v3514 = vunpack.c.l.b16 %v2593
    %v3515 = vunpack.c.l.b16 %v2594
    %v3516 = vunpack.c.h.b16 %v2594
    %v3517 = vunpack.c.l.b16 %v2595
    %v3518 = vunpack.c.l.b16 %v2596
    %v3519 = vunpack.c.h.b16 %v2596
    %v3520 = vunpack.c.l.b16 %v2597
    %v3521 = vunpack.c.l.b16 %v2598
    %v3522 = vunpack.c.h.b16 %v2598
    %v3523 = vunpack.c.l.b16 %v2599
    %v3524 = vunpack.c.l.b16 %v2600
    %v3525 = vunpack.c.h.b16 %v2600
    %v3526 = vunpack.c.l.b16 %v2601
    %v3527 = vunpack.c.l.b16 %v2602
    %v3528 = vunpack.c.h.b16 %v2602
    %v3529 = vunpack.c.l.b16 %v2603
    %v3530 = vunpack.c.l.b16 %v2604
    %v3531 = vunpack.c.h.b16 %v2604
    %v3532 = vunpack.c.l.b16 %v2605
    %v3533 = vunpack.c.l.b16 %v2606
    %v3534 = vunpack.c.h.b16 %v2606
    %v3535 = vunpack.c.l.b16 %v2607
    %v3536 = vunpack.c.l.b16 %v2608
    %v3537 = vunpack.c.h.b16 %v2608
    %v3538 = vunpack.c.l.b16 %v2609
    %v3539 = vunpack.c.l.b16 %v2610
    %v3540 = vunpack.c.h.b16 %v2610
    %v3541 = vunpack.c.l.b16 %v2611
    %v3542 = vunpack.c.l.b16 %v2612
    %v3543 = vunpack.c.h.b16 %v2612
    %v3544 = vunpack.c.l.b16 %v2613
    %v3545 = vunpack.c.l.b16 %v2614
    %v3546 = vunpack.c.h.b16 %v2614
    %v3547 = vunpack.c.l.b16 %v2615
    %v3548 = vunpack.c.l.b16 %v2616
    %v3549 = vunpack.c.h.b16 %v2616
    %v3550 = vunpack.c.l.b16 %v2617
    %v3551 = vunpack.c.l.b16 %v2618
    %v3552 = vunpack.c.h.b16 %v2618
    %v3553 = vunpack.c.l.b16 %v2619
    %v3554 = vunpack.c.l.b16 %v2620
    %v3555 = vunpack.c.h.b16 %v2620
    %v3556 = vunpack.c.l.b16 %v2621
    %v3557 = vunpack.c.l.b16 %v2622
    %v3558 = vunpack.c.h.b16 %v2622
    %v3559 = vunpack.c.l.b16 %v2623
    %v3560 = vunpack.c.l.b16 %v2624
    %v3561 = vunpack.c.h.b16 %v2624
    %v3562 = vunpack.c.l.b16 %v2625
    %v3563 = vunpack.c.l.b16 %v2626
    %v3564 = vunpack.c.h.b16 %v2626
    %v3565 = vunpack.c.l.b16 %v2627
    %v3566 = vunpack.c.l.b16 %v2628
    %v3567 = vunpack.c.h.b16 %v2628
    %v3568 = vunpack.c.l.b16 %v2629
    %v3569 = vunpack.c.l.b16 %v2630
    %v3570 = vunpack.c.h.b16 %v2630
    %v3571 = vunpack.c.l.b16 %v2631
    %v3572 = vunpack.c.l.b16 %v2632
    %v3573 = vunpack.c.h.b16 %v2632
    %v3574 = vunpack.c.l.b16 %v2633
    %v3575 = vunpack.c.l.b16 %v2634
    %v3576 = vunpack.c.h.b16 %v2634
    %v3577 = vunpack.c.l.b16 %v2635
    %v3578 = vunpack.c.l.b16 %v2636
    %v3579 = vunpack.c.h.b16 %v2636
    %v3580 = vunpack.c.l.b16 %v2637
    %v3581 = vunpack.c.l.b16 %v2638
    %v3582 = vunpack.c.h.b16 %v2638
    %v3583 = vunpack.c.l.b16 %v2639
    %v3584 = vunpack.c.l.b16 %v2640
    %v3585 = vunpack.c.h.b16 %v2640
    %v3586 = vunpack.c.l.b16 %v2641
    %v3587 = vunpack.c.l.b16 %v2642
    %v3588 = vunpack.c.h.b16 %v2642
    %v3589 = vunpack.c.l.b16 %v2643
    %v3590 = vunpack.c.l.b16 %v2644
    %v3591 = vunpack.c.h.b16 %v2644
    %v3592 = vunpack.c.l.b16 %v2645
    %v3593 = vunpack.c.l.b16 %v2646
    %v3594 = vunpack.c.h.b16 %v2646
    %v3595 = vunpack.c.l.b16 %v2647
    %v3596 = vunpack.c.l.b16 %v2648
    %v3597 = vunpack.c.h.b16 %v2648
    %v3598 = vunpack.c.l.b16 %v2649
    %v3599 = vunpack.c.l.b16 %v2650
    %v3600 = vunpack.c.h.b16 %v2650
    %v3601 = vunpack.c.l.b16 %v2651
    %v3602 = vunpack.c.l.b16 %v2652
    %v3603 = vunpack.c.h.b16 %v2652
    %v3604 = vunpack.c.l.b16 %v2653
    %v3605 = vunpack.c.l.b16 %v2654
    %v3606 = vunpack.c.h.b16 %v2654
    %v3607 = vunpack.c.l.b16 %v2655
    %v3608 = vunpack.c.l.b16 %v2656
    %v3609 = vunpack.c.h.b16 %v2656
    %v3610 = vunpack.c.l.b16 %v2657
    %v3611 = vunpack.c.l.b16 %v2658
    %v3612 = vunpack.c.h.b16 %v2658
    %v3613 = vunpack.c.l.b16 %v2659
    %v3614 = vunpack.c.l.b16 %v2660
    %v3615 = vunpack.c.h.b16 %v2660
    %v3616 = vunpack.c.l.b16 %v2661
    %v3617 = vunpack.c.l.b16 %v2662
    %v3618 = vunpack.c.h.b16 %v2662
    %v3619 = vunpack.c.l.b16 %v2663
    %v3620 = vunpack.c.l.b16 %v2664
    %v3621 = vunpack.c.h.b16 %v2664
    %v3622 = vunpack.c.l.b16 %v2665
    %v3623 = vunpack.c.l.b16 %v2666
    %v3624 = vunpack.c.h.b16 %v2666
    %v3625 = vunpack.c.l.b16 %v2667
    %v3626 = vunpack.c.l.b16 %v2668
    %v3627 = vunpack.c.h.b16 %v2668
    %v3628 = vunpack.c.l.b16 %v2669
    %v3629 = vunpack.c.l.b16 %v2670
    %v3630 = vunpack.c.h.b16 %v2670
    %v3631 = vunpack.c.l.b16 %v2671
    %v3632 = vunpack.c.l.b16 %v2672
    %v3633 = vunpack.c.h.b16 %v2672
    %v3634 = vunpack.c.l.b16 %v2673
    %v3635 = vunpack.c.l.b16 %v2674
    %v3636 = vunpack.c.h.b16 %v2674
    %v3637 = vunpack.c.l.b16 %v2675
    %v3638 = vunpack.c.l.b16 %v2676
    %v3639 = vunpack.c.h.b16 %v2676
    %v3640 = vunpack.c.l.b16 %v2677
    %v3641 = vunpack.c.l.b16 %v2678
    %v3642 = vunpack.c.h.b16 %v2678
    %v3643 = vunpack.c.l.b16 %v2679
    %v3644 = vunpack.c.l.b16 %v2680
    %v3645 = vunpack.c.h.b16 %v2680
    %v3646 = vunpack.c.l.b16 %v2681
    %v3647 = vunpack.c.l.b16 %v2682
    %v3648 = vunpack.c.h.b16 %v2682
    %v3649 = vunpack.c.l.b16 %v2683
    %v3650 = vunpack.c.l.b16 %v2684
    %v3651 = vunpack.c.h.b16 %v2684
    %v3652 = vunpack.c.l.b16 %v2685
    %v3653 = vunpack.c.l.b16 %v2686
    %v3654 = vunpack.c.h.b16 %v2686
    %v3655 = vunpack.c.l.b16 %v2687
    %v3656 = vunpack.c.l.b16 %v2688
    %v3657 = vunpack.c.h.b16 %v2688
    %v3658 = vunpack.c.l.b16 %v2689
    %v3659 = vunpack.c.l.b16 %v2690
    %v3660 = vunpack.c.h.b16 %v2690
    %v3661 = vunpack.c.l.b16 %v2691
    %v3662 = vunpack.c.l.b16 %v2692
    %v3663 = vunpack.c.h.b16 %v2692
    %v3664 = vunpack.c.l.b16 %v2693
    %v3665 = vunpack.c.l.b16 %v2694
    %v3666 = vunpack.c.h.b16 %v2694
    %v3667 = vunpack.c.l.b16 %v2695
    %v3668 = vunpack.c.l.b16 %v2696
    %v3669 = vunpack.c.h.b16 %v2696
    %v3670 = vunpack.c.l.b16 %v2697
    %v3671 = vunpack.c.l.b16 %v2698
    %v3672 = vunpack.c.h.b16 %v2698
    %v3673 = vunpack.c.l.b16 %v2699
    %v3674 = vunpack.c.l.b16 %v2700
    %v3675 = vunpack.c.h.b16 %v2700
    %v3676 = vunpack.c.l.b16 %v2701
    %v3677 = vunpack.c.l.b16 %v2702
    %v3678 = vunpack.c.h.b16 %v2702
    %v3679 = vunpack.c.l.b16 %v2703
    %v3680 = vunpack.c.l.b16 %v2704
    %v3681 = vunpack.c.h.b16 %v2704
    %v3682 = vunpack.c.l.b16 %v2705
    %v3683 = vunpack.c.l.b16 %v2706
    %v3684 = vunpack.c.h.b16 %v2706
    %v3685 = vunpack.c.l.b16 %v2707
    %v3686 = vunpack.c.l.b16 %v2708
    %v3687 = vunpack.c.h.b16 %v2708
    %v3688 = vunpack.c.l.b16 %v2709
    %v3689 = vunpack.c.l.b16 %v2710
    %v3690 = vunpack.c.h.b16 %v2710
    %v3691 = vunpack.c.l.b16 %v2711
    %v3692 = vunpack.c.l.b16 %v2712
    %v3693 = vunpack.c.h.b16 %v2712
    %v3694 = vunpack.c.l.b16 %v2713
    %v3695 = vunpack.c.l.b16 %v2714
    %v3696 = vunpack.c.h.b16 %v2714
    %v3697 = vunpack.c.l.b16 %v2715
    %v3698 = vunpack.c.l.b16 %v2716
    %v3699 = vunpack.c.h.b16 %v2716
    %v3700 = vunpack.c.l.b16 %v2717
    %v3701 = vunpack.c.l.b16 %v2718
    %v3702 = vunpack.c.h.b16 %v2718
    %v3703 = vunpack.c.l.b16 %v2719
    %v3704 = vunpack.c.l.b16 %v2720
    %v3705 = vunpack.c.h.b16 %v2720
    %v3706 = vunpack.c.l.b16 %v2721
    %v3707 = vunpack.c.l.b16 %v2722
    %v3708 = vunpack.c.h.b16 %v2722
    %v3709 = vunpack.c.l.b16 %v2723
    %v3710 = vunpack.c.l.b16 %v2724
    %v3711 = vunpack.c.h.b16 %v2724
    %v3712 = vunpack.c.l.b16 %v2725
    %v3713 = vunpack.c.l.b16 %v2726
    %v3714 = vunpack.c.h.b16 %v2726
    %v3715 = vunpack.c.l.b16 %v2727
    %v3716 = vunpack.c.l.b16 %v2728
    %v3717 = vunpack.c.h.b16 %v2728
    %v3718 = vunpack.c.l.b16 %v2729
    %v3719 = vunpack.c.l.b16 %v2730
    %v3720 = vunpack.c.h.b16 %v2730
    %v3721 = vunpack.c.l.b16 %v2731
    %v3722 = vunpack.c.l.b16 %v2732
    %v3723 = vunpack.c.h.b16 %v2732
    %v3724 = vunpack.c.l.b16 %v2733
    %v3725 = vunpack.c.l.b16 %v2734
    %v3726 = vunpack.c.h.b16 %v2734
    %v3727 = vunpack.c.l.b16 %v2735
    %v3728 = vunpack.c.l.b16 %v2736
    %v3729 = vunpack.c.h.b16 %v2736
    %v3730 = vunpack.c.l.b16 %v2737
    %v3731 = vunpack.c.l.b16 %v2738
    %v3732 = vunpack.c.h.b16 %v2738
    %v3733 = vunpack.c.l.b16 %v2739
    %v3734 = vunpack.c.l.b16 %v2740
    %v3735 = vunpack.c.h.b16 %v2740
    %v3736 = vunpack.c.l.b16 %v2741
    %v3737 = vunpack.c.l.b16 %v2742
    %v3738 = vunpack.c.h.b16 %v2742
    %v3739 = vunpack.c.l.b16 %v2743
    %v3740 = vunpack.c.l.b16 %v2744
    %v3741 = vunpack.c.h.b16 %v2744
    %v3742 = vunpack.c.l.b16 %v2745
    %v3743 = vunpack.c.l.b16 %v2746
    %v3744 = vunpack.c.h.b16 %v2746
    %v3745 = vunpack.c.l.b16 %v2747
    %v3746 = vunpack.c.l.b16 %v2748
    %v3747 = vunpack.c.h.b16 %v2748
    %v3748 = vunpack.c.l.b16 %v2749
    %v3749 = vunpack.c.l.b16 %v2750
    %v3750 = vunpack.c.h.b16 %v2750
    %v3751 = vunpack.c.l.b16 %v2751
    %v3752 = vunpack.c.l.b16 %v2752
    %v3753 = vunpack.c.h.b16 %v2752
    %v3754 = vunpack.c.l.b16 %v2753
    %v3755 = vunpack.c.l.b16 %v2754
    %v3756 = vunpack.c.h.b16 %v2754
    %v3757 = vunpack.c.l.b16 %v2755
    %v3758 = vunpack.c.l.b16 %v2756
    %v3759 = vunpack.c.h.b16 %v2756
    %v3760 = vunpack.c.l.b16 %v2757
    %v3761 = vunpack.c.l.b16 %v2758
    %v3762 = vunpack.c.h.b16 %v2758
    %v3763 = vunpack.c.l.b16 %v2759
    %v3764 = vunpack.c.l.b16 %v2760
    %v3765 = vunpack.c.h.b16 %v2760
    %v3766 = vunpack.c.l.b16 %v2761
    %v3767 = vunpack.c.l.b16 %v2762
    %v3768 = vunpack.c.h.b16 %v2762
    %v3769 = vunpack.c.l.b16 %v2763
    %v3770 = vunpack.c.l.b16 %v2764
    %v3771 = vunpack.c.h.b16 %v2764
    %v3772 = vunpack.c.l.b16 %v2765
    %v3773 = vunpack.c.l.b16 %v2766
    %v3774 = vunpack.c.h.b16 %v2766
    %v3775 = vunpack.c.l.b16 %v2767
    %v3776 = vunpack.c.l.b16 %v2768
    %v3777 = vunpack.c.h.b16 %v2768
    %v3778 = vunpack.c.l.b16 %v2769
    %v3779 = vunpack.c.l.b16 %v2770
    %v3780 = vunpack.c.h.b16 %v2770
    %v3781 = vunpack.c.l.b16 %v2771
    %v3782 = vunpack.c.l.b16 %v2772
    %v3783 = vunpack.c.h.b16 %v2772
    %v3784 = vunpack.c.l.b16 %v2773
    %v3785 = vunpack.c.l.b16 %v2774
    %v3786 = vunpack.c.h.b16 %v2774
    %v3787 = vunpack.c.l.b16 %v2775
    %v3788 = vunpack.c.l.b16 %v2776
    %v3789 = vunpack.c.h.b16 %v2776
    %v3790 = vunpack.c.l.b16 %v2777
    %v3791 = vunpack.c.l.b16 %v2778
    %v3792 = vunpack.c.h.b16 %v2778
    %v3793 = vunpack.c.l.b16 %v2779
    %v3794 = vunpack.c.l.b16 %v2780
    %v3795 = vunpack.c.h.b16 %v2780
    %v3796 = vunpack.c.l.b16 %v2781
    %v3797 = vunpack.c.l.b16 %v2782
    %v3798 = vunpack.c.h.b16 %v2782
    %v3799 = vunpack.c.l.b16 %v2783
    %v3800 = vunpack.c.l.b16 %v2784
    %v3801 = vunpack.c.h.b16 %v2784
    %v3802 = vunpack.c.l.b16 %v2785
    %v3803 = vunpack.c.l.b16 %v2786
    %v3804 = vunpack.c.h.b16 %v2786
    %v3805 = vunpack.c.l.b16 %v2787
    %v3806 = vunpack.c.l.b16 %v2788
    %v3807 = vunpack.c.h.b16 %v2788
    %v3808 = vunpack.c.l.b16 %v2789
    %v3809 = vunpack.c.l.b16 %v2790
    %v3810 = vunpack.c.h.b16 %v2790
    %v3811 = vunpack.c.l.b16 %v2791
    %v3812 = vunpack.c.l.b16 %v2792
    %v3813 = vunpack.c.h.b16 %v2792
    %v3814 = vunpack.c.l.b16 %v2793
    %v3815 = vunpack.c.l.b16 %v2794
    %v3816 = vunpack.c.h.b16 %v2794
    %v3817 = vunpack.c.l.b16 %v2795
    %v3818 = vunpack.c.l.b16 %v2796
    %v3819 = vunpack.c.h.b16 %v2796
    %v3820 = vunpack.c.l.b16 %v2797
    %v3821 = vunpack.c.l.b16 %v2798
    %v3822 = vunpack.c.h.b16 %v2798
    %v3823 = vunpack.c.l.b16 %v2799
    %v3824 = vunpack.c.l.b16 %v2800
    %v3825 = vunpack.c.h.b16 %v2800
    %v3826 = vunpack.c.l.b16 %v2801
    %v3827 = vunpack.c.l.b16 %v2802
    %v3828 = vunpack.c.h.b16 %v2802
    %v3829 = vunpack.c.l.b16 %v2803
    %v3830 = vunpack.c.l.b16 %v2804
    %v3831 = vunpack.c.h.b16 %v2804
    %v3832 = vunpack.c.l.b16 %v2805
    %v3833 = vunpack.c.l.b16 %v2806
    %v3834 = vunpack.c.h.b16 %v2806
    %v3835 = vunpack.c.l.b16 %v2807
    %v3836 = vpack.c.b16 %v3263, %v3260
    %v3837 = vpack.c.b16 %v3264, %v3261
    %v3838 = vpack.c.b16 %v3265, %v3262
    %v3839 = vpack.c.b16 %v3269, %v3266
    %v3840 = vpack.c.b16 %v3270, %v3267
    %v3841 = vpack.c.b16 %v3271, %v3268
    %v3842 = vpack.c.b16 %v3275, %v3272
    %v3843 = vpack.c.b16 %v3276, %v3273
    %v3844 = vpack.c.b16 %v3277, %v3274
    %v3845 = vpack.c.b16 %v3281, %v3278
    %v3846 = vpack.c.b16 %v3282, %v3279
    %v3847 = vpack.c.b16 %v3283, %v3280
    %v3848 = vpack.c.b16 %v3287, %v3284
    %v3849 = vpack.c.b16 %v3288, %v3285
    %v3850 = vpack.c.b16 %v3289, %v3286
    %v3851 = vpack.c.b16 %v3293, %v3290
    %v3852 = vpack.c.b16 %v3294, %v3291
    %v3853 = vpack.c.b16 %v3295, %v3292
    %v3854 = vpack.c.b16 %v3299, %v3296
    %v3855 = vpack.c.b16 %v3300, %v3297
    %v3856 = vpack.c.b16 %v3301, %v3298
    %v3857 = vpack.c.b16 %v3305, %v3302
    %v3858 = vpack.c.b16 %v3306, %v3303
    %v3859 = vpack.c.b16 %v3307, %v3304
    %v3860 = vpack.c.b16 %v3311, %v3308
    %v3861 = vpack.c.b16 %v3312, %v3309
    %v3862 = vpack.c.b16 %v3313, %v3310
    %v3863 = vpack.c.b16 %v3317, %v3314
    %v3864 = vpack.c.b16 %v3318, %v3315
    %v3865 = vpack.c.b16 %v3319, %v3316
    %v3866 = vpack.c.b16 %v3323, %v3320
    %v3867 = vpack.c.b16 %v3324, %v3321
    %v3868 = vpack.c.b16 %v3325, %v3322
    %v3869 = vpack.c.b16 %v3329, %v3326
    %v3870 = vpack.c.b16 %v3330, %v3327
    %v3871 = vpack.c.b16 %v3331, %v3328
    %v3872 = vpack.c.b16 %v3335, %v3332
    %v3873 = vpack.c.b16 %v3336, %v3333
    %v3874 = vpack.c.b16 %v3337, %v3334
    %v3875 = vpack.c.b16 %v3341, %v3338
    %v3876 = vpack.c.b16 %v3342, %v3339
    %v3877 = vpack.c.b16 %v3343, %v3340
    %v3878 = vpack.c.b16 %v3347, %v3344
    %v3879 = vpack.c.b16 %v3348, %v3345
    %v3880 = vpack.c.b16 %v3349, %v3346
    %v3881 = vpack.c.b16 %v3353, %v3350
    %v3882 = vpack.c.b16 %v3354, %v3351
    %v3883 = vpack.c.b16 %v3355, %v3352
    %v3884 = vpack.c.b16 %v3359, %v3356
    %v3885 = vpack.c.b16 %v3360, %v3357
    %v3886 = vpack.c.b16 %v3361, %v3358
    %v3887 = vpack.c.b16 %v3365, %v3362
    %v3888 = vpack.c.b16 %v3366, %v3363
    %v3889 = vpack.c.b16 %v3367, %v3364
    %v3890 = vpack.c.b16 %v3371, %v3368
    %v3891 = vpack.c.b16 %v3372, %v3369
    %v3892 = vpack.c.b16 %v3373, %v3370
    %v3893 = vpack.c.b16 %v3377, %v3374
    %v3894 = vpack.c.b16 %v3378, %v3375
    %v3895 = vpack.c.b16 %v3379, %v3376
    %v3896 = vpack.c.b16 %v3383, %v3380
    %v3897 = vpack.c.b16 %v3384, %v3381
    %v3898 = vpack.c.b16 %v3385, %v3382
    %v3899 = vpack.c.b16 %v3389, %v3386
    %v3900 = vpack.c.b16 %v3390, %v3387
    %v3901 = vpack.c.b16 %v3391, %v3388
    %v3902 = vpack.c.b16 %v3395, %v3392
    %v3903 = vpack.c.b16 %v3396, %v3393
    %v3904 = vpack.c.b16 %v3397, %v3394
    %v3905 = vpack.c.b16 %v3401, %v3398
    %v3906 = vpack.c.b16 %v3402, %v3399
    %v3907 = vpack.c.b16 %v3403, %v3400
    %v3908 = vpack.c.b16 %v3407, %v3404
    %v3909 = vpack.c.b16 %v3408, %v3405
    %v3910 = vpack.c.b16 %v3409, %v3406
    %v3911 = vpack.c.b16 %v3413, %v3410
    %v3912 = vpack.c.b16 %v3414, %v3411
    %v3913 = vpack.c.b16 %v3415, %v3412
    %v3914 = vpack.c.b16 %v3419, %v3416
    %v3915 = vpack.c.b16 %v3420, %v3417
    %v3916 = vpack.c.b16 %v3421, %v3418
    %v3917 = vpack.c.b16 %v3425, %v3422
    %v3918 = vpack.c.b16 %v3426, %v3423
    %v3919 = vpack.c.b16 %v3427, %v3424
    %v3920 = vpack.c.b16 %v3431, %v3428
    %v3921 = vpack.c.b16 %v3432, %v3429
    %v3922 = vpack.c.b16 %v3433, %v3430
    %v3923 = vpack.c.b16 %v3437, %v3434
    %v3924 = vpack.c.b16 %v3438, %v3435
    %v3925 = vpack.c.b16 %v3439, %v3436
    %v3926 = vpack.c.b16 %v3443, %v3440
    %v3927 = vpack.c.b16 %v3444, %v3441
    %v3928 = vpack.c.b16 %v3445, %v3442
    %v3929 = vpack.c.b16 %v3449, %v3446
    %v3930 = vpack.c.b16 %v3450, %v3447
    %v3931 = vpack.c.b16 %v3451, %v3448
    %v3932 = vpack.c.b16 %v3455, %v3452
    %v3933 = vpack.c.b16 %v3456, %v3453
    %v3934 = vpack.c.b16 %v3457, %v3454
    %v3935 = vpack.c.b16 %v3461, %v3458
    %v3936 = vpack.c.b16 %v3462, %v3459
    %v3937 = vpack.c.b16 %v3463, %v3460
    %v3938 = vpack.c.b16 %v3467, %v3464
    %v3939 = vpack.c.b16 %v3468, %v3465
    %v3940 = vpack.c.b16 %v3469, %v3466
    %v3941 = vpack.c.b16 %v3473, %v3470
    %v3942 = vpack.c.b16 %v3474, %v3471
    %v3943 = vpack.c.b16 %v3475, %v3472
    %v3944 = vpack.c.b16 %v3479, %v3476
    %v3945 = vpack.c.b16 %v3480, %v3477
    %v3946 = vpack.c.b16 %v3481, %v3478
    %v3947 = vpack.c.b16 %v3485, %v3482
    %v3948 = vpack.c.b16 %v3486, %v3483
    %v3949 = vpack.c.b16 %v3487, %v3484
    %v3950 = vpack.c.b16 %v3491, %v3488
    %v3951 = vpack.c.b16 %v3492, %v3489
    %v3952 = vpack.c.b16 %v3493, %v3490
    %v3953 = vpack.c.b16 %v3497, %v3494
    %v3954 = vpack.c.b16 %v3498, %v3495
    %v3955 = vpack.c.b16 %v3499, %v3496
    %v3956 = vpack.c.b16 %v3503, %v3500
    %v3957 = vpack.c.b16 %v3504, %v3501
    %v3958 = vpack.c.b16 %v3505, %v3502
    %v3959 = vpack.c.b16 %v3509, %v3506
    %v3960 = vpack.c.b16 %v3510, %v3507
    %v3961 = vpack.c.b16 %v3511, %v3508
    %v3962 = vpack.c.b16 %v3515, %v3512
    %v3963 = vpack.c.b16 %v3516, %v3513
    %v3964 = vpack.c.b16 %v3517, %v3514
    %v3965 = vpack.c.b16 %v3521, %v3518
    %v3966 = vpack.c.b16 %v3522, %v3519
    %v3967 = vpack.c.b16 %v3523, %v3520
    %v3968 = vpack.c.b16 %v3527, %v3524
    %v3969 = vpack.c.b16 %v3528, %v3525
    %v3970 = vpack.c.b16 %v3529, %v3526
    %v3971 = vpack.c.b16 %v3533, %v3530
    %v3972 = vpack.c.b16 %v3534, %v3531
    %v3973 = vpack.c.b16 %v3535, %v3532
    %v3974 = vpack.c.b16 %v3539, %v3536
    %v3975 = vpack.c.b16 %v3540, %v3537
    %v3976 = vpack.c.b16 %v3541, %v3538
    %v3977 = vpack.c.b16 %v3545, %v3542
    %v3978 = vpack.c.b16 %v3546, %v3543
    %v3979 = vpack.c.b16 %v3547, %v3544
    %v3980 = vpack.c.b16 %v3551, %v3548
    %v3981 = vpack.c.b16 %v3552, %v3549
    %v3982 = vpack.c.b16 %v3553, %v3550
    %v3983 = vpack.c.b16 %v3557, %v3554
    %v3984 = vpack.c.b16 %v3558, %v3555
    %v3985 = vpack.c.b16 %v3559, %v3556
    %v3986 = vpack.c.b16 %v3563, %v3560
    %v3987 = vpack.c.b16 %v3564, %v3561
    %v3988 = vpack.c.b16 %v3565, %v3562
    %v3989 = vpack.c.b16 %v3569, %v3566
    %v3990 = vpack.c.b16 %v3570, %v3567
    %v3991 = vpack.c.b16 %v3571, %v3568
    %v3992 = vpack.c.b16 %v3575, %v3572
    %v3993 = vpack.c.b16 %v3576, %v3573
    %v3994 = vpack.c.b16 %v3577, %v3574
    %v3995 = vpack.c.b16 %v3581, %v3578
    %v3996 = vpack.c.b16 %v3582, %v3579
    %v3997 = vpack.c.b16 %v3583, %v3580
    %v3998 = vpack.c.b16 %v3587, %v3584
    %v3999 = vpack.c.b16 %v3588, %v3585
    %v4000 = vpack.c.b16 %v3589, %v3586
    %v4001 = vpack.c.b16 %v3593, %v3590
    %v4002 = vpack.c.b16 %v3594, %v3591
    %v4003 = vpack.c.b16 %v3595, %v3592
    %v4004 = vpack.c.b16 %v3599, %v3596
    %v4005 = vpack.c.b16 %v3600, %v3597
    %v4006 = vpack.c.b16 %v3601, %v3598
    %v4007 = vpack.c.b16 %v3605, %v3602
    %v4008 = vpack.c.b16 %v3606, %v3603
    %v4009 = vpack.c.b16 %v3607, %v3604
    %v4010 = vpack.c.b16 %v3611, %v3608
    %v4011 = vpack.c.b16 %v3612, %v3609
    %v4012 = vpack.c.b16 %v3613, %v3610
    %v4013 = vpack.c.b16 %v3617, %v3614
    %v4014 = vpack.c.b16 %v3618, %v3615
    %v4015 = vpack.c.b16 %v3619, %v3616
    %v4016 = vpack.c.b16 %v3623, %v3620
    %v4017 = vpack.c.b16 %v3624, %v3621
    %v4018 = vpack.c.b16 %v3625, %v3622
    %v4019 = vpack.c.b16 %v3629, %v3626
    %v4020 = vpack.c.b16 %v3630, %v3627
    %v4021 = vpack.c.b16 %v3631, %v3628
    %v4022 = vpack.c.b16 %v3635, %v3632
    %v4023 = vpack.c.b16 %v3636, %v3633
    %v4024 = vpack.c.b16 %v3637, %v3634
    %v4025 = vpack.c.b16 %v3641, %v3638
    %v4026 = vpack.c.b16 %v3642, %v3639
    %v4027 = vpack.c.b16 %v3643, %v3640
    %v4028 = vpack.c.b16 %v3647, %v3644
    %v4029 = vpack.c.b16 %v3648, %v3645
    %v4030 = vpack.c.b16 %v3649, %v3646
    %v4031 = vpack.c.b16 %v3653, %v3650
    %v4032 = vpack.c.b16 %v3654, %v3651
    %v4033 = vpack.c.b16 %v3655, %v3652
    %v4034 = vpack.c.b16 %v3659, %v3656
    %v4035 = vpack.c.b16 %v3660, %v3657
    %v4036 = vpack.c.b16 %v3661, %v3658
    %v4037 = vpack.c.b16 %v3665, %v3662
    %v4038 = vpack.c.b16 %v3666, %v3663
    %v4039 = vpack.c.b16 %v3667, %v3664
    %v4040 = vpack.c.b16 %v3671, %v3668
    %v4041 = vpack.c.b16 %v3672, %v3669
    %v4042 = vpack.c.b16 %v3673, %v3670
    %v4043 = vpack.c.b16 %v3677, %v3674
    %v4044 = vpack.c.b16 %v3678, %v3675
    %v4045 = vpack.c.b16 %v3679, %v3676
    %v4046 = vpack.c.b16 %v3683, %v3680
    %v4047 = vpack.c.b16 %v3684, %v3681
    %v4048 = vpack.c.b16 %v3685, %v3682
    %v4049 = vpack.c.b16 %v3689, %v3686
    %v4050 = vpack.c.b16 %v3690, %v3687
    %v4051 = vpack.c.b16 %v3691, %v3688
    %v4052 = vpack.c.b16 %v3695, %v3692
    %v4053 = vpack.c.b16 %v3696, %v3693
    %v4054 = vpack.c.b16 %v3697, %v3694
    %v4055 = vpack.c.b16 %v3701, %v3698
    %v4056 = vpack.c.b16 %v3702, %v3699
    %v4057 = vpack.c.b16 %v3703, %v3700
    %v4058 = vpack.c.b16 %v3707, %v3704
    %v4059 = vpack.c.b16 %v3708, %v3705
    %v4060 = vpack.c.b16 %v3709, %v3706
    %v4061 = vpack.c.b16 %v3713, %v3710
    %v4062 = vpack.c.b16 %v3714, %v3711
    %v4063 = vpack.c.b16 %v3715, %v3712
    %v4064 = vpack.c.b16 %v3719, %v3716
    %v4065 = vpack.c.b16 %v3720, %v3717
    %v4066 = vpack.c.b16 %v3721, %v3718
    %v4067 = vpack.c.b16 %v3725, %v3722
    %v4068 = vpack.c.b16 %v3726, %v3723
    %v4069 = vpack.c.b16 %v3727, %v3724
    %v4070 = vpack.c.b16 %v3731, %v3728
    %v4071 = vpack.c.b16 %v3732, %v3729
    %v4072 = vpack.c.b16 %v3733, %v3730
    %v4073 = vpack.c.b16 %v3737, %v3734
    %v4074 = vpack.c.b16 %v3738, %v3735
    %v4075 = vpack.c.b16 %v3739, %v3736
    %v4076 = vpack.c.b16 %v3743, %v3740
    %v4077 = vpack.c.b16 %v3744, %v3741
    %v4078 = vpack.c.b16 %v3745, %v3742
    %v4079 = vpack.c.b16 %v3749, %v3746
    %v4080 = vpack.c.b16 %v3750, %v3747
    %v4081 = vpack.c.b16 %v3751, %v3748
    %v4082 = vpack.c.b16 %v3755, %v3752
    %v4083 = vpack.c.b16 %v3756, %v3753
    %v4084 = vpack.c.b16 %v3757, %v3754
    %v4085 = vpack.c.b16 %v3761, %v3758
    %v4086 = vpack.c.b16 %v3762, %v3759
    %v4087 = vpack.c.b16 %v3763, %v3760
    %v4088 = vpack.c.b16 %v3767, %v3764
    %v4089 = vpack.c.b16 %v3768, %v3765
    %v4090 = vpack.c.b16 %v3769, %v3766
    %v4091 = vpack.c.b16 %v3773, %v3770
    %v4092 = vpack.c.b16 %v3774, %v3771
    %v4093 = vpack.c.b16 %v3775, %v3772
    %v4094 = vpack.c.b16 %v3779, %v3776
    %v4095 = vpack.c.b16 %v3780, %v3777
    %v4096 = vpack.c.b16 %v3781, %v3778
    %v4097 = vpack.c.b16 %v3785, %v3782
    %v4098 = vpack.c.b16 %v3786, %v3783
    %v4099 = vpack.c.b16 %v3787, %v3784
    %v4100 = vpack.c.b16 %v3791, %v3788
    %v4101 = vpack.c.b16 %v3792, %v3789
    %v4102 = vpack.c.b16 %v3793, %v3790
    %v4103 = vpack.c.b16 %v3797, %v3794
    %v4104 = vpack.c.b16 %v3798, %v3795
    %v4105 = vpack.c.b16 %v3799, %v3796
    %v4106 = vpack.c.b16 %v3803, %v3800
    %v4107 = vpack.c.b16 %v3804, %v3801
    %v4108 = vpack.c.b16 %v3805, %v3802
    %v4109 = vpack.c.b16 %v3809, %v3806
    %v4110 = vpack.c.b16 %v3810, %v3807
    %v4111 = vpack.c.b16 %v3811, %v3808
    %v4112 = vpack.c.b16 %v3815, %v3812
    %v4113 = vpack.c.b16 %v3816, %v3813
    %v4114 = vpack.c.b16 %v3817, %v3814
    %v4115 = vpack.c.b16 %v3821, %v3818
    %v4116 = vpack.c.b16 %v3822, %v3819
    %v4117 = vpack.c.b16 %v3823, %v3820
    %v4118 = vpack.c.b16 %v3827, %v3824
    %v4119 = vpack.c.b16 %v3828, %v3825
    %v4120 = vpack.c.b16 %v3829, %v3826
    %v4121 = vpack.c.b16 %v3833, %v3830
    %v4122 = vpack.c.b16 %v3834, %v3831
    %v4123 = vpack.c.b16 %v3835, %v3832
    %4412 = vmatpush.bf16.msra.mxu0 %v3857
    %4413 = vmatpush.bf16.msra.mxu0 %v3854
    %4414 = vmatpush.bf16.msra.mxu0 %v3851
    %4415 = vmatpush.bf16.msra.mxu0 %v3848
    %4416 = vmatpush.bf16.msra.mxu0 %v3845
    %4417 = vmatpush.bf16.msra.mxu0 %v3842
    %4418 = vmatpush.bf16.msra.mxu0 %v3839
    %4419 = vmatpush.bf16.msra.mxu0 %v3836
    %4420 = vmatmul.bf16.gmra.mxu0 %v2852
    %v4421 = vpop.f32.mrf.mxu0
    %v4422 = vadd.f32 %v2810, %v4421
    %v4423 = vpop.f32.mrf.mxu0
    %v4424 = vadd.f32 %v2810, %v4423
    %4425 = vdwg.mxu0
    %4426 = vmatpush.bf16.msra.mxu0 %v3881
    %4427 = vmatpush.bf16.msra.mxu0 %v3878
    %4428 = vmatpush.bf16.msra.mxu0 %v3875
    %4429 = vmatpush.bf16.msra.mxu0 %v3872
    %4430 = vmatpush.bf16.msra.mxu0 %v3869
    %4431 = vmatpush.bf16.msra.mxu0 %v3866
    %4432 = vmatpush.bf16.msra.mxu0 %v3863
    %4433 = vmatpush.bf16.msra.mxu0 %v3860
    %4434 = vmatmul.bf16.gmra.mxu0 %v2853
    %v4435 = vpop.f32.mrf.mxu0
    %v4436 = vadd.f32 %v4422, %v4435
    %v4437 = vpop.f32.mrf.mxu0
    %v4438 = vadd.f32 %v4424, %v4437
    %4439 = vdwg.mxu0
    %4440 = vmatpush.bf16.msra.mxu0 %v3905
    %4441 = vmatpush.bf16.msra.mxu0 %v3902
    %4442 = vmatpush.bf16.msra.mxu0 %v3899
    %4443 = vmatpush.bf16.msra.mxu0 %v3896
    %4444 = vmatpush.bf16.msra.mxu0 %v3893
    %4445 = vmatpush.bf16.msra.mxu0 %v3890
    %4446 = vmatpush.bf16.msra.mxu0 %v3887
    %4447 = vmatpush.bf16.msra.mxu0 %v3884
    %4448 = vmatmul.bf16.gmra.mxu0 %v2854
    %v4449 = vpop.f32.mrf.mxu0
    %v4450 = vadd.f32 %v4436, %v4449
    %v4451 = vpop.f32.mrf.mxu0
    %v4452 = vadd.f32 %v4438, %v4451
    %4453 = vdwg.mxu0
    %4454 = vmatpush.bf16.msra.mxu0 %v3929
    %4455 = vmatpush.bf16.msra.mxu0 %v3926
    %4456 = vmatpush.bf16.msra.mxu0 %v3923
    %4457 = vmatpush.bf16.msra.mxu0 %v3920
    %4458 = vmatpush.bf16.msra.mxu0 %v3917
    %4459 = vmatpush.bf16.msra.mxu0 %v3914
    %4460 = vmatpush.bf16.msra.mxu0 %v3911
    %4461 = vmatpush.bf16.msra.mxu0 %v3908
    %4462 = vmatmul.bf16.gmra.mxu0 %v2855
    %v4463 = vpop.f32.mrf.mxu0
    %v4464 = vadd.f32 %v4450, %v4463
    %v4465 = vpop.f32.mrf.mxu0
    %v4466 = vadd.f32 %v4452, %v4465
    %4467 = vdwg.mxu0
    %4468 = vmatpush.bf16.msra.mxu0 %v3953
    %4469 = vmatpush.bf16.msra.mxu0 %v3950
    %4470 = vmatpush.bf16.msra.mxu0 %v3947
    %4471 = vmatpush.bf16.msra.mxu0 %v3944
    %4472 = vmatpush.bf16.msra.mxu0 %v3941
    %4473 = vmatpush.bf16.msra.mxu0 %v3938
    %4474 = vmatpush.bf16.msra.mxu0 %v3935
    %4475 = vmatpush.bf16.msra.mxu0 %v3932
    %4476 = vmatmul.bf16.gmra.mxu0 %v2856
    %v4477 = vpop.f32.mrf.mxu0
    %v4478 = vadd.f32 %v4464, %v4477
    %v4479 = vpop.f32.mrf.mxu0
    %v4480 = vadd.f32 %v4466, %v4479
    %4481 = vdwg.mxu0
    %4482 = vmatpush.bf16.msra.mxu0 %v3977
    %4483 = vmatpush.bf16.msra.mxu0 %v3974
    %4484 = vmatpush.bf16.msra.mxu0 %v3971
    %4485 = vmatpush.bf16.msra.mxu0 %v3968
    %4486 = vmatpush.bf16.msra.mxu0 %v3965
    %4487 = vmatpush.bf16.msra.mxu0 %v3962
    %4488 = vmatpush.bf16.msra.mxu0 %v3959
    %4489 = vmatpush.bf16.msra.mxu0 %v3956
    %4490 = vmatmul.bf16.gmra.mxu0 %v2857
    %v4491 = vpop.f32.mrf.mxu0
    %v4492 = vadd.f32 %v4478, %v4491
    %v4493 = vpop.f32.mrf.mxu0
    %v4494 = vadd.f32 %v4480, %v4493
    %4495 = vdwg.mxu0
    %4496 = vmatpush.bf16.msra.mxu0 %v4001
    %4497 = vmatpush.bf16.msra.mxu0 %v3998
    %4498 = vmatpush.bf16.msra.mxu0 %v3995
    %4499 = vmatpush.bf16.msra.mxu0 %v3992
    %4500 = vmatpush.bf16.msra.mxu0 %v3989
    %4501 = vmatpush.bf16.msra.mxu0 %v3986
    %4502 = vmatpush.bf16.msra.mxu0 %v3983
    %4503 = vmatpush.bf16.msra.mxu0 %v3980
    %4504 = vmatmul.bf16.gmra.mxu0 %v2858
    %v4505 = vpop.f32.mrf.mxu0
    %v4506 = vadd.f32 %v4492, %v4505
    %v4507 = vpop.f32.mrf.mxu0
    %v4508 = vadd.f32 %v4494, %v4507
    %4509 = vdwg.mxu0
    %4510 = vmatpush.bf16.msra.mxu0 %v4025
    %4511 = vmatpush.bf16.msra.mxu0 %v4022
    %4512 = vmatpush.bf16.msra.mxu0 %v4019
    %4513 = vmatpush.bf16.msra.mxu0 %v4016
    %4514 = vmatpush.bf16.msra.mxu0 %v4013
    %4515 = vmatpush.bf16.msra.mxu0 %v4010
    %4516 = vmatpush.bf16.msra.mxu0 %v4007
    %4517 = vmatpush.bf16.msra.mxu0 %v4004
    %4518 = vmatmul.bf16.gmra.mxu0 %v2859
    %v4519 = vpop.f32.mrf.mxu0
    %v4520 = vadd.f32 %v4506, %v4519
    %v4521 = vpop.f32.mrf.mxu0
    %v4522 = vadd.f32 %v4508, %v4521
    %4523 = vdwg.mxu0
    %4524 = vmatpush.bf16.msra.mxu0 %v4049
    %4525 = vmatpush.bf16.msra.mxu0 %v4046
    %4526 = vmatpush.bf16.msra.mxu0 %v4043
    %4527 = vmatpush.bf16.msra.mxu0 %v4040
    %4528 = vmatpush.bf16.msra.mxu0 %v4037
    %4529 = vmatpush.bf16.msra.mxu0 %v4034
    %4530 = vmatpush.bf16.msra.mxu0 %v4031
    %4531 = vmatpush.bf16.msra.mxu0 %v4028
    %4532 = vmatmul.bf16.gmra.mxu0 %v2860
    %v4533 = vpop.f32.mrf.mxu0
    %v4534 = vadd.f32 %v4520, %v4533
    %v4535 = vpop.f32.mrf.mxu0
    %v4536 = vadd.f32 %v4522, %v4535
    %4537 = vdwg.mxu0
    %4538 = vmatpush.bf16.msra.mxu0 %v4073
    %4539 = vmatpush.bf16.msra.mxu0 %v4070
    %4540 = vmatpush.bf16.msra.mxu0 %v4067
    %4541 = vmatpush.bf16.msra.mxu0 %v4064
    %4542 = vmatpush.bf16.msra.mxu0 %v4061
    %4543 = vmatpush.bf16.msra.mxu0 %v4058
    %4544 = vmatpush.bf16.msra.mxu0 %v4055
    %4545 = vmatpush.bf16.msra.mxu0 %v4052
    %4546 = vmatmul.bf16.gmra.mxu0 %v2861
    %v4547 = vpop.f32.mrf.mxu0
    %v4548 = vadd.f32 %v4534, %v4547
    %v4549 = vpop.f32.mrf.mxu0
    %v4550 = vadd.f32 %v4536, %v4549
    %4551 = vdwg.mxu0
    %4552 = vmatpush.bf16.msra.mxu0 %v4097
    %4553 = vmatpush.bf16.msra.mxu0 %v4094
    %4554 = vmatpush.bf16.msra.mxu0 %v4091
    %4555 = vmatpush.bf16.msra.mxu0 %v4088
    %4556 = vmatpush.bf16.msra.mxu0 %v4085
    %4557 = vmatpush.bf16.msra.mxu0 %v4082
    %4558 = vmatpush.bf16.msra.mxu0 %v4079
    %4559 = vmatpush.bf16.msra.mxu0 %v4076
    %4560 = vmatmul.bf16.gmra.mxu0 %v2862
    %v4561 = vpop.f32.mrf.mxu0
    %v4562 = vadd.f32 %v4548, %v4561
    %v4563 = vpop.f32.mrf.mxu0
    %v4564 = vadd.f32 %v4550, %v4563
    %4565 = vdwg.mxu0
    %4566 = vmatpush.bf16.msra.mxu0 %v4121
    %4567 = vmatpush.bf16.msra.mxu0 %v4118
    %4568 = vmatpush.bf16.msra.mxu0 %v4115
    %4569 = vmatpush.bf16.msra.mxu0 %v4112
    %4570 = vmatpush.bf16.msra.mxu0 %v4109
    %4571 = vmatpush.bf16.msra.mxu0 %v4106
    %4572 = vmatpush.bf16.msra.mxu0 %v4103
    %4573 = vmatpush.bf16.msra.mxu0 %v4100
    %4574 = vmatmul.bf16.gmra.mxu0 %v2863
    %v4575 = vpop.f32.mrf.mxu0
    %v4576 = vadd.f32 %v4562, %v4575
    %v4577 = vpop.f32.mrf.mxu0
    %v4578 = vadd.f32 %v4564, %v4577
    %4579 = vdwg.mxu0
    %4580 = vmatpush.bf16.msra.mxu0 %v3858
    %4581 = vmatpush.bf16.msra.mxu0 %v3855
    %4582 = vmatpush.bf16.msra.mxu0 %v3852
    %4583 = vmatpush.bf16.msra.mxu0 %v3849
    %4584 = vmatpush.bf16.msra.mxu0 %v3846
    %4585 = vmatpush.bf16.msra.mxu0 %v3843
    %4586 = vmatpush.bf16.msra.mxu0 %v3840
    %4587 = vmatpush.bf16.msra.mxu0 %v3837
    %4588 = vmatmul.bf16.gmra.mxu0 %v2852
    %v4589 = vpop.f32.mrf.mxu0
    %v4590 = vadd.f32 %v2811, %v4589
    %v4591 = vpop.f32.mrf.mxu0
    %v4592 = vadd.f32 %v2811, %v4591
    %4593 = vdwg.mxu0
    %4594 = vmatpush.bf16.msra.mxu0 %v3882
    %4595 = vmatpush.bf16.msra.mxu0 %v3879
    %4596 = vmatpush.bf16.msra.mxu0 %v3876
    %4597 = vmatpush.bf16.msra.mxu0 %v3873
    %4598 = vmatpush.bf16.msra.mxu0 %v3870
    %4599 = vmatpush.bf16.msra.mxu0 %v3867
    %4600 = vmatpush.bf16.msra.mxu0 %v3864
    %4601 = vmatpush.bf16.msra.mxu0 %v3861
    %4602 = vmatmul.bf16.gmra.mxu0 %v2853
    %v4603 = vpop.f32.mrf.mxu0
    %v4604 = vadd.f32 %v4590, %v4603
    %v4605 = vpop.f32.mrf.mxu0
    %v4606 = vadd.f32 %v4592, %v4605
    %4607 = vdwg.mxu0
    %4608 = vmatpush.bf16.msra.mxu0 %v3906
    %4609 = vmatpush.bf16.msra.mxu0 %v3903
    %4610 = vmatpush.bf16.msra.mxu0 %v3900
    %4611 = vmatpush.bf16.msra.mxu0 %v3897
    %4612 = vmatpush.bf16.msra.mxu0 %v3894
    %4613 = vmatpush.bf16.msra.mxu0 %v3891
    %4614 = vmatpush.bf16.msra.mxu0 %v3888
    %4615 = vmatpush.bf16.msra.mxu0 %v3885
    %4616 = vmatmul.bf16.gmra.mxu0 %v2854
    %v4617 = vpop.f32.mrf.mxu0
    %v4618 = vadd.f32 %v4604, %v4617
    %v4619 = vpop.f32.mrf.mxu0
    %v4620 = vadd.f32 %v4606, %v4619
    %4621 = vdwg.mxu0
    %4622 = vmatpush.bf16.msra.mxu0 %v3930
    %4623 = vmatpush.bf16.msra.mxu0 %v3927
    %4624 = vmatpush.bf16.msra.mxu0 %v3924
    %4625 = vmatpush.bf16.msra.mxu0 %v3921
    %4626 = vmatpush.bf16.msra.mxu0 %v3918
    %4627 = vmatpush.bf16.msra.mxu0 %v3915
    %4628 = vmatpush.bf16.msra.mxu0 %v3912
    %4629 = vmatpush.bf16.msra.mxu0 %v3909
    %4630 = vmatmul.bf16.gmra.mxu0 %v2855
    %v4631 = vpop.f32.mrf.mxu0
    %v4632 = vadd.f32 %v4618, %v4631
    %v4633 = vpop.f32.mrf.mxu0
    %v4634 = vadd.f32 %v4620, %v4633
    %4635 = vdwg.mxu0
    %4636 = vmatpush.bf16.msra.mxu0 %v3954
    %4637 = vmatpush.bf16.msra.mxu0 %v3951
    %4638 = vmatpush.bf16.msra.mxu0 %v3948
    %4639 = vmatpush.bf16.msra.mxu0 %v3945
    %4640 = vmatpush.bf16.msra.mxu0 %v3942
    %4641 = vmatpush.bf16.msra.mxu0 %v3939
    %4642 = vmatpush.bf16.msra.mxu0 %v3936
    %4643 = vmatpush.bf16.msra.mxu0 %v3933
    %4644 = vmatmul.bf16.gmra.mxu0 %v2856
    %v4645 = vpop.f32.mrf.mxu0
    %v4646 = vadd.f32 %v4632, %v4645
    %v4647 = vpop.f32.mrf.mxu0
    %v4648 = vadd.f32 %v4634, %v4647
    %4649 = vdwg.mxu0
    %4650 = vmatpush.bf16.msra.mxu0 %v3978
    %4651 = vmatpush.bf16.msra.mxu0 %v3975
    %4652 = vmatpush.bf16.msra.mxu0 %v3972
    %4653 = vmatpush.bf16.msra.mxu0 %v3969
    %4654 = vmatpush.bf16.msra.mxu0 %v3966
    %4655 = vmatpush.bf16.msra.mxu0 %v3963
    %4656 = vmatpush.bf16.msra.mxu0 %v3960
    %4657 = vmatpush.bf16.msra.mxu0 %v3957
    %4658 = vmatmul.bf16.gmra.mxu0 %v2857
    %v4659 = vpop.f32.mrf.mxu0
    %v4660 = vadd.f32 %v4646, %v4659
    %v4661 = vpop.f32.mrf.mxu0
    %v4662 = vadd.f32 %v4648, %v4661
    %4663 = vdwg.mxu0
    %4664 = vmatpush.bf16.msra.mxu0 %v4002
    %4665 = vmatpush.bf16.msra.mxu0 %v3999
    %4666 = vmatpush.bf16.msra.mxu0 %v3996
    %4667 = vmatpush.bf16.msra.mxu0 %v3993
    %4668 = vmatpush.bf16.msra.mxu0 %v3990
    %4669 = vmatpush.bf16.msra.mxu0 %v3987
    %4670 = vmatpush.bf16.msra.mxu0 %v3984
    %4671 = vmatpush.bf16.msra.mxu0 %v3981
    %4672 = vmatmul.bf16.gmra.mxu0 %v2858
    %v4673 = vpop.f32.mrf.mxu0
    %v4674 = vadd.f32 %v4660, %v4673
    %v4675 = vpop.f32.mrf.mxu0
    %v4676 = vadd.f32 %v4662, %v4675
    %4677 = vdwg.mxu0
    %4678 = vmatpush.bf16.msra.mxu0 %v4026
    %4679 = vmatpush.bf16.msra.mxu0 %v4023
    %4680 = vmatpush.bf16.msra.mxu0 %v4020
    %4681 = vmatpush.bf16.msra.mxu0 %v4017
    %4682 = vmatpush.bf16.msra.mxu0 %v4014
    %4683 = vmatpush.bf16.msra.mxu0 %v4011
    %4684 = vmatpush.bf16.msra.mxu0 %v4008
    %4685 = vmatpush.bf16.msra.mxu0 %v4005
    %4686 = vmatmul.bf16.gmra.mxu0 %v2859
    %v4687 = vpop.f32.mrf.mxu0
    %v4688 = vadd.f32 %v4674, %v4687
    %v4689 = vpop.f32.mrf.mxu0
    %v4690 = vadd.f32 %v4676, %v4689
    %4691 = vdwg.mxu0
    %4692 = vmatpush.bf16.msra.mxu0 %v4050
    %4693 = vmatpush.bf16.msra.mxu0 %v4047
    %4694 = vmatpush.bf16.msra.mxu0 %v4044
    %4695 = vmatpush.bf16.msra.mxu0 %v4041
    %4696 = vmatpush.bf16.msra.mxu0 %v4038
    %4697 = vmatpush.bf16.msra.mxu0 %v4035
    %4698 = vmatpush.bf16.msra.mxu0 %v4032
    %4699 = vmatpush.bf16.msra.mxu0 %v4029
    %4700 = vmatmul.bf16.gmra.mxu0 %v2860
    %v4701 = vpop.f32.mrf.mxu0
    %v4702 = vadd.f32 %v4688, %v4701
    %v4703 = vpop.f32.mrf.mxu0
    %v4704 = vadd.f32 %v4690, %v4703
    %4705 = vdwg.mxu0
    %4706 = vmatpush.bf16.msra.mxu0 %v4074
    %4707 = vmatpush.bf16.msra.mxu0 %v4071
    %4708 = vmatpush.bf16.msra.mxu0 %v4068
    %4709 = vmatpush.bf16.msra.mxu0 %v4065
    %4710 = vmatpush.bf16.msra.mxu0 %v4062
    %4711 = vmatpush.bf16.msra.mxu0 %v4059
    %4712 = vmatpush.bf16.msra.mxu0 %v4056
    %4713 = vmatpush.bf16.msra.mxu0 %v4053
    %4714 = vmatmul.bf16.gmra.mxu0 %v2861
    %v4715 = vpop.f32.mrf.mxu0
    %v4716 = vadd.f32 %v4702, %v4715
    %v4717 = vpop.f32.mrf.mxu0
    %v4718 = vadd.f32 %v4704, %v4717
    %4719 = vdwg.mxu0
    %4720 = vmatpush.bf16.msra.mxu0 %v4098
    %4721 = vmatpush.bf16.msra.mxu0 %v4095
    %4722 = vmatpush.bf16.msra.mxu0 %v4092
    %4723 = vmatpush.bf16.msra.mxu0 %v4089
    %4724 = vmatpush.bf16.msra.mxu0 %v4086
    %4725 = vmatpush.bf16.msra.mxu0 %v4083
    %4726 = vmatpush.bf16.msra.mxu0 %v4080
    %4727 = vmatpush.bf16.msra.mxu0 %v4077
    %4728 = vmatmul.bf16.gmra.mxu0 %v2862
    %v4729 = vpop.f32.mrf.mxu0
    %v4730 = vadd.f32 %v4716, %v4729
    %v4731 = vpop.f32.mrf.mxu0
    %v4732 = vadd.f32 %v4718, %v4731
    %4733 = vdwg.mxu0
    %4734 = vmatpush.bf16.msra.mxu0 %v4122
    %4735 = vmatpush.bf16.msra.mxu0 %v4119
    %4736 = vmatpush.bf16.msra.mxu0 %v4116
    %4737 = vmatpush.bf16.msra.mxu0 %v4113
    %4738 = vmatpush.bf16.msra.mxu0 %v4110
    %4739 = vmatpush.bf16.msra.mxu0 %v4107
    %4740 = vmatpush.bf16.msra.mxu0 %v4104
    %4741 = vmatpush.bf16.msra.mxu0 %v4101
    %4742 = vmatmul.bf16.gmra.mxu0 %v2863
    %v4743 = vpop.f32.mrf.mxu0
    %v4744 = vadd.f32 %v4730, %v4743
    %v4745 = vpop.f32.mrf.mxu0
    %v4746 = vadd.f32 %v4732, %v4745
    %4747 = vdwg.mxu0
    %4748 = vmatpush.bf16.msra.mxu0 %v3859
    %4749 = vmatpush.bf16.msra.mxu0 %v3856
    %4750 = vmatpush.bf16.msra.mxu0 %v3853
    %4751 = vmatpush.bf16.msra.mxu0 %v3850
    %4752 = vmatpush.bf16.msra.mxu0 %v3847
    %4753 = vmatpush.bf16.msra.mxu0 %v3844
    %4754 = vmatpush.bf16.msra.mxu0 %v3841
    %4755 = vmatpush.bf16.msra.mxu0 %v3838
    %4756 = vmatmul.bf16.gmra.mxu0 %v2852
    %v4757 = vpop.f32.mrf.mxu0
    %v4758 = vadd.f32 %v2812, %v4757
    %v4759 = vpop.f32.mrf.mxu0
    %v4760 = vadd.f32 %v2812, %v4759
    %4761 = vdwg.mxu0
    %4762 = vmatpush.bf16.msra.mxu0 %v3883
    %4763 = vmatpush.bf16.msra.mxu0 %v3880
    %4764 = vmatpush.bf16.msra.mxu0 %v3877
    %4765 = vmatpush.bf16.msra.mxu0 %v3874
    %4766 = vmatpush.bf16.msra.mxu0 %v3871
    %4767 = vmatpush.bf16.msra.mxu0 %v3868
    %4768 = vmatpush.bf16.msra.mxu0 %v3865
    %4769 = vmatpush.bf16.msra.mxu0 %v3862
    %4770 = vmatmul.bf16.gmra.mxu0 %v2853
    %v4771 = vpop.f32.mrf.mxu0
    %v4772 = vadd.f32 %v4758, %v4771
    %v4773 = vpop.f32.mrf.mxu0
    %v4774 = vadd.f32 %v4760, %v4773
    %4775 = vdwg.mxu0
    %4776 = vmatpush.bf16.msra.mxu0 %v3907
    %4777 = vmatpush.bf16.msra.mxu0 %v3904
    %4778 = vmatpush.bf16.msra.mxu0 %v3901
    %4779 = vmatpush.bf16.msra.mxu0 %v3898
    %4780 = vmatpush.bf16.msra.mxu0 %v3895
    %4781 = vmatpush.bf16.msra.mxu0 %v3892
    %4782 = vmatpush.bf16.msra.mxu0 %v3889
    %4783 = vmatpush.bf16.msra.mxu0 %v3886
    %4784 = vmatmul.bf16.gmra.mxu0 %v2854
    %v4785 = vpop.f32.mrf.mxu0
    %v4786 = vadd.f32 %v4772, %v4785
    %v4787 = vpop.f32.mrf.mxu0
    %v4788 = vadd.f32 %v4774, %v4787
    %4789 = vdwg.mxu0
    %4790 = vmatpush.bf16.msra.mxu0 %v3931
    %4791 = vmatpush.bf16.msra.mxu0 %v3928
    %4792 = vmatpush.bf16.msra.mxu0 %v3925
    %4793 = vmatpush.bf16.msra.mxu0 %v3922
    %4794 = vmatpush.bf16.msra.mxu0 %v3919
    %4795 = vmatpush.bf16.msra.mxu0 %v3916
    %4796 = vmatpush.bf16.msra.mxu0 %v3913
    %4797 = vmatpush.bf16.msra.mxu0 %v3910
    %4798 = vmatmul.bf16.gmra.mxu0 %v2855
    %v4799 = vpop.f32.mrf.mxu0
    %v4800 = vadd.f32 %v4786, %v4799
    %v4801 = vpop.f32.mrf.mxu0
    %v4802 = vadd.f32 %v4788, %v4801
    %4803 = vdwg.mxu0
    %4804 = vmatpush.bf16.msra.mxu0 %v3955
    %4805 = vmatpush.bf16.msra.mxu0 %v3952
    %4806 = vmatpush.bf16.msra.mxu0 %v3949
    %4807 = vmatpush.bf16.msra.mxu0 %v3946
    %4808 = vmatpush.bf16.msra.mxu0 %v3943
    %4809 = vmatpush.bf16.msra.mxu0 %v3940
    %4810 = vmatpush.bf16.msra.mxu0 %v3937
    %4811 = vmatpush.bf16.msra.mxu0 %v3934
    %4812 = vmatmul.bf16.gmra.mxu0 %v2856
    %v4813 = vpop.f32.mrf.mxu0
    %v4814 = vadd.f32 %v4800, %v4813
    %v4815 = vpop.f32.mrf.mxu0
    %v4816 = vadd.f32 %v4802, %v4815
    %4817 = vdwg.mxu0
    %4818 = vmatpush.bf16.msra.mxu0 %v3979
    %4819 = vmatpush.bf16.msra.mxu0 %v3976
    %4820 = vmatpush.bf16.msra.mxu0 %v3973
    %4821 = vmatpush.bf16.msra.mxu0 %v3970
    %4822 = vmatpush.bf16.msra.mxu0 %v3967
    %4823 = vmatpush.bf16.msra.mxu0 %v3964
    %4824 = vmatpush.bf16.msra.mxu0 %v3961
    %4825 = vmatpush.bf16.msra.mxu0 %v3958
    %4826 = vmatmul.bf16.gmra.mxu0 %v2857
    %v4827 = vpop.f32.mrf.mxu0
    %v4828 = vadd.f32 %v4814, %v4827
    %v4829 = vpop.f32.mrf.mxu0
    %v4830 = vadd.f32 %v4816, %v4829
    %4831 = vdwg.mxu0
    %4832 = vmatpush.bf16.msra.mxu0 %v4003
    %4833 = vmatpush.bf16.msra.mxu0 %v4000
    %4834 = vmatpush.bf16.msra.mxu0 %v3997
    %4835 = vmatpush.bf16.msra.mxu0 %v3994
    %4836 = vmatpush.bf16.msra.mxu0 %v3991
    %4837 = vmatpush.bf16.msra.mxu0 %v3988
    %4838 = vmatpush.bf16.msra.mxu0 %v3985
    %4839 = vmatpush.bf16.msra.mxu0 %v3982
    %4840 = vmatmul.bf16.gmra.mxu0 %v2858
    %v4841 = vpop.f32.mrf.mxu0
    %v4842 = vadd.f32 %v4828, %v4841
    %v4843 = vpop.f32.mrf.mxu0
    %v4844 = vadd.f32 %v4830, %v4843
    %4845 = vdwg.mxu0
    %4846 = vmatpush.bf16.msra.mxu0 %v4027
    %4847 = vmatpush.bf16.msra.mxu0 %v4024
    %4848 = vmatpush.bf16.msra.mxu0 %v4021
    %4849 = vmatpush.bf16.msra.mxu0 %v4018
    %4850 = vmatpush.bf16.msra.mxu0 %v4015
    %4851 = vmatpush.bf16.msra.mxu0 %v4012
    %4852 = vmatpush.bf16.msra.mxu0 %v4009
    %4853 = vmatpush.bf16.msra.mxu0 %v4006
    %4854 = vmatmul.bf16.gmra.mxu0 %v2859
    %v4855 = vpop.f32.mrf.mxu0
    %v4856 = vadd.f32 %v4842, %v4855
    %v4857 = vpop.f32.mrf.mxu0
    %v4858 = vadd.f32 %v4844, %v4857
    %4859 = vdwg.mxu0
    %4860 = vmatpush.bf16.msra.mxu0 %v4051
    %4861 = vmatpush.bf16.msra.mxu0 %v4048
    %4862 = vmatpush.bf16.msra.mxu0 %v4045
    %4863 = vmatpush.bf16.msra.mxu0 %v4042
    %4864 = vmatpush.bf16.msra.mxu0 %v4039
    %4865 = vmatpush.bf16.msra.mxu0 %v4036
    %4866 = vmatpush.bf16.msra.mxu0 %v4033
    %4867 = vmatpush.bf16.msra.mxu0 %v4030
    %4868 = vmatmul.bf16.gmra.mxu0 %v2860
    %v4869 = vpop.f32.mrf.mxu0
    %v4870 = vadd.f32 %v4856, %v4869
    %v4871 = vpop.f32.mrf.mxu0
    %v4872 = vadd.f32 %v4858, %v4871
    %4873 = vdwg.mxu0
    %4874 = vmatpush.bf16.msra.mxu0 %v4075
    %4875 = vmatpush.bf16.msra.mxu0 %v4072
    %4876 = vmatpush.bf16.msra.mxu0 %v4069
    %4877 = vmatpush.bf16.msra.mxu0 %v4066
    %4878 = vmatpush.bf16.msra.mxu0 %v4063
    %4879 = vmatpush.bf16.msra.mxu0 %v4060
    %4880 = vmatpush.bf16.msra.mxu0 %v4057
    %4881 = vmatpush.bf16.msra.mxu0 %v4054
    %4882 = vmatmul.bf16.gmra.mxu0 %v2861
    %v4883 = vpop.f32.mrf.mxu0
    %v4884 = vadd.f32 %v4870, %v4883
    %v4885 = vpop.f32.mrf.mxu0
    %v4886 = vadd.f32 %v4872, %v4885
    %4887 = vdwg.mxu0
    %4888 = vmatpush.bf16.msra.mxu0 %v4099
    %4889 = vmatpush.bf16.msra.mxu0 %v4096
    %4890 = vmatpush.bf16.msra.mxu0 %v4093
    %4891 = vmatpush.bf16.msra.mxu0 %v4090
    %4892 = vmatpush.bf16.msra.mxu0 %v4087
    %4893 = vmatpush.bf16.msra.mxu0 %v4084
    %4894 = vmatpush.bf16.msra.mxu0 %v4081
    %4895 = vmatpush.bf16.msra.mxu0 %v4078
    %4896 = vmatmul.bf16.gmra.mxu0 %v2862
    %v4897 = vpop.f32.mrf.mxu0
    %v4898 = vadd.f32 %v4884, %v4897
    %v4899 = vpop.f32.mrf.mxu0
    %v4900 = vadd.f32 %v4886, %v4899
    %4901 = vdwg.mxu0
    %4902 = vmatpush.bf16.msra.mxu0 %v4123
    %4903 = vmatpush.bf16.msra.mxu0 %v4120
    %4904 = vmatpush.bf16.msra.mxu0 %v4117
    %4905 = vmatpush.bf16.msra.mxu0 %v4114
    %4906 = vmatpush.bf16.msra.mxu0 %v4111
    %4907 = vmatpush.bf16.msra.mxu0 %v4108
    %4908 = vmatpush.bf16.msra.mxu0 %v4105
    %4909 = vmatpush.bf16.msra.mxu0 %v4102
    %4910 = vmatmul.bf16.gmra.mxu0 %v2863
    %v4911 = vpop.f32.mrf.mxu0
    %v4912 = vadd.f32 %v4898, %v4911
    %v4913 = vpop.f32.mrf.mxu0
    %v4914 = vadd.f32 %v4900, %v4913
    %4915 = vdwg.mxu0
    %4916 = vst [vmem:[#allocation12] sm:$0xff] %v4576
    %4917 = vst [vmem:[#allocation12 + $0x8] sm:$0xff] %v4744
    %4918 = vst [vmem:[#allocation12 + $0x10] sm:$0xff] %v4912
    %4919 = vst [vmem:[#allocation12 + $0x18] sm:$0xff] %v4578
    %4920 = vst [vmem:[#allocation12 + $0x20] sm:$0xff] %v4746
    %4921 = vst [vmem:[#allocation12 + $0x28] sm:$0xff] %v4914
    // Predicated region
    $region42: #{tpu_custom_call.1} parent=1 // pred_check
      _
    $region43: #{tpu_custom_call.1} parent=1 // pred_check_branch
      %4923 = sbr.rel (0) target = $region45
    $region44: #{tpu_custom_call.1} parent=1 // pred_region
      %4925 = vsyncadd [#allocation5], 0
      %s4926 = sshll.u32 [#allocation12], 4
      %s4927 = int_to_ptr.vmem [resolvable:$true] %s4926
      %s4928 = sshll.u32 %s5, 4
      %s4929 = int_to_ptr.hbm [resolvable:$true] %s4928
      %4934 = dma.vmem_to_hbm [thread:$0]  %s4927, 768, %s4929, [#allocation5], 384, 384, 24
    $region45: #{tpu_custom_call.1} parent=1 // pred_fallthru
      _
    // Predicated region
    $region46: #{tpu_custom_call.1} parent=1 // pred_check
      _
    $region47: #{tpu_custom_call.1} parent=1 // pred_check_branch
      %4936 = sbr.rel (0) target = $region49
    $region48: #{tpu_custom_call.1} parent=1 // pred_region
      %4938 = dma.done [#allocation5], 768
    $region49: #{tpu_custom_call.1} parent=1 // pred_fallthru
      _
    %4939 = vsyncpa [#allocation4], 1
    %4940 = vsyncpa [#allocation7], 1
    %4941 = vsyncpa [#allocation10], 1
    %4942 = vsyncpa [#allocation5], 1

// kernel: tpu_custom_call.1
$region0: #{tpu_custom_call.1}
  #allocation0 [shape = 'u32[]', space=smem, size = 0x4, offset = 0x4, fixed_abs, tag = 'smem constant byte address 0x4 - core index']
  #allocation1 [shape = 'u32[72,128]{1,0:T(1,128)}', space=vmem, size = 0x9000, scoped, tag = 'internal scratch']
  #allocation2 [shape = 'bf16[16,1536]{1,0:T(8,128)(2,1)}', space=vmem, size = 0xc000, scoped, tag = 'scratch operand']
  %s0 = inlined_call_operand.hbm [shape: f32[16,384], index: 0, kind: input, shape index: {}]
  %s1 = inlined_call_operand.hbm [shape: bf16[384,1536], index: 1, kind: input, shape index: {}]
  %s2 = inlined_call_operand.hbm [shape: f32[1,1536], index: 2, kind: input, shape index: {}]
  %s3 = inlined_call_operand.hbm [shape: bf16[1536,384], index: 3, kind: input, shape index: {}]
  %s4 = inlined_call_operand.hbm [shape: f32[1,384], index: 4, kind: input, shape index: {}]
  %s5 = inlined_call_operand.hbm [shape: f32[16,384], index: 5, kind: output, shape index: {}]
  %s6 = sld [smem:[#allocation0]]
  $region50: #{tpu_custom_call.1} parent=0
    _
  %s8 = ssub.s32 1, %s6
  %s9 = scalar_select 0, %s8, %s6
  $region1: #{tpu_custom_call.1} parent=0
    #allocation3 [shape = 'u8[24576]{0}', space=vmem, size = 0x6000, scoped, tag = 'input window, operand 0, single buffered']
    #allocation4 [shape = 's32[1]{0}', space=sflag, size = 0x4, scoped, tag = 'scoped memory for tpu_custom_call.1']
    #allocation5 [shape = 's32[1]{0}', space=sflag, size = 0x4, scoped, tag = 'scoped memory for tpu_custom_call.1']
    #allocation6 [shape = 'u8[1179648]{0}', space=vmem, size = 0x120000, scoped, tag = 'input window, operand 1, single buffered']
    #allocation7 [shape = 's32[1]{0}', space=sflag, size = 0x4, scoped, tag = 'scoped memory for tpu_custom_call.1']
    #allocation8 [shape = 'u8[6144]{0}', space=vmem, size = 0x1800, scoped, tag = 'input window, operand 2, single buffered']
    #allocation9 [shape = 'u8[1179648]{0}', space=vmem, size = 0x120000, scoped, tag = 'input window, operand 3, single buffered']
    #allocation10 [shape = 's32[1]{0}', space=sflag, size = 0x4, scoped, tag = 'scoped memory for tpu_custom_call.1']
    #allocation11 [shape = 'u8[1536]{0}', space=vmem, size = 0x800, scoped, tag = 'input window, operand 4, single buffered']
    #allocation12 [shape = 'u8[24576]{0}', space=vmem, size = 0x6000, scoped, tag = 'output window, operand 0, single buffered']
    %10 = vsyncpa [#allocation4], 0
    %11 = vsyncpa [#allocation7], 0
    %12 = vsyncpa [#allocation10], 0
    %13 = vsyncpa [#allocation5], 0
    // Predicated region
    $region2: #{tpu_custom_call.1} parent=1 // pred_check
      _
    $region3: #{tpu_custom_call.1} parent=1 // pred_check_branch
      %15 = sbr.rel (0) target = $region5
    $region4: #{tpu_custom_call.1} parent=1 // pred_region
      %17 = vsyncadd [#allocation4], 0
      %s18 = sshll.u32 %s0, 4
      %s19 = int_to_ptr.hbm [resolvable:$true] %s18
      %s20 = sshll.u32 [#allocation3], 4
      %s21 = int_to_ptr.vmem [resolvable:$true] %s20
      %26 = dma.hbm_to_vmem [thread:$0]  %s19, 768, %s21, [#allocation4], 384, 384, 24
    $region5: #{tpu_custom_call.1} parent=1 // pred_fallthru
      _
    // Predicated region
    $region6: #{tpu_custom_call.1} parent=1 // pred_check
      _
    $region7: #{tpu_custom_call.1} parent=1 // pred_check_branch
      %28 = sbr.rel (0) target = $region9
    $region8: #{tpu_custom_call.1} parent=1 // pred_region
      %30 = vsyncadd [#allocation7], 0
      %s31 = sshll.u32 %s1, 4
      %s32 = int_to_ptr.hbm [resolvable:$true] %s31
      %s33 = sshll.u32 [#allocation6], 4
      %s34 = int_to_ptr.vmem [resolvable:$true] %s33
      %39 = dma.hbm_to_vmem [thread:$0]  %s32, 36864, %s34, [#allocation7], 768, 768, 48
    $region9: #{tpu_custom_call.1} parent=1 // pred_fallthru
      _
    // Predicated region
    $region10: #{tpu_custom_call.1} parent=1 // pred_check
      _
    $region11: #{tpu_custom_call.1} parent=1 // pred_check_branch
      %41 = sbr.rel (0) target = $region13
    $region12: #{tpu_custom_call.1} parent=1 // pred_region
      %43 = vsyncadd [#allocation7], 0
      %s45 = sshll.u32 %s2, 4
      %s46 = int_to_ptr.hbm [resolvable:$true] %s45
      %s47 = sshll.u32 [#allocation8], 4
      %s48 = int_to_ptr.vmem [resolvable:$true] %s47
      %50 = dma.hbm_to_vmem [thread:$0]  %s46, 192, %s48, [#allocation7]
    $region13: #{tpu_custom_call.1} parent=1 // pred_fallthru
      _
    // Predicated region
    $region14: #{tpu_custom_call.1} parent=1 // pred_check
      _
    $region15: #{tpu_custom_call.1} parent=1 // pred_check_branch
      %52 = sbr.rel (0) target = $region17
    $region16: #{tpu_custom_call.1} parent=1 // pred_region
      %54 = vsyncadd [#allocation10], 0
      %s55 = sshll.u32 %s3, 4
      %s56 = int_to_ptr.hbm [resolvable:$true] %s55
      %s57 = sshll.u32 [#allocation9], 4
      %s58 = int_to_ptr.vmem [resolvable:$true] %s57
      %63 = dma.hbm_to_vmem [thread:$0]  %s56, 36864, %s58, [#allocation10], 192, 192, 12
    $region17: #{tpu_custom_call.1} parent=1 // pred_fallthru
      _
    // Predicated region
    $region18: #{tpu_custom_call.1} parent=1 // pred_check
      _
    $region19: #{tpu_custom_call.1} parent=1 // pred_check_branch
      %65 = sbr.rel (0) target = $region21
    $region20: #{tpu_custom_call.1} parent=1 // pred_region
      %67 = vsyncadd [#allocation10], 0
      %s69 = sshll.u32 %s4, 4
      %s70 = int_to_ptr.hbm [resolvable:$true] %s69
      %s71 = sshll.u32 [#allocation11], 4
      %s72 = int_to_ptr.vmem [resolvable:$true] %s71
      %74 = dma.hbm_to_vmem [thread:$0]  %s70, 48, %s72, [#allocation10]
    $region21: #{tpu_custom_call.1} parent=1 // pred_fallthru
      _
    // Predicated region
    $region22: #{tpu_custom_call.1} parent=1 // pred_check
      _
    $region23: #{tpu_custom_call.1} parent=1 // pred_check_branch
      %76 = sbr.rel (0) target = $region25
    $region24: #{tpu_custom_call.1} parent=1 // pred_region
      %78 = dma.done [#allocation4], 768
    $region25: #{tpu_custom_call.1} parent=1 // pred_fallthru
      _
    // Predicated region
    $region26: #{tpu_custom_call.1} parent=1 // pred_check
      _
    $region27: #{tpu_custom_call.1} parent=1 // pred_check_branch
      %80 = sbr.rel (0) target = $region29
    $region28: #{tpu_custom_call.1} parent=1 // pred_region
      %82 = dma.done [#allocation7], 36864
    $region29: #{tpu_custom_call.1} parent=1 // pred_fallthru
      _
    // Predicated region
    $region30: #{tpu_custom_call.1} parent=1 // pred_check
      _
    $region31: #{tpu_custom_call.1} parent=1 // pred_check_branch
      %84 = sbr.rel (0) target = $region33
    $region32: #{tpu_custom_call.1} parent=1 // pred_region
      %86 = dma.done [#allocation7], 192
    $region33: #{tpu_custom_call.1} parent=1 // pred_fallthru
      _
    // Predicated region
    $region34: #{tpu_custom_call.1} parent=1 // pred_check
      _
    $region35: #{tpu_custom_call.1} parent=1 // pred_check_branch
      %88 = sbr.rel (0) target = $region37
    $region36: #{tpu_custom_call.1} parent=1 // pred_region
      %90 = dma.done [#allocation10], 36864
    $region37: #{tpu_custom_call.1} parent=1 // pred_fallthru
      _
    // Predicated region
    $region38: #{tpu_custom_call.1} parent=1 // pred_check
      _
    $region39: #{tpu_custom_call.1} parent=1 // pred_check_branch
      %92 = sbr.rel (0) target = $region41
    $region40: #{tpu_custom_call.1} parent=1 // pred_region
      %94 = dma.done [#allocation10], 48
    $region41: #{tpu_custom_call.1} parent=1 // pred_fallthru
      _
    %v95 = vld [vmem:[#allocation3] sm:$0xff]
    %v96 = vld [vmem:[#allocation3 + $0x8] sm:$0xff]
    %v97 = vld [vmem:[#allocation3 + $0x10] sm:$0xff]
    %v98 = vld [vmem:[#allocation3 + $0x18] sm:$0xff]
    %v99 = vld [vmem:[#allocation3 + $0x20] sm:$0xff]
    %v100 = vld [vmem:[#allocation3 + $0x28] sm:$0xff]
    %v101 = vpack.c.bf16 %v98, %v95
    %v102 = vpack.c.bf16 %v99, %v96
    %v103 = vpack.c.bf16 %v100, %v97
    %v104 = vld [vmem:[#allocation6] sm:$0xff]
    %v105 = vld [vmem:[#allocation6 + $0x8] sm:$0xff]
    %v106 = vld [vmem:[#allocation6 + $0x10] sm:$0xff]
    %v107 = vld [vmem:[#allocation6 + $0x18] sm:$0xff]
    %v108 = vld [vmem:[#allocation6 + $0x20] sm:$0xff]
    %v109 = vld [vmem:[#allocation6 + $0x28] sm:$0xff]
    %v110 = vld [vmem:[#allocation6 + $0x30] sm:$0xff]
    %v111 = vld [vmem:[#allocation6 + $0x38] sm:$0xff]
    %v112 = vld [vmem:[#allocation6 + $0x40] sm:$0xff]
    %v113 = vld [vmem:[#allocation6 + $0x48] sm:$0xff]
    %v114 = vld [vmem:[#allocation6 + $0x50] sm:$0xff]
    %v115 = vld [vmem:[#allocation6 + $0x58] sm:$0xff]
    %v116 = vld [vmem:[#allocation6 + $0x60] sm:$0xff]
    %v117 = vld [vmem:[#allocation6 + $0x68] sm:$0xff]
    %v118 = vld [vmem:[#allocation6 + $0x70] sm:$0xff]
    %v119 = vld [vmem:[#allocation6 + $0x78] sm:$0xff]
    %v120 = vld [vmem:[#allocation6 + $0x80] sm:$0xff]
    %v121 = vld [vmem:[#allocation6 + $0x88] sm:$0xff]
    %v122 = vld [vmem:[#allocation6 + $0x90] sm:$0xff]
    %v123 = vld [vmem:[#allocation6 + $0x98] sm:$0xff]
    %v124 = vld [vmem:[#allocation6 + $0xa0] sm:$0xff]
    %v125 = vld [vmem:[#allocation6 + $0xa8] sm:$0xff]
    %v126 = vld [vmem:[#allocation6 + $0xb0] sm:$0xff]
    %v127 = vld [vmem:[#allocation6 + $0xb8] sm:$0xff]
    %v128 = vld [vmem:[#allocation6 + $0xc0] sm:$0xff]
    %v129 = vld [vmem:[#allocation6 + $0xc8] sm:$0xff]
    %v130 = vld [vmem:[#allocation6 + $0xd0] sm:$0xff]
    %v131 = vld [vmem:[#allocation6 + $0xd8] sm:$0xff]
    %v132 = vld [vmem:[#allocation6 + $0xe0] sm:$0xff]
    %v133 = vld [vmem:[#allocation6 + $0xe8] sm:$0xff]
    %v134 = vld [vmem:[#allocation6 + $0xf0] sm:$0xff]
    %v135 = vld [vmem:[#allocation6 + $0xf8] sm:$0xff]
    %v136 = vld [vmem:[#allocation6 + $0x100] sm:$0xff]
    %v137 = vld [vmem:[#allocation6 + $0x108] sm:$0xff]
    %v138 = vld [vmem:[#allocation6 + $0x110] sm:$0xff]
    %v139 = vld [vmem:[#allocation6 + $0x118] sm:$0xff]
    %v140 = vld [vmem:[#allocation6 + $0x120] sm:$0xff]
    %v141 = vld [vmem:[#allocation6 + $0x128] sm:$0xff]
    %v142 = vld [vmem:[#allocation6 + $0x130] sm:$0xff]
    %v143 = vld [vmem:[#allocation6 + $0x138] sm:$0xff]
    %v144 = vld [vmem:[#allocation6 + $0x140] sm:$0xff]
    %v145 = vld [vmem:[#allocation6 + $0x148] sm:$0xff]
    %v146 = vld [vmem:[#allocation6 + $0x150] sm:$0xff]
    %v147 = vld [vmem:[#allocation6 + $0x158] sm:$0xff]
    %v148 = vld [vmem:[#allocation6 + $0x160] sm:$0xff]
    %v149 = vld [vmem:[#allocation6 + $0x168] sm:$0xff]
    %v150 = vld [vmem:[#allocation6 + $0x170] sm:$0xff]
    %v151 = vld [vmem:[#allocation6 + $0x178] sm:$0xff]
    %v152 = vld [vmem:[#allocation6 + $0x180] sm:$0xff]
    %v153 = vld [vmem:[#allocation6 + $0x188] sm:$0xff]
    %v154 = vld [vmem:[#allocation6 + $0x190] sm:$0xff]
    %v155 = vld [vmem:[#allocation6 + $0x198] sm:$0xff]
    %v156 = vld [vmem:[#allocation6 + $0x1a0] sm:$0xff]
    %v157 = vld [vmem:[#allocation6 + $0x1a8] sm:$0xff]
    %v158 = vld [vmem:[#allocation6 + $0x1b0] sm:$0xff]
    %v159 = vld [vmem:[#allocation6 + $0x1b8] sm:$0xff]
    %v160 = vld [vmem:[#allocation6 + $0x1c0] sm:$0xff]
    %v161 = vld [vmem:[#allocation6 + $0x1c8] sm:$0xff]
    %v162 = vld [vmem:[#allocation6 + $0x1d0] sm:$0xff]
    %v163 = vld [vmem:[#allocation6 + $0x1d8] sm:$0xff]
    %v164 = vld [vmem:[#allocation6 + $0x1e0] sm:$0xff]
    %v165 = vld [vmem:[#allocation6 + $0x1e8] sm:$0xff]
    %v166 = vld [vmem:[#allocation6 + $0x1f0] sm:$0xff]
    %v167 = vld [vmem:[#allocation6 + $0x1f8] sm:$0xff]
    %v168 = vld [vmem:[#allocation6 + $0x200] sm:$0xff]
    %v169 = vld [vmem:[#allocation6 + $0x208] sm:$0xff]
    %v170 = vld [vmem:[#allocation6 + $0x210] sm:$0xff]
    %v171 = vld [vmem:[#allocation6 + $0x218] sm:$0xff]
    %v172 = vld [vmem:[#allocation6 + $0x220] sm:$0xff]
    %v173 = vld [vmem:[#allocation6 + $0x228] sm:$0xff]
    %v174 = vld [vmem:[#allocation6 + $0x230] sm:$0xff]
    %v175 = vld [vmem:[#allocation6 + $0x238] sm:$0xff]
    %v176 = vld [vmem:[#allocation6 + $0x240] sm:$0xff]
    %v177 = vld [vmem:[#allocation6 + $0x248] sm:$0xff]
    %v178 = vld [vmem:[#allocation6 + $0x250] sm:$0xff]
    %v179 = vld [vmem:[#allocation6 + $0x258] sm:$0xff]
    %v180 = vld [vmem:[#allocation6 + $0x260] sm:$0xff]
    %v181 = vld [vmem:[#allocation6 + $0x268] sm:$0xff]
    %v182 = vld [vmem:[#allocation6 + $0x270] sm:$0xff]
    %v183 = vld [vmem:[#allocation6 + $0x278] sm:$0xff]
    %v184 = vld [vmem:[#allocation6 + $0x280] sm:$0xff]
    %v185 = vld [vmem:[#allocation6 + $0x288] sm:$0xff]
    %v186 = vld [vmem:[#allocation6 + $0x290] sm:$0xff]
    %v187 = vld [vmem:[#allocation6 + $0x298] sm:$0xff]
    %v188 = vld [vmem:[#allocation6 + $0x2a0] sm:$0xff]
    %v189 = vld [vmem:[#allocation6 + $0x2a8] sm:$0xff]
    %v190 = vld [vmem:[#allocation6 + $0x2b0] sm:$0xff]
    %v191 = vld [vmem:[#allocation6 + $0x2b8] sm:$0xff]
    %v192 = vld [vmem:[#allocation6 + $0x2c0] sm:$0xff]
    %v193 = vld [vmem:[#allocation6 + $0x2c8] sm:$0xff]
    %v194 = vld [vmem:[#allocation6 + $0x2d0] sm:$0xff]
    %v195 = vld [vmem:[#allocation6 + $0x2d8] sm:$0xff]
    %v196 = vld [vmem:[#allocation6 + $0x2e0] sm:$0xff]
    %v197 = vld [vmem:[#allocation6 + $0x2e8] sm:$0xff]
    %v198 = vld [vmem:[#allocation6 + $0x2f0] sm:$0xff]
    %v199 = vld [vmem:[#allocation6 + $0x2f8] sm:$0xff]
    %v200 = vld [vmem:[#allocation6 + $0x300] sm:$0xff]
    %v201 = vld [vmem:[#allocation6 + $0x308] sm:$0xff]
    %v202 = vld [vmem:[#allocation6 + $0x310] sm:$0xff]
    %v203 = vld [vmem:[#allocation6 + $0x318] sm:$0xff]
    %v204 = vld [vmem:[#allocation6 + $0x320] sm:$0xff]
    %v205 = vld [vmem:[#allocation6 + $0x328] sm:$0xff]
    %v206 = vld [vmem:[#allocation6 + $0x330] sm:$0xff]
    %v207 = vld [vmem:[#allocation6 + $0x338] sm:$0xff]
    %v208 = vld [vmem:[#allocation6 + $0x340] sm:$0xff]
    %v209 = vld [vmem:[#allocation6 + $0x348] sm:$0xff]
    %v210 = vld [vmem:[#allocation6 + $0x350] sm:$0xff]
    %v211 = vld [vmem:[#allocation6 + $0x358] sm:$0xff]
    %v212 = vld [vmem:[#allocation6 + $0x360] sm:$0xff]
    %v213 = vld [vmem:[#allocation6 + $0x368] sm:$0xff]
    %v214 = vld [vmem:[#allocation6 + $0x370] sm:$0xff]
    %v215 = vld [vmem:[#allocation6 + $0x378] sm:$0xff]
    %v216 = vld [vmem:[#allocation6 + $0x380] sm:$0xff]
    %v217 = vld [vmem:[#allocation6 + $0x388] sm:$0xff]
    %v218 = vld [vmem:[#allocation6 + $0x390] sm:$0xff]
    %v219 = vld [vmem:[#allocation6 + $0x398] sm:$0xff]
    %v220 = vld [vmem:[#allocation6 + $0x3a0] sm:$0xff]
    %v221 = vld [vmem:[#allocation6 + $0x3a8] sm:$0xff]
    %v222 = vld [vmem:[#allocation6 + $0x3b0] sm:$0xff]
    %v223 = vld [vmem:[#allocation6 + $0x3b8] sm:$0xff]
    %v224 = vld [vmem:[#allocation6 + $0x3c0] sm:$0xff]
    %v225 = vld [vmem:[#allocation6 + $0x3c8] sm:$0xff]
    %v226 = vld [vmem:[#allocation6 + $0x3d0] sm:$0xff]
    %v227 = vld [vmem:[#allocation6 + $0x3d8] sm:$0xff]
    %v228 = vld [vmem:[#allocation6 + $0x3e0] sm:$0xff]
    %v229 = vld [vmem:[#allocation6 + $0x3e8] sm:$0xff]
    %v230 = vld [vmem:[#allocation6 + $0x3f0] sm:$0xff]
    %v231 = vld [vmem:[#allocation6 + $0x3f8] sm:$0xff]
    %v232 = vld [vmem:[#allocation6 + $0x400] sm:$0xff]
    %v233 = vld [vmem:[#allocation6 + $0x408] sm:$0xff]
    %v234 = vld [vmem:[#allocation6 + $0x410] sm:$0xff]
    %v235 = vld [vmem:[#allocation6 + $0x418] sm:$0xff]
    %v236 = vld [vmem:[#allocation6 + $0x420] sm:$0xff]
    %v237 = vld [vmem:[#allocation6 + $0x428] sm:$0xff]
    %v238 = vld [vmem:[#allocation6 + $0x430] sm:$0xff]
    %v239 = vld [vmem:[#allocation6 + $0x438] sm:$0xff]
    %v240 = vld [vmem:[#allocation6 + $0x440] sm:$0xff]
    %v241 = vld [vmem:[#allocation6 + $0x448] sm:$0xff]
    %v242 = vld [vmem:[#allocation6 + $0x450] sm:$0xff]
    %v243 = vld [vmem:[#allocation6 + $0x458] sm:$0xff]
    %v244 = vld [vmem:[#allocation6 + $0x460] sm:$0xff]
    %v245 = vld [vmem:[#allocation6 + $0x468] sm:$0xff]
    %v246 = vld [vmem:[#allocation6 + $0x470] sm:$0xff]
    %v247 = vld [vmem:[#allocation6 + $0x478] sm:$0xff]
    %v248 = vld [vmem:[#allocation6 + $0x480] sm:$0xff]
    %v249 = vld [vmem:[#allocation6 + $0x488] sm:$0xff]
    %v250 = vld [vmem:[#allocation6 + $0x490] sm:$0xff]
    %v251 = vld [vmem:[#allocation6 + $0x498] sm:$0xff]
    %v252 = vld [vmem:[#allocation6 + $0x4a0] sm:$0xff]
    %v253 = vld [vmem:[#allocation6 + $0x4a8] sm:$0xff]
    %v254 = vld [vmem:[#allocation6 + $0x4b0] sm:$0xff]
    %v255 = vld [vmem:[#allocation6 + $0x4b8] sm:$0xff]
    %v256 = vld [vmem:[#allocation6 + $0x4c0] sm:$0xff]
    %v257 = vld [vmem:[#allocation6 + $0x4c8] sm:$0xff]
    %v258 = vld [vmem:[#allocation6 + $0x4d0] sm:$0xff]
    %v259 = vld [vmem:[#allocation6 + $0x4d8] sm:$0xff]
    %v260 = vld [vmem:[#allocation6 + $0x4e0] sm:$0xff]
    %v261 = vld [vmem:[#allocation6 + $0x4e8] sm:$0xff]
    %v262 = vld [vmem:[#allocation6 + $0x4f0] sm:$0xff]
    %v263 = vld [vmem:[#allocation6 + $0x4f8] sm:$0xff]
    %v264 = vld [vmem:[#allocation6 + $0x500] sm:$0xff]
    %v265 = vld [vmem:[#allocation6 + $0x508] sm:$0xff]
    %v266 = vld [vmem:[#allocation6 + $0x510] sm:$0xff]
    %v267 = vld [vmem:[#allocation6 + $0x518] sm:$0xff]
    %v268 = vld [vmem:[#allocation6 + $0x520] sm:$0xff]
    %v269 = vld [vmem:[#allocation6 + $0x528] sm:$0xff]
    %v270 = vld [vmem:[#allocation6 + $0x530] sm:$0xff]
    %v271 = vld [vmem:[#allocation6 + $0x538] sm:$0xff]
    %v272 = vld [vmem:[#allocation6 + $0x540] sm:$0xff]
    %v273 = vld [vmem:[#allocation6 + $0x548] sm:$0xff]
    %v274 = vld [vmem:[#allocation6 + $0x550] sm:$0xff]
    %v275 = vld [vmem:[#allocation6 + $0x558] sm:$0xff]
    %v276 = vld [vmem:[#allocation6 + $0x560] sm:$0xff]
    %v277 = vld [vmem:[#allocation6 + $0x568] sm:$0xff]
    %v278 = vld [vmem:[#allocation6 + $0x570] sm:$0xff]
    %v279 = vld [vmem:[#allocation6 + $0x578] sm:$0xff]
    %v280 = vld [vmem:[#allocation6 + $0x580] sm:$0xff]
    %v281 = vld [vmem:[#allocation6 + $0x588] sm:$0xff]
    %v282 = vld [vmem:[#allocation6 + $0x590] sm:$0xff]
    %v283 = vld [vmem:[#allocation6 + $0x598] sm:$0xff]
    %v284 = vld [vmem:[#allocation6 + $0x5a0] sm:$0xff]
    %v285 = vld [vmem:[#allocation6 + $0x5a8] sm:$0xff]
    %v286 = vld [vmem:[#allocation6 + $0x5b0] sm:$0xff]
    %v287 = vld [vmem:[#allocation6 + $0x5b8] sm:$0xff]
    %v288 = vld [vmem:[#allocation6 + $0x5c0] sm:$0xff]
    %v289 = vld [vmem:[#allocation6 + $0x5c8] sm:$0xff]
    %v290 = vld [vmem:[#allocation6 + $0x5d0] sm:$0xff]
    %v291 = vld [vmem:[#allocation6 + $0x5d8] sm:$0xff]
    %v292 = vld [vmem:[#allocation6 + $0x5e0] sm:$0xff]
    %v293 = vld [vmem:[#allocation6 + $0x5e8] sm:$0xff]
    %v294 = vld [vmem:[#allocation6 + $0x5f0] sm:$0xff]
    %v295 = vld [vmem:[#allocation6 + $0x5f8] sm:$0xff]
    %v296 = vld [vmem:[#allocation6 + $0x600] sm:$0xff]
    %v297 = vld [vmem:[#allocation6 + $0x608] sm:$0xff]
    %v298 = vld [vmem:[#allocation6 + $0x610] sm:$0xff]
    %v299 = vld [vmem:[#allocation6 + $0x618] sm:$0xff]
    %v300 = vld [vmem:[#allocation6 + $0x620] sm:$0xff]
    %v301 = vld [vmem:[#allocation6 + $0x628] sm:$0xff]
    %v302 = vld [vmem:[#allocation6 + $0x630] sm:$0xff]
    %v303 = vld [vmem:[#allocation6 + $0x638] sm:$0xff]
    %v304 = vld [vmem:[#allocation6 + $0x640] sm:$0xff]
    %v305 = vld [vmem:[#allocation6 + $0x648] sm:$0xff]
    %v306 = vld [vmem:[#allocation6 + $0x650] sm:$0xff]
    %v307 = vld [vmem:[#allocation6 + $0x658] sm:$0xff]
    %v308 = vld [vmem:[#allocation6 + $0x660] sm:$0xff]
    %v309 = vld [vmem:[#allocation6 + $0x668] sm:$0xff]
    %v310 = vld [vmem:[#allocation6 + $0x670] sm:$0xff]
    %v311 = vld [vmem:[#allocation6 + $0x678] sm:$0xff]
    %v312 = vld [vmem:[#allocation6 + $0x680] sm:$0xff]
    %v313 = vld [vmem:[#allocation6 + $0x688] sm:$0xff]
    %v314 = vld [vmem:[#allocation6 + $0x690] sm:$0xff]
    %v315 = vld [vmem:[#allocation6 + $0x698] sm:$0xff]
    %v316 = vld [vmem:[#allocation6 + $0x6a0] sm:$0xff]
    %v317 = vld [vmem:[#allocation6 + $0x6a8] sm:$0xff]
    %v318 = vld [vmem:[#allocation6 + $0x6b0] sm:$0xff]
    %v319 = vld [vmem:[#allocation6 + $0x6b8] sm:$0xff]
    %v320 = vld [vmem:[#allocation6 + $0x6c0] sm:$0xff]
    %v321 = vld [vmem:[#allocation6 + $0x6c8] sm:$0xff]
    %v322 = vld [vmem:[#allocation6 + $0x6d0] sm:$0xff]
    %v323 = vld [vmem:[#allocation6 + $0x6d8] sm:$0xff]
    %v324 = vld [vmem:[#allocation6 + $0x6e0] sm:$0xff]
    %v325 = vld [vmem:[#allocation6 + $0x6e8] sm:$0xff]
    %v326 = vld [vmem:[#allocation6 + $0x6f0] sm:$0xff]
    %v327 = vld [vmem:[#allocation6 + $0x6f8] sm:$0xff]
    %v328 = vld [vmem:[#allocation6 + $0x700] sm:$0xff]
    %v329 = vld [vmem:[#allocation6 + $0x708] sm:$0xff]
    %v330 = vld [vmem:[#allocation6 + $0x710] sm:$0xff]
    %v331 = vld [vmem:[#allocation6 + $0x718] sm:$0xff]
    %v332 = vld [vmem:[#allocation6 + $0x720] sm:$0xff]
    %v333 = vld [vmem:[#allocation6 + $0x728] sm:$0xff]
    %v334 = vld [vmem:[#allocation6 + $0x730] sm:$0xff]
    %v335 = vld [vmem:[#allocation6 + $0x738] sm:$0xff]
    %v336 = vld [vmem:[#allocation6 + $0x740] sm:$0xff]
    %v337 = vld [vmem:[#allocation6 + $0x748] sm:$0xff]
    %v338 = vld [vmem:[#allocation6 + $0x750] sm:$0xff]
    %v339 = vld [vmem:[#allocation6 + $0x758] sm:$0xff]
    %v340 = vld [vmem:[#allocation6 + $0x760] sm:$0xff]
    %v341 = vld [vmem:[#allocation6 + $0x768] sm:$0xff]
    %v342 = vld [vmem:[#allocation6 + $0x770] sm:$0xff]
    %v343 = vld [vmem:[#allocation6 + $0x778] sm:$0xff]
    %v344 = vld [vmem:[#allocation6 + $0x780] sm:$0xff]
    %v345 = vld [vmem:[#allocation6 + $0x788] sm:$0xff]
    %v346 = vld [vmem:[#allocation6 + $0x790] sm:$0xff]
    %v347 = vld [vmem:[#allocation6 + $0x798] sm:$0xff]
    %v348 = vld [vmem:[#allocation6 + $0x7a0] sm:$0xff]
    %v349 = vld [vmem:[#allocation6 + $0x7a8] sm:$0xff]
    %v350 = vld [vmem:[#allocation6 + $0x7b0] sm:$0xff]
    %v351 = vld [vmem:[#allocation6 + $0x7b8] sm:$0xff]
    %v352 = vld [vmem:[#allocation6 + $0x7c0] sm:$0xff]
    %v353 = vld [vmem:[#allocation6 + $0x7c8] sm:$0xff]
    %v354 = vld [vmem:[#allocation6 + $0x7d0] sm:$0xff]
    %v355 = vld [vmem:[#allocation6 + $0x7d8] sm:$0xff]
    %v356 = vld [vmem:[#allocation6 + $0x7e0] sm:$0xff]
    %v357 = vld [vmem:[#allocation6 + $0x7e8] sm:$0xff]
    %v358 = vld [vmem:[#allocation6 + $0x7f0] sm:$0xff]
    %v359 = vld [vmem:[#allocation6 + $0x7f8] sm:$0xff]
    %v360 = vld [vmem:[#allocation6 + $0x800] sm:$0xff]
    %v361 = vld [vmem:[#allocation6 + $0x808] sm:$0xff]
    %v362 = vld [vmem:[#allocation6 + $0x810] sm:$0xff]
    %v363 = vld [vmem:[#allocation6 + $0x818] sm:$0xff]
    %v364 = vld [vmem:[#allocation6 + $0x820] sm:$0xff]
    %v365 = vld [vmem:[#allocation6 + $0x828] sm:$0xff]
    %v366 = vld [vmem:[#allocation6 + $0x830] sm:$0xff]
    %v367 = vld [vmem:[#allocation6 + $0x838] sm:$0xff]
    %v368 = vld [vmem:[#allocation6 + $0x840] sm:$0xff]
    %v369 = vld [vmem:[#allocation6 + $0x848] sm:$0xff]
    %v370 = vld [vmem:[#allocation6 + $0x850] sm:$0xff]
    %v371 = vld [vmem:[#allocation6 + $0x858] sm:$0xff]
    %v372 = vld [vmem:[#allocation6 + $0x860] sm:$0xff]
    %v373 = vld [vmem:[#allocation6 + $0x868] sm:$0xff]
    %v374 = vld [vmem:[#allocation6 + $0x870] sm:$0xff]
    %v375 = vld [vmem:[#allocation6 + $0x878] sm:$0xff]
    %v376 = vld [vmem:[#allocation6 + $0x880] sm:$0xff]
    %v377 = vld [vmem:[#allocation6 + $0x888] sm:$0xff]
    %v378 = vld [vmem:[#allocation6 + $0x890] sm:$0xff]
    %v379 = vld [vmem:[#allocation6 + $0x898] sm:$0xff]
    %v380 = vld [vmem:[#allocation6 + $0x8a0] sm:$0xff]
    %v381 = vld [vmem:[#allocation6 + $0x8a8] sm:$0xff]
    %v382 = vld [vmem:[#allocation6 + $0x8b0] sm:$0xff]
    %v383 = vld [vmem:[#allocation6 + $0x8b8] sm:$0xff]
    %v384 = vld [vmem:[#allocation6 + $0x8c0] sm:$0xff]
    %v385 = vld [vmem:[#allocation6 + $0x8c8] sm:$0xff]
    %v386 = vld [vmem:[#allocation6 + $0x8d0] sm:$0xff]
    %v387 = vld [vmem:[#allocation6 + $0x8d8] sm:$0xff]
    %v388 = vld [vmem:[#allocation6 + $0x8e0] sm:$0xff]
    %v389 = vld [vmem:[#allocation6 + $0x8e8] sm:$0xff]
    %v390 = vld [vmem:[#allocation6 + $0x8f0] sm:$0xff]
    %v391 = vld [vmem:[#allocation6 + $0x8f8] sm:$0xff]
    %v392 = vld [vmem:[#allocation8] sm:$0xff]
    %v393 = vld [vmem:[#allocation8 + $0x8] sm:$0xf]
    %v396 = vperm.slane %v392, 0
    %v397 = vperm.slane %v392, 1
    %v398 = vperm.slane %v392, 2
    %v399 = vperm.slane %v392, 3
    %v400 = vperm.slane %v392, 4
    %v401 = vperm.slane %v392, 5
    %v402 = vperm.slane %v392, 6
    %v403 = vperm.slane %v392, 7
    %v404 = vperm.slane %v393, 0
    %v405 = vperm.slane %v393, 1
    %v406 = vperm.slane %v393, 2
    %v407 = vperm.slane %v393, 3
    %v708 = vunpack.c.l.b16 %v104
    %v709 = vunpack.c.h.b16 %v104
    %v710 = vunpack.c.l.b16 %v105
    %v711 = vunpack.c.h.b16 %v105
    %v712 = vunpack.c.l.b16 %v106
    %v713 = vunpack.c.h.b16 %v106
    %v714 = vunpack.c.l.b16 %v107
    %v715 = vunpack.c.h.b16 %v107
    %v716 = vunpack.c.l.b16 %v108
    %v717 = vunpack.c.h.b16 %v108
    %v718 = vunpack.c.l.b16 %v109
    %v719 = vunpack.c.h.b16 %v109
    %v720 = vunpack.c.l.b16 %v110
    %v721 = vunpack.c.h.b16 %v110
    %v722 = vunpack.c.l.b16 %v111
    %v723 = vunpack.c.h.b16 %v111
    %v724 = vunpack.c.l.b16 %v112
    %v725 = vunpack.c.h.b16 %v112
    %v726 = vunpack.c.l.b16 %v113
    %v727 = vunpack.c.h.b16 %v113
    %v728 = vunpack.c.l.b16 %v114
    %v729 = vunpack.c.h.b16 %v114
    %v730 = vunpack.c.l.b16 %v115
    %v731 = vunpack.c.h.b16 %v115
    %v732 = vunpack.c.l.b16 %v116
    %v733 = vunpack.c.h.b16 %v116
    %v734 = vunpack.c.l.b16 %v117
    %v735 = vunpack.c.h.b16 %v117
    %v736 = vunpack.c.l.b16 %v118
    %v737 = vunpack.c.h.b16 %v118
    %v738 = vunpack.c.l.b16 %v119
    %v739 = vunpack.c.h.b16 %v119
    %v740 = vunpack.c.l.b16 %v120
    %v741 = vunpack.c.h.b16 %v120
    %v742 = vunpack.c.l.b16 %v121
    %v743 = vunpack.c.h.b16 %v121
    %v744 = vunpack.c.l.b16 %v122
    %v745 = vunpack.c.h.b16 %v122
    %v746 = vunpack.c.l.b16 %v123
    %v747 = vunpack.c.h.b16 %v123
    %v748 = vunpack.c.l.b16 %v124
    %v749 = vunpack.c.h.b16 %v124
    %v750 = vunpack.c.l.b16 %v125
    %v751 = vunpack.c.h.b16 %v125
    %v752 = vunpack.c.l.b16 %v126
    %v753 = vunpack.c.h.b16 %v126
    %v754 = vunpack.c.l.b16 %v127
    %v755 = vunpack.c.h.b16 %v127
    %v756 = vunpack.c.l.b16 %v128
    %v757 = vunpack.c.h.b16 %v128
    %v758 = vunpack.c.l.b16 %v129
    %v759 = vunpack.c.h.b16 %v129
    %v760 = vunpack.c.l.b16 %v130
    %v761 = vunpack.c.h.b16 %v130
    %v762 = vunpack.c.l.b16 %v131
    %v763 = vunpack.c.h.b16 %v131
    %v764 = vunpack.c.l.b16 %v132
    %v765 = vunpack.c.h.b16 %v132
    %v766 = vunpack.c.l.b16 %v133
    %v767 = vunpack.c.h.b16 %v133
    %v768 = vunpack.c.l.b16 %v134
    %v769 = vunpack.c.h.b16 %v134
    %v770 = vunpack.c.l.b16 %v135
    %v771 = vunpack.c.h.b16 %v135
    %v772 = vunpack.c.l.b16 %v136
    %v773 = vunpack.c.h.b16 %v136
    %v774 = vunpack.c.l.b16 %v137
    %v775 = vunpack.c.h.b16 %v137
    %v776 = vunpack.c.l.b16 %v138
    %v777 = vunpack.c.h.b16 %v138
    %v778 = vunpack.c.l.b16 %v139
    %v779 = vunpack.c.h.b16 %v139
    %v780 = vunpack.c.l.b16 %v140
    %v781 = vunpack.c.h.b16 %v140
    %v782 = vunpack.c.l.b16 %v141
    %v783 = vunpack.c.h.b16 %v141
    %v784 = vunpack.c.l.b16 %v142
    %v785 = vunpack.c.h.b16 %v142
    %v786 = vunpack.c.l.b16 %v143
    %v787 = vunpack.c.h.b16 %v143
    %v788 = vunpack.c.l.b16 %v144
    %v789 = vunpack.c.h.b16 %v144
    %v790 = vunpack.c.l.b16 %v145
    %v791 = vunpack.c.h.b16 %v145
    %v792 = vunpack.c.l.b16 %v146
    %v793 = vunpack.c.h.b16 %v146
    %v794 = vunpack.c.l.b16 %v147
    %v795 = vunpack.c.h.b16 %v147
    %v796 = vunpack.c.l.b16 %v148
    %v797 = vunpack.c.h.b16 %v148
    %v798 = vunpack.c.l.b16 %v149
    %v799 = vunpack.c.h.b16 %v149
    %v800 = vunpack.c.l.b16 %v150
    %v801 = vunpack.c.h.b16 %v150
    %v802 = vunpack.c.l.b16 %v151
    %v803 = vunpack.c.h.b16 %v151
    %v804 = vunpack.c.l.b16 %v152
    %v805 = vunpack.c.h.b16 %v152
    %v806 = vunpack.c.l.b16 %v153
    %v807 = vunpack.c.h.b16 %v153
    %v808 = vunpack.c.l.b16 %v154
    %v809 = vunpack.c.h.b16 %v154
    %v810 = vunpack.c.l.b16 %v155
    %v811 = vunpack.c.h.b16 %v155
    %v812 = vunpack.c.l.b16 %v156
    %v813 = vunpack.c.h.b16 %v156
    %v814 = vunpack.c.l.b16 %v157
    %v815 = vunpack.c.h.b16 %v157
    %v816 = vunpack.c.l.b16 %v158
    %v817 = vunpack.c.h.b16 %v158
    %v818 = vunpack.c.l.b16 %v159
    %v819 = vunpack.c.h.b16 %v159
    %v820 = vunpack.c.l.b16 %v160
    %v821 = vunpack.c.h.b16 %v160
    %v822 = vunpack.c.l.b16 %v161
    %v823 = vunpack.c.h.b16 %v161
    %v824 = vunpack.c.l.b16 %v162
    %v825 = vunpack.c.h.b16 %v162
    %v826 = vunpack.c.l.b16 %v163
    %v827 = vunpack.c.h.b16 %v163
    %v828 = vunpack.c.l.b16 %v164
    %v829 = vunpack.c.h.b16 %v164
    %v830 = vunpack.c.l.b16 %v165
    %v831 = vunpack.c.h.b16 %v165
    %v832 = vunpack.c.l.b16 %v166
    %v833 = vunpack.c.h.b16 %v166
    %v834 = vunpack.c.l.b16 %v167
    %v835 = vunpack.c.h.b16 %v167
    %v836 = vunpack.c.l.b16 %v168
    %v837 = vunpack.c.h.b16 %v168
    %v838 = vunpack.c.l.b16 %v169
    %v839 = vunpack.c.h.b16 %v169
    %v840 = vunpack.c.l.b16 %v170
    %v841 = vunpack.c.h.b16 %v170
    %v842 = vunpack.c.l.b16 %v171
    %v843 = vunpack.c.h.b16 %v171
    %v844 = vunpack.c.l.b16 %v172
    %v845 = vunpack.c.h.b16 %v172
    %v846 = vunpack.c.l.b16 %v173
    %v847 = vunpack.c.h.b16 %v173
    %v848 = vunpack.c.l.b16 %v174
    %v849 = vunpack.c.h.b16 %v174
    %v850 = vunpack.c.l.b16 %v175
    %v851 = vunpack.c.h.b16 %v175
    %v852 = vunpack.c.l.b16 %v176
    %v853 = vunpack.c.h.b16 %v176
    %v854 = vunpack.c.l.b16 %v177
    %v855 = vunpack.c.h.b16 %v177
    %v856 = vunpack.c.l.b16 %v178
    %v857 = vunpack.c.h.b16 %v178
    %v858 = vunpack.c.l.b16 %v179
    %v859 = vunpack.c.h.b16 %v179
    %v860 = vunpack.c.l.b16 %v180
    %v861 = vunpack.c.h.b16 %v180
    %v862 = vunpack.c.l.b16 %v181
    %v863 = vunpack.c.h.b16 %v181
    %v864 = vunpack.c.l.b16 %v182
    %v865 = vunpack.c.h.b16 %v182
    %v866 = vunpack.c.l.b16 %v183
    %v867 = vunpack.c.h.b16 %v183
    %v868 = vunpack.c.l.b16 %v184
    %v869 = vunpack.c.h.b16 %v184
    %v870 = vunpack.c.l.b16 %v185
    %v871 = vunpack.c.h.b16 %v185
    %v872 = vunpack.c.l.b16 %v186
    %v873 = vunpack.c.h.b16 %v186
    %v874 = vunpack.c.l.b16 %v187
    %v875 = vunpack.c.h.b16 %v187
    %v876 = vunpack.c.l.b16 %v188
    %v877 = vunpack.c.h.b16 %v188
    %v878 = vunpack.c.l.b16 %v189
    %v879 = vunpack.c.h.b16 %v189
    %v880 = vunpack.c.l.b16 %v190
    %v881 = vunpack.c.h.b16 %v190
    %v882 = vunpack.c.l.b16 %v191
    %v883 = vunpack.c.h.b16 %v191
    %v884 = vunpack.c.l.b16 %v192
    %v885 = vunpack.c.h.b16 %v192
    %v886 = vunpack.c.l.b16 %v193
    %v887 = vunpack.c.h.b16 %v193
    %v888 = vunpack.c.l.b16 %v194
    %v889 = vunpack.c.h.b16 %v194
    %v890 = vunpack.c.l.b16 %v195
    %v891 = vunpack.c.h.b16 %v195
    %v892 = vunpack.c.l.b16 %v196
    %v893 = vunpack.c.h.b16 %v196
    %v894 = vunpack.c.l.b16 %v197
    %v895 = vunpack.c.h.b16 %v197
    %v896 = vunpack.c.l.b16 %v198
    %v897 = vunpack.c.h.b16 %v198
    %v898 = vunpack.c.l.b16 %v199
    %v899 = vunpack.c.h.b16 %v199
    %v900 = vunpack.c.l.b16 %v200
    %v901 = vunpack.c.h.b16 %v200
    %v902 = vunpack.c.l.b16 %v201
    %v903 = vunpack.c.h.b16 %v201
    %v904 = vunpack.c.l.b16 %v202
    %v905 = vunpack.c.h.b16 %v202
    %v906 = vunpack.c.l.b16 %v203
    %v907 = vunpack.c.h.b16 %v203
    %v908 = vunpack.c.l.b16 %v204
    %v909 = vunpack.c.h.b16 %v204
    %v910 = vunpack.c.l.b16 %v205
    %v911 = vunpack.c.h.b16 %v205
    %v912 = vunpack.c.l.b16 %v206
    %v913 = vunpack.c.h.b16 %v206
    %v914 = vunpack.c.l.b16 %v207
    %v915 = vunpack.c.h.b16 %v207
    %v916 = vunpack.c.l.b16 %v208
    %v917 = vunpack.c.h.b16 %v208
    %v918 = vunpack.c.l.b16 %v209
    %v919 = vunpack.c.h.b16 %v209
    %v920 = vunpack.c.l.b16 %v210
    %v921 = vunpack.c.h.b16 %v210
    %v922 = vunpack.c.l.b16 %v211
    %v923 = vunpack.c.h.b16 %v211
    %v924 = vunpack.c.l.b16 %v212
    %v925 = vunpack.c.h.b16 %v212
    %v926 = vunpack.c.l.b16 %v213
    %v927 = vunpack.c.h.b16 %v213
    %v928 = vunpack.c.l.b16 %v214
    %v929 = vunpack.c.h.b16 %v214
    %v930 = vunpack.c.l.b16 %v215
    %v931 = vunpack.c.h.b16 %v215
    %v932 = vunpack.c.l.b16 %v216
    %v933 = vunpack.c.h.b16 %v216
    %v934 = vunpack.c.l.b16 %v217
    %v935 = vunpack.c.h.b16 %v217
    %v936 = vunpack.c.l.b16 %v218
    %v937 = vunpack.c.h.b16 %v218
    %v938 = vunpack.c.l.b16 %v219
    %v939 = vunpack.c.h.b16 %v219
    %v940 = vunpack.c.l.b16 %v220
    %v941 = vunpack.c.h.b16 %v220
    %v942 = vunpack.c.l.b16 %v221
    %v943 = vunpack.c.h.b16 %v221
    %v944 = vunpack.c.l.b16 %v222
    %v945 = vunpack.c.h.b16 %v222
    %v946 = vunpack.c.l.b16 %v223
    %v947 = vunpack.c.h.b16 %v223
    %v948 = vunpack.c.l.b16 %v224
    %v949 = vunpack.c.h.b16 %v224
    %v950 = vunpack.c.l.b16 %v225
    %v951 = vunpack.c.h.b16 %v225
    %v952 = vunpack.c.l.b16 %v226
    %v953 = vunpack.c.h.b16 %v226
    %v954 = vunpack.c.l.b16 %v227
    %v955 = vunpack.c.h.b16 %v227
    %v956 = vunpack.c.l.b16 %v228
    %v957 = vunpack.c.h.b16 %v228
    %v958 = vunpack.c.l.b16 %v229
    %v959 = vunpack.c.h.b16 %v229
    %v960 = vunpack.c.l.b16 %v230
    %v961 = vunpack.c.h.b16 %v230
    %v962 = vunpack.c.l.b16 %v231
    %v963 = vunpack.c.h.b16 %v231
    %v964 = vunpack.c.l.b16 %v232
    %v965 = vunpack.c.h.b16 %v232
    %v966 = vunpack.c.l.b16 %v233
    %v967 = vunpack.c.h.b16 %v233
    %v968 = vunpack.c.l.b16 %v234
    %v969 = vunpack.c.h.b16 %v234
    %v970 = vunpack.c.l.b16 %v235
    %v971 = vunpack.c.h.b16 %v235
    %v972 = vunpack.c.l.b16 %v236
    %v973 = vunpack.c.h.b16 %v236
    %v974 = vunpack.c.l.b16 %v237
    %v975 = vunpack.c.h.b16 %v237
    %v976 = vunpack.c.l.b16 %v238
    %v977 = vunpack.c.h.b16 %v238
    %v978 = vunpack.c.l.b16 %v239
    %v979 = vunpack.c.h.b16 %v239
    %v980 = vunpack.c.l.b16 %v240
    %v981 = vunpack.c.h.b16 %v240
    %v982 = vunpack.c.l.b16 %v241
    %v983 = vunpack.c.h.b16 %v241
    %v984 = vunpack.c.l.b16 %v242
    %v985 = vunpack.c.h.b16 %v242
    %v986 = vunpack.c.l.b16 %v243
    %v987 = vunpack.c.h.b16 %v243
    %v988 = vunpack.c.l.b16 %v244
    %v989 = vunpack.c.h.b16 %v244
    %v990 = vunpack.c.l.b16 %v245
    %v991 = vunpack.c.h.b16 %v245
    %v992 = vunpack.c.l.b16 %v246
    %v993 = vunpack.c.h.b16 %v246
    %v994 = vunpack.c.l.b16 %v247
    %v995 = vunpack.c.h.b16 %v247
    %v996 = vunpack.c.l.b16 %v248
    %v997 = vunpack.c.h.b16 %v248
    %v998 = vunpack.c.l.b16 %v249
    %v999 = vunpack.c.h.b16 %v249
    %v1000 = vunpack.c.l.b16 %v250
    %v1001 = vunpack.c.h.b16 %v250
    %v1002 = vunpack.c.l.b16 %v251
    %v1003 = vunpack.c.h.b16 %v251
    %v1004 = vunpack.c.l.b16 %v252
    %v1005 = vunpack.c.h.b16 %v252
    %v1006 = vunpack.c.l.b16 %v253
    %v1007 = vunpack.c.h.b16 %v253
    %v1008 = vunpack.c.l.b16 %v254
    %v1009 = vunpack.c.h.b16 %v254
    %v1010 = vunpack.c.l.b16 %v255
    %v1011 = vunpack.c.h.b16 %v255
    %v1012 = vunpack.c.l.b16 %v256
    %v1013 = vunpack.c.h.b16 %v256
    %v1014 = vunpack.c.l.b16 %v257
    %v1015 = vunpack.c.h.b16 %v257
    %v1016 = vunpack.c.l.b16 %v258
    %v1017 = vunpack.c.h.b16 %v258
    %v1018 = vunpack.c.l.b16 %v259
    %v1019 = vunpack.c.h.b16 %v259
    %v1020 = vunpack.c.l.b16 %v260
    %v1021 = vunpack.c.h.b16 %v260
    %v1022 = vunpack.c.l.b16 %v261
    %v1023 = vunpack.c.h.b16 %v261
    %v1024 = vunpack.c.l.b16 %v262
    %v1025 = vunpack.c.h.b16 %v262
    %v1026 = vunpack.c.l.b16 %v263
    %v1027 = vunpack.c.h.b16 %v263
    %v1028 = vunpack.c.l.b16 %v264
    %v1029 = vunpack.c.h.b16 %v264
    %v1030 = vunpack.c.l.b16 %v265
    %v1031 = vunpack.c.h.b16 %v265
    %v1032 = vunpack.c.l.b16 %v266
    %v1033 = vunpack.c.h.b16 %v266
    %v1034 = vunpack.c.l.b16 %v267
    %v1035 = vunpack.c.h.b16 %v267
    %v1036 = vunpack.c.l.b16 %v268
    %v1037 = vunpack.c.h.b16 %v268
    %v1038 = vunpack.c.l.b16 %v269
    %v1039 = vunpack.c.h.b16 %v269
    %v1040 = vunpack.c.l.b16 %v270
    %v1041 = vunpack.c.h.b16 %v270
    %v1042 = vunpack.c.l.b16 %v271
    %v1043 = vunpack.c.h.b16 %v271
    %v1044 = vunpack.c.l.b16 %v272
    %v1045 = vunpack.c.h.b16 %v272
    %v1046 = vunpack.c.l.b16 %v273
    %v1047 = vunpack.c.h.b16 %v273
    %v1048 = vunpack.c.l.b16 %v274
    %v1049 = vunpack.c.h.b16 %v274
    %v1050 = vunpack.c.l.b16 %v275
    %v1051 = vunpack.c.h.b16 %v275
    %v1052 = vunpack.c.l.b16 %v276
    %v1053 = vunpack.c.h.b16 %v276
    %v1054 = vunpack.c.l.b16 %v277
    %v1055 = vunpack.c.h.b16 %v277
    %v1056 = vunpack.c.l.b16 %v278
    %v1057 = vunpack.c.h.b16 %v278
    %v1058 = vunpack.c.l.b16 %v279
    %v1059 = vunpack.c.h.b16 %v279
    %v1060 = vunpack.c.l.b16 %v280
    %v1061 = vunpack.c.h.b16 %v280
    %v1062 = vunpack.c.l.b16 %v281
    %v1063 = vunpack.c.h.b16 %v281
    %v1064 = vunpack.c.l.b16 %v282
    %v1065 = vunpack.c.h.b16 %v282
    %v1066 = vunpack.c.l.b16 %v283
    %v1067 = vunpack.c.h.b16 %v283
    %v1068 = vunpack.c.l.b16 %v284
    %v1069 = vunpack.c.h.b16 %v284
    %v1070 = vunpack.c.l.b16 %v285
    %v1071 = vunpack.c.h.b16 %v285
    %v1072 = vunpack.c.l.b16 %v286
    %v1073 = vunpack.c.h.b16 %v286
    %v1074 = vunpack.c.l.b16 %v287
    %v1075 = vunpack.c.h.b16 %v287
    %v1076 = vunpack.c.l.b16 %v288
    %v1077 = vunpack.c.h.b16 %v288
    %v1078 = vunpack.c.l.b16 %v289
    %v1079 = vunpack.c.h.b16 %v289
    %v1080 = vunpack.c.l.b16 %v290
    %v1081 = vunpack.c.h.b16 %v290
    %v1082 = vunpack.c.l.b16 %v291
    %v1083 = vunpack.c.h.b16 %v291
    %v1084 = vunpack.c.l.b16 %v292
    %v1085 = vunpack.c.h.b16 %v292
    %v1086 = vunpack.c.l.b16 %v293
    %v1087 = vunpack.c.h.b16 %v293
    %v1088 = vunpack.c.l.b16 %v294
    %v1089 = vunpack.c.h.b16 %v294
    %v1090 = vunpack.c.l.b16 %v295
    %v1091 = vunpack.c.h.b16 %v295
    %v1092 = vunpack.c.l.b16 %v296
    %v1093 = vunpack.c.h.b16 %v296
    %v1094 = vunpack.c.l.b16 %v297
    %v1095 = vunpack.c.h.b16 %v297
    %v1096 = vunpack.c.l.b16 %v298
    %v1097 = vunpack.c.h.b16 %v298
    %v1098 = vunpack.c.l.b16 %v299
    %v1099 = vunpack.c.h.b16 %v299
    %v1100 = vunpack.c.l.b16 %v300
    %v1101 = vunpack.c.h.b16 %v300
    %v1102 = vunpack.c.l.b16 %v301
    %v1103 = vunpack.c.h.b16 %v301
    %v1104 = vunpack.c.l.b16 %v302
    %v1105 = vunpack.c.h.b16 %v302
    %v1106 = vunpack.c.l.b16 %v303
    %v1107 = vunpack.c.h.b16 %v303
    %v1108 = vunpack.c.l.b16 %v304
    %v1109 = vunpack.c.h.b16 %v304
    %v1110 = vunpack.c.l.b16 %v305
    %v1111 = vunpack.c.h.b16 %v305
    %v1112 = vunpack.c.l.b16 %v306
    %v1113 = vunpack.c.h.b16 %v306
    %v1114 = vunpack.c.l.b16 %v307
    %v1115 = vunpack.c.h.b16 %v307
    %v1116 = vunpack.c.l.b16 %v308
    %v1117 = vunpack.c.h.b16 %v308
    %v1118 = vunpack.c.l.b16 %v309
    %v1119 = vunpack.c.h.b16 %v309
    %v1120 = vunpack.c.l.b16 %v310
    %v1121 = vunpack.c.h.b16 %v310
    %v1122 = vunpack.c.l.b16 %v311
    %v1123 = vunpack.c.h.b16 %v311
    %v1124 = vunpack.c.l.b16 %v312
    %v1125 = vunpack.c.h.b16 %v312
    %v1126 = vunpack.c.l.b16 %v313
    %v1127 = vunpack.c.h.b16 %v313
    %v1128 = vunpack.c.l.b16 %v314
    %v1129 = vunpack.c.h.b16 %v314
    %v1130 = vunpack.c.l.b16 %v315
    %v1131 = vunpack.c.h.b16 %v315
    %v1132 = vunpack.c.l.b16 %v316
    %v1133 = vunpack.c.h.b16 %v316
    %v1134 = vunpack.c.l.b16 %v317
    %v1135 = vunpack.c.h.b16 %v317
    %v1136 = vunpack.c.l.b16 %v318
    %v1137 = vunpack.c.h.b16 %v318
    %v1138 = vunpack.c.l.b16 %v319
    %v1139 = vunpack.c.h.b16 %v319
    %v1140 = vunpack.c.l.b16 %v320
    %v1141 = vunpack.c.h.b16 %v320
    %v1142 = vunpack.c.l.b16 %v321
    %v1143 = vunpack.c.h.b16 %v321
    %v1144 = vunpack.c.l.b16 %v322
    %v1145 = vunpack.c.h.b16 %v322
    %v1146 = vunpack.c.l.b16 %v323
    %v1147 = vunpack.c.h.b16 %v323
    %v1148 = vunpack.c.l.b16 %v324
    %v1149 = vunpack.c.h.b16 %v324
    %v1150 = vunpack.c.l.b16 %v325
    %v1151 = vunpack.c.h.b16 %v325
    %v1152 = vunpack.c.l.b16 %v326
    %v1153 = vunpack.c.h.b16 %v326
    %v1154 = vunpack.c.l.b16 %v327
    %v1155 = vunpack.c.h.b16 %v327
    %v1156 = vunpack.c.l.b16 %v328
    %v1157 = vunpack.c.h.b16 %v328
    %v1158 = vunpack.c.l.b16 %v329
    %v1159 = vunpack.c.h.b16 %v329
    %v1160 = vunpack.c.l.b16 %v330
    %v1161 = vunpack.c.h.b16 %v330
    %v1162 = vunpack.c.l.b16 %v331
    %v1163 = vunpack.c.h.b16 %v331
    %v1164 = vunpack.c.l.b16 %v332
    %v1165 = vunpack.c.h.b16 %v332
    %v1166 = vunpack.c.l.b16 %v333
    %v1167 = vunpack.c.h.b16 %v333
    %v1168 = vunpack.c.l.b16 %v334
    %v1169 = vunpack.c.h.b16 %v334
    %v1170 = vunpack.c.l.b16 %v335
    %v1171 = vunpack.c.h.b16 %v335
    %v1172 = vunpack.c.l.b16 %v336
    %v1173 = vunpack.c.h.b16 %v336
    %v1174 = vunpack.c.l.b16 %v337
    %v1175 = vunpack.c.h.b16 %v337
    %v1176 = vunpack.c.l.b16 %v338
    %v1177 = vunpack.c.h.b16 %v338
    %v1178 = vunpack.c.l.b16 %v339
    %v1179 = vunpack.c.h.b16 %v339
    %v1180 = vunpack.c.l.b16 %v340
    %v1181 = vunpack.c.h.b16 %v340
    %v1182 = vunpack.c.l.b16 %v341
    %v1183 = vunpack.c.h.b16 %v341
    %v1184 = vunpack.c.l.b16 %v342
    %v1185 = vunpack.c.h.b16 %v342
    %v1186 = vunpack.c.l.b16 %v343
    %v1187 = vunpack.c.h.b16 %v343
    %v1188 = vunpack.c.l.b16 %v344
    %v1189 = vunpack.c.h.b16 %v344
    %v1190 = vunpack.c.l.b16 %v345
    %v1191 = vunpack.c.h.b16 %v345
    %v1192 = vunpack.c.l.b16 %v346
    %v1193 = vunpack.c.h.b16 %v346
    %v1194 = vunpack.c.l.b16 %v347
    %v1195 = vunpack.c.h.b16 %v347
    %v1196 = vunpack.c.l.b16 %v348
    %v1197 = vunpack.c.h.b16 %v348
    %v1198 = vunpack.c.l.b16 %v349
    %v1199 = vunpack.c.h.b16 %v349
    %v1200 = vunpack.c.l.b16 %v350
    %v1201 = vunpack.c.h.b16 %v350
    %v1202 = vunpack.c.l.b16 %v351
    %v1203 = vunpack.c.h.b16 %v351
    %v1204 = vunpack.c.l.b16 %v352
    %v1205 = vunpack.c.h.b16 %v352
    %v1206 = vunpack.c.l.b16 %v353
    %v1207 = vunpack.c.h.b16 %v353
    %v1208 = vunpack.c.l.b16 %v354
    %v1209 = vunpack.c.h.b16 %v354
    %v1210 = vunpack.c.l.b16 %v355
    %v1211 = vunpack.c.h.b16 %v355
    %v1212 = vunpack.c.l.b16 %v356
    %v1213 = vunpack.c.h.b16 %v356
    %v1214 = vunpack.c.l.b16 %v357
    %v1215 = vunpack.c.h.b16 %v357
    %v1216 = vunpack.c.l.b16 %v358
    %v1217 = vunpack.c.h.b16 %v358
    %v1218 = vunpack.c.l.b16 %v359
    %v1219 = vunpack.c.h.b16 %v359
    %v1220 = vunpack.c.l.b16 %v360
    %v1221 = vunpack.c.h.b16 %v360
    %v1222 = vunpack.c.l.b16 %v361
    %v1223 = vunpack.c.h.b16 %v361
    %v1224 = vunpack.c.l.b16 %v362
    %v1225 = vunpack.c.h.b16 %v362
    %v1226 = vunpack.c.l.b16 %v363
    %v1227 = vunpack.c.h.b16 %v363
    %v1228 = vunpack.c.l.b16 %v364
    %v1229 = vunpack.c.h.b16 %v364
    %v1230 = vunpack.c.l.b16 %v365
    %v1231 = vunpack.c.h.b16 %v365
    %v1232 = vunpack.c.l.b16 %v366
    %v1233 = vunpack.c.h.b16 %v366
    %v1234 = vunpack.c.l.b16 %v367
    %v1235 = vunpack.c.h.b16 %v367
    %v1236 = vunpack.c.l.b16 %v368
    %v1237 = vunpack.c.h.b16 %v368
    %v1238 = vunpack.c.l.b16 %v369
    %v1239 = vunpack.c.h.b16 %v369
    %v1240 = vunpack.c.l.b16 %v370
    %v1241 = vunpack.c.h.b16 %v370
    %v1242 = vunpack.c.l.b16 %v371
    %v1243 = vunpack.c.h.b16 %v371
    %v1244 = vunpack.c.l.b16 %v372
    %v1245 = vunpack.c.h.b16 %v372
    %v1246 = vunpack.c.l.b16 %v373
    %v1247 = vunpack.c.h.b16 %v373
    %v1248 = vunpack.c.l.b16 %v374
    %v1249 = vunpack.c.h.b16 %v374
    %v1250 = vunpack.c.l.b16 %v375
    %v1251 = vunpack.c.h.b16 %v375
    %v1252 = vunpack.c.l.b16 %v376
    %v1253 = vunpack.c.h.b16 %v376
    %v1254 = vunpack.c.l.b16 %v377
    %v1255 = vunpack.c.h.b16 %v377
    %v1256 = vunpack.c.l.b16 %v378
    %v1257 = vunpack.c.h.b16 %v378
    %v1258 = vunpack.c.l.b16 %v379
    %v1259 = vunpack.c.h.b16 %v379
    %v1260 = vunpack.c.l.b16 %v380
    %v1261 = vunpack.c.h.b16 %v380
    %v1262 = vunpack.c.l.b16 %v381
    %v1263 = vunpack.c.h.b16 %v381
    %v1264 = vunpack.c.l.b16 %v382
    %v1265 = vunpack.c.h.b16 %v382
    %v1266 = vunpack.c.l.b16 %v383
    %v1267 = vunpack.c.h.b16 %v383
    %v1268 = vunpack.c.l.b16 %v384
    %v1269 = vunpack.c.h.b16 %v384
    %v1270 = vunpack.c.l.b16 %v385
    %v1271 = vunpack.c.h.b16 %v385
    %v1272 = vunpack.c.l.b16 %v386
    %v1273 = vunpack.c.h.b16 %v386
    %v1274 = vunpack.c.l.b16 %v387
    %v1275 = vunpack.c.h.b16 %v387
    %v1276 = vunpack.c.l.b16 %v388
    %v1277 = vunpack.c.h.b16 %v388
    %v1278 = vunpack.c.l.b16 %v389
    %v1279 = vunpack.c.h.b16 %v389
    %v1280 = vunpack.c.l.b16 %v390
    %v1281 = vunpack.c.h.b16 %v390
    %v1282 = vunpack.c.l.b16 %v391
    %v1283 = vunpack.c.h.b16 %v391
    %v1284 = vpack.c.b16 %v720, %v708
    %v1285 = vpack.c.b16 %v721, %v709
    %v1286 = vpack.c.b16 %v722, %v710
    %v1287 = vpack.c.b16 %v723, %v711
    %v1288 = vpack.c.b16 %v724, %v712
    %v1289 = vpack.c.b16 %v725, %v713
    %v1290 = vpack.c.b16 %v726, %v714
    %v1291 = vpack.c.b16 %v727, %v715
    %v1292 = vpack.c.b16 %v728, %v716
    %v1293 = vpack.c.b16 %v729, %v717
    %v1294 = vpack.c.b16 %v730, %v718
    %v1295 = vpack.c.b16 %v731, %v719
    %v1296 = vpack.c.b16 %v744, %v732
    %v1297 = vpack.c.b16 %v745, %v733
    %v1298 = vpack.c.b16 %v746, %v734
    %v1299 = vpack.c.b16 %v747, %v735
    %v1300 = vpack.c.b16 %v748, %v736
    %v1301 = vpack.c.b16 %v749, %v737
    %v1302 = vpack.c.b16 %v750, %v738
    %v1303 = vpack.c.b16 %v751, %v739
    %v1304 = vpack.c.b16 %v752, %v740
    %v1305 = vpack.c.b16 %v753, %v741
    %v1306 = vpack.c.b16 %v754, %v742
    %v1307 = vpack.c.b16 %v755, %v743
    %v1308 = vpack.c.b16 %v768, %v756
    %v1309 = vpack.c.b16 %v769, %v757
    %v1310 = vpack.c.b16 %v770, %v758
    %v1311 = vpack.c.b16 %v771, %v759
    %v1312 = vpack.c.b16 %v772, %v760
    %v1313 = vpack.c.b16 %v773, %v761
    %v1314 = vpack.c.b16 %v774, %v762
    %v1315 = vpack.c.b16 %v775, %v763
    %v1316 = vpack.c.b16 %v776, %v764
    %v1317 = vpack.c.b16 %v777, %v765
    %v1318 = vpack.c.b16 %v778, %v766
    %v1319 = vpack.c.b16 %v779, %v767
    %v1320 = vpack.c.b16 %v792, %v780
    %v1321 = vpack.c.b16 %v793, %v781
    %v1322 = vpack.c.b16 %v794, %v782
    %v1323 = vpack.c.b16 %v795, %v783
    %v1324 = vpack.c.b16 %v796, %v784
    %v1325 = vpack.c.b16 %v797, %v785
    %v1326 = vpack.c.b16 %v798, %v786
    %v1327 = vpack.c.b16 %v799, %v787
    %v1328 = vpack.c.b16 %v800, %v788
    %v1329 = vpack.c.b16 %v801, %v789
    %v1330 = vpack.c.b16 %v802, %v790
    %v1331 = vpack.c.b16 %v803, %v791
    %v1332 = vpack.c.b16 %v816, %v804
    %v1333 = vpack.c.b16 %v817, %v805
    %v1334 = vpack.c.b16 %v818, %v806
    %v1335 = vpack.c.b16 %v819, %v807
    %v1336 = vpack.c.b16 %v820, %v808
    %v1337 = vpack.c.b16 %v821, %v809
    %v1338 = vpack.c.b16 %v822, %v810
    %v1339 = vpack.c.b16 %v823, %v811
    %v1340 = vpack.c.b16 %v824, %v812
    %v1341 = vpack.c.b16 %v825, %v813
    %v1342 = vpack.c.b16 %v826, %v814
    %v1343 = vpack.c.b16 %v827, %v815
    %v1344 = vpack.c.b16 %v840, %v828
    %v1345 = vpack.c.b16 %v841, %v829
    %v1346 = vpack.c.b16 %v842, %v830
    %v1347 = vpack.c.b16 %v843, %v831
    %v1348 = vpack.c.b16 %v844, %v832
    %v1349 = vpack.c.b16 %v845, %v833
    %v1350 = vpack.c.b16 %v846, %v834
    %v1351 = vpack.c.b16 %v847, %v835
    %v1352 = vpack.c.b16 %v848, %v836
    %v1353 = vpack.c.b16 %v849, %v837
    %v1354 = vpack.c.b16 %v850, %v838
    %v1355 = vpack.c.b16 %v851, %v839
    %v1356 = vpack.c.b16 %v864, %v852
    %v1357 = vpack.c.b16 %v865, %v853
    %v1358 = vpack.c.b16 %v866, %v854
    %v1359 = vpack.c.b16 %v867, %v855
    %v1360 = vpack.c.b16 %v868, %v856
    %v1361 = vpack.c.b16 %v869, %v857
    %v1362 = vpack.c.b16 %v870, %v858
    %v1363 = vpack.c.b16 %v871, %v859
    %v1364 = vpack.c.b16 %v872, %v860
    %v1365 = vpack.c.b16 %v873, %v861
    %v1366 = vpack.c.b16 %v874, %v862
    %v1367 = vpack.c.b16 %v875, %v863
    %v1368 = vpack.c.b16 %v888, %v876
    %v1369 = vpack.c.b16 %v889, %v877
    %v1370 = vpack.c.b16 %v890, %v878
    %v1371 = vpack.c.b16 %v891, %v879
    %v1372 = vpack.c.b16 %v892, %v880
    %v1373 = vpack.c.b16 %v893, %v881
    %v1374 = vpack.c.b16 %v894, %v882
    %v1375 = vpack.c.b16 %v895, %v883
    %v1376 = vpack.c.b16 %v896, %v884
    %v1377 = vpack.c.b16 %v897, %v885
    %v1378 = vpack.c.b16 %v898, %v886
    %v1379 = vpack.c.b16 %v899, %v887
    %v1380 = vpack.c.b16 %v912, %v900
    %v1381 = vpack.c.b16 %v913, %v901
    %v1382 = vpack.c.b16 %v914, %v902
    %v1383 = vpack.c.b16 %v915, %v903
    %v1384 = vpack.c.b16 %v916, %v904
    %v1385 = vpack.c.b16 %v917, %v905
    %v1386 = vpack.c.b16 %v918, %v906
    %v1387 = vpack.c.b16 %v919, %v907
    %v1388 = vpack.c.b16 %v920, %v908
    %v1389 = vpack.c.b16 %v921, %v909
    %v1390 = vpack.c.b16 %v922, %v910
    %v1391 = vpack.c.b16 %v923, %v911
    %v1392 = vpack.c.b16 %v936, %v924
    %v1393 = vpack.c.b16 %v937, %v925
    %v1394 = vpack.c.b16 %v938, %v926
    %v1395 = vpack.c.b16 %v939, %v927
    %v1396 = vpack.c.b16 %v940, %v928
    %v1397 = vpack.c.b16 %v941, %v929
    %v1398 = vpack.c.b16 %v942, %v930
    %v1399 = vpack.c.b16 %v943, %v931
    %v1400 = vpack.c.b16 %v944, %v932
    %v1401 = vpack.c.b16 %v945, %v933
    %v1402 = vpack.c.b16 %v946, %v934
    %v1403 = vpack.c.b16 %v947, %v935
    %v1404 = vpack.c.b16 %v960, %v948
    %v1405 = vpack.c.b16 %v961, %v949
    %v1406 = vpack.c.b16 %v962, %v950
    %v1407 = vpack.c.b16 %v963, %v951
    %v1408 = vpack.c.b16 %v964, %v952
    %v1409 = vpack.c.b16 %v965, %v953
    %v1410 = vpack.c.b16 %v966, %v954
    %v1411 = vpack.c.b16 %v967, %v955
    %v1412 = vpack.c.b16 %v968, %v956
    %v1413 = vpack.c.b16 %v969, %v957
    %v1414 = vpack.c.b16 %v970, %v958
    %v1415 = vpack.c.b16 %v971, %v959
    %v1416 = vpack.c.b16 %v984, %v972
    %v1417 = vpack.c.b16 %v985, %v973
    %v1418 = vpack.c.b16 %v986, %v974
    %v1419 = vpack.c.b16 %v987, %v975
    %v1420 = vpack.c.b16 %v988, %v976
    %v1421 = vpack.c.b16 %v989, %v977
    %v1422 = vpack.c.b16 %v990, %v978
    %v1423 = vpack.c.b16 %v991, %v979
    %v1424 = vpack.c.b16 %v992, %v980
    %v1425 = vpack.c.b16 %v993, %v981
    %v1426 = vpack.c.b16 %v994, %v982
    %v1427 = vpack.c.b16 %v995, %v983
    %v1428 = vpack.c.b16 %v1008, %v996
    %v1429 = vpack.c.b16 %v1009, %v997
    %v1430 = vpack.c.b16 %v1010, %v998
    %v1431 = vpack.c.b16 %v1011, %v999
    %v1432 = vpack.c.b16 %v1012, %v1000
    %v1433 = vpack.c.b16 %v1013, %v1001
    %v1434 = vpack.c.b16 %v1014, %v1002
    %v1435 = vpack.c.b16 %v1015, %v1003
    %v1436 = vpack.c.b16 %v1016, %v1004
    %v1437 = vpack.c.b16 %v1017, %v1005
    %v1438 = vpack.c.b16 %v1018, %v1006
    %v1439 = vpack.c.b16 %v1019, %v1007
    %v1440 = vpack.c.b16 %v1032, %v1020
    %v1441 = vpack.c.b16 %v1033, %v1021
    %v1442 = vpack.c.b16 %v1034, %v1022
    %v1443 = vpack.c.b16 %v1035, %v1023
    %v1444 = vpack.c.b16 %v1036, %v1024
    %v1445 = vpack.c.b16 %v1037, %v1025
    %v1446 = vpack.c.b16 %v1038, %v1026
    %v1447 = vpack.c.b16 %v1039, %v1027
    %v1448 = vpack.c.b16 %v1040, %v1028
    %v1449 = vpack.c.b16 %v1041, %v1029
    %v1450 = vpack.c.b16 %v1042, %v1030
    %v1451 = vpack.c.b16 %v1043, %v1031
    %v1452 = vpack.c.b16 %v1056, %v1044
    %v1453 = vpack.c.b16 %v1057, %v1045
    %v1454 = vpack.c.b16 %v1058, %v1046
    %v1455 = vpack.c.b16 %v1059, %v1047
    %v1456 = vpack.c.b16 %v1060, %v1048
    %v1457 = vpack.c.b16 %v1061, %v1049
    %v1458 = vpack.c.b16 %v1062, %v1050
    %v1459 = vpack.c.b16 %v1063, %v1051
    %v1460 = vpack.c.b16 %v1064, %v1052
    %v1461 = vpack.c.b16 %v1065, %v1053
    %v1462 = vpack.c.b16 %v1066, %v1054
    %v1463 = vpack.c.b16 %v1067, %v1055
    %v1464 = vpack.c.b16 %v1080, %v1068
    %v1465 = vpack.c.b16 %v1081, %v1069
    %v1466 = vpack.c.b16 %v1082, %v1070
    %v1467 = vpack.c.b16 %v1083, %v1071
    %v1468 = vpack.c.b16 %v1084, %v1072
    %v1469 = vpack.c.b16 %v1085, %v1073
    %v1470 = vpack.c.b16 %v1086, %v1074
    %v1471 = vpack.c.b16 %v1087, %v1075
    %v1472 = vpack.c.b16 %v1088, %v1076
    %v1473 = vpack.c.b16 %v1089, %v1077
    %v1474 = vpack.c.b16 %v1090, %v1078
    %v1475 = vpack.c.b16 %v1091, %v1079
    %v1476 = vpack.c.b16 %v1104, %v1092
    %v1477 = vpack.c.b16 %v1105, %v1093
    %v1478 = vpack.c.b16 %v1106, %v1094
    %v1479 = vpack.c.b16 %v1107, %v1095
    %v1480 = vpack.c.b16 %v1108, %v1096
    %v1481 = vpack.c.b16 %v1109, %v1097
    %v1482 = vpack.c.b16 %v1110, %v1098
    %v1483 = vpack.c.b16 %v1111, %v1099
    %v1484 = vpack.c.b16 %v1112, %v1100
    %v1485 = vpack.c.b16 %v1113, %v1101
    %v1486 = vpack.c.b16 %v1114, %v1102
    %v1487 = vpack.c.b16 %v1115, %v1103
    %v1488 = vpack.c.b16 %v1128, %v1116
    %v1489 = vpack.c.b16 %v1129, %v1117
    %v1490 = vpack.c.b16 %v1130, %v1118
    %v1491 = vpack.c.b16 %v1131, %v1119
    %v1492 = vpack.c.b16 %v1132, %v1120
    %v1493 = vpack.c.b16 %v1133, %v1121
    %v1494 = vpack.c.b16 %v1134, %v1122
    %v1495 = vpack.c.b16 %v1135, %v1123
    %v1496 = vpack.c.b16 %v1136, %v1124
    %v1497 = vpack.c.b16 %v1137, %v1125
    %v1498 = vpack.c.b16 %v1138, %v1126
    %v1499 = vpack.c.b16 %v1139, %v1127
    %v1500 = vpack.c.b16 %v1152, %v1140
    %v1501 = vpack.c.b16 %v1153, %v1141
    %v1502 = vpack.c.b16 %v1154, %v1142
    %v1503 = vpack.c.b16 %v1155, %v1143
    %v1504 = vpack.c.b16 %v1156, %v1144
    %v1505 = vpack.c.b16 %v1157, %v1145
    %v1506 = vpack.c.b16 %v1158, %v1146
    %v1507 = vpack.c.b16 %v1159, %v1147
    %v1508 = vpack.c.b16 %v1160, %v1148
    %v1509 = vpack.c.b16 %v1161, %v1149
    %v1510 = vpack.c.b16 %v1162, %v1150
    %v1511 = vpack.c.b16 %v1163, %v1151
    %v1512 = vpack.c.b16 %v1176, %v1164
    %v1513 = vpack.c.b16 %v1177, %v1165
    %v1514 = vpack.c.b16 %v1178, %v1166
    %v1515 = vpack.c.b16 %v1179, %v1167
    %v1516 = vpack.c.b16 %v1180, %v1168
    %v1517 = vpack.c.b16 %v1181, %v1169
    %v1518 = vpack.c.b16 %v1182, %v1170
    %v1519 = vpack.c.b16 %v1183, %v1171
    %v1520 = vpack.c.b16 %v1184, %v1172
    %v1521 = vpack.c.b16 %v1185, %v1173
    %v1522 = vpack.c.b16 %v1186, %v1174
    %v1523 = vpack.c.b16 %v1187, %v1175
    %v1524 = vpack.c.b16 %v1200, %v1188
    %v1525 = vpack.c.b16 %v1201, %v1189
    %v1526 = vpack.c.b16 %v1202, %v1190
    %v1527 = vpack.c.b16 %v1203, %v1191
    %v1528 = vpack.c.b16 %v1204, %v1192
    %v1529 = vpack.c.b16 %v1205, %v1193
    %v1530 = vpack.c.b16 %v1206, %v1194
    %v1531 = vpack.c.b16 %v1207, %v1195
    %v1532 = vpack.c.b16 %v1208, %v1196
    %v1533 = vpack.c.b16 %v1209, %v1197
    %v1534 = vpack.c.b16 %v1210, %v1198
    %v1535 = vpack.c.b16 %v1211, %v1199
    %v1536 = vpack.c.b16 %v1224, %v1212
    %v1537 = vpack.c.b16 %v1225, %v1213
    %v1538 = vpack.c.b16 %v1226, %v1214
    %v1539 = vpack.c.b16 %v1227, %v1215
    %v1540 = vpack.c.b16 %v1228, %v1216
    %v1541 = vpack.c.b16 %v1229, %v1217
    %v1542 = vpack.c.b16 %v1230, %v1218
    %v1543 = vpack.c.b16 %v1231, %v1219
    %v1544 = vpack.c.b16 %v1232, %v1220
    %v1545 = vpack.c.b16 %v1233, %v1221
    %v1546 = vpack.c.b16 %v1234, %v1222
    %v1547 = vpack.c.b16 %v1235, %v1223
    %v1548 = vpack.c.b16 %v1248, %v1236
    %v1549 = vpack.c.b16 %v1249, %v1237
    %v1550 = vpack.c.b16 %v1250, %v1238
    %v1551 = vpack.c.b16 %v1251, %v1239
    %v1552 = vpack.c.b16 %v1252, %v1240
    %v1553 = vpack.c.b16 %v1253, %v1241
    %v1554 = vpack.c.b16 %v1254, %v1242
    %v1555 = vpack.c.b16 %v1255, %v1243
    %v1556 = vpack.c.b16 %v1256, %v1244
    %v1557 = vpack.c.b16 %v1257, %v1245
    %v1558 = vpack.c.b16 %v1258, %v1246
    %v1559 = vpack.c.b16 %v1259, %v1247
    %v1560 = vpack.c.b16 %v1272, %v1260
    %v1561 = vpack.c.b16 %v1273, %v1261
    %v1562 = vpack.c.b16 %v1274, %v1262
    %v1563 = vpack.c.b16 %v1275, %v1263
    %v1564 = vpack.c.b16 %v1276, %v1264
    %v1565 = vpack.c.b16 %v1277, %v1265
    %v1566 = vpack.c.b16 %v1278, %v1266
    %v1567 = vpack.c.b16 %v1279, %v1267
    %v1568 = vpack.c.b16 %v1280, %v1268
    %v1569 = vpack.c.b16 %v1281, %v1269
    %v1570 = vpack.c.b16 %v1282, %v1270
    %v1571 = vpack.c.b16 %v1283, %v1271
    %1860 = vmatpush.bf16.msra.mxu0 %v1368
    %1861 = vmatpush.bf16.msra.mxu0 %v1356
    %1862 = vmatpush.bf16.msra.mxu0 %v1344
    %1863 = vmatpush.bf16.msra.mxu0 %v1332
    %1864 = vmatpush.bf16.msra.mxu0 %v1320
    %1865 = vmatpush.bf16.msra.mxu0 %v1308
    %1866 = vmatpush.bf16.msra.mxu0 %v1296
    %1867 = vmatpush.bf16.msra.mxu0 %v1284
    %1868 = vmatmul.bf16.gmra.mxu0 %v101
    %v1869 = vpop.f32.mrf.mxu0
    %v1870 = vadd.f32 %v396, %v1869
    %v1871 = vpop.f32.mrf.mxu0
    %v1872 = vadd.f32 %v396, %v1871
    %1873 = vdwg.mxu0
    %1874 = vmatpush.bf16.msra.mxu0 %v1464
    %1875 = vmatpush.bf16.msra.mxu0 %v1452
    %1876 = vmatpush.bf16.msra.mxu0 %v1440
    %1877 = vmatpush.bf16.msra.mxu0 %v1428
    %1878 = vmatpush.bf16.msra.mxu0 %v1416
    %1879 = vmatpush.bf16.msra.mxu0 %v1404
    %1880 = vmatpush.bf16.msra.mxu0 %v1392
    %1881 = vmatpush.bf16.msra.mxu0 %v1380
    %1882 = vmatmul.bf16.gmra.mxu0 %v102
    %v1883 = vpop.f32.mrf.mxu0
    %v1884 = vadd.f32 %v1870, %v1883
    %v1885 = vpop.f32.mrf.mxu0
    %v1886 = vadd.f32 %v1872, %v1885
    %1887 = vdwg.mxu0
    %1888 = vmatpush.bf16.msra.mxu0 %v1560
    %1889 = vmatpush.bf16.msra.mxu0 %v1548
    %1890 = vmatpush.bf16.msra.mxu0 %v1536
    %1891 = vmatpush.bf16.msra.mxu0 %v1524
    %1892 = vmatpush.bf16.msra.mxu0 %v1512
    %1893 = vmatpush.bf16.msra.mxu0 %v1500
    %1894 = vmatpush.bf16.msra.mxu0 %v1488
    %1895 = vmatpush.bf16.msra.mxu0 %v1476
    %1896 = vmatmul.bf16.gmra.mxu0 %v103
    %v1897 = vpop.f32.mrf.mxu0
    %v1898 = vadd.f32 %v1884, %v1897
    %v1899 = vpop.f32.mrf.mxu0
    %v1900 = vadd.f32 %v1886, %v1899
    %1901 = vdwg.mxu0
    %1902 = vmatpush.bf16.msra.mxu0 %v1369
    %1903 = vmatpush.bf16.msra.mxu0 %v1357
    %1904 = vmatpush.bf16.msra.mxu0 %v1345
    %1905 = vmatpush.bf16.msra.mxu0 %v1333
    %1906 = vmatpush.bf16.msra.mxu0 %v1321
    %1907 = vmatpush.bf16.msra.mxu0 %v1309
    %1908 = vmatpush.bf16.msra.mxu0 %v1297
    %1909 = vmatpush.bf16.msra.mxu0 %v1285
    %1910 = vmatmul.bf16.gmra.mxu0 %v101
    %v1911 = vpop.f32.mrf.mxu0
    %v1912 = vadd.f32 %v397, %v1911
    %v1913 = vpop.f32.mrf.mxu0
    %v1914 = vadd.f32 %v397, %v1913
    %1915 = vdwg.mxu0
    %1916 = vmatpush.bf16.msra.mxu0 %v1465
    %1917 = vmatpush.bf16.msra.mxu0 %v1453
    %1918 = vmatpush.bf16.msra.mxu0 %v1441
    %1919 = vmatpush.bf16.msra.mxu0 %v1429
    %1920 = vmatpush.bf16.msra.mxu0 %v1417
    %1921 = vmatpush.bf16.msra.mxu0 %v1405
    %1922 = vmatpush.bf16.msra.mxu0 %v1393
    %1923 = vmatpush.bf16.msra.mxu0 %v1381
    %1924 = vmatmul.bf16.gmra.mxu0 %v102
    %v1925 = vpop.f32.mrf.mxu0
    %v1926 = vadd.f32 %v1912, %v1925
    %v1927 = vpop.f32.mrf.mxu0
    %v1928 = vadd.f32 %v1914, %v1927
    %1929 = vdwg.mxu0
    %1930 = vmatpush.bf16.msra.mxu0 %v1561
    %1931 = vmatpush.bf16.msra.mxu0 %v1549
    %1932 = vmatpush.bf16.msra.mxu0 %v1537
    %1933 = vmatpush.bf16.msra.mxu0 %v1525
    %1934 = vmatpush.bf16.msra.mxu0 %v1513
    %1935 = vmatpush.bf16.msra.mxu0 %v1501
    %1936 = vmatpush.bf16.msra.mxu0 %v1489
    %1937 = vmatpush.bf16.msra.mxu0 %v1477
    %1938 = vmatmul.bf16.gmra.mxu0 %v103
    %v1939 = vpop.f32.mrf.mxu0
    %v1940 = vadd.f32 %v1926, %v1939
    %v1941 = vpop.f32.mrf.mxu0
    %v1942 = vadd.f32 %v1928, %v1941
    %1943 = vdwg.mxu0
    %1944 = vmatpush.bf16.msra.mxu0 %v1370
    %1945 = vmatpush.bf16.msra.mxu0 %v1358
    %1946 = vmatpush.bf16.msra.mxu0 %v1346
    %1947 = vmatpush.bf16.msra.mxu0 %v1334
    %1948 = vmatpush.bf16.msra.mxu0 %v1322
    %1949 = vmatpush.bf16.msra.mxu0 %v1310
    %1950 = vmatpush.bf16.msra.mxu0 %v1298
    %1951 = vmatpush.bf16.msra.mxu0 %v1286
    %1952 = vmatmul.bf16.gmra.mxu0 %v101
    %v1953 = vpop.f32.mrf.mxu0
    %v1954 = vadd.f32 %v398, %v1953
    %v1955 = vpop.f32.mrf.mxu0
    %v1956 = vadd.f32 %v398, %v1955
    %1957 = vdwg.mxu0
    %1958 = vmatpush.bf16.msra.mxu0 %v1466
    %1959 = vmatpush.bf16.msra.mxu0 %v1454
    %1960 = vmatpush.bf16.msra.mxu0 %v1442
    %1961 = vmatpush.bf16.msra.mxu0 %v1430
    %1962 = vmatpush.bf16.msra.mxu0 %v1418
    %1963 = vmatpush.bf16.msra.mxu0 %v1406
    %1964 = vmatpush.bf16.msra.mxu0 %v1394
    %1965 = vmatpush.bf16.msra.mxu0 %v1382
    %1966 = vmatmul.bf16.gmra.mxu0 %v102
    %v1967 = vpop.f32.mrf.mxu0
    %v1968 = vadd.f32 %v1954, %v1967
    %v1969 = vpop.f32.mrf.mxu0
    %v1970 = vadd.f32 %v1956, %v1969
    %1971 = vdwg.mxu0
    %1972 = vmatpush.bf16.msra.mxu0 %v1562
    %1973 = vmatpush.bf16.msra.mxu0 %v1550
    %1974 = vmatpush.bf16.msra.mxu0 %v1538
    %1975 = vmatpush.bf16.msra.mxu0 %v1526
    %1976 = vmatpush.bf16.msra.mxu0 %v1514
    %1977 = vmatpush.bf16.msra.mxu0 %v1502
    %1978 = vmatpush.bf16.msra.mxu0 %v1490
    %1979 = vmatpush.bf16.msra.mxu0 %v1478
    %1980 = vmatmul.bf16.gmra.mxu0 %v103
    %v1981 = vpop.f32.mrf.mxu0
    %v1982 = vadd.f32 %v1968, %v1981
    %v1983 = vpop.f32.mrf.mxu0
    %v1984 = vadd.f32 %v1970, %v1983
    %1985 = vdwg.mxu0
    %1986 = vmatpush.bf16.msra.mxu0 %v1371
    %1987 = vmatpush.bf16.msra.mxu0 %v1359
    %1988 = vmatpush.bf16.msra.mxu0 %v1347
    %1989 = vmatpush.bf16.msra.mxu0 %v1335
    %1990 = vmatpush.bf16.msra.mxu0 %v1323
    %1991 = vmatpush.bf16.msra.mxu0 %v1311
    %1992 = vmatpush.bf16.msra.mxu0 %v1299
    %1993 = vmatpush.bf16.msra.mxu0 %v1287
    %1994 = vmatmul.bf16.gmra.mxu0 %v101
    %v1995 = vpop.f32.mrf.mxu0
    %v1996 = vadd.f32 %v399, %v1995
    %v1997 = vpop.f32.mrf.mxu0
    %v1998 = vadd.f32 %v399, %v1997
    %1999 = vdwg.mxu0
    %2000 = vmatpush.bf16.msra.mxu0 %v1467
    %2001 = vmatpush.bf16.msra.mxu0 %v1455
    %2002 = vmatpush.bf16.msra.mxu0 %v1443
    %2003 = vmatpush.bf16.msra.mxu0 %v1431
    %2004 = vmatpush.bf16.msra.mxu0 %v1419
    %2005 = vmatpush.bf16.msra.mxu0 %v1407
    %2006 = vmatpush.bf16.msra.mxu0 %v1395
    %2007 = vmatpush.bf16.msra.mxu0 %v1383
    %2008 = vmatmul.bf16.gmra.mxu0 %v102
    %v2009 = vpop.f32.mrf.mxu0
    %v2010 = vadd.f32 %v1996, %v2009
    %v2011 = vpop.f32.mrf.mxu0
    %v2012 = vadd.f32 %v1998, %v2011
    %2013 = vdwg.mxu0
    %2014 = vmatpush.bf16.msra.mxu0 %v1563
    %2015 = vmatpush.bf16.msra.mxu0 %v1551
    %2016 = vmatpush.bf16.msra.mxu0 %v1539
    %2017 = vmatpush.bf16.msra.mxu0 %v1527
    %2018 = vmatpush.bf16.msra.mxu0 %v1515
    %2019 = vmatpush.bf16.msra.mxu0 %v1503
    %2020 = vmatpush.bf16.msra.mxu0 %v1491
    %2021 = vmatpush.bf16.msra.mxu0 %v1479
    %2022 = vmatmul.bf16.gmra.mxu0 %v103
    %v2023 = vpop.f32.mrf.mxu0
    %v2024 = vadd.f32 %v2010, %v2023
    %v2025 = vpop.f32.mrf.mxu0
    %v2026 = vadd.f32 %v2012, %v2025
    %2027 = vdwg.mxu0
    %2028 = vmatpush.bf16.msra.mxu0 %v1372
    %2029 = vmatpush.bf16.msra.mxu0 %v1360
    %2030 = vmatpush.bf16.msra.mxu0 %v1348
    %2031 = vmatpush.bf16.msra.mxu0 %v1336
    %2032 = vmatpush.bf16.msra.mxu0 %v1324
    %2033 = vmatpush.bf16.msra.mxu0 %v1312
    %2034 = vmatpush.bf16.msra.mxu0 %v1300
    %2035 = vmatpush.bf16.msra.mxu0 %v1288
    %2036 = vmatmul.bf16.gmra.mxu0 %v101
    %v2037 = vpop.f32.mrf.mxu0
    %v2038 = vadd.f32 %v400, %v2037
    %v2039 = vpop.f32.mrf.mxu0
    %v2040 = vadd.f32 %v400, %v2039
    %2041 = vdwg.mxu0
    %2042 = vmatpush.bf16.msra.mxu0 %v1468
    %2043 = vmatpush.bf16.msra.mxu0 %v1456
    %2044 = vmatpush.bf16.msra.mxu0 %v1444
    %2045 = vmatpush.bf16.msra.mxu0 %v1432
    %2046 = vmatpush.bf16.msra.mxu0 %v1420
    %2047 = vmatpush.bf16.msra.mxu0 %v1408
    %2048 = vmatpush.bf16.msra.mxu0 %v1396
    %2049 = vmatpush.bf16.msra.mxu0 %v1384
    %2050 = vmatmul.bf16.gmra.mxu0 %v102
    %v2051 = vpop.f32.mrf.mxu0
    %v2052 = vadd.f32 %v2038, %v2051
    %v2053 = vpop.f32.mrf.mxu0
    %v2054 = vadd.f32 %v2040, %v2053
    %2055 = vdwg.mxu0
    %2056 = vmatpush.bf16.msra.mxu0 %v1564
    %2057 = vmatpush.bf16.msra.mxu0 %v1552
    %2058 = vmatpush.bf16.msra.mxu0 %v1540
    %2059 = vmatpush.bf16.msra.mxu0 %v1528
    %2060 = vmatpush.bf16.msra.mxu0 %v1516
    %2061 = vmatpush.bf16.msra.mxu0 %v1504
    %2062 = vmatpush.bf16.msra.mxu0 %v1492
    %2063 = vmatpush.bf16.msra.mxu0 %v1480
    %2064 = vmatmul.bf16.gmra.mxu0 %v103
    %v2065 = vpop.f32.mrf.mxu0
    %v2066 = vadd.f32 %v2052, %v2065
    %v2067 = vpop.f32.mrf.mxu0
    %v2068 = vadd.f32 %v2054, %v2067
    %2069 = vdwg.mxu0
    %2070 = vmatpush.bf16.msra.mxu0 %v1373
    %2071 = vmatpush.bf16.msra.mxu0 %v1361
    %2072 = vmatpush.bf16.msra.mxu0 %v1349
    %2073 = vmatpush.bf16.msra.mxu0 %v1337
    %2074 = vmatpush.bf16.msra.mxu0 %v1325
    %2075 = vmatpush.bf16.msra.mxu0 %v1313
    %2076 = vmatpush.bf16.msra.mxu0 %v1301
    %2077 = vmatpush.bf16.msra.mxu0 %v1289
    %2078 = vmatmul.bf16.gmra.mxu0 %v101
    %v2079 = vpop.f32.mrf.mxu0
    %v2080 = vadd.f32 %v401, %v2079
    %v2081 = vpop.f32.mrf.mxu0
    %v2082 = vadd.f32 %v401, %v2081
    %2083 = vdwg.mxu0
    %2084 = vmatpush.bf16.msra.mxu0 %v1469
    %2085 = vmatpush.bf16.msra.mxu0 %v1457
    %2086 = vmatpush.bf16.msra.mxu0 %v1445
    %2087 = vmatpush.bf16.msra.mxu0 %v1433
    %2088 = vmatpush.bf16.msra.mxu0 %v1421
    %2089 = vmatpush.bf16.msra.mxu0 %v1409
    %2090 = vmatpush.bf16.msra.mxu0 %v1397
    %2091 = vmatpush.bf16.msra.mxu0 %v1385
    %2092 = vmatmul.bf16.gmra.mxu0 %v102
    %v2093 = vpop.f32.mrf.mxu0
    %v2094 = vadd.f32 %v2080, %v2093
    %v2095 = vpop.f32.mrf.mxu0
    %v2096 = vadd.f32 %v2082, %v2095
    %2097 = vdwg.mxu0
    %2098 = vmatpush.bf16.msra.mxu0 %v1565
    %2099 = vmatpush.bf16.msra.mxu0 %v1553
    %2100 = vmatpush.bf16.msra.mxu0 %v1541
    %2101 = vmatpush.bf16.msra.mxu0 %v1529
    %2102 = vmatpush.bf16.msra.mxu0 %v1517
    %2103 = vmatpush.bf16.msra.mxu0 %v1505
    %2104 = vmatpush.bf16.msra.mxu0 %v1493
    %2105 = vmatpush.bf16.msra.mxu0 %v1481
    %2106 = vmatmul.bf16.gmra.mxu0 %v103
    %v2107 = vpop.f32.mrf.mxu0
    %v2108 = vadd.f32 %v2094, %v2107
    %v2109 = vpop.f32.mrf.mxu0
    %v2110 = vadd.f32 %v2096, %v2109
    %2111 = vdwg.mxu0
    %2112 = vmatpush.bf16.msra.mxu0 %v1374
    %2113 = vmatpush.bf16.msra.mxu0 %v1362
    %2114 = vmatpush.bf16.msra.mxu0 %v1350
    %2115 = vmatpush.bf16.msra.mxu0 %v1338
    %2116 = vmatpush.bf16.msra.mxu0 %v1326
    %2117 = vmatpush.bf16.msra.mxu0 %v1314
    %2118 = vmatpush.bf16.msra.mxu0 %v1302
    %2119 = vmatpush.bf16.msra.mxu0 %v1290
    %2120 = vmatmul.bf16.gmra.mxu0 %v101
    %v2121 = vpop.f32.mrf.mxu0
    %v2122 = vadd.f32 %v402, %v2121
    %v2123 = vpop.f32.mrf.mxu0
    %v2124 = vadd.f32 %v402, %v2123
    %2125 = vdwg.mxu0
    %2126 = vmatpush.bf16.msra.mxu0 %v1470
    %2127 = vmatpush.bf16.msra.mxu0 %v1458
    %2128 = vmatpush.bf16.msra.mxu0 %v1446
    %2129 = vmatpush.bf16.msra.mxu0 %v1434
    %2130 = vmatpush.bf16.msra.mxu0 %v1422
    %2131 = vmatpush.bf16.msra.mxu0 %v1410
    %2132 = vmatpush.bf16.msra.mxu0 %v1398
    %2133 = vmatpush.bf16.msra.mxu0 %v1386
    %2134 = vmatmul.bf16.gmra.mxu0 %v102
    %v2135 = vpop.f32.mrf.mxu0
    %v2136 = vadd.f32 %v2122, %v2135
    %v2137 = vpop.f32.mrf.mxu0
    %v2138 = vadd.f32 %v2124, %v2137
    %2139 = vdwg.mxu0
    %2140 = vmatpush.bf16.msra.mxu0 %v1566
    %2141 = vmatpush.bf16.msra.mxu0 %v1554
    %2142 = vmatpush.bf16.msra.mxu0 %v1542
    %2143 = vmatpush.bf16.msra.mxu0 %v1530
    %2144 = vmatpush.bf16.msra.mxu0 %v1518
    %2145 = vmatpush.bf16.msra.mxu0 %v1506
    %2146 = vmatpush.bf16.msra.mxu0 %v1494
    %2147 = vmatpush.bf16.msra.mxu0 %v1482
    %2148 = vmatmul.bf16.gmra.mxu0 %v103
    %v2149 = vpop.f32.mrf.mxu0
    %v2150 = vadd.f32 %v2136, %v2149
    %v2151 = vpop.f32.mrf.mxu0
    %v2152 = vadd.f32 %v2138, %v2151
    %2153 = vdwg.mxu0
    %2154 = vmatpush.bf16.msra.mxu0 %v1375
    %2155 = vmatpush.bf16.msra.mxu0 %v1363
    %2156 = vmatpush.bf16.msra.mxu0 %v1351
    %2157 = vmatpush.bf16.msra.mxu0 %v1339
    %2158 = vmatpush.bf16.msra.mxu0 %v1327
    %2159 = vmatpush.bf16.msra.mxu0 %v1315
    %2160 = vmatpush.bf16.msra.mxu0 %v1303
    %2161 = vmatpush.bf16.msra.mxu0 %v1291
    %2162 = vmatmul.bf16.gmra.mxu0 %v101
    %v2163 = vpop.f32.mrf.mxu0
    %v2164 = vadd.f32 %v403, %v2163
    %v2165 = vpop.f32.mrf.mxu0
    %v2166 = vadd.f32 %v403, %v2165
    %2167 = vdwg.mxu0
    %2168 = vmatpush.bf16.msra.mxu0 %v1471
    %2169 = vmatpush.bf16.msra.mxu0 %v1459
    %2170 = vmatpush.bf16.msra.mxu0 %v1447
    %2171 = vmatpush.bf16.msra.mxu0 %v1435
    %2172 = vmatpush.bf16.msra.mxu0 %v1423
    %2173 = vmatpush.bf16.msra.mxu0 %v1411
    %2174 = vmatpush.bf16.msra.mxu0 %v1399
    %2175 = vmatpush.bf16.msra.mxu0 %v1387
    %2176 = vmatmul.bf16.gmra.mxu0 %v102
    %v2177 = vpop.f32.mrf.mxu0
    %v2178 = vadd.f32 %v2164, %v2177
    %v2179 = vpop.f32.mrf.mxu0
    %v2180 = vadd.f32 %v2166, %v2179
    %2181 = vdwg.mxu0
    %2182 = vmatpush.bf16.msra.mxu0 %v1567
    %2183 = vmatpush.bf16.msra.mxu0 %v1555
    %2184 = vmatpush.bf16.msra.mxu0 %v1543
    %2185 = vmatpush.bf16.msra.mxu0 %v1531
    %2186 = vmatpush.bf16.msra.mxu0 %v1519
    %2187 = vmatpush.bf16.msra.mxu0 %v1507
    %2188 = vmatpush.bf16.msra.mxu0 %v1495
    %2189 = vmatpush.bf16.msra.mxu0 %v1483
    %2190 = vmatmul.bf16.gmra.mxu0 %v103
    %v2191 = vpop.f32.mrf.mxu0
    %v2192 = vadd.f32 %v2178, %v2191
    %v2193 = vpop.f32.mrf.mxu0
    %v2194 = vadd.f32 %v2180, %v2193
    %2195 = vdwg.mxu0
    %2196 = vmatpush.bf16.msra.mxu0 %v1376
    %2197 = vmatpush.bf16.msra.mxu0 %v1364
    %2198 = vmatpush.bf16.msra.mxu0 %v1352
    %2199 = vmatpush.bf16.msra.mxu0 %v1340
    %2200 = vmatpush.bf16.msra.mxu0 %v1328
    %2201 = vmatpush.bf16.msra.mxu0 %v1316
    %2202 = vmatpush.bf16.msra.mxu0 %v1304
    %2203 = vmatpush.bf16.msra.mxu0 %v1292
    %2204 = vmatmul.bf16.gmra.mxu0 %v101
    %v2205 = vpop.f32.mrf.mxu0
    %v2206 = vadd.f32 %v404, %v2205
    %v2207 = vpop.f32.mrf.mxu0
    %v2208 = vadd.f32 %v404, %v2207
    %2209 = vdwg.mxu0
    %2210 = vmatpush.bf16.msra.mxu0 %v1472
    %2211 = vmatpush.bf16.msra.mxu0 %v1460
    %2212 = vmatpush.bf16.msra.mxu0 %v1448
    %2213 = vmatpush.bf16.msra.mxu0 %v1436
    %2214 = vmatpush.bf16.msra.mxu0 %v1424
    %2215 = vmatpush.bf16.msra.mxu0 %v1412
    %2216 = vmatpush.bf16.msra.mxu0 %v1400
    %2217 = vmatpush.bf16.msra.mxu0 %v1388
    %2218 = vmatmul.bf16.gmra.mxu0 %v102
    %v2219 = vpop.f32.mrf.mxu0
    %v2220 = vadd.f32 %v2206, %v2219
    %v2221 = vpop.f32.mrf.mxu0
    %v2222 = vadd.f32 %v2208, %v2221
    %2223 = vdwg.mxu0
    %2224 = vmatpush.bf16.msra.mxu0 %v1568
    %2225 = vmatpush.bf16.msra.mxu0 %v1556
    %2226 = vmatpush.bf16.msra.mxu0 %v1544
    %2227 = vmatpush.bf16.msra.mxu0 %v1532
    %2228 = vmatpush.bf16.msra.mxu0 %v1520
    %2229 = vmatpush.bf16.msra.mxu0 %v1508
    %2230 = vmatpush.bf16.msra.mxu0 %v1496
    %2231 = vmatpush.bf16.msra.mxu0 %v1484
    %2232 = vmatmul.bf16.gmra.mxu0 %v103
    %v2233 = vpop.f32.mrf.mxu0
    %v2234 = vadd.f32 %v2220, %v2233
    %v2235 = vpop.f32.mrf.mxu0
    %v2236 = vadd.f32 %v2222, %v2235
    %2237 = vdwg.mxu0
    %2238 = vmatpush.bf16.msra.mxu0 %v1377
    %2239 = vmatpush.bf16.msra.mxu0 %v1365
    %2240 = vmatpush.bf16.msra.mxu0 %v1353
    %2241 = vmatpush.bf16.msra.mxu0 %v1341
    %2242 = vmatpush.bf16.msra.mxu0 %v1329
    %2243 = vmatpush.bf16.msra.mxu0 %v1317
    %2244 = vmatpush.bf16.msra.mxu0 %v1305
    %2245 = vmatpush.bf16.msra.mxu0 %v1293
    %2246 = vmatmul.bf16.gmra.mxu0 %v101
    %v2247 = vpop.f32.mrf.mxu0
    %v2248 = vadd.f32 %v405, %v2247
    %v2249 = vpop.f32.mrf.mxu0
    %v2250 = vadd.f32 %v405, %v2249
    %2251 = vdwg.mxu0
    %2252 = vmatpush.bf16.msra.mxu0 %v1473
    %2253 = vmatpush.bf16.msra.mxu0 %v1461
    %2254 = vmatpush.bf16.msra.mxu0 %v1449
    %2255 = vmatpush.bf16.msra.mxu0 %v1437
    %2256 = vmatpush.bf16.msra.mxu0 %v1425
    %2257 = vmatpush.bf16.msra.mxu0 %v1413
    %2258 = vmatpush.bf16.msra.mxu0 %v1401
    %2259 = vmatpush.bf16.msra.mxu0 %v1389
    %2260 = vmatmul.bf16.gmra.mxu0 %v102
    %v2261 = vpop.f32.mrf.mxu0
    %v2262 = vadd.f32 %v2248, %v2261
    %v2263 = vpop.f32.mrf.mxu0
    %v2264 = vadd.f32 %v2250, %v2263
    %2265 = vdwg.mxu0
    %2266 = vmatpush.bf16.msra.mxu0 %v1569
    %2267 = vmatpush.bf16.msra.mxu0 %v1557
    %2268 = vmatpush.bf16.msra.mxu0 %v1545
    %2269 = vmatpush.bf16.msra.mxu0 %v1533
    %2270 = vmatpush.bf16.msra.mxu0 %v1521
    %2271 = vmatpush.bf16.msra.mxu0 %v1509
    %2272 = vmatpush.bf16.msra.mxu0 %v1497
    %2273 = vmatpush.bf16.msra.mxu0 %v1485
    %2274 = vmatmul.bf16.gmra.mxu0 %v103
    %v2275 = vpop.f32.mrf.mxu0
    %v2276 = vadd.f32 %v2262, %v2275
    %v2277 = vpop.f32.mrf.mxu0
    %v2278 = vadd.f32 %v2264, %v2277
    %2279 = vdwg.mxu0
    %2280 = vmatpush.bf16.msra.mxu0 %v1378
    %2281 = vmatpush.bf16.msra.mxu0 %v1366
    %2282 = vmatpush.bf16.msra.mxu0 %v1354
    %2283 = vmatpush.bf16.msra.mxu0 %v1342
    %2284 = vmatpush.bf16.msra.mxu0 %v1330
    %2285 = vmatpush.bf16.msra.mxu0 %v1318
    %2286 = vmatpush.bf16.msra.mxu0 %v1306
    %2287 = vmatpush.bf16.msra.mxu0 %v1294
    %2288 = vmatmul.bf16.gmra.mxu0 %v101
    %v2289 = vpop.f32.mrf.mxu0
    %v2290 = vadd.f32 %v406, %v2289
    %v2291 = vpop.f32.mrf.mxu0
    %v2292 = vadd.f32 %v406, %v2291
    %2293 = vdwg.mxu0
    %2294 = vmatpush.bf16.msra.mxu0 %v1474
    %2295 = vmatpush.bf16.msra.mxu0 %v1462
    %2296 = vmatpush.bf16.msra.mxu0 %v1450
    %2297 = vmatpush.bf16.msra.mxu0 %v1438
    %2298 = vmatpush.bf16.msra.mxu0 %v1426
    %2299 = vmatpush.bf16.msra.mxu0 %v1414
    %2300 = vmatpush.bf16.msra.mxu0 %v1402
    %2301 = vmatpush.bf16.msra.mxu0 %v1390
    %2302 = vmatmul.bf16.gmra.mxu0 %v102
    %v2303 = vpop.f32.mrf.mxu0
    %v2304 = vadd.f32 %v2290, %v2303
    %v2305 = vpop.f32.mrf.mxu0
    %v2306 = vadd.f32 %v2292, %v2305
    %2307 = vdwg.mxu0
    %2308 = vmatpush.bf16.msra.mxu0 %v1570
    %2309 = vmatpush.bf16.msra.mxu0 %v1558
    %2310 = vmatpush.bf16.msra.mxu0 %v1546
    %2311 = vmatpush.bf16.msra.mxu0 %v1534
    %2312 = vmatpush.bf16.msra.mxu0 %v1522
    %2313 = vmatpush.bf16.msra.mxu0 %v1510
    %2314 = vmatpush.bf16.msra.mxu0 %v1498
    %2315 = vmatpush.bf16.msra.mxu0 %v1486
    %2316 = vmatmul.bf16.gmra.mxu0 %v103
    %v2317 = vpop.f32.mrf.mxu0
    %v2318 = vadd.f32 %v2304, %v2317
    %v2319 = vpop.f32.mrf.mxu0
    %v2320 = vadd.f32 %v2306, %v2319
    %2321 = vdwg.mxu0
    %2322 = vmatpush.bf16.msra.mxu0 %v1379
    %2323 = vmatpush.bf16.msra.mxu0 %v1367
    %2324 = vmatpush.bf16.msra.mxu0 %v1355
    %2325 = vmatpush.bf16.msra.mxu0 %v1343
    %2326 = vmatpush.bf16.msra.mxu0 %v1331
    %2327 = vmatpush.bf16.msra.mxu0 %v1319
    %2328 = vmatpush.bf16.msra.mxu0 %v1307
    %2329 = vmatpush.bf16.msra.mxu0 %v1295
    %2330 = vmatmul.bf16.gmra.mxu0 %v101
    %v2331 = vpop.f32.mrf.mxu0
    %v2332 = vadd.f32 %v407, %v2331
    %v2333 = vpop.f32.mrf.mxu0
    %v2334 = vadd.f32 %v407, %v2333
    %2335 = vdwg.mxu0
    %2336 = vmatpush.bf16.msra.mxu0 %v1475
    %2337 = vmatpush.bf16.msra.mxu0 %v1463
    %2338 = vmatpush.bf16.msra.mxu0 %v1451
    %2339 = vmatpush.bf16.msra.mxu0 %v1439
    %2340 = vmatpush.bf16.msra.mxu0 %v1427
    %2341 = vmatpush.bf16.msra.mxu0 %v1415
    %2342 = vmatpush.bf16.msra.mxu0 %v1403
    %2343 = vmatpush.bf16.msra.mxu0 %v1391
    %2344 = vmatmul.bf16.gmra.mxu0 %v102
    %v2345 = vpop.f32.mrf.mxu0
    %v2346 = vadd.f32 %v2332, %v2345
    %v2347 = vpop.f32.mrf.mxu0
    %v2348 = vadd.f32 %v2334, %v2347
    %2349 = vdwg.mxu0
    %2350 = vmatpush.bf16.msra.mxu0 %v1571
    %2351 = vmatpush.bf16.msra.mxu0 %v1559
    %2352 = vmatpush.bf16.msra.mxu0 %v1547
    %2353 = vmatpush.bf16.msra.mxu0 %v1535
    %2354 = vmatpush.bf16.msra.mxu0 %v1523
    %2355 = vmatpush.bf16.msra.mxu0 %v1511
    %2356 = vmatpush.bf16.msra.mxu0 %v1499
    %2357 = vmatpush.bf16.msra.mxu0 %v1487
    %2358 = vmatmul.bf16.gmra.mxu0 %v103
    %v2359 = vpop.f32.mrf.mxu0
    %v2360 = vadd.f32 %v2346, %v2359
    %v2361 = vpop.f32.mrf.mxu0
    %v2362 = vadd.f32 %v2348, %v2361
    %2363 = vdwg.mxu0
    %v2364 = vmax.f32 %v1898, 0.0
    %v2365 = vmax.f32 %v1940, 0.0
    %v2366 = vmax.f32 %v1982, 0.0
    %v2367 = vmax.f32 %v2024, 0.0
    %v2368 = vmax.f32 %v2066, 0.0
    %v2369 = vmax.f32 %v2108, 0.0
    %v2370 = vmax.f32 %v2150, 0.0
    %v2371 = vmax.f32 %v2192, 0.0
    %v2372 = vmax.f32 %v2234, 0.0
    %v2373 = vmax.f32 %v2276, 0.0
    %v2374 = vmax.f32 %v2318, 0.0
    %v2375 = vmax.f32 %v2360, 0.0
    %v2376 = vmax.f32 %v1900, 0.0
    %v2377 = vmax.f32 %v1942, 0.0
    %v2378 = vmax.f32 %v1984, 0.0
    %v2379 = vmax.f32 %v2026, 0.0
    %v2380 = vmax.f32 %v2068, 0.0
    %v2381 = vmax.f32 %v2110, 0.0
    %v2382 = vmax.f32 %v2152, 0.0
    %v2383 = vmax.f32 %v2194, 0.0
    %v2384 = vmax.f32 %v2236, 0.0
    %v2385 = vmax.f32 %v2278, 0.0
    %v2386 = vmax.f32 %v2320, 0.0
    %v2387 = vmax.f32 %v2362, 0.0
    %v2388 = vpack.c.bf16 %v2365, %v2364
    %v2389 = vpack.c.bf16 %v2367, %v2366
    %v2390 = vpack.c.bf16 %v2369, %v2368
    %v2391 = vpack.c.bf16 %v2371, %v2370
    %v2392 = vpack.c.bf16 %v2373, %v2372
    %v2393 = vpack.c.bf16 %v2375, %v2374
    %v2394 = vpack.c.bf16 %v2377, %v2376
    %v2395 = vpack.c.bf16 %v2379, %v2378
    %v2396 = vpack.c.bf16 %v2381, %v2380
    %v2397 = vpack.c.bf16 %v2383, %v2382
    %v2398 = vpack.c.bf16 %v2385, %v2384
    %v2399 = vpack.c.bf16 %v2387, %v2386
    %2400 = vst [vmem:[#allocation2] sm:$0xff] %v2388
    %2401 = vst [vmem:[#allocation2 + $0x8] sm:$0xff] %v2389
    %2402 = vst [vmem:[#allocation2 + $0x10] sm:$0xff] %v2390
    %2403 = vst [vmem:[#allocation2 + $0x18] sm:$0xff] %v2391
    %2404 = vst [vmem:[#allocation2 + $0x20] sm:$0xff] %v2392
    %2405 = vst [vmem:[#allocation2 + $0x28] sm:$0xff] %v2393
    %2406 = vst [vmem:[#allocation2 + $0x30] sm:$0xff] %v2394
    %2407 = vst [vmem:[#allocation2 + $0x38] sm:$0xff] %v2395
    %2408 = vst [vmem:[#allocation2 + $0x40] sm:$0xff] %v2396
    %2409 = vst [vmem:[#allocation2 + $0x48] sm:$0xff] %v2397
    %2410 = vst [vmem:[#allocation2 + $0x50] sm:$0xff] %v2398
    %2411 = vst [vmem:[#allocation2 + $0x58] sm:$0xff] %v2399
    %v2412 = vld [vmem:[#allocation2] sm:$0xff]
    %v2413 = vld [vmem:[#allocation2 + $0x8] sm:$0xff]
    %v2414 = vld [vmem:[#allocation2 + $0x10] sm:$0xff]
    %v2415 = vld [vmem:[#allocation2 + $0x18] sm:$0xff]
    %v2416 = vld [vmem:[#allocation2 + $0x20] sm:$0xff]
    %v2417 = vld [vmem:[#allocation2 + $0x28] sm:$0xff]
    %v2418 = vld [vmem:[#allocation2 + $0x30] sm:$0xff]
    %v2419 = vld [vmem:[#allocation2 + $0x38] sm:$0xff]
    %v2420 = vld [vmem:[#allocation2 + $0x40] sm:$0xff]
    %v2421 = vld [vmem:[#allocation2 + $0x48] sm:$0xff]
    %v2422 = vld [vmem:[#allocation2 + $0x50] sm:$0xff]
    %v2423 = vld [vmem:[#allocation2 + $0x58] sm:$0xff]
    %v2424 = vld [vmem:[#allocation9] sm:$0xff]
    %v2425 = vld [vmem:[#allocation9 + $0x8] sm:$0xf]
    %v2426 = vld [vmem:[#allocation9 + $0xc] sm:$0xff]
    %v2427 = vld [vmem:[#allocation9 + $0x14] sm:$0xf]
    %v2428 = vld [vmem:[#allocation9 + $0x18] sm:$0xff]
    %v2429 = vld [vmem:[#allocation9 + $0x20] sm:$0xf]
    %v2430 = vld [vmem:[#allocation9 + $0x24] sm:$0xff]
    %v2431 = vld [vmem:[#allocation9 + $0x2c] sm:$0xf]
    %v2432 = vld [vmem:[#allocation9 + $0x30] sm:$0xff]
    %v2433 = vld [vmem:[#allocation9 + $0x38] sm:$0xf]
    %v2434 = vld [vmem:[#allocation9 + $0x3c] sm:$0xff]
    %v2435 = vld [vmem:[#allocation9 + $0x44] sm:$0xf]
    %v2436 = vld [vmem:[#allocation9 + $0x48] sm:$0xff]
    %v2437 = vld [vmem:[#allocation9 + $0x50] sm:$0xf]
    %v2438 = vld [vmem:[#allocation9 + $0x54] sm:$0xff]
    %v2439 = vld [vmem:[#allocation9 + $0x5c] sm:$0xf]
    %v2440 = vld [vmem:[#allocation9 + $0x60] sm:$0xff]
    %v2441 = vld [vmem:[#allocation9 + $0x68] sm:$0xf]
    %v2442 = vld [vmem:[#allocation9 + $0x6c] sm:$0xff]
    %v2443 = vld [vmem:[#allocation9 + $0x74] sm:$0xf]
    %v2444 = vld [vmem:[#allocation9 + $0x78] sm:$0xff]
    %v2445 = vld [vmem:[#allocation9 + $0x80] sm:$0xf]
    %v2446 = vld [vmem:[#allocation9 + $0x84] sm:$0xff]
    %v2447 = vld [vmem:[#allocation9 + $0x8c] sm:$0xf]
    %v2448 = vld [vmem:[#allocation9 + $0x90] sm:$0xff]
    %v2449 = vld [vmem:[#allocation9 + $0x98] sm:$0xf]
    %v2450 = vld [vmem:[#allocation9 + $0x9c] sm:$0xff]
    %v2451 = vld [vmem:[#allocation9 + $0xa4] sm:$0xf]
    %v2452 = vld [vmem:[#allocation9 + $0xa8] sm:$0xff]
    %v2453 = vld [vmem:[#allocation9 + $0xb0] sm:$0xf]
    %v2454 = vld [vmem:[#allocation9 + $0xb4] sm:$0xff]
    %v2455 = vld [vmem:[#allocation9 + $0xbc] sm:$0xf]
    %v2456 = vld [vmem:[#allocation9 + $0xc0] sm:$0xff]
    %v2457 = vld [vmem:[#allocation9 + $0xc8] sm:$0xf]
    %v2458 = vld [vmem:[#allocation9 + $0xcc] sm:$0xff]
    %v2459 = vld [vmem:[#allocation9 + $0xd4] sm:$0xf]
    %v2460 = vld [vmem:[#allocation9 + $0xd8] sm:$0xff]
    %v2461 = vld [vmem:[#allocation9 + $0xe0] sm:$0xf]
    %v2462 = vld [vmem:[#allocation9 + $0xe4] sm:$0xff]
    %v2463 = vld [vmem:[#allocation9 + $0xec] sm:$0xf]
    %v2464 = vld [vmem:[#allocation9 + $0xf0] sm:$0xff]
    %v2465 = vld [vmem:[#allocation9 + $0xf8] sm:$0xf]
    %v2466 = vld [vmem:[#allocation9 + $0xfc] sm:$0xff]
    %v2467 = vld [vmem:[#allocation9 + $0x104] sm:$0xf]
    %v2468 = vld [vmem:[#allocation9 + $0x108] sm:$0xff]
    %v2469 = vld [vmem:[#allocation9 + $0x110] sm:$0xf]
    %v2470 = vld [vmem:[#allocation9 + $0x114] sm:$0xff]
    %v2471 = vld [vmem:[#allocation9 + $0x11c] sm:$0xf]
    %v2472 = vld [vmem:[#allocation9 + $0x120] sm:$0xff]
    %v2473 = vld [vmem:[#allocation9 + $0x128] sm:$0xf]
    %v2474 = vld [vmem:[#allocation9 + $0x12c] sm:$0xff]
    %v2475 = vld [vmem:[#allocation9 + $0x134] sm:$0xf]
    %v2476 = vld [vmem:[#allocation9 + $0x138] sm:$0xff]
    %v2477 = vld [vmem:[#allocation9 + $0x140] sm:$0xf]
    %v2478 = vld [vmem:[#allocation9 + $0x144] sm:$0xff]
    %v2479 = vld [vmem:[#allocation9 + $0x14c] sm:$0xf]
    %v2480 = vld [vmem:[#allocation9 + $0x150] sm:$0xff]
    %v2481 = vld [vmem:[#allocation9 + $0x158] sm:$0xf]
    %v2482 = vld [vmem:[#allocation9 + $0x15c] sm:$0xff]
    %v2483 = vld [vmem:[#allocation9 + $0x164] sm:$0xf]
    %v2484 = vld [vmem:[#allocation9 + $0x168] sm:$0xff]
    %v2485 = vld [vmem:[#allocation9 + $0x170] sm:$0xf]
    %v2486 = vld [vmem:[#allocation9 + $0x174] sm:$0xff]
    %v2487 = vld [vmem:[#allocation9 + $0x17c] sm:$0xf]
    %v2488 = vld [vmem:[#allocation9 + $0x180] sm:$0xff]
    %v2489 = vld [vmem:[#allocation9 + $0x188] sm:$0xf]
    %v2490 = vld [vmem:[#allocation9 + $0x18c] sm:$0xff]
    %v2491 = vld [vmem:[#allocation9 + $0x194] sm:$0xf]
    %v2492 = vld [vmem:[#allocation9 + $0x198] sm:$0xff]
    %v2493 = vld [vmem:[#allocation9 + $0x1a0] sm:$0xf]
    %v2494 = vld [vmem:[#allocation9 + $0x1a4] sm:$0xff]
    %v2495 = vld [vmem:[#allocation9 + $0x1ac] sm:$0xf]
    %v2496 = vld [vmem:[#allocation9 + $0x1b0] sm:$0xff]
    %v2497 = vld [vmem:[#allocation9 + $0x1b8] sm:$0xf]
    %v2498 = vld [vmem:[#allocation9 + $0x1bc] sm:$0xff]
    %v2499 = vld [vmem:[#allocation9 + $0x1c4] sm:$0xf]
    %v2500 = vld [vmem:[#allocation9 + $0x1c8] sm:$0xff]
    %v2501 = vld [vmem:[#allocation9 + $0x1d0] sm:$0xf]
    %v2502 = vld [vmem:[#allocation9 + $0x1d4] sm:$0xff]
    %v2503 = vld [vmem:[#allocation9 + $0x1dc] sm:$0xf]
    %v2504 = vld [vmem:[#allocation9 + $0x1e0] sm:$0xff]
    %v2505 = vld [vmem:[#allocation9 + $0x1e8] sm:$0xf]
    %v2506 = vld [vmem:[#allocation9 + $0x1ec] sm:$0xff]
    %v2507 = vld [vmem:[#allocation9 + $0x1f4] sm:$0xf]
    %v2508 = vld [vmem:[#allocation9 + $0x1f8] sm:$0xff]
    %v2509 = vld [vmem:[#allocation9 + $0x200] sm:$0xf]
    %v2510 = vld [vmem:[#allocation9 + $0x204] sm:$0xff]
    %v2511 = vld [vmem:[#allocation9 + $0x20c] sm:$0xf]
    %v2512 = vld [vmem:[#allocation9 + $0x210] sm:$0xff]
    %v2513 = vld [vmem:[#allocation9 + $0x218] sm:$0xf]
    %v2514 = vld [vmem:[#allocation9 + $0x21c] sm:$0xff]
    %v2515 = vld [vmem:[#allocation9 + $0x224] sm:$0xf]
    %v2516 = vld [vmem:[#allocation9 + $0x228] sm:$0xff]
    %v2517 = vld [vmem:[#allocation9 + $0x230] sm:$0xf]
    %v2518 = vld [vmem:[#allocation9 + $0x234] sm:$0xff]
    %v2519 = vld [vmem:[#allocation9 + $0x23c] sm:$0xf]
    %v2520 = vld [vmem:[#allocation9 + $0x240] sm:$0xff]
    %v2521 = vld [vmem:[#allocation9 + $0x248] sm:$0xf]
    %v2522 = vld [vmem:[#allocation9 + $0x24c] sm:$0xff]
    %v2523 = vld [vmem:[#allocation9 + $0x254] sm:$0xf]
    %v2524 = vld [vmem:[#allocation9 + $0x258] sm:$0xff]
    %v2525 = vld [vmem:[#allocation9 + $0x260] sm:$0xf]
    %v2526 = vld [vmem:[#allocation9 + $0x264] sm:$0xff]
    %v2527 = vld [vmem:[#allocation9 + $0x26c] sm:$0xf]
    %v2528 = vld [vmem:[#allocation9 + $0x270] sm:$0xff]
    %v2529 = vld [vmem:[#allocation9 + $0x278] sm:$0xf]
    %v2530 = vld [vmem:[#allocation9 + $0x27c] sm:$0xff]
    %v2531 = vld [vmem:[#allocation9 + $0x284] sm:$0xf]
    %v2532 = vld [vmem:[#allocation9 + $0x288] sm:$0xff]
    %v2533 = vld [vmem:[#allocation9 + $0x290] sm:$0xf]
    %v2534 = vld [vmem:[#allocation9 + $0x294] sm:$0xff]
    %v2535 = vld [vmem:[#allocation9 + $0x29c] sm:$0xf]
    %v2536 = vld [vmem:[#allocation9 + $0x2a0] sm:$0xff]
    %v2537 = vld [vmem:[#allocation9 + $0x2a8] sm:$0xf]
    %v2538 = vld [vmem:[#allocation9 + $0x2ac] sm:$0xff]
    %v2539 = vld [vmem:[#allocation9 + $0x2b4] sm:$0xf]
    %v2540 = vld [vmem:[#allocation9 + $0x2b8] sm:$0xff]
    %v2541 = vld [vmem:[#allocation9 + $0x2c0] sm:$0xf]
    %v2542 = vld [vmem:[#allocation9 + $0x2c4] sm:$0xff]
    %v2543 = vld [vmem:[#allocation9 + $0x2cc] sm:$0xf]
    %v2544 = vld [vmem:[#allocation9 + $0x2d0] sm:$0xff]
    %v2545 = vld [vmem:[#allocation9 + $0x2d8] sm:$0xf]
    %v2546 = vld [vmem:[#allocation9 + $0x2dc] sm:$0xff]
    %v2547 = vld [vmem:[#allocation9 + $0x2e4] sm:$0xf]
    %v2548 = vld [vmem:[#allocation9 + $0x2e8] sm:$0xff]
    %v2549 = vld [vmem:[#allocation9 + $0x2f0] sm:$0xf]
    %v2550 = vld [vmem:[#allocation9 + $0x2f4] sm:$0xff]
    %v2551 = vld [vmem:[#allocation9 + $0x2fc] sm:$0xf]
    %v2552 = vld [vmem:[#allocation9 + $0x300] sm:$0xff]
    %v2553 = vld [vmem:[#allocation9 + $0x308] sm:$0xf]
    %v2554 = vld [vmem:[#allocation9 + $0x30c] sm:$0xff]
    %v2555 = vld [vmem:[#allocation9 + $0x314] sm:$0xf]
    %v2556 = vld [vmem:[#allocation9 + $0x318] sm:$0xff]
    %v2557 = vld [vmem:[#allocation9 + $0x320] sm:$0xf]
    %v2558 = vld [vmem:[#allocation9 + $0x324] sm:$0xff]
    %v2559 = vld [vmem:[#allocation9 + $0x32c] sm:$0xf]
    %v2560 = vld [vmem:[#allocation9 + $0x330] sm:$0xff]
    %v2561 = vld [vmem:[#allocation9 + $0x338] sm:$0xf]
    %v2562 = vld [vmem:[#allocation9 + $0x33c] sm:$0xff]
    %v2563 = vld [vmem:[#allocation9 + $0x344] sm:$0xf]
    %v2564 = vld [vmem:[#allocation9 + $0x348] sm:$0xff]
    %v2565 = vld [vmem:[#allocation9 + $0x350] sm:$0xf]
    %v2566 = vld [vmem:[#allocation9 + $0x354] sm:$0xff]
    %v2567 = vld [vmem:[#allocation9 + $0x35c] sm:$0xf]
    %v2568 = vld [vmem:[#allocation9 + $0x360] sm:$0xff]
    %v2569 = vld [vmem:[#allocation9 + $0x368] sm:$0xf]
    %v2570 = vld [vmem:[#allocation9 + $0x36c] sm:$0xff]
    %v2571 = vld [vmem:[#allocation9 + $0x374] sm:$0xf]
    %v2572 = vld [vmem:[#allocation9 + $0x378] sm:$0xff]
    %v2573 = vld [vmem:[#allocation9 + $0x380] sm:$0xf]
    %v2574 = vld [vmem:[#allocation9 + $0x384] sm:$0xff]
    %v2575 = vld [vmem:[#allocation9 + $0x38c] sm:$0xf]
    %v2576 = vld [vmem:[#allocation9 + $0x390] sm:$0xff]
    %v2577 = vld [vmem:[#allocation9 + $0x398] sm:$0xf]
    %v2578 = vld [vmem:[#allocation9 + $0x39c] sm:$0xff]
    %v2579 = vld [vmem:[#allocation9 + $0x3a4] sm:$0xf]
    %v2580 = vld [vmem:[#allocation9 + $0x3a8] sm:$0xff]
    %v2581 = vld [vmem:[#allocation9 + $0x3b0] sm:$0xf]
    %v2582 = vld [vmem:[#allocation9 + $0x3b4] sm:$0xff]
    %v2583 = vld [vmem:[#allocation9 + $0x3bc] sm:$0xf]
    %v2584 = vld [vmem:[#allocation9 + $0x3c0] sm:$0xff]
    %v2585 = vld [vmem:[#allocation9 + $0x3c8] sm:$0xf]
    %v2586 = vld [vmem:[#allocation9 + $0x3cc] sm:$0xff]
    %v2587 = vld [vmem:[#allocation9 + $0x3d4] sm:$0xf]
    %v2588 = vld [vmem:[#allocation9 + $0x3d8] sm:$0xff]
    %v2589 = vld [vmem:[#allocation9 + $0x3e0] sm:$0xf]
    %v2590 = vld [vmem:[#allocation9 + $0x3e4] sm:$0xff]
    %v2591 = vld [vmem:[#allocation9 + $0x3ec] sm:$0xf]
    %v2592 = vld [vmem:[#allocation9 + $0x3f0] sm:$0xff]
    %v2593 = vld [vmem:[#allocation9 + $0x3f8] sm:$0xf]
    %v2594 = vld [vmem:[#allocation9 + $0x3fc] sm:$0xff]
    %v2595 = vld [vmem:[#allocation9 + $0x404] sm:$0xf]
    %v2596 = vld [vmem:[#allocation9 + $0x408] sm:$0xff]
    %v2597 = vld [vmem:[#allocation9 + $0x410] sm:$0xf]
    %v2598 = vld [vmem:[#allocation9 + $0x414] sm:$0xff]
    %v2599 = vld [vmem:[#allocation9 + $0x41c] sm:$0xf]
    %v2600 = vld [vmem:[#allocation9 + $0x420] sm:$0xff]
    %v2601 = vld [vmem:[#allocation9 + $0x428] sm:$0xf]
    %v2602 = vld [vmem:[#allocation9 + $0x42c] sm:$0xff]
    %v2603 = vld [vmem:[#allocation9 + $0x434] sm:$0xf]
    %v2604 = vld [vmem:[#allocation9 + $0x438] sm:$0xff]
    %v2605 = vld [vmem:[#allocation9 + $0x440] sm:$0xf]
    %v2606 = vld [vmem:[#allocation9 + $0x444] sm:$0xff]
    %v2607 = vld [vmem:[#allocation9 + $0x44c] sm:$0xf]
    %v2608 = vld [vmem:[#allocation9 + $0x450] sm:$0xff]
    %v2609 = vld [vmem:[#allocation9 + $0x458] sm:$0xf]
    %v2610 = vld [vmem:[#allocation9 + $0x45c] sm:$0xff]
    %v2611 = vld [vmem:[#allocation9 + $0x464] sm:$0xf]
    %v2612 = vld [vmem:[#allocation9 + $0x468] sm:$0xff]
    %v2613 = vld [vmem:[#allocation9 + $0x470] sm:$0xf]
    %v2614 = vld [vmem:[#allocation9 + $0x474] sm:$0xff]
    %v2615 = vld [vmem:[#allocation9 + $0x47c] sm:$0xf]
    %v2616 = vld [vmem:[#allocation9 + $0x480] sm:$0xff]
    %v2617 = vld [vmem:[#allocation9 + $0x488] sm:$0xf]
    %v2618 = vld [vmem:[#allocation9 + $0x48c] sm:$0xff]
    %v2619 = vld [vmem:[#allocation9 + $0x494] sm:$0xf]
    %v2620 = vld [vmem:[#allocation9 + $0x498] sm:$0xff]
    %v2621 = vld [vmem:[#allocation9 + $0x4a0] sm:$0xf]
    %v2622 = vld [vmem:[#allocation9 + $0x4a4] sm:$0xff]
    %v2623 = vld [vmem:[#allocation9 + $0x4ac] sm:$0xf]
    %v2624 = vld [vmem:[#allocation9 + $0x4b0] sm:$0xff]
    %v2625 = vld [vmem:[#allocation9 + $0x4b8] sm:$0xf]
    %v2626 = vld [vmem:[#allocation9 + $0x4bc] sm:$0xff]
    %v2627 = vld [vmem:[#allocation9 + $0x4c4] sm:$0xf]
    %v2628 = vld [vmem:[#allocation9 + $0x4c8] sm:$0xff]
    %v2629 = vld [vmem:[#allocation9 + $0x4d0] sm:$0xf]
    %v2630 = vld [vmem:[#allocation9 + $0x4d4] sm:$0xff]
    %v2631 = vld [vmem:[#allocation9 + $0x4dc] sm:$0xf]
    %v2632 = vld [vmem:[#allocation9 + $0x4e0] sm:$0xff]
    %v2633 = vld [vmem:[#allocation9 + $0x4e8] sm:$0xf]
    %v2634 = vld [vmem:[#allocation9 + $0x4ec] sm:$0xff]
    %v2635 = vld [vmem:[#allocation9 + $0x4f4] sm:$0xf]
    %v2636 = vld [vmem:[#allocation9 + $0x4f8] sm:$0xff]
    %v2637 = vld [vmem:[#allocation9 + $0x500] sm:$0xf]
    %v2638 = vld [vmem:[#allocation9 + $0x504] sm:$0xff]
    %v2639 = vld [vmem:[#allocation9 + $0x50c] sm:$0xf]
    %v2640 = vld [vmem:[#allocation9 + $0x510] sm:$0xff]
    %v2641 = vld [vmem:[#allocation9 + $0x518] sm:$0xf]
    %v2642 = vld [vmem:[#allocation9 + $0x51c] sm:$0xff]
    %v2643 = vld [vmem:[#allocation9 + $0x524] sm:$0xf]
    %v2644 = vld [vmem:[#allocation9 + $0x528] sm:$0xff]
    %v2645 = vld [vmem:[#allocation9 + $0x530] sm:$0xf]
    %v2646 = vld [vmem:[#allocation9 + $0x534] sm:$0xff]
    %v2647 = vld [vmem:[#allocation9 + $0x53c] sm:$0xf]
    %v2648 = vld [vmem:[#allocation9 + $0x540] sm:$0xff]
    %v2649 = vld [vmem:[#allocation9 + $0x548] sm:$0xf]
    %v2650 = vld [vmem:[#allocation9 + $0x54c] sm:$0xff]
    %v2651 = vld [vmem:[#allocation9 + $0x554] sm:$0xf]
    %v2652 = vld [vmem:[#allocation9 + $0x558] sm:$0xff]
    %v2653 = vld [vmem:[#allocation9 + $0x560] sm:$0xf]
    %v2654 = vld [vmem:[#allocation9 + $0x564] sm:$0xff]
    %v2655 = vld [vmem:[#allocation9 + $0x56c] sm:$0xf]
    %v2656 = vld [vmem:[#allocation9 + $0x570] sm:$0xff]
    %v2657 = vld [vmem:[#allocation9 + $0x578] sm:$0xf]
    %v2658 = vld [vmem:[#allocation9 + $0x57c] sm:$0xff]
    %v2659 = vld [vmem:[#allocation9 + $0x584] sm:$0xf]
    %v2660 = vld [vmem:[#allocation9 + $0x588] sm:$0xff]
    %v2661 = vld [vmem:[#allocation9 + $0x590] sm:$0xf]
    %v2662 = vld [vmem:[#allocation9 + $0x594] sm:$0xff]
    %v2663 = vld [vmem:[#allocation9 + $0x59c] sm:$0xf]
    %v2664 = vld [vmem:[#allocation9 + $0x5a0] sm:$0xff]
    %v2665 = vld [vmem:[#allocation9 + $0x5a8] sm:$0xf]
    %v2666 = vld [vmem:[#allocation9 + $0x5ac] sm:$0xff]
    %v2667 = vld [vmem:[#allocation9 + $0x5b4] sm:$0xf]
    %v2668 = vld [vmem:[#allocation9 + $0x5b8] sm:$0xff]
    %v2669 = vld [vmem:[#allocation9 + $0x5c0] sm:$0xf]
    %v2670 = vld [vmem:[#allocation9 + $0x5c4] sm:$0xff]
    %v2671 = vld [vmem:[#allocation9 + $0x5cc] sm:$0xf]
    %v2672 = vld [vmem:[#allocation9 + $0x5d0] sm:$0xff]
    %v2673 = vld [vmem:[#allocation9 + $0x5d8] sm:$0xf]
    %v2674 = vld [vmem:[#allocation9 + $0x5dc] sm:$0xff]
    %v2675 = vld [vmem:[#allocation9 + $0x5e4] sm:$0xf]
    %v2676 = vld [vmem:[#allocation9 + $0x5e8] sm:$0xff]
    %v2677 = vld [vmem:[#allocation9 + $0x5f0] sm:$0xf]
    %v2678 = vld [vmem:[#allocation9 + $0x5f4] sm:$0xff]
    %v2679 = vld [vmem:[#allocation9 + $0x5fc] sm:$0xf]
    %v2680 = vld [vmem:[#allocation9 + $0x600] sm:$0xff]
    %v2681 = vld [vmem:[#allocation9 + $0x608] sm:$0xf]
    %v2682 = vld [vmem:[#allocation9 + $0x60c] sm:$0xff]
    %v2683 = vld [vmem:[#allocation9 + $0x614] sm:$0xf]
    %v2684 = vld [vmem:[#allocation9 + $0x618] sm:$0xff]
    %v2685 = vld [vmem:[#allocation9 + $0x620] sm:$0xf]
    %v2686 = vld [vmem:[#allocation9 + $0x624] sm:$0xff]
    %v2687 = vld [vmem:[#allocation9 + $0x62c] sm:$0xf]
    %v2688 = vld [vmem:[#allocation9 + $0x630] sm:$0xff]
    %v2689 = vld [vmem:[#allocation9 + $0x638] sm:$0xf]
    %v2690 = vld [vmem:[#allocation9 + $0x63c] sm:$0xff]
    %v2691 = vld [vmem:[#allocation9 + $0x644] sm:$0xf]
    %v2692 = vld [vmem:[#allocation9 + $0x648] sm:$0xff]
    %v2693 = vld [vmem:[#allocation9 + $0x650] sm:$0xf]
    %v2694 = vld [vmem:[#allocation9 + $0x654] sm:$0xff]
    %v2695 = vld [vmem:[#allocation9 + $0x65c] sm:$0xf]
    %v2696 = vld [vmem:[#allocation9 + $0x660] sm:$0xff]
    %v2697 = vld [vmem:[#allocation9 + $0x668] sm:$0xf]
    %v2698 = vld [vmem:[#allocation9 + $0x66c] sm:$0xff]
    %v2699 = vld [vmem:[#allocation9 + $0x674] sm:$0xf]
    %v2700 = vld [vmem:[#allocation9 + $0x678] sm:$0xff]
    %v2701 = vld [vmem:[#allocation9 + $0x680] sm:$0xf]
    %v2702 = vld [vmem:[#allocation9 + $0x684] sm:$0xff]
    %v2703 = vld [vmem:[#allocation9 + $0x68c] sm:$0xf]
    %v2704 = vld [vmem:[#allocation9 + $0x690] sm:$0xff]
    %v2705 = vld [vmem:[#allocation9 + $0x698] sm:$0xf]
    %v2706 = vld [vmem:[#allocation9 + $0x69c] sm:$0xff]
    %v2707 = vld [vmem:[#allocation9 + $0x6a4] sm:$0xf]
    %v2708 = vld [vmem:[#allocation9 + $0x6a8] sm:$0xff]
    %v2709 = vld [vmem:[#allocation9 + $0x6b0] sm:$0xf]
    %v2710 = vld [vmem:[#allocation9 + $0x6b4] sm:$0xff]
    %v2711 = vld [vmem:[#allocation9 + $0x6bc] sm:$0xf]
    %v2712 = vld [vmem:[#allocation9 + $0x6c0] sm:$0xff]
    %v2713 = vld [vmem:[#allocation9 + $0x6c8] sm:$0xf]
    %v2714 = vld [vmem:[#allocation9 + $0x6cc] sm:$0xff]
    %v2715 = vld [vmem:[#allocation9 + $0x6d4] sm:$0xf]
    %v2716 = vld [vmem:[#allocation9 + $0x6d8] sm:$0xff]
    %v2717 = vld [vmem:[#allocation9 + $0x6e0] sm:$0xf]
    %v2718 = vld [vmem:[#allocation9 + $0x6e4] sm:$0xff]
    %v2719 = vld [vmem:[#allocation9 + $0x6ec] sm:$0xf]
    %v2720 = vld [vmem:[#allocation9 + $0x6f0] sm:$0xff]
    %v2721 = vld [vmem:[#allocation9 + $0x6f8] sm:$0xf]
    %v2722 = vld [vmem:[#allocation9 + $0x6fc] sm:$0xff]
    %v2723 = vld [vmem:[#allocation9 + $0x704] sm:$0xf]
    %v2724 = vld [vmem:[#allocation9 + $0x708] sm:$0xff]
    %v2725 = vld [vmem:[#allocation9 + $0x710] sm:$0xf]
    %v2726 = vld [vmem:[#allocation9 + $0x714] sm:$0xff]
    %v2727 = vld [vmem:[#allocation9 + $0x71c] sm:$0xf]
    %v2728 = vld [vmem:[#allocation9 + $0x720] sm:$0xff]
    %v2729 = vld [vmem:[#allocation9 + $0x728] sm:$0xf]
    %v2730 = vld [vmem:[#allocation9 + $0x72c] sm:$0xff]
    %v2731 = vld [vmem:[#allocation9 + $0x734] sm:$0xf]
    %v2732 = vld [vmem:[#allocation9 + $0x738] sm:$0xff]
    %v2733 = vld [vmem:[#allocation9 + $0x740] sm:$0xf]
    %v2734 = vld [vmem:[#allocation9 + $0x744] sm:$0xff]
    %v2735 = vld [vmem:[#allocation9 + $0x74c] sm:$0xf]
    %v2736 = vld [vmem:[#allocation9 + $0x750] sm:$0xff]
    %v2737 = vld [vmem:[#allocation9 + $0x758] sm:$0xf]
    %v2738 = vld [vmem:[#allocation9 + $0x75c] sm:$0xff]
    %v2739 = vld [vmem:[#allocation9 + $0x764] sm:$0xf]
    %v2740 = vld [vmem:[#allocation9 + $0x768] sm:$0xff]
    %v2741 = vld [vmem:[#allocation9 + $0x770] sm:$0xf]
    %v2742 = vld [vmem:[#allocation9 + $0x774] sm:$0xff]
    %v2743 = vld [vmem:[#allocation9 + $0x77c] sm:$0xf]
    %v2744 = vld [vmem:[#allocation9 + $0x780] sm:$0xff]
    %v2745 = vld [vmem:[#allocation9 + $0x788] sm:$0xf]
    %v2746 = vld [vmem:[#allocation9 + $0x78c] sm:$0xff]
    %v2747 = vld [vmem:[#allocation9 + $0x794] sm:$0xf]
    %v2748 = vld [vmem:[#allocation9 + $0x798] sm:$0xff]
    %v2749 = vld [vmem:[#allocation9 + $0x7a0] sm:$0xf]
    %v2750 = vld [vmem:[#allocation9 + $0x7a4] sm:$0xff]
    %v2751 = vld [vmem:[#allocation9 + $0x7ac] sm:$0xf]
    %v2752 = vld [vmem:[#allocation9 + $0x7b0] sm:$0xff]
    %v2753 = vld [vmem:[#allocation9 + $0x7b8] sm:$0xf]
    %v2754 = vld [vmem:[#allocation9 + $0x7bc] sm:$0xff]
    %v2755 = vld [vmem:[#allocation9 + $0x7c4] sm:$0xf]
    %v2756 = vld [vmem:[#allocation9 + $0x7c8] sm:$0xff]
    %v2757 = vld [vmem:[#allocation9 + $0x7d0] sm:$0xf]
    %v2758 = vld [vmem:[#allocation9 + $0x7d4] sm:$0xff]
    %v2759 = vld [vmem:[#allocation9 + $0x7dc] sm:$0xf]
    %v2760 = vld [vmem:[#allocation9 + $0x7e0] sm:$0xff]
    %v2761 = vld [vmem:[#allocation9 + $0x7e8] sm:$0xf]
    %v2762 = vld [vmem:[#allocation9 + $0x7ec] sm:$0xff]
    %v2763 = vld [vmem:[#allocation9 + $0x7f4] sm:$0xf]
    %v2764 = vld [vmem:[#allocation9 + $0x7f8] sm:$0xff]
    %v2765 = vld [vmem:[#allocation9 + $0x800] sm:$0xf]
    %v2766 = vld [vmem:[#allocation9 + $0x804] sm:$0xff]
    %v2767 = vld [vmem:[#allocation9 + $0x80c] sm:$0xf]
    %v2768 = vld [vmem:[#allocation9 + $0x810] sm:$0xff]
    %v2769 = vld [vmem:[#allocation9 + $0x818] sm:$0xf]
    %v2770 = vld [vmem:[#allocation9 + $0x81c] sm:$0xff]
    %v2771 = vld [vmem:[#allocation9 + $0x824] sm:$0xf]
    %v2772 = vld [vmem:[#allocation9 + $0x828] sm:$0xff]
    %v2773 = vld [vmem:[#allocation9 + $0x830] sm:$0xf]
    %v2774 = vld [vmem:[#allocation9 + $0x834] sm:$0xff]
    %v2775 = vld [vmem:[#allocation9 + $0x83c] sm:$0xf]
    %v2776 = vld [vmem:[#allocation9 + $0x840] sm:$0xff]
    %v2777 = vld [vmem:[#allocation9 + $0x848] sm:$0xf]
    %v2778 = vld [vmem:[#allocation9 + $0x84c] sm:$0xff]
    %v2779 = vld [vmem:[#allocation9 + $0x854] sm:$0xf]
    %v2780 = vld [vmem:[#allocation9 + $0x858] sm:$0xff]
    %v2781 = vld [vmem:[#allocation9 + $0x860] sm:$0xf]
    %v2782 = vld [vmem:[#allocation9 + $0x864] sm:$0xff]
    %v2783 = vld [vmem:[#allocation9 + $0x86c] sm:$0xf]
    %v2784 = vld [vmem:[#allocation9 + $0x870] sm:$0xff]
    %v2785 = vld [vmem:[#allocation9 + $0x878] sm:$0xf]
    %v2786 = vld [vmem:[#allocation9 + $0x87c] sm:$0xff]
    %v2787 = vld [vmem:[#allocation9 + $0x884] sm:$0xf]
    %v2788 = vld [vmem:[#allocation9 + $0x888] sm:$0xff]
    %v2789 = vld [vmem:[#allocation9 + $0x890] sm:$0xf]
    %v2790 = vld [vmem:[#allocation9 + $0x894] sm:$0xff]
    %v2791 = vld [vmem:[#allocation9 + $0x89c] sm:$0xf]
    %v2792 = vld [vmem:[#allocation9 + $0x8a0] sm:$0xff]
    %v2793 = vld [vmem:[#allocation9 + $0x8a8] sm:$0xf]
    %v2794 = vld [vmem:[#allocation9 + $0x8ac] sm:$0xff]
    %v2795 = vld [vmem:[#allocation9 + $0x8b4] sm:$0xf]
    %v2796 = vld [vmem:[#allocation9 + $0x8b8] sm:$0xff]
    %v2797 = vld [vmem:[#allocation9 + $0x8c0] sm:$0xf]
    %v2798 = vld [vmem:[#allocation9 + $0x8c4] sm:$0xff]
    %v2799 = vld [vmem:[#allocation9 + $0x8cc] sm:$0xf]
    %v2800 = vld [vmem:[#allocation9 + $0x8d0] sm:$0xff]
    %v2801 = vld [vmem:[#allocation9 + $0x8d8] sm:$0xf]
    %v2802 = vld [vmem:[#allocation9 + $0x8dc] sm:$0xff]
    %v2803 = vld [vmem:[#allocation9 + $0x8e4] sm:$0xf]
    %v2804 = vld [vmem:[#allocation9 + $0x8e8] sm:$0xff]
    %v2805 = vld [vmem:[#allocation9 + $0x8f0] sm:$0xf]
    %v2806 = vld [vmem:[#allocation9 + $0x8f4] sm:$0xff]
    %v2807 = vld [vmem:[#allocation9 + $0x8fc] sm:$0xf]
    %v2808 = vld [vmem:[#allocation11] sm:$0x7]
    %v2810 = vperm.slane %v2808, 0
    %v2811 = vperm.slane %v2808, 1
    %v2812 = vperm.slane %v2808, 2
    %v2828 = vunpack.c.l.b16 %v2412
    %v2829 = vunpack.c.h.b16 %v2412
    %v2830 = vunpack.c.l.b16 %v2413
    %v2831 = vunpack.c.h.b16 %v2413
    %v2832 = vunpack.c.l.b16 %v2414
    %v2833 = vunpack.c.h.b16 %v2414
    %v2834 = vunpack.c.l.b16 %v2415
    %v2835 = vunpack.c.h.b16 %v2415
    %v2836 = vunpack.c.l.b16 %v2416
    %v2837 = vunpack.c.h.b16 %v2416
    %v2838 = vunpack.c.l.b16 %v2417
    %v2839 = vunpack.c.h.b16 %v2417
    %v2840 = vunpack.c.l.b16 %v2418
    %v2841 = vunpack.c.h.b16 %v2418
    %v2842 = vunpack.c.l.b16 %v2419
    %v2843 = vunpack.c.h.b16 %v2419
    %v2844 = vunpack.c.l.b16 %v2420
    %v2845 = vunpack.c.h.b16 %v2420
    %v2846 = vunpack.c.l.b16 %v2421
    %v2847 = vunpack.c.h.b16 %v2421
    %v2848 = vunpack.c.l.b16 %v2422
    %v2849 = vunpack.c.h.b16 %v2422
    %v2850 = vunpack.c.l.b16 %v2423
    %v2851 = vunpack.c.h.b16 %v2423
    %v2852 = vpack.c.b16 %v2840, %v2828
    %v2853 = vpack.c.b16 %v2841, %v2829
    %v2854 = vpack.c.b16 %v2842, %v2830
    %v2855 = vpack.c.b16 %v2843, %v2831
    %v2856 = vpack.c.b16 %v2844, %v2832
    %v2857 = vpack.c.b16 %v2845, %v2833
    %v2858 = vpack.c.b16 %v2846, %v2834
    %v2859 = vpack.c.b16 %v2847, %v2835
    %v2860 = vpack.c.b16 %v2848, %v2836
    %v2861 = vpack.c.b16 %v2849, %v2837
    %v2862 = vpack.c.b16 %v2850, %v2838
    %v2863 = vpack.c.b16 %v2851, %v2839
    %v3260 = vunpack.c.l.b16 %v2424
    %v3261 = vunpack.c.h.b16 %v2424
    %v3262 = vunpack.c.l.b16 %v2425
    %v3263 = vunpack.c.l.b16 %v2426
    %v3264 = vunpack.c.h.b16 %v2426
    %v3265 = vunpack.c.l.b16 %v2427
    %v3266 = vunpack.c.l.b16 %v2428
    %v3267 = vunpack.c.h.b16 %v2428
    %v3268 = vunpack.c.l.b16 %v2429
    %v3269 = vunpack.c.l.b16 %v2430
    %v3270 = vunpack.c.h.b16 %v2430
    %v3271 = vunpack.c.l.b16 %v2431
    %v3272 = vunpack.c.l.b16 %v2432
    %v3273 = vunpack.c.h.b16 %v2432
    %v3274 = vunpack.c.l.b16 %v2433
    %v3275 = vunpack.c.l.b16 %v2434
    %v3276 = vunpack.c.h.b16 %v2434
    %v3277 = vunpack.c.l.b16 %v2435
    %v3278 = vunpack.c.l.b16 %v2436
    %v3279 = vunpack.c.h.b16 %v2436
    %v3280 = vunpack.c.l.b16 %v2437
    %v3281 = vunpack.c.l.b16 %v2438
    %v3282 = vunpack.c.h.b16 %v2438
    %v3283 = vunpack.c.l.b16 %v2439
    %v3284 = vunpack.c.l.b16 %v2440
    %v3285 = vunpack.c.h.b16 %v2440
    %v3286 = vunpack.c.l.b16 %v2441
    %v3287 = vunpack.c.l.b16 %v2442
    %v3288 = vunpack.c.h.b16 %v2442
    %v3289 = vunpack.c.l.b16 %v2443
    %v3290 = vunpack.c.l.b16 %v2444
    %v3291 = vunpack.c.h.b16 %v2444
    %v3292 = vunpack.c.l.b16 %v2445
    %v3293 = vunpack.c.l.b16 %v2446
    %v3294 = vunpack.c.h.b16 %v2446
    %v3295 = vunpack.c.l.b16 %v2447
    %v3296 = vunpack.c.l.b16 %v2448
    %v3297 = vunpack.c.h.b16 %v2448
    %v3298 = vunpack.c.l.b16 %v2449
    %v3299 = vunpack.c.l.b16 %v2450
    %v3300 = vunpack.c.h.b16 %v2450
    %v3301 = vunpack.c.l.b16 %v2451
    %v3302 = vunpack.c.l.b16 %v2452
    %v3303 = vunpack.c.h.b16 %v2452
    %v3304 = vunpack.c.l.b16 %v2453
    %v3305 = vunpack.c.l.b16 %v2454
    %v3306 = vunpack.c.h.b16 %v2454
    %v3307 = vunpack.c.l.b16 %v2455
    %v3308 = vunpack.c.l.b16 %v2456
    %v3309 = vunpack.c.h.b16 %v2456
    %v3310 = vunpack.c.l.b16 %v2457
    %v3311 = vunpack.c.l.b16 %v2458
    %v3312 = vunpack.c.h.b16 %v2458
    %v3313 = vunpack.c.l.b16 %v2459
    %v3314 = vunpack.c.l.b16 %v2460
    %v3315 = vunpack.c.h.b16 %v2460
    %v3316 = vunpack.c.l.b16 %v2461
    %v3317 = vunpack.c.l.b16 %v2462
    %v3318 = vunpack.c.h.b16 %v2462
    %v3319 = vunpack.c.l.b16 %v2463
    %v3320 = vunpack.c.l.b16 %v2464
    %v3321 = vunpack.c.h.b16 %v2464
    %v3322 = vunpack.c.l.b16 %v2465
    %v3323 = vunpack.c.l.b16 %v2466
    %v3324 = vunpack.c.h.b16 %v2466
    %v3325 = vunpack.c.l.b16 %v2467
    %v3326 = vunpack.c.l.b16 %v2468
    %v3327 = vunpack.c.h.b16 %v2468
    %v3328 = vunpack.c.l.b16 %v2469
    %v3329 = vunpack.c.l.b16 %v2470
    %v3330 = vunpack.c.h.b16 %v2470
    %v3331 = vunpack.c.l.b16 %v2471
    %v3332 = vunpack.c.l.b16 %v2472
    %v3333 = vunpack.c.h.b16 %v2472
    %v3334 = vunpack.c.l.b16 %v2473
    %v3335 = vunpack.c.l.b16 %v2474
    %v3336 = vunpack.c.h.b16 %v2474
    %v3337 = vunpack.c.l.b16 %v2475
    %v3338 = vunpack.c.l.b16 %v2476
    %v3339 = vunpack.c.h.b16 %v2476
    %v3340 = vunpack.c.l.b16 %v2477
    %v3341 = vunpack.c.l.b16 %v2478
    %v3342 = vunpack.c.h.b16 %v2478
    %v3343 = vunpack.c.l.b16 %v2479
    %v3344 = vunpack.c.l.b16 %v2480
    %v3345 = vunpack.c.h.b16 %v2480
    %v3346 = vunpack.c.l.b16 %v2481
    %v3347 = vunpack.c.l.b16 %v2482
    %v3348 = vunpack.c.h.b16 %v2482
    %v3349 = vunpack.c.l.b16 %v2483
    %v3350 = vunpack.c.l.b16 %v2484
    %v3351 = vunpack.c.h.b16 %v2484
    %v3352 = vunpack.c.l.b16 %v2485
    %v3353 = vunpack.c.l.b16 %v2486
    %v3354 = vunpack.c.h.b16 %v2486
    %v3355 = vunpack.c.l.b16 %v2487
    %v3356 = vunpack.c.l.b16 %v2488
    %v3357 = vunpack.c.h.b16 %v2488
    %v3358 = vunpack.c.l.b16 %v2489
    %v3359 = vunpack.c.l.b16 %v2490
    %v3360 = vunpack.c.h.b16 %v2490
    %v3361 = vunpack.c.l.b16 %v2491
    %v3362 = vunpack.c.l.b16 %v2492
    %v3363 = vunpack.c.h.b16 %v2492
    %v3364 = vunpack.c.l.b16 %v2493
    %v3365 = vunpack.c.l.b16 %v2494
    %v3366 = vunpack.c.h.b16 %v2494
    %v3367 = vunpack.c.l.b16 %v2495
    %v3368 = vunpack.c.l.b16 %v2496
    %v3369 = vunpack.c.h.b16 %v2496
    %v3370 = vunpack.c.l.b16 %v2497
    %v3371 = vunpack.c.l.b16 %v2498
    %v3372 = vunpack.c.h.b16 %v2498
    %v3373 = vunpack.c.l.b16 %v2499
    %v3374 = vunpack.c.l.b16 %v2500
    %v3375 = vunpack.c.h.b16 %v2500
    %v3376 = vunpack.c.l.b16 %v2501
    %v3377 = vunpack.c.l.b16 %v2502
    %v3378 = vunpack.c.h.b16 %v2502
    %v3379 = vunpack.c.l.b16 %v2503
    %v3380 = vunpack.c.l.b16 %v2504
    %v3381 = vunpack.c.h.b16 %v2504
    %v3382 = vunpack.c.l.b16 %v2505
    %v3383 = vunpack.c.l.b16 %v2506
    %v3384 = vunpack.c.h.b16 %v2506
    %v3385 = vunpack.c.l.b16 %v2507
    %v3386 = vunpack.c.l.b16 %v2508
    %v3387 = vunpack.c.h.b16 %v2508
    %v3388 = vunpack.c.l.b16 %v2509
    %v3389 = vunpack.c.l.b16 %v2510
    %v3390 = vunpack.c.h.b16 %v2510
    %v3391 = vunpack.c.l.b16 %v2511
    %v3392 = vunpack.c.l.b16 %v2512
    %v3393 = vunpack.c.h.b16 %v2512
    %v3394 = vunpack.c.l.b16 %v2513
    %v3395 = vunpack.c.l.b16 %v2514
    %v3396 = vunpack.c.h.b16 %v2514
    %v3397 = vunpack.c.l.b16 %v2515
    %v3398 = vunpack.c.l.b16 %v2516
    %v3399 = vunpack.c.h.b16 %v2516
    %v3400 = vunpack.c.l.b16 %v2517
    %v3401 = vunpack.c.l.b16 %v2518
    %v3402 = vunpack.c.h.b16 %v2518
    %v3403 = vunpack.c.l.b16 %v2519
    %v3404 = vunpack.c.l.b16 %v2520
    %v3405 = vunpack.c.h.b16 %v2520
    %v3406 = vunpack.c.l.b16 %v2521
    %v3407 = vunpack.c.l.b16 %v2522
    %v3408 = vunpack.c.h.b16 %v2522
    %v3409 = vunpack.c.l.b16 %v2523
    %v3410 = vunpack.c.l.b16 %v2524
    %v3411 = vunpack.c.h.b16 %v2524
    %v3412 = vunpack.c.l.b16 %v2525
    %v3413 = vunpack.c.l.b16 %v2526
    %v3414 = vunpack.c.h.b16 %v2526
    %v3415 = vunpack.c.l.b16 %v2527
    %v3416 = vunpack.c.l.b16 %v2528
    %v3417 = vunpack.c.h.b16 %v2528
    %v3418 = vunpack.c.l.b16 %v2529
    %v3419 = vunpack.c.l.b16 %v2530
    %v3420 = vunpack.c.h.b16 %v2530
    %v3421 = vunpack.c.l.b16 %v2531
    %v3422 = vunpack.c.l.b16 %v2532
    %v3423 = vunpack.c.h.b16 %v2532
    %v3424 = vunpack.c.l.b16 %v2533
    %v3425 = vunpack.c.l.b16 %v2534
    %v3426 = vunpack.c.h.b16 %v2534
    %v3427 = vunpack.c.l.b16 %v2535
    %v3428 = vunpack.c.l.b16 %v2536
    %v3429 = vunpack.c.h.b16 %v2536
    %v3430 = vunpack.c.l.b16 %v2537
    %v3431 = vunpack.c.l.b16 %v2538
    %v3432 = vunpack.c.h.b16 %v2538
    %v3433 = vunpack.c.l.b16 %v2539
    %v3434 = vunpack.c.l.b16 %v2540
    %v3435 = vunpack.c.h.b16 %v2540
    %v3436 = vunpack.c.l.b16 %v2541
    %v3437 = vunpack.c.l.b16 %v2542
    %v3438 = vunpack.c.h.b16 %v2542
    %v3439 = vunpack.c.l.b16 %v2543
    %v3440 = vunpack.c.l.b16 %v2544
    %v3441 = vunpack.c.h.b16 %v2544
    %v3442 = vunpack.c.l.b16 %v2545
    %v3443 = vunpack.c.l.b16 %v2546
    %v3444 = vunpack.c.h.b16 %v2546
    %v3445 = vunpack.c.l.b16 %v2547
    %v3446 = vunpack.c.l.b16 %v2548
    %v3447 = vunpack.c.h.b16 %v2548
    %v3448 = vunpack.c.l.b16 %v2549
    %v3449 = vunpack.c.l.b16 %v2550
    %v3450 = vunpack.c.h.b16 %v2550
    %v3451 = vunpack.c.l.b16 %v2551
    %v3452 = vunpack.c.l.b16 %v2552
    %v3453 = vunpack.c.h.b16 %v2552
    %v3454 = vunpack.c.l.b16 %v2553
    %v3455 = vunpack.c.l.b16 %v2554
    %v3456 = vunpack.c.h.b16 %v2554
    %v3457 = vunpack.c.l.b16 %v2555
    %v3458 = vunpack.c.l.b16 %v2556
    %v3459 = vunpack.c.h.b16 %v2556
    %v3460 = vunpack.c.l.b16 %v2557
    %v3461 = vunpack.c.l.b16 %v2558
    %v3462 = vunpack.c.h.b16 %v2558
    %v3463 = vunpack.c.l.b16 %v2559
    %v3464 = vunpack.c.l.b16 %v2560
    %v3465 = vunpack.c.h.b16 %v2560
    %v3466 = vunpack.c.l.b16 %v2561
    %v3467 = vunpack.c.l.b16 %v2562
    %v3468 = vunpack.c.h.b16 %v2562
    %v3469 = vunpack.c.l.b16 %v2563
    %v3470 = vunpack.c.l.b16 %v2564
    %v3471 = vunpack.c.h.b16 %v2564
    %v3472 = vunpack.c.l.b16 %v2565
    %v3473 = vunpack.c.l.b16 %v2566
    %v3474 = vunpack.c.h.b16 %v2566
    %v3475 = vunpack.c.l.b16 %v2567
    %v3476 = vunpack.c.l.b16 %v2568
    %v3477 = vunpack.c.h.b16 %v2568
    %v3478 = vunpack.c.l.b16 %v2569
    %v3479 = vunpack.c.l.b16 %v2570
    %v3480 = vunpack.c.h.b16 %v2570
    %v3481 = vunpack.c.l.b16 %v2571
    %v3482 = vunpack.c.l.b16 %v2572
    %v3483 = vunpack.c.h.b16 %v2572
    %v3484 = vunpack.c.l.b16 %v2573
    %v3485 = vunpack.c.l.b16 %v2574
    %v3486 = vunpack.c.h.b16 %v2574
    %v3487 = vunpack.c.l.b16 %v2575
    %v3488 = vunpack.c.l.b16 %v2576
    %v3489 = vunpack.c.h.b16 %v2576
    %v3490 = vunpack.c.l.b16 %v2577
    %v3491 = vunpack.c.l.b16 %v2578
    %v3492 = vunpack.c.h.b16 %v2578
    %v3493 = vunpack.c.l.b16 %v2579
    %v3494 = vunpack.c.l.b16 %v2580
    %v3495 = vunpack.c.h.b16 %v2580
    %v3496 = vunpack.c.l.b16 %v2581
    %v3497 = vunpack.c.l.b16 %v2582
    %v3498 = vunpack.c.h.b16 %v2582
    %v3499 = vunpack.c.l.b16 %v2583
    %v3500 = vunpack.c.l.b16 %v2584
    %v3501 = vunpack.c.h.b16 %v2584
    %v3502 = vunpack.c.l.b16 %v2585
    %v3503 = vunpack.c.l.b16 %v2586
    %v3504 = vunpack.c.h.b16 %v2586
    %v3505 = vunpack.c.l.b16 %v2587
    %v3506 = vunpack.c.l.b16 %v2588
    %v3507 = vunpack.c.h.b16 %v2588
    %v3508 = vunpack.c.l.b16 %v2589
    %v3509 = vunpack.c.l.b16 %v2590
    %v3510 = vunpack.c.h.b16 %v2590
    %v3511 = vunpack.c.l.b16 %v2591
    %v3512 = vunpack.c.l.b16 %v2592
    %v3513 = vunpack.c.h.b16 %v2592
    %v3514 = vunpack.c.l.b16 %v2593
    %v3515 = vunpack.c.l.b16 %v2594
    %v3516 = vunpack.c.h.b16 %v2594
    %v3517 = vunpack.c.l.b16 %v2595
    %v3518 = vunpack.c.l.b16 %v2596
    %v3519 = vunpack.c.h.b16 %v2596
    %v3520 = vunpack.c.l.b16 %v2597
    %v3521 = vunpack.c.l.b16 %v2598
    %v3522 = vunpack.c.h.b16 %v2598
    %v3523 = vunpack.c.l.b16 %v2599
    %v3524 = vunpack.c.l.b16 %v2600
    %v3525 = vunpack.c.h.b16 %v2600
    %v3526 = vunpack.c.l.b16 %v2601
    %v3527 = vunpack.c.l.b16 %v2602
    %v3528 = vunpack.c.h.b16 %v2602
    %v3529 = vunpack.c.l.b16 %v2603
    %v3530 = vunpack.c.l.b16 %v2604
    %v3531 = vunpack.c.h.b16 %v2604
    %v3532 = vunpack.c.l.b16 %v2605
    %v3533 = vunpack.c.l.b16 %v2606
    %v3534 = vunpack.c.h.b16 %v2606
    %v3535 = vunpack.c.l.b16 %v2607
    %v3536 = vunpack.c.l.b16 %v2608
    %v3537 = vunpack.c.h.b16 %v2608
    %v3538 = vunpack.c.l.b16 %v2609
    %v3539 = vunpack.c.l.b16 %v2610
    %v3540 = vunpack.c.h.b16 %v2610
    %v3541 = vunpack.c.l.b16 %v2611
    %v3542 = vunpack.c.l.b16 %v2612
    %v3543 = vunpack.c.h.b16 %v2612
    %v3544 = vunpack.c.l.b16 %v2613
    %v3545 = vunpack.c.l.b16 %v2614
    %v3546 = vunpack.c.h.b16 %v2614
    %v3547 = vunpack.c.l.b16 %v2615
    %v3548 = vunpack.c.l.b16 %v2616
    %v3549 = vunpack.c.h.b16 %v2616
    %v3550 = vunpack.c.l.b16 %v2617
    %v3551 = vunpack.c.l.b16 %v2618
    %v3552 = vunpack.c.h.b16 %v2618
    %v3553 = vunpack.c.l.b16 %v2619
    %v3554 = vunpack.c.l.b16 %v2620
    %v3555 = vunpack.c.h.b16 %v2620
    %v3556 = vunpack.c.l.b16 %v2621
    %v3557 = vunpack.c.l.b16 %v2622
    %v3558 = vunpack.c.h.b16 %v2622
    %v3559 = vunpack.c.l.b16 %v2623
    %v3560 = vunpack.c.l.b16 %v2624
    %v3561 = vunpack.c.h.b16 %v2624
    %v3562 = vunpack.c.l.b16 %v2625
    %v3563 = vunpack.c.l.b16 %v2626
    %v3564 = vunpack.c.h.b16 %v2626
    %v3565 = vunpack.c.l.b16 %v2627
    %v3566 = vunpack.c.l.b16 %v2628
    %v3567 = vunpack.c.h.b16 %v2628
    %v3568 = vunpack.c.l.b16 %v2629
    %v3569 = vunpack.c.l.b16 %v2630
    %v3570 = vunpack.c.h.b16 %v2630
    %v3571 = vunpack.c.l.b16 %v2631
    %v3572 = vunpack.c.l.b16 %v2632
    %v3573 = vunpack.c.h.b16 %v2632
    %v3574 = vunpack.c.l.b16 %v2633
    %v3575 = vunpack.c.l.b16 %v2634
    %v3576 = vunpack.c.h.b16 %v2634
    %v3577 = vunpack.c.l.b16 %v2635
    %v3578 = vunpack.c.l.b16 %v2636
    %v3579 = vunpack.c.h.b16 %v2636
    %v3580 = vunpack.c.l.b16 %v2637
    %v3581 = vunpack.c.l.b16 %v2638
    %v3582 = vunpack.c.h.b16 %v2638
    %v3583 = vunpack.c.l.b16 %v2639
    %v3584 = vunpack.c.l.b16 %v2640
    %v3585 = vunpack.c.h.b16 %v2640
    %v3586 = vunpack.c.l.b16 %v2641
    %v3587 = vunpack.c.l.b16 %v2642
    %v3588 = vunpack.c.h.b16 %v2642
    %v3589 = vunpack.c.l.b16 %v2643
    %v3590 = vunpack.c.l.b16 %v2644
    %v3591 = vunpack.c.h.b16 %v2644
    %v3592 = vunpack.c.l.b16 %v2645
    %v3593 = vunpack.c.l.b16 %v2646
    %v3594 = vunpack.c.h.b16 %v2646
    %v3595 = vunpack.c.l.b16 %v2647
    %v3596 = vunpack.c.l.b16 %v2648
    %v3597 = vunpack.c.h.b16 %v2648
    %v3598 = vunpack.c.l.b16 %v2649
    %v3599 = vunpack.c.l.b16 %v2650
    %v3600 = vunpack.c.h.b16 %v2650
    %v3601 = vunpack.c.l.b16 %v2651
    %v3602 = vunpack.c.l.b16 %v2652
    %v3603 = vunpack.c.h.b16 %v2652
    %v3604 = vunpack.c.l.b16 %v2653
    %v3605 = vunpack.c.l.b16 %v2654
    %v3606 = vunpack.c.h.b16 %v2654
    %v3607 = vunpack.c.l.b16 %v2655
    %v3608 = vunpack.c.l.b16 %v2656
    %v3609 = vunpack.c.h.b16 %v2656
    %v3610 = vunpack.c.l.b16 %v2657
    %v3611 = vunpack.c.l.b16 %v2658
    %v3612 = vunpack.c.h.b16 %v2658
    %v3613 = vunpack.c.l.b16 %v2659
    %v3614 = vunpack.c.l.b16 %v2660
    %v3615 = vunpack.c.h.b16 %v2660
    %v3616 = vunpack.c.l.b16 %v2661
    %v3617 = vunpack.c.l.b16 %v2662
    %v3618 = vunpack.c.h.b16 %v2662
    %v3619 = vunpack.c.l.b16 %v2663
    %v3620 = vunpack.c.l.b16 %v2664
    %v3621 = vunpack.c.h.b16 %v2664
    %v3622 = vunpack.c.l.b16 %v2665
    %v3623 = vunpack.c.l.b16 %v2666
    %v3624 = vunpack.c.h.b16 %v2666
    %v3625 = vunpack.c.l.b16 %v2667
    %v3626 = vunpack.c.l.b16 %v2668
    %v3627 = vunpack.c.h.b16 %v2668
    %v3628 = vunpack.c.l.b16 %v2669
    %v3629 = vunpack.c.l.b16 %v2670
    %v3630 = vunpack.c.h.b16 %v2670
    %v3631 = vunpack.c.l.b16 %v2671
    %v3632 = vunpack.c.l.b16 %v2672
    %v3633 = vunpack.c.h.b16 %v2672
    %v3634 = vunpack.c.l.b16 %v2673
    %v3635 = vunpack.c.l.b16 %v2674
    %v3636 = vunpack.c.h.b16 %v2674
    %v3637 = vunpack.c.l.b16 %v2675
    %v3638 = vunpack.c.l.b16 %v2676
    %v3639 = vunpack.c.h.b16 %v2676
    %v3640 = vunpack.c.l.b16 %v2677
    %v3641 = vunpack.c.l.b16 %v2678
    %v3642 = vunpack.c.h.b16 %v2678
    %v3643 = vunpack.c.l.b16 %v2679
    %v3644 = vunpack.c.l.b16 %v2680
    %v3645 = vunpack.c.h.b16 %v2680
    %v3646 = vunpack.c.l.b16 %v2681
    %v3647 = vunpack.c.l.b16 %v2682
    %v3648 = vunpack.c.h.b16 %v2682
    %v3649 = vunpack.c.l.b16 %v2683
    %v3650 = vunpack.c.l.b16 %v2684
    %v3651 = vunpack.c.h.b16 %v2684
    %v3652 = vunpack.c.l.b16 %v2685
    %v3653 = vunpack.c.l.b16 %v2686
    %v3654 = vunpack.c.h.b16 %v2686
    %v3655 = vunpack.c.l.b16 %v2687
    %v3656 = vunpack.c.l.b16 %v2688
    %v3657 = vunpack.c.h.b16 %v2688
    %v3658 = vunpack.c.l.b16 %v2689
    %v3659 = vunpack.c.l.b16 %v2690
    %v3660 = vunpack.c.h.b16 %v2690
    %v3661 = vunpack.c.l.b16 %v2691
    %v3662 = vunpack.c.l.b16 %v2692
    %v3663 = vunpack.c.h.b16 %v2692
    %v3664 = vunpack.c.l.b16 %v2693
    %v3665 = vunpack.c.l.b16 %v2694
    %v3666 = vunpack.c.h.b16 %v2694
    %v3667 = vunpack.c.l.b16 %v2695
    %v3668 = vunpack.c.l.b16 %v2696
    %v3669 = vunpack.c.h.b16 %v2696
    %v3670 = vunpack.c.l.b16 %v2697
    %v3671 = vunpack.c.l.b16 %v2698
    %v3672 = vunpack.c.h.b16 %v2698
    %v3673 = vunpack.c.l.b16 %v2699
    %v3674 = vunpack.c.l.b16 %v2700
    %v3675 = vunpack.c.h.b16 %v2700
    %v3676 = vunpack.c.l.b16 %v2701
    %v3677 = vunpack.c.l.b16 %v2702
    %v3678 = vunpack.c.h.b16 %v2702
    %v3679 = vunpack.c.l.b16 %v2703
    %v3680 = vunpack.c.l.b16 %v2704
    %v3681 = vunpack.c.h.b16 %v2704
    %v3682 = vunpack.c.l.b16 %v2705
    %v3683 = vunpack.c.l.b16 %v2706
    %v3684 = vunpack.c.h.b16 %v2706
    %v3685 = vunpack.c.l.b16 %v2707
    %v3686 = vunpack.c.l.b16 %v2708
    %v3687 = vunpack.c.h.b16 %v2708
    %v3688 = vunpack.c.l.b16 %v2709
    %v3689 = vunpack.c.l.b16 %v2710
    %v3690 = vunpack.c.h.b16 %v2710
    %v3691 = vunpack.c.l.b16 %v2711
    %v3692 = vunpack.c.l.b16 %v2712
    %v3693 = vunpack.c.h.b16 %v2712
    %v3694 = vunpack.c.l.b16 %v2713
    %v3695 = vunpack.c.l.b16 %v2714
    %v3696 = vunpack.c.h.b16 %v2714
    %v3697 = vunpack.c.l.b16 %v2715
    %v3698 = vunpack.c.l.b16 %v2716
    %v3699 = vunpack.c.h.b16 %v2716
    %v3700 = vunpack.c.l.b16 %v2717
    %v3701 = vunpack.c.l.b16 %v2718
    %v3702 = vunpack.c.h.b16 %v2718
    %v3703 = vunpack.c.l.b16 %v2719
    %v3704 = vunpack.c.l.b16 %v2720
    %v3705 = vunpack.c.h.b16 %v2720
    %v3706 = vunpack.c.l.b16 %v2721
    %v3707 = vunpack.c.l.b16 %v2722
    %v3708 = vunpack.c.h.b16 %v2722
    %v3709 = vunpack.c.l.b16 %v2723
    %v3710 = vunpack.c.l.b16 %v2724
    %v3711 = vunpack.c.h.b16 %v2724
    %v3712 = vunpack.c.l.b16 %v2725
    %v3713 = vunpack.c.l.b16 %v2726
    %v3714 = vunpack.c.h.b16 %v2726
    %v3715 = vunpack.c.l.b16 %v2727
    %v3716 = vunpack.c.l.b16 %v2728
    %v3717 = vunpack.c.h.b16 %v2728
    %v3718 = vunpack.c.l.b16 %v2729
    %v3719 = vunpack.c.l.b16 %v2730
    %v3720 = vunpack.c.h.b16 %v2730
    %v3721 = vunpack.c.l.b16 %v2731
    %v3722 = vunpack.c.l.b16 %v2732
    %v3723 = vunpack.c.h.b16 %v2732
    %v3724 = vunpack.c.l.b16 %v2733
    %v3725 = vunpack.c.l.b16 %v2734
    %v3726 = vunpack.c.h.b16 %v2734
    %v3727 = vunpack.c.l.b16 %v2735
    %v3728 = vunpack.c.l.b16 %v2736
    %v3729 = vunpack.c.h.b16 %v2736
    %v3730 = vunpack.c.l.b16 %v2737
    %v3731 = vunpack.c.l.b16 %v2738
    %v3732 = vunpack.c.h.b16 %v2738
    %v3733 = vunpack.c.l.b16 %v2739
    %v3734 = vunpack.c.l.b16 %v2740
    %v3735 = vunpack.c.h.b16 %v2740
    %v3736 = vunpack.c.l.b16 %v2741
    %v3737 = vunpack.c.l.b16 %v2742
    %v3738 = vunpack.c.h.b16 %v2742
    %v3739 = vunpack.c.l.b16 %v2743
    %v3740 = vunpack.c.l.b16 %v2744
    %v3741 = vunpack.c.h.b16 %v2744
    %v3742 = vunpack.c.l.b16 %v2745
    %v3743 = vunpack.c.l.b16 %v2746
    %v3744 = vunpack.c.h.b16 %v2746
    %v3745 = vunpack.c.l.b16 %v2747
    %v3746 = vunpack.c.l.b16 %v2748
    %v3747 = vunpack.c.h.b16 %v2748
    %v3748 = vunpack.c.l.b16 %v2749
    %v3749 = vunpack.c.l.b16 %v2750
    %v3750 = vunpack.c.h.b16 %v2750
    %v3751 = vunpack.c.l.b16 %v2751
    %v3752 = vunpack.c.l.b16 %v2752
    %v3753 = vunpack.c.h.b16 %v2752
    %v3754 = vunpack.c.l.b16 %v2753
    %v3755 = vunpack.c.l.b16 %v2754
    %v3756 = vunpack.c.h.b16 %v2754
    %v3757 = vunpack.c.l.b16 %v2755
    %v3758 = vunpack.c.l.b16 %v2756
    %v3759 = vunpack.c.h.b16 %v2756
    %v3760 = vunpack.c.l.b16 %v2757
    %v3761 = vunpack.c.l.b16 %v2758
    %v3762 = vunpack.c.h.b16 %v2758
    %v3763 = vunpack.c.l.b16 %v2759
    %v3764 = vunpack.c.l.b16 %v2760
    %v3765 = vunpack.c.h.b16 %v2760
    %v3766 = vunpack.c.l.b16 %v2761
    %v3767 = vunpack.c.l.b16 %v2762
    %v3768 = vunpack.c.h.b16 %v2762
    %v3769 = vunpack.c.l.b16 %v2763
    %v3770 = vunpack.c.l.b16 %v2764
    %v3771 = vunpack.c.h.b16 %v2764
    %v3772 = vunpack.c.l.b16 %v2765
    %v3773 = vunpack.c.l.b16 %v2766
    %v3774 = vunpack.c.h.b16 %v2766
    %v3775 = vunpack.c.l.b16 %v2767
    %v3776 = vunpack.c.l.b16 %v2768
    %v3777 = vunpack.c.h.b16 %v2768
    %v3778 = vunpack.c.l.b16 %v2769
    %v3779 = vunpack.c.l.b16 %v2770
    %v3780 = vunpack.c.h.b16 %v2770
    %v3781 = vunpack.c.l.b16 %v2771
    %v3782 = vunpack.c.l.b16 %v2772
    %v3783 = vunpack.c.h.b16 %v2772
    %v3784 = vunpack.c.l.b16 %v2773
    %v3785 = vunpack.c.l.b16 %v2774
    %v3786 = vunpack.c.h.b16 %v2774
    %v3787 = vunpack.c.l.b16 %v2775
    %v3788 = vunpack.c.l.b16 %v2776
    %v3789 = vunpack.c.h.b16 %v2776
    %v3790 = vunpack.c.l.b16 %v2777
    %v3791 = vunpack.c.l.b16 %v2778
    %v3792 = vunpack.c.h.b16 %v2778
    %v3793 = vunpack.c.l.b16 %v2779
    %v3794 = vunpack.c.l.b16 %v2780
    %v3795 = vunpack.c.h.b16 %v2780
    %v3796 = vunpack.c.l.b16 %v2781
    %v3797 = vunpack.c.l.b16 %v2782
    %v3798 = vunpack.c.h.b16 %v2782
    %v3799 = vunpack.c.l.b16 %v2783
    %v3800 = vunpack.c.l.b16 %v2784
    %v3801 = vunpack.c.h.b16 %v2784
    %v3802 = vunpack.c.l.b16 %v2785
    %v3803 = vunpack.c.l.b16 %v2786
    %v3804 = vunpack.c.h.b16 %v2786
    %v3805 = vunpack.c.l.b16 %v2787
    %v3806 = vunpack.c.l.b16 %v2788
    %v3807 = vunpack.c.h.b16 %v2788
    %v3808 = vunpack.c.l.b16 %v2789
    %v3809 = vunpack.c.l.b16 %v2790
    %v3810 = vunpack.c.h.b16 %v2790
    %v3811 = vunpack.c.l.b16 %v2791
    %v3812 = vunpack.c.l.b16 %v2792
    %v3813 = vunpack.c.h.b16 %v2792
    %v3814 = vunpack.c.l.b16 %v2793
    %v3815 = vunpack.c.l.b16 %v2794
    %v3816 = vunpack.c.h.b16 %v2794
    %v3817 = vunpack.c.l.b16 %v2795
    %v3818 = vunpack.c.l.b16 %v2796
    %v3819 = vunpack.c.h.b16 %v2796
    %v3820 = vunpack.c.l.b16 %v2797
    %v3821 = vunpack.c.l.b16 %v2798
    %v3822 = vunpack.c.h.b16 %v2798
    %v3823 = vunpack.c.l.b16 %v2799
    %v3824 = vunpack.c.l.b16 %v2800
    %v3825 = vunpack.c.h.b16 %v2800
    %v3826 = vunpack.c.l.b16 %v2801
    %v3827 = vunpack.c.l.b16 %v2802
    %v3828 = vunpack.c.h.b16 %v2802
    %v3829 = vunpack.c.l.b16 %v2803
    %v3830 = vunpack.c.l.b16 %v2804
    %v3831 = vunpack.c.h.b16 %v2804
    %v3832 = vunpack.c.l.b16 %v2805
    %v3833 = vunpack.c.l.b16 %v2806
    %v3834 = vunpack.c.h.b16 %v2806
    %v3835 = vunpack.c.l.b16 %v2807
    %v3836 = vpack.c.b16 %v3263, %v3260
    %v3837 = vpack.c.b16 %v3264, %v3261
    %v3838 = vpack.c.b16 %v3265, %v3262
    %v3839 = vpack.c.b16 %v3269, %v3266
    %v3840 = vpack.c.b16 %v3270, %v3267
    %v3841 = vpack.c.b16 %v3271, %v3268
    %v3842 = vpack.c.b16 %v3275, %v3272
    %v3843 = vpack.c.b16 %v3276, %v3273
    %v3844 = vpack.c.b16 %v3277, %v3274
    %v3845 = vpack.c.b16 %v3281, %v3278
    %v3846 = vpack.c.b16 %v3282, %v3279
    %v3847 = vpack.c.b16 %v3283, %v3280
    %v3848 = vpack.c.b16 %v3287, %v3284
    %v3849 = vpack.c.b16 %v3288, %v3285
    %v3850 = vpack.c.b16 %v3289, %v3286
    %v3851 = vpack.c.b16 %v3293, %v3290
    %v3852 = vpack.c.b16 %v3294, %v3291
    %v3853 = vpack.c.b16 %v3295, %v3292
    %v3854 = vpack.c.b16 %v3299, %v3296
    %v3855 = vpack.c.b16 %v3300, %v3297
    %v3856 = vpack.c.b16 %v3301, %v3298
    %v3857 = vpack.c.b16 %v3305, %v3302
    %v3858 = vpack.c.b16 %v3306, %v3303
    %v3859 = vpack.c.b16 %v3307, %v3304
    %v3860 = vpack.c.b16 %v3311, %v3308
    %v3861 = vpack.c.b16 %v3312, %v3309
    %v3862 = vpack.c.b16 %v3313, %v3310
    %v3863 = vpack.c.b16 %v3317, %v3314
    %v3864 = vpack.c.b16 %v3318, %v3315
    %v3865 = vpack.c.b16 %v3319, %v3316
    %v3866 = vpack.c.b16 %v3323, %v3320
    %v3867 = vpack.c.b16 %v3324, %v3321
    %v3868 = vpack.c.b16 %v3325, %v3322
    %v3869 = vpack.c.b16 %v3329, %v3326
    %v3870 = vpack.c.b16 %v3330, %v3327
    %v3871 = vpack.c.b16 %v3331, %v3328
    %v3872 = vpack.c.b16 %v3335, %v3332
    %v3873 = vpack.c.b16 %v3336, %v3333
    %v3874 = vpack.c.b16 %v3337, %v3334
    %v3875 = vpack.c.b16 %v3341, %v3338
    %v3876 = vpack.c.b16 %v3342, %v3339
    %v3877 = vpack.c.b16 %v3343, %v3340
    %v3878 = vpack.c.b16 %v3347, %v3344
    %v3879 = vpack.c.b16 %v3348, %v3345
    %v3880 = vpack.c.b16 %v3349, %v3346
    %v3881 = vpack.c.b16 %v3353, %v3350
    %v3882 = vpack.c.b16 %v3354, %v3351
    %v3883 = vpack.c.b16 %v3355, %v3352
    %v3884 = vpack.c.b16 %v3359, %v3356
    %v3885 = vpack.c.b16 %v3360, %v3357
    %v3886 = vpack.c.b16 %v3361, %v3358
    %v3887 = vpack.c.b16 %v3365, %v3362
    %v3888 = vpack.c.b16 %v3366, %v3363
    %v3889 = vpack.c.b16 %v3367, %v3364
    %v3890 = vpack.c.b16 %v3371, %v3368
    %v3891 = vpack.c.b16 %v3372, %v3369
    %v3892 = vpack.c.b16 %v3373, %v3370
    %v3893 = vpack.c.b16 %v3377, %v3374
    %v3894 = vpack.c.b16 %v3378, %v3375
    %v3895 = vpack.c.b16 %v3379, %v3376
    %v3896 = vpack.c.b16 %v3383, %v3380
    %v3897 = vpack.c.b16 %v3384, %v3381
    %v3898 = vpack.c.b16 %v3385, %v3382
    %v3899 = vpack.c.b16 %v3389, %v3386
    %v3900 = vpack.c.b16 %v3390, %v3387
    %v3901 = vpack.c.b16 %v3391, %v3388
    %v3902 = vpack.c.b16 %v3395, %v3392
    %v3903 = vpack.c.b16 %v3396, %v3393
    %v3904 = vpack.c.b16 %v3397, %v3394
    %v3905 = vpack.c.b16 %v3401, %v3398
    %v3906 = vpack.c.b16 %v3402, %v3399
    %v3907 = vpack.c.b16 %v3403, %v3400
    %v3908 = vpack.c.b16 %v3407, %v3404
    %v3909 = vpack.c.b16 %v3408, %v3405
    %v3910 = vpack.c.b16 %v3409, %v3406
    %v3911 = vpack.c.b16 %v3413, %v3410
    %v3912 = vpack.c.b16 %v3414, %v3411
    %v3913 = vpack.c.b16 %v3415, %v3412
    %v3914 = vpack.c.b16 %v3419, %v3416
    %v3915 = vpack.c.b16 %v3420, %v3417
    %v3916 = vpack.c.b16 %v3421, %v3418
    %v3917 = vpack.c.b16 %v3425, %v3422
    %v3918 = vpack.c.b16 %v3426, %v3423
    %v3919 = vpack.c.b16 %v3427, %v3424
    %v3920 = vpack.c.b16 %v3431, %v3428
    %v3921 = vpack.c.b16 %v3432, %v3429
    %v3922 = vpack.c.b16 %v3433, %v3430
    %v3923 = vpack.c.b16 %v3437, %v3434
    %v3924 = vpack.c.b16 %v3438, %v3435
    %v3925 = vpack.c.b16 %v3439, %v3436
    %v3926 = vpack.c.b16 %v3443, %v3440
    %v3927 = vpack.c.b16 %v3444, %v3441
    %v3928 = vpack.c.b16 %v3445, %v3442
    %v3929 = vpack.c.b16 %v3449, %v3446
    %v3930 = vpack.c.b16 %v3450, %v3447
    %v3931 = vpack.c.b16 %v3451, %v3448
    %v3932 = vpack.c.b16 %v3455, %v3452
    %v3933 = vpack.c.b16 %v3456, %v3453
    %v3934 = vpack.c.b16 %v3457, %v3454
    %v3935 = vpack.c.b16 %v3461, %v3458
    %v3936 = vpack.c.b16 %v3462, %v3459
    %v3937 = vpack.c.b16 %v3463, %v3460
    %v3938 = vpack.c.b16 %v3467, %v3464
    %v3939 = vpack.c.b16 %v3468, %v3465
    %v3940 = vpack.c.b16 %v3469, %v3466
    %v3941 = vpack.c.b16 %v3473, %v3470
    %v3942 = vpack.c.b16 %v3474, %v3471
    %v3943 = vpack.c.b16 %v3475, %v3472
    %v3944 = vpack.c.b16 %v3479, %v3476
    %v3945 = vpack.c.b16 %v3480, %v3477
    %v3946 = vpack.c.b16 %v3481, %v3478
    %v3947 = vpack.c.b16 %v3485, %v3482
    %v3948 = vpack.c.b16 %v3486, %v3483
    %v3949 = vpack.c.b16 %v3487, %v3484
    %v3950 = vpack.c.b16 %v3491, %v3488
    %v3951 = vpack.c.b16 %v3492, %v3489
    %v3952 = vpack.c.b16 %v3493, %v3490
    %v3953 = vpack.c.b16 %v3497, %v3494
    %v3954 = vpack.c.b16 %v3498, %v3495
    %v3955 = vpack.c.b16 %v3499, %v3496
    %v3956 = vpack.c.b16 %v3503, %v3500
    %v3957 = vpack.c.b16 %v3504, %v3501
    %v3958 = vpack.c.b16 %v3505, %v3502
    %v3959 = vpack.c.b16 %v3509, %v3506
    %v3960 = vpack.c.b16 %v3510, %v3507
    %v3961 = vpack.c.b16 %v3511, %v3508
    %v3962 = vpack.c.b16 %v3515, %v3512
    %v3963 = vpack.c.b16 %v3516, %v3513
    %v3964 = vpack.c.b16 %v3517, %v3514
    %v3965 = vpack.c.b16 %v3521, %v3518
    %v3966 = vpack.c.b16 %v3522, %v3519
    %v3967 = vpack.c.b16 %v3523, %v3520
    %v3968 = vpack.c.b16 %v3527, %v3524
    %v3969 = vpack.c.b16 %v3528, %v3525
    %v3970 = vpack.c.b16 %v3529, %v3526
    %v3971 = vpack.c.b16 %v3533, %v3530
    %v3972 = vpack.c.b16 %v3534, %v3531
    %v3973 = vpack.c.b16 %v3535, %v3532
    %v3974 = vpack.c.b16 %v3539, %v3536
    %v3975 = vpack.c.b16 %v3540, %v3537
    %v3976 = vpack.c.b16 %v3541, %v3538
    %v3977 = vpack.c.b16 %v3545, %v3542
    %v3978 = vpack.c.b16 %v3546, %v3543
    %v3979 = vpack.c.b16 %v3547, %v3544
    %v3980 = vpack.c.b16 %v3551, %v3548
    %v3981 = vpack.c.b16 %v3552, %v3549
    %v3982 = vpack.c.b16 %v3553, %v3550
    %v3983 = vpack.c.b16 %v3557, %v3554
    %v3984 = vpack.c.b16 %v3558, %v3555
    %v3985 = vpack.c.b16 %v3559, %v3556
    %v3986 = vpack.c.b16 %v3563, %v3560
    %v3987 = vpack.c.b16 %v3564, %v3561
    %v3988 = vpack.c.b16 %v3565, %v3562
    %v3989 = vpack.c.b16 %v3569, %v3566
    %v3990 = vpack.c.b16 %v3570, %v3567
    %v3991 = vpack.c.b16 %v3571, %v3568
    %v3992 = vpack.c.b16 %v3575, %v3572
    %v3993 = vpack.c.b16 %v3576, %v3573
    %v3994 = vpack.c.b16 %v3577, %v3574
    %v3995 = vpack.c.b16 %v3581, %v3578
    %v3996 = vpack.c.b16 %v3582, %v3579
    %v3997 = vpack.c.b16 %v3583, %v3580
    %v3998 = vpack.c.b16 %v3587, %v3584
    %v3999 = vpack.c.b16 %v3588, %v3585
    %v4000 = vpack.c.b16 %v3589, %v3586
    %v4001 = vpack.c.b16 %v3593, %v3590
    %v4002 = vpack.c.b16 %v3594, %v3591
    %v4003 = vpack.c.b16 %v3595, %v3592
    %v4004 = vpack.c.b16 %v3599, %v3596
    %v4005 = vpack.c.b16 %v3600, %v3597
    %v4006 = vpack.c.b16 %v3601, %v3598
    %v4007 = vpack.c.b16 %v3605, %v3602
    %v4008 = vpack.c.b16 %v3606, %v3603
    %v4009 = vpack.c.b16 %v3607, %v3604
    %v4010 = vpack.c.b16 %v3611, %v3608
    %v4011 = vpack.c.b16 %v3612, %v3609
    %v4012 = vpack.c.b16 %v3613, %v3610
    %v4013 = vpack.c.b16 %v3617, %v3614
    %v4014 = vpack.c.b16 %v3618, %v3615
    %v4015 = vpack.c.b16 %v3619, %v3616
    %v4016 = vpack.c.b16 %v3623, %v3620
    %v4017 = vpack.c.b16 %v3624, %v3621
    %v4018 = vpack.c.b16 %v3625, %v3622
    %v4019 = vpack.c.b16 %v3629, %v3626
    %v4020 = vpack.c.b16 %v3630, %v3627
    %v4021 = vpack.c.b16 %v3631, %v3628
    %v4022 = vpack.c.b16 %v3635, %v3632
    %v4023 = vpack.c.b16 %v3636, %v3633
    %v4024 = vpack.c.b16 %v3637, %v3634
    %v4025 = vpack.c.b16 %v3641, %v3638
    %v4026 = vpack.c.b16 %v3642, %v3639
    %v4027 = vpack.c.b16 %v3643, %v3640
    %v4028 = vpack.c.b16 %v3647, %v3644
    %v4029 = vpack.c.b16 %v3648, %v3645
    %v4030 = vpack.c.b16 %v3649, %v3646
    %v4031 = vpack.c.b16 %v3653, %v3650
    %v4032 = vpack.c.b16 %v3654, %v3651
    %v4033 = vpack.c.b16 %v3655, %v3652
    %v4034 = vpack.c.b16 %v3659, %v3656
    %v4035 = vpack.c.b16 %v3660, %v3657
    %v4036 = vpack.c.b16 %v3661, %v3658
    %v4037 = vpack.c.b16 %v3665, %v3662
    %v4038 = vpack.c.b16 %v3666, %v3663
    %v4039 = vpack.c.b16 %v3667, %v3664
    %v4040 = vpack.c.b16 %v3671, %v3668
    %v4041 = vpack.c.b16 %v3672, %v3669
    %v4042 = vpack.c.b16 %v3673, %v3670
    %v4043 = vpack.c.b16 %v3677, %v3674
    %v4044 = vpack.c.b16 %v3678, %v3675
    %v4045 = vpack.c.b16 %v3679, %v3676
    %v4046 = vpack.c.b16 %v3683, %v3680
    %v4047 = vpack.c.b16 %v3684, %v3681
    %v4048 = vpack.c.b16 %v3685, %v3682
    %v4049 = vpack.c.b16 %v3689, %v3686
    %v4050 = vpack.c.b16 %v3690, %v3687
    %v4051 = vpack.c.b16 %v3691, %v3688
    %v4052 = vpack.c.b16 %v3695, %v3692
    %v4053 = vpack.c.b16 %v3696, %v3693
    %v4054 = vpack.c.b16 %v3697, %v3694
    %v4055 = vpack.c.b16 %v3701, %v3698
    %v4056 = vpack.c.b16 %v3702, %v3699
    %v4057 = vpack.c.b16 %v3703, %v3700
    %v4058 = vpack.c.b16 %v3707, %v3704
    %v4059 = vpack.c.b16 %v3708, %v3705
    %v4060 = vpack.c.b16 %v3709, %v3706
    %v4061 = vpack.c.b16 %v3713, %v3710
    %v4062 = vpack.c.b16 %v3714, %v3711
    %v4063 = vpack.c.b16 %v3715, %v3712
    %v4064 = vpack.c.b16 %v3719, %v3716
    %v4065 = vpack.c.b16 %v3720, %v3717
    %v4066 = vpack.c.b16 %v3721, %v3718
    %v4067 = vpack.c.b16 %v3725, %v3722
    %v4068 = vpack.c.b16 %v3726, %v3723
    %v4069 = vpack.c.b16 %v3727, %v3724
    %v4070 = vpack.c.b16 %v3731, %v3728
    %v4071 = vpack.c.b16 %v3732, %v3729
    %v4072 = vpack.c.b16 %v3733, %v3730
    %v4073 = vpack.c.b16 %v3737, %v3734
    %v4074 = vpack.c.b16 %v3738, %v3735
    %v4075 = vpack.c.b16 %v3739, %v3736
    %v4076 = vpack.c.b16 %v3743, %v3740
    %v4077 = vpack.c.b16 %v3744, %v3741
    %v4078 = vpack.c.b16 %v3745, %v3742
    %v4079 = vpack.c.b16 %v3749, %v3746
    %v4080 = vpack.c.b16 %v3750, %v3747
    %v4081 = vpack.c.b16 %v3751, %v3748
    %v4082 = vpack.c.b16 %v3755, %v3752
    %v4083 = vpack.c.b16 %v3756, %v3753
    %v4084 = vpack.c.b16 %v3757, %v3754
    %v4085 = vpack.c.b16 %v3761, %v3758
    %v4086 = vpack.c.b16 %v3762, %v3759
    %v4087 = vpack.c.b16 %v3763, %v3760
    %v4088 = vpack.c.b16 %v3767, %v3764
    %v4089 = vpack.c.b16 %v3768, %v3765
    %v4090 = vpack.c.b16 %v3769, %v3766
    %v4091 = vpack.c.b16 %v3773, %v3770
    %v4092 = vpack.c.b16 %v3774, %v3771
    %v4093 = vpack.c.b16 %v3775, %v3772
    %v4094 = vpack.c.b16 %v3779, %v3776
    %v4095 = vpack.c.b16 %v3780, %v3777
    %v4096 = vpack.c.b16 %v3781, %v3778
    %v4097 = vpack.c.b16 %v3785, %v3782
    %v4098 = vpack.c.b16 %v3786, %v3783
    %v4099 = vpack.c.b16 %v3787, %v3784
    %v4100 = vpack.c.b16 %v3791, %v3788
    %v4101 = vpack.c.b16 %v3792, %v3789
    %v4102 = vpack.c.b16 %v3793, %v3790
    %v4103 = vpack.c.b16 %v3797, %v3794
    %v4104 = vpack.c.b16 %v3798, %v3795
    %v4105 = vpack.c.b16 %v3799, %v3796
    %v4106 = vpack.c.b16 %v3803, %v3800
    %v4107 = vpack.c.b16 %v3804, %v3801
    %v4108 = vpack.c.b16 %v3805, %v3802
    %v4109 = vpack.c.b16 %v3809, %v3806
    %v4110 = vpack.c.b16 %v3810, %v3807
    %v4111 = vpack.c.b16 %v3811, %v3808
    %v4112 = vpack.c.b16 %v3815, %v3812
    %v4113 = vpack.c.b16 %v3816, %v3813
    %v4114 = vpack.c.b16 %v3817, %v3814
    %v4115 = vpack.c.b16 %v3821, %v3818
    %v4116 = vpack.c.b16 %v3822, %v3819
    %v4117 = vpack.c.b16 %v3823, %v3820
    %v4118 = vpack.c.b16 %v3827, %v3824
    %v4119 = vpack.c.b16 %v3828, %v3825
    %v4120 = vpack.c.b16 %v3829, %v3826
    %v4121 = vpack.c.b16 %v3833, %v3830
    %v4122 = vpack.c.b16 %v3834, %v3831
    %v4123 = vpack.c.b16 %v3835, %v3832
    %4412 = vmatpush.bf16.msra.mxu0 %v3857
    %4413 = vmatpush.bf16.msra.mxu0 %v3854
    %4414 = vmatpush.bf16.msra.mxu0 %v3851
    %4415 = vmatpush.bf16.msra.mxu0 %v3848
    %4416 = vmatpush.bf16.msra.mxu0 %v3845
    %4417 = vmatpush.bf16.msra.mxu0 %v3842
    %4418 = vmatpush.bf16.msra.mxu0 %v3839
    %4419 = vmatpush.bf16.msra.mxu0 %v3836
    %4420 = vmatmul.bf16.gmra.mxu0 %v2852
    %v4421 = vpop.f32.mrf.mxu0
    %v4422 = vadd.f32 %v2810, %v4421
    %v4423 = vpop.f32.mrf.mxu0
    %v4424 = vadd.f32 %v2810, %v4423
    %4425 = vdwg.mxu0
    %4426 = vmatpush.bf16.msra.mxu0 %v3881
    %4427 = vmatpush.bf16.msra.mxu0 %v3878
    %4428 = vmatpush.bf16.msra.mxu0 %v3875
    %4429 = vmatpush.bf16.msra.mxu0 %v3872
    %4430 = vmatpush.bf16.msra.mxu0 %v3869
    %4431 = vmatpush.bf16.msra.mxu0 %v3866
    %4432 = vmatpush.bf16.msra.mxu0 %v3863
    %4433 = vmatpush.bf16.msra.mxu0 %v3860
    %4434 = vmatmul.bf16.gmra.mxu0 %v2853
    %v4435 = vpop.f32.mrf.mxu0
    %v4436 = vadd.f32 %v4422, %v4435
    %v4437 = vpop.f32.mrf.mxu0
    %v4438 = vadd.f32 %v4424, %v4437
    %4439 = vdwg.mxu0
    %4440 = vmatpush.bf16.msra.mxu0 %v3905
    %4441 = vmatpush.bf16.msra.mxu0 %v3902
    %4442 = vmatpush.bf16.msra.mxu0 %v3899
    %4443 = vmatpush.bf16.msra.mxu0 %v3896
    %4444 = vmatpush.bf16.msra.mxu0 %v3893
    %4445 = vmatpush.bf16.msra.mxu0 %v3890
    %4446 = vmatpush.bf16.msra.mxu0 %v3887
    %4447 = vmatpush.bf16.msra.mxu0 %v3884
    %4448 = vmatmul.bf16.gmra.mxu0 %v2854
    %v4449 = vpop.f32.mrf.mxu0
    %v4450 = vadd.f32 %v4436, %v4449
    %v4451 = vpop.f32.mrf.mxu0
    %v4452 = vadd.f32 %v4438, %v4451
    %4453 = vdwg.mxu0
    %4454 = vmatpush.bf16.msra.mxu0 %v3929
    %4455 = vmatpush.bf16.msra.mxu0 %v3926
    %4456 = vmatpush.bf16.msra.mxu0 %v3923
    %4457 = vmatpush.bf16.msra.mxu0 %v3920
    %4458 = vmatpush.bf16.msra.mxu0 %v3917
    %4459 = vmatpush.bf16.msra.mxu0 %v3914
    %4460 = vmatpush.bf16.msra.mxu0 %v3911
    %4461 = vmatpush.bf16.msra.mxu0 %v3908
    %4462 = vmatmul.bf16.gmra.mxu0 %v2855
    %v4463 = vpop.f32.mrf.mxu0
    %v4464 = vadd.f32 %v4450, %v4463
    %v4465 = vpop.f32.mrf.mxu0
    %v4466 = vadd.f32 %v4452, %v4465
    %4467 = vdwg.mxu0
    %4468 = vmatpush.bf16.msra.mxu0 %v3953
    %4469 = vmatpush.bf16.msra.mxu0 %v3950
    %4470 = vmatpush.bf16.msra.mxu0 %v3947
    %4471 = vmatpush.bf16.msra.mxu0 %v3944
    %4472 = vmatpush.bf16.msra.mxu0 %v3941
    %4473 = vmatpush.bf16.msra.mxu0 %v3938
    %4474 = vmatpush.bf16.msra.mxu0 %v3935
    %4475 = vmatpush.bf16.msra.mxu0 %v3932
    %4476 = vmatmul.bf16.gmra.mxu0 %v2856
    %v4477 = vpop.f32.mrf.mxu0
    %v4478 = vadd.f32 %v4464, %v4477
    %v4479 = vpop.f32.mrf.mxu0
    %v4480 = vadd.f32 %v4466, %v4479
    %4481 = vdwg.mxu0
    %4482 = vmatpush.bf16.msra.mxu0 %v3977
    %4483 = vmatpush.bf16.msra.mxu0 %v3974
    %4484 = vmatpush.bf16.msra.mxu0 %v3971
    %4485 = vmatpush.bf16.msra.mxu0 %v3968
    %4486 = vmatpush.bf16.msra.mxu0 %v3965
    %4487 = vmatpush.bf16.msra.mxu0 %v3962
    %4488 = vmatpush.bf16.msra.mxu0 %v3959
    %4489 = vmatpush.bf16.msra.mxu0 %v3956
    %4490 = vmatmul.bf16.gmra.mxu0 %v2857
    %v4491 = vpop.f32.mrf.mxu0
    %v4492 = vadd.f32 %v4478, %v4491
    %v4493 = vpop.f32.mrf.mxu0
    %v4494 = vadd.f32 %v4480, %v4493
    %4495 = vdwg.mxu0
    %4496 = vmatpush.bf16.msra.mxu0 %v4001
    %4497 = vmatpush.bf16.msra.mxu0 %v3998
    %4498 = vmatpush.bf16.msra.mxu0 %v3995
    %4499 = vmatpush.bf16.msra.mxu0 %v3992
    %4500 = vmatpush.bf16.msra.mxu0 %v3989
    %4501 = vmatpush.bf16.msra.mxu0 %v3986
    %4502 = vmatpush.bf16.msra.mxu0 %v3983
    %4503 = vmatpush.bf16.msra.mxu0 %v3980
    %4504 = vmatmul.bf16.gmra.mxu0 %v2858
    %v4505 = vpop.f32.mrf.mxu0
    %v4506 = vadd.f32 %v4492, %v4505
    %v4507 = vpop.f32.mrf.mxu0
    %v4508 = vadd.f32 %v4494, %v4507
    %4509 = vdwg.mxu0
    %4510 = vmatpush.bf16.msra.mxu0 %v4025
    %4511 = vmatpush.bf16.msra.mxu0 %v4022
    %4512 = vmatpush.bf16.msra.mxu0 %v4019
    %4513 = vmatpush.bf16.msra.mxu0 %v4016
    %4514 = vmatpush.bf16.msra.mxu0 %v4013
    %4515 = vmatpush.bf16.msra.mxu0 %v4010
    %4516 = vmatpush.bf16.msra.mxu0 %v4007
    %4517 = vmatpush.bf16.msra.mxu0 %v4004
    %4518 = vmatmul.bf16.gmra.mxu0 %v2859
    %v4519 = vpop.f32.mrf.mxu0
    %v4520 = vadd.f32 %v4506, %v4519
    %v4521 = vpop.f32.mrf.mxu0
    %v4522 = vadd.f32 %v4508, %v4521
    %4523 = vdwg.mxu0
    %4524 = vmatpush.bf16.msra.mxu0 %v4049
    %4525 = vmatpush.bf16.msra.mxu0 %v4046
    %4526 = vmatpush.bf16.msra.mxu0 %v4043
    %4527 = vmatpush.bf16.msra.mxu0 %v4040
    %4528 = vmatpush.bf16.msra.mxu0 %v4037
    %4529 = vmatpush.bf16.msra.mxu0 %v4034
    %4530 = vmatpush.bf16.msra.mxu0 %v4031
    %4531 = vmatpush.bf16.msra.mxu0 %v4028
    %4532 = vmatmul.bf16.gmra.mxu0 %v2860
    %v4533 = vpop.f32.mrf.mxu0
    %v4534 = vadd.f32 %v4520, %v4533
    %v4535 = vpop.f32.mrf.mxu0
    %v4536 = vadd.f32 %v4522, %v4535
    %4537 = vdwg.mxu0
    %4538 = vmatpush.bf16.msra.mxu0 %v4073
    %4539 = vmatpush.bf16.msra.mxu0 %v4070
    %4540 = vmatpush.bf16.msra.mxu0 %v4067
    %4541 = vmatpush.bf16.msra.mxu0 %v4064
    %4542 = vmatpush.bf16.msra.mxu0 %v4061
    %4543 = vmatpush.bf16.msra.mxu0 %v4058
    %4544 = vmatpush.bf16.msra.mxu0 %v4055
    %4545 = vmatpush.bf16.msra.mxu0 %v4052
    %4546 = vmatmul.bf16.gmra.mxu0 %v2861
    %v4547 = vpop.f32.mrf.mxu0
    %v4548 = vadd.f32 %v4534, %v4547
    %v4549 = vpop.f32.mrf.mxu0
    %v4550 = vadd.f32 %v4536, %v4549
    %4551 = vdwg.mxu0
    %4552 = vmatpush.bf16.msra.mxu0 %v4097
    %4553 = vmatpush.bf16.msra.mxu0 %v4094
    %4554 = vmatpush.bf16.msra.mxu0 %v4091
    %4555 = vmatpush.bf16.msra.mxu0 %v4088
    %4556 = vmatpush.bf16.msra.mxu0 %v4085
    %4557 = vmatpush.bf16.msra.mxu0 %v4082
    %4558 = vmatpush.bf16.msra.mxu0 %v4079
    %4559 = vmatpush.bf16.msra.mxu0 %v4076
    %4560 = vmatmul.bf16.gmra.mxu0 %v2862
    %v4561 = vpop.f32.mrf.mxu0
    %v4562 = vadd.f32 %v4548, %v4561
    %v4563 = vpop.f32.mrf.mxu0
    %v4564 = vadd.f32 %v4550, %v4563
    %4565 = vdwg.mxu0
    %4566 = vmatpush.bf16.msra.mxu0 %v4121
    %4567 = vmatpush.bf16.msra.mxu0 %v4118
    %4568 = vmatpush.bf16.msra.mxu0 %v4115
    %4569 = vmatpush.bf16.msra.mxu0 %v4112
    %4570 = vmatpush.bf16.msra.mxu0 %v4109
    %4571 = vmatpush.bf16.msra.mxu0 %v4106
    %4572 = vmatpush.bf16.msra.mxu0 %v4103
    %4573 = vmatpush.bf16.msra.mxu0 %v4100
    %4574 = vmatmul.bf16.gmra.mxu0 %v2863
    %v4575 = vpop.f32.mrf.mxu0
    %v4576 = vadd.f32 %v4562, %v4575
    %v4577 = vpop.f32.mrf.mxu0
    %v4578 = vadd.f32 %v4564, %v4577
    %4579 = vdwg.mxu0
    %4580 = vmatpush.bf16.msra.mxu0 %v3858
    %4581 = vmatpush.bf16.msra.mxu0 %v3855
    %4582 = vmatpush.bf16.msra.mxu0 %v3852
    %4583 = vmatpush.bf16.msra.mxu0 %v3849
    %4584 = vmatpush.bf16.msra.mxu0 %v3846
    %4585 = vmatpush.bf16.msra.mxu0 %v3843
    %4586 = vmatpush.bf16.msra.mxu0 %v3840
    %4587 = vmatpush.bf16.msra.mxu0 %v3837
    %4588 = vmatmul.bf16.gmra.mxu0 %v2852
    %v4589 = vpop.f32.mrf.mxu0
    %v4590 = vadd.f32 %v2811, %v4589
    %v4591 = vpop.f32.mrf.mxu0
    %v4592 = vadd.f32 %v2811, %v4591
    %4593 = vdwg.mxu0
    %4594 = vmatpush.bf16.msra.mxu0 %v3882
    %4595 = vmatpush.bf16.msra.mxu0 %v3879
    %4596 = vmatpush.bf16.msra.mxu0 %v3876
    %4597 = vmatpush.bf16.msra.mxu0 %v3873
    %4598 = vmatpush.bf16.msra.mxu0 %v3870
    %4599 = vmatpush.bf16.msra.mxu0 %v3867
    %4600 = vmatpush.bf16.msra.mxu0 %v3864
    %4601 = vmatpush.bf16.msra.mxu0 %v3861
    %4602 = vmatmul.bf16.gmra.mxu0 %v2853
    %v4603 = vpop.f32.mrf.mxu0
    %v4604 = vadd.f32 %v4590, %v4603
    %v4605 = vpop.f32.mrf.mxu0
    %v4606 = vadd.f32 %v4592, %v4605
    %4607 = vdwg.mxu0
    %4608 = vmatpush.bf16.msra.mxu0 %v3906
    %4609 = vmatpush.bf16.msra.mxu0 %v3903
    %4610 = vmatpush.bf16.msra.mxu0 %v3900
    %4611 = vmatpush.bf16.msra.mxu0 %v3897
    %4612 = vmatpush.bf16.msra.mxu0 %v3894
    %4613 = vmatpush.bf16.msra.mxu0 %v3891
    %4614 = vmatpush.bf16.msra.mxu0 %v3888
    %4615 = vmatpush.bf16.msra.mxu0 %v3885
    %4616 = vmatmul.bf16.gmra.mxu0 %v2854
    %v4617 = vpop.f32.mrf.mxu0
    %v4618 = vadd.f32 %v4604, %v4617
    %v4619 = vpop.f32.mrf.mxu0
    %v4620 = vadd.f32 %v4606, %v4619
    %4621 = vdwg.mxu0
    %4622 = vmatpush.bf16.msra.mxu0 %v3930
    %4623 = vmatpush.bf16.msra.mxu0 %v3927
    %4624 = vmatpush.bf16.msra.mxu0 %v3924
    %4625 = vmatpush.bf16.msra.mxu0 %v3921
    %4626 = vmatpush.bf16.msra.mxu0 %v3918
    %4627 = vmatpush.bf16.msra.mxu0 %v3915
    %4628 = vmatpush.bf16.msra.mxu0 %v3912
    %4629 = vmatpush.bf16.msra.mxu0 %v3909
    %4630 = vmatmul.bf16.gmra.mxu0 %v2855
    %v4631 = vpop.f32.mrf.mxu0
    %v4632 = vadd.f32 %v4618, %v4631
    %v4633 = vpop.f32.mrf.mxu0
    %v4634 = vadd.f32 %v4620, %v4633
    %4635 = vdwg.mxu0
    %4636 = vmatpush.bf16.msra.mxu0 %v3954
    %4637 = vmatpush.bf16.msra.mxu0 %v3951
    %4638 = vmatpush.bf16.msra.mxu0 %v3948
    %4639 = vmatpush.bf16.msra.mxu0 %v3945
    %4640 = vmatpush.bf16.msra.mxu0 %v3942
    %4641 = vmatpush.bf16.msra.mxu0 %v3939
    %4642 = vmatpush.bf16.msra.mxu0 %v3936
    %4643 = vmatpush.bf16.msra.mxu0 %v3933
    %4644 = vmatmul.bf16.gmra.mxu0 %v2856
    %v4645 = vpop.f32.mrf.mxu0
    %v4646 = vadd.f32 %v4632, %v4645
    %v4647 = vpop.f32.mrf.mxu0
    %v4648 = vadd.f32 %v4634, %v4647
    %4649 = vdwg.mxu0
    %4650 = vmatpush.bf16.msra.mxu0 %v3978
    %4651 = vmatpush.bf16.msra.mxu0 %v3975
    %4652 = vmatpush.bf16.msra.mxu0 %v3972
    %4653 = vmatpush.bf16.msra.mxu0 %v3969
    %4654 = vmatpush.bf16.msra.mxu0 %v3966
    %4655 = vmatpush.bf16.msra.mxu0 %v3963
    %4656 = vmatpush.bf16.msra.mxu0 %v3960
    %4657 = vmatpush.bf16.msra.mxu0 %v3957
    %4658 = vmatmul.bf16.gmra.mxu0 %v2857
    %v4659 = vpop.f32.mrf.mxu0
    %v4660 = vadd.f32 %v4646, %v4659
    %v4661 = vpop.f32.mrf.mxu0
    %v4662 = vadd.f32 %v4648, %v4661
    %4663 = vdwg.mxu0
    %4664 = vmatpush.bf16.msra.mxu0 %v4002
    %4665 = vmatpush.bf16.msra.mxu0 %v3999
    %4666 = vmatpush.bf16.msra.mxu0 %v3996
    %4667 = vmatpush.bf16.msra.mxu0 %v3993
    %4668 = vmatpush.bf16.msra.mxu0 %v3990
    %4669 = vmatpush.bf16.msra.mxu0 %v3987
    %4670 = vmatpush.bf16.msra.mxu0 %v3984
    %4671 = vmatpush.bf16.msra.mxu0 %v3981
    %4672 = vmatmul.bf16.gmra.mxu0 %v2858
    %v4673 = vpop.f32.mrf.mxu0
    %v4674 = vadd.f32 %v4660, %v4673
    %v4675 = vpop.f32.mrf.mxu0
    %v4676 = vadd.f32 %v4662, %v4675
    %4677 = vdwg.mxu0
    %4678 = vmatpush.bf16.msra.mxu0 %v4026
    %4679 = vmatpush.bf16.msra.mxu0 %v4023
    %4680 = vmatpush.bf16.msra.mxu0 %v4020
    %4681 = vmatpush.bf16.msra.mxu0 %v4017
    %4682 = vmatpush.bf16.msra.mxu0 %v4014
    %4683 = vmatpush.bf16.msra.mxu0 %v4011
    %4684 = vmatpush.bf16.msra.mxu0 %v4008
    %4685 = vmatpush.bf16.msra.mxu0 %v4005
    %4686 = vmatmul.bf16.gmra.mxu0 %v2859
    %v4687 = vpop.f32.mrf.mxu0
    %v4688 = vadd.f32 %v4674, %v4687
    %v4689 = vpop.f32.mrf.mxu0
    %v4690 = vadd.f32 %v4676, %v4689
    %4691 = vdwg.mxu0
    %4692 = vmatpush.bf16.msra.mxu0 %v4050
    %4693 = vmatpush.bf16.msra.mxu0 %v4047
    %4694 = vmatpush.bf16.msra.mxu0 %v4044
    %4695 = vmatpush.bf16.msra.mxu0 %v4041
    %4696 = vmatpush.bf16.msra.mxu0 %v4038
    %4697 = vmatpush.bf16.msra.mxu0 %v4035
    %4698 = vmatpush.bf16.msra.mxu0 %v4032
    %4699 = vmatpush.bf16.msra.mxu0 %v4029
    %4700 = vmatmul.bf16.gmra.mxu0 %v2860
    %v4701 = vpop.f32.mrf.mxu0
    %v4702 = vadd.f32 %v4688, %v4701
    %v4703 = vpop.f32.mrf.mxu0
    %v4704 = vadd.f32 %v4690, %v4703
    %4705 = vdwg.mxu0
    %4706 = vmatpush.bf16.msra.mxu0 %v4074
    %4707 = vmatpush.bf16.msra.mxu0 %v4071
    %4708 = vmatpush.bf16.msra.mxu0 %v4068
    %4709 = vmatpush.bf16.msra.mxu0 %v4065
    %4710 = vmatpush.bf16.msra.mxu0 %v4062
    %4711 = vmatpush.bf16.msra.mxu0 %v4059
    %4712 = vmatpush.bf16.msra.mxu0 %v4056
    %4713 = vmatpush.bf16.msra.mxu0 %v4053
    %4714 = vmatmul.bf16.gmra.mxu0 %v2861
    %v4715 = vpop.f32.mrf.mxu0
    %v4716 = vadd.f32 %v4702, %v4715
    %v4717 = vpop.f32.mrf.mxu0
    %v4718 = vadd.f32 %v4704, %v4717
    %4719 = vdwg.mxu0
    %4720 = vmatpush.bf16.msra.mxu0 %v4098
    %4721 = vmatpush.bf16.msra.mxu0 %v4095
    %4722 = vmatpush.bf16.msra.mxu0 %v4092
    %4723 = vmatpush.bf16.msra.mxu0 %v4089
    %4724 = vmatpush.bf16.msra.mxu0 %v4086
    %4725 = vmatpush.bf16.msra.mxu0 %v4083
    %4726 = vmatpush.bf16.msra.mxu0 %v4080
    %4727 = vmatpush.bf16.msra.mxu0 %v4077
    %4728 = vmatmul.bf16.gmra.mxu0 %v2862
    %v4729 = vpop.f32.mrf.mxu0
    %v4730 = vadd.f32 %v4716, %v4729
    %v4731 = vpop.f32.mrf.mxu0
    %v4732 = vadd.f32 %v4718, %v4731
    %4733 = vdwg.mxu0
    %4734 = vmatpush.bf16.msra.mxu0 %v4122
    %4735 = vmatpush.bf16.msra.mxu0 %v4119
    %4736 = vmatpush.bf16.msra.mxu0 %v4116
    %4737 = vmatpush.bf16.msra.mxu0 %v4113
    %4738 = vmatpush.bf16.msra.mxu0 %v4110
    %4739 = vmatpush.bf16.msra.mxu0 %v4107
    %4740 = vmatpush.bf16.msra.mxu0 %v4104
    %4741 = vmatpush.bf16.msra.mxu0 %v4101
    %4742 = vmatmul.bf16.gmra.mxu0 %v2863
    %v4743 = vpop.f32.mrf.mxu0
    %v4744 = vadd.f32 %v4730, %v4743
    %v4745 = vpop.f32.mrf.mxu0
    %v4746 = vadd.f32 %v4732, %v4745
    %4747 = vdwg.mxu0
    %4748 = vmatpush.bf16.msra.mxu0 %v3859
    %4749 = vmatpush.bf16.msra.mxu0 %v3856
    %4750 = vmatpush.bf16.msra.mxu0 %v3853
    %4751 = vmatpush.bf16.msra.mxu0 %v3850
    %4752 = vmatpush.bf16.msra.mxu0 %v3847
    %4753 = vmatpush.bf16.msra.mxu0 %v3844
    %4754 = vmatpush.bf16.msra.mxu0 %v3841
    %4755 = vmatpush.bf16.msra.mxu0 %v3838
    %4756 = vmatmul.bf16.gmra.mxu0 %v2852
    %v4757 = vpop.f32.mrf.mxu0
    %v4758 = vadd.f32 %v2812, %v4757
    %v4759 = vpop.f32.mrf.mxu0
    %v4760 = vadd.f32 %v2812, %v4759
    %4761 = vdwg.mxu0
    %4762 = vmatpush.bf16.msra.mxu0 %v3883
    %4763 = vmatpush.bf16.msra.mxu0 %v3880
    %4764 = vmatpush.bf16.msra.mxu0 %v3877
    %4765 = vmatpush.bf16.msra.mxu0 %v3874
    %4766 = vmatpush.bf16.msra.mxu0 %v3871
    %4767 = vmatpush.bf16.msra.mxu0 %v3868
    %4768 = vmatpush.bf16.msra.mxu0 %v3865
    %4769 = vmatpush.bf16.msra.mxu0 %v3862
    %4770 = vmatmul.bf16.gmra.mxu0 %v2853
    %v4771 = vpop.f32.mrf.mxu0
    %v4772 = vadd.f32 %v4758, %v4771
    %v4773 = vpop.f32.mrf.mxu0
    %v4774 = vadd.f32 %v4760, %v4773
    %4775 = vdwg.mxu0
    %4776 = vmatpush.bf16.msra.mxu0 %v3907
    %4777 = vmatpush.bf16.msra.mxu0 %v3904
    %4778 = vmatpush.bf16.msra.mxu0 %v3901
    %4779 = vmatpush.bf16.msra.mxu0 %v3898
    %4780 = vmatpush.bf16.msra.mxu0 %v3895
    %4781 = vmatpush.bf16.msra.mxu0 %v3892
    %4782 = vmatpush.bf16.msra.mxu0 %v3889
    %4783 = vmatpush.bf16.msra.mxu0 %v3886
    %4784 = vmatmul.bf16.gmra.mxu0 %v2854
    %v4785 = vpop.f32.mrf.mxu0
    %v4786 = vadd.f32 %v4772, %v4785
    %v4787 = vpop.f32.mrf.mxu0
    %v4788 = vadd.f32 %v4774, %v4787
    %4789 = vdwg.mxu0
    %4790 = vmatpush.bf16.msra.mxu0 %v3931
    %4791 = vmatpush.bf16.msra.mxu0 %v3928
    %4792 = vmatpush.bf16.msra.mxu0 %v3925
    %4793 = vmatpush.bf16.msra.mxu0 %v3922
    %4794 = vmatpush.bf16.msra.mxu0 %v3919
    %4795 = vmatpush.bf16.msra.mxu0 %v3916
    %4796 = vmatpush.bf16.msra.mxu0 %v3913
    %4797 = vmatpush.bf16.msra.mxu0 %v3910
    %4798 = vmatmul.bf16.gmra.mxu0 %v2855
    %v4799 = vpop.f32.mrf.mxu0
    %v4800 = vadd.f32 %v4786, %v4799
    %v4801 = vpop.f32.mrf.mxu0
    %v4802 = vadd.f32 %v4788, %v4801
    %4803 = vdwg.mxu0
    %4804 = vmatpush.bf16.msra.mxu0 %v3955
    %4805 = vmatpush.bf16.msra.mxu0 %v3952
    %4806 = vmatpush.bf16.msra.mxu0 %v3949
    %4807 = vmatpush.bf16.msra.mxu0 %v3946
    %4808 = vmatpush.bf16.msra.mxu0 %v3943
    %4809 = vmatpush.bf16.msra.mxu0 %v3940
    %4810 = vmatpush.bf16.msra.mxu0 %v3937
    %4811 = vmatpush.bf16.msra.mxu0 %v3934
    %4812 = vmatmul.bf16.gmra.mxu0 %v2856
    %v4813 = vpop.f32.mrf.mxu0
    %v4814 = vadd.f32 %v4800, %v4813
    %v4815 = vpop.f32.mrf.mxu0
    %v4816 = vadd.f32 %v4802, %v4815
    %4817 = vdwg.mxu0
    %4818 = vmatpush.bf16.msra.mxu0 %v3979
    %4819 = vmatpush.bf16.msra.mxu0 %v3976
    %4820 = vmatpush.bf16.msra.mxu0 %v3973
    %4821 = vmatpush.bf16.msra.mxu0 %v3970
    %4822 = vmatpush.bf16.msra.mxu0 %v3967
    %4823 = vmatpush.bf16.msra.mxu0 %v3964
    %4824 = vmatpush.bf16.msra.mxu0 %v3961
    %4825 = vmatpush.bf16.msra.mxu0 %v3958
    %4826 = vmatmul.bf16.gmra.mxu0 %v2857
    %v4827 = vpop.f32.mrf.mxu0
    %v4828 = vadd.f32 %v4814, %v4827
    %v4829 = vpop.f32.mrf.mxu0
    %v4830 = vadd.f32 %v4816, %v4829
    %4831 = vdwg.mxu0
    %4832 = vmatpush.bf16.msra.mxu0 %v4003
    %4833 = vmatpush.bf16.msra.mxu0 %v4000
    %4834 = vmatpush.bf16.msra.mxu0 %v3997
    %4835 = vmatpush.bf16.msra.mxu0 %v3994
    %4836 = vmatpush.bf16.msra.mxu0 %v3991
    %4837 = vmatpush.bf16.msra.mxu0 %v3988
    %4838 = vmatpush.bf16.msra.mxu0 %v3985
    %4839 = vmatpush.bf16.msra.mxu0 %v3982
    %4840 = vmatmul.bf16.gmra.mxu0 %v2858
    %v4841 = vpop.f32.mrf.mxu0
    %v4842 = vadd.f32 %v4828, %v4841
    %v4843 = vpop.f32.mrf.mxu0
    %v4844 = vadd.f32 %v4830, %v4843
    %4845 = vdwg.mxu0
    %4846 = vmatpush.bf16.msra.mxu0 %v4027
    %4847 = vmatpush.bf16.msra.mxu0 %v4024
    %4848 = vmatpush.bf16.msra.mxu0 %v4021
    %4849 = vmatpush.bf16.msra.mxu0 %v4018
    %4850 = vmatpush.bf16.msra.mxu0 %v4015
    %4851 = vmatpush.bf16.msra.mxu0 %v4012
    %4852 = vmatpush.bf16.msra.mxu0 %v4009
    %4853 = vmatpush.bf16.msra.mxu0 %v4006
    %4854 = vmatmul.bf16.gmra.mxu0 %v2859
    %v4855 = vpop.f32.mrf.mxu0
    %v4856 = vadd.f32 %v4842, %v4855
    %v4857 = vpop.f32.mrf.mxu0
    %v4858 = vadd.f32 %v4844, %v4857
    %4859 = vdwg.mxu0
    %4860 = vmatpush.bf16.msra.mxu0 %v4051
    %4861 = vmatpush.bf16.msra.mxu0 %v4048
    %4862 = vmatpush.bf16.msra.mxu0 %v4045
    %4863 = vmatpush.bf16.msra.mxu0 %v4042
    %4864 = vmatpush.bf16.msra.mxu0 %v4039
    %4865 = vmatpush.bf16.msra.mxu0 %v4036
    %4866 = vmatpush.bf16.msra.mxu0 %v4033
    %4867 = vmatpush.bf16.msra.mxu0 %v4030
    %4868 = vmatmul.bf16.gmra.mxu0 %v2860
    %v4869 = vpop.f32.mrf.mxu0
    %v4870 = vadd.f32 %v4856, %v4869
    %v4871 = vpop.f32.mrf.mxu0
    %v4872 = vadd.f32 %v4858, %v4871
    %4873 = vdwg.mxu0
    %4874 = vmatpush.bf16.msra.mxu0 %v4075
    %4875 = vmatpush.bf16.msra.mxu0 %v4072
    %4876 = vmatpush.bf16.msra.mxu0 %v4069
    %4877 = vmatpush.bf16.msra.mxu0 %v4066
    %4878 = vmatpush.bf16.msra.mxu0 %v4063
    %4879 = vmatpush.bf16.msra.mxu0 %v4060
    %4880 = vmatpush.bf16.msra.mxu0 %v4057
    %4881 = vmatpush.bf16.msra.mxu0 %v4054
    %4882 = vmatmul.bf16.gmra.mxu0 %v2861
    %v4883 = vpop.f32.mrf.mxu0
    %v4884 = vadd.f32 %v4870, %v4883
    %v4885 = vpop.f32.mrf.mxu0
    %v4886 = vadd.f32 %v4872, %v4885
    %4887 = vdwg.mxu0
    %4888 = vmatpush.bf16.msra.mxu0 %v4099
    %4889 = vmatpush.bf16.msra.mxu0 %v4096
    %4890 = vmatpush.bf16.msra.mxu0 %v4093
    %4891 = vmatpush.bf16.msra.mxu0 %v4090
    %4892 = vmatpush.bf16.msra.mxu0 %v4087
    %4893 = vmatpush.bf16.msra.mxu0 %v4084
    %4894 = vmatpush.bf16.msra.mxu0 %v4081
    %4895 = vmatpush.bf16.msra.mxu0 %v4078
    %4896 = vmatmul.bf16.gmra.mxu0 %v2862
    %v4897 = vpop.f32.mrf.mxu0
    %v4898 = vadd.f32 %v4884, %v4897
    %v4899 = vpop.f32.mrf.mxu0
    %v4900 = vadd.f32 %v4886, %v4899
    %4901 = vdwg.mxu0
    %4902 = vmatpush.bf16.msra.mxu0 %v4123
    %4903 = vmatpush.bf16.msra.mxu0 %v4120
    %4904 = vmatpush.bf16.msra.mxu0 %v4117
    %4905 = vmatpush.bf16.msra.mxu0 %v4114
    %4906 = vmatpush.bf16.msra.mxu0 %v4111
    %4907 = vmatpush.bf16.msra.mxu0 %v4108
    %4908 = vmatpush.bf16.msra.mxu0 %v4105
    %4909 = vmatpush.bf16.msra.mxu0 %v4102
    %4910 = vmatmul.bf16.gmra.mxu0 %v2863
    %v4911 = vpop.f32.mrf.mxu0
    %v4912 = vadd.f32 %v4898, %v4911
    %v4913 = vpop.f32.mrf.mxu0
    %v4914 = vadd.f32 %v4900, %v4913
    %4915 = vdwg.mxu0
    %4916 = vst [vmem:[#allocation12] sm:$0xff] %v4576
    %4917 = vst [vmem:[#allocation12 + $0x8] sm:$0xff] %v4744
    %4918 = vst [vmem:[#allocation12 + $0x10] sm:$0xff] %v4912
    %4919 = vst [vmem:[#allocation12 + $0x18] sm:$0xff] %v4578
    %4920 = vst [vmem:[#allocation12 + $0x20] sm:$0xff] %v4746
    %4921 = vst [vmem:[#allocation12 + $0x28] sm:$0xff] %v4914
    // Predicated region
    $region42: #{tpu_custom_call.1} parent=1 // pred_check
      _
    $region43: #{tpu_custom_call.1} parent=1 // pred_check_branch
      %4923 = sbr.rel (0) target = $region45
    $region44: #{tpu_custom_call.1} parent=1 // pred_region
      %4925 = vsyncadd [#allocation5], 0
      %s4926 = sshll.u32 [#allocation12], 4
      %s4927 = int_to_ptr.vmem [resolvable:$true] %s4926
      %s4928 = sshll.u32 %s5, 4
      %s4929 = int_to_ptr.hbm [resolvable:$true] %s4928
      %4934 = dma.vmem_to_hbm [thread:$0]  %s4927, 768, %s4929, [#allocation5], 384, 384, 24
    $region45: #{tpu_custom_call.1} parent=1 // pred_fallthru
      _
    // Predicated region
    $region46: #{tpu_custom_call.1} parent=1 // pred_check
      _
    $region47: #{tpu_custom_call.1} parent=1 // pred_check_branch
      %4936 = sbr.rel (0) target = $region49
    $region48: #{tpu_custom_call.1} parent=1 // pred_region
      %4938 = dma.done [#allocation5], 768
    $region49: #{tpu_custom_call.1} parent=1 // pred_fallthru
      _
    %4939 = vsyncpa [#allocation4], 1
    %4940 = vsyncpa [#allocation7], 1
    %4941 = vsyncpa [#allocation10], 1
    %4942 = vsyncpa [#allocation5], 1

</llo_original>
